<compile_context>
chip_gen: v7x
topology: tpu7x:2x2x1
jax: 0.10.0
libtpu: 0.0.40
codegen_flags: <defaults>
</compile_context>

<pallas_src>
import jax
import jax.numpy as jnp
import numpy as np
from jax import lax
from jax.experimental import pallas as pl
from jax.experimental.pallas import tpu as pltpu

FOLD = 8  # batch slots folded into lanes (f32 sublane tile height)


# ---------------------------------------------------------------------------
# Pallas kernel
# ---------------------------------------------------------------------------
def _shallow_gru_kernel(xw_ref, h1_ref, h2_ref,
                        wih1_ref, whh1_ref, wih2_ref, whh2_ref,
                        b1x_ref, b1hn_ref, b2x_ref, b2hn_ref,
                        wfc_ref, bfc_ref,
                        out_ref, h1o_ref, h2o_ref,
                        gx1_scr, h2all_scr):
    Bg, L = h1_ref.shape            # folded state: L = FOLD*H lanes
    S = h2all_scr.shape[0] // Bg
    G = 3 * L                       # three gates, gate-major lanes

    # ---- Hoisted layer-1 input projection (state independent): one bf16 MXU
    # matmul (S*Bg, FOLD*T) x (FOLD*T, 3L).  b_ih1 and the r/z halves of b_hh1
    # were folded into b1x by the wrapper.
    gx1_scr[...] = (jnp.dot(xw_ref[...], wih1_ref[...],
                            preferred_element_type=jnp.float32)
                    + b1x_ref[...])

    # Bias broadcasts hoisted out of the unrolled loop (JAX does not CSE them).
    b1hn = jnp.broadcast_to(b1hn_ref[...], (Bg, L))   # layer-1 b_hh n-gate
    b2x = jnp.broadcast_to(b2x_ref[...], (Bg, G))     # layer-2 b_ih + b_hh(r,z)
    b2hn = jnp.broadcast_to(b2hn_ref[...], (Bg, L))   # layer-2 b_hh n-gate

    def gru_update(gx, gh, bhn, h_prev):
        # PyTorch nn.GRUCell, gate order (r, z, n); in the folded layout each
        # gate is a full L-lane block, slot-major within the gate.
        rz = jax.nn.sigmoid(gx[:, :2 * L] + gh[:, :2 * L])
        r, z = rz[:, :L], rz[:, L:]
        n = jnp.tanh(gx[:, 2 * L:] + r * (gh[:, 2 * L:] + bhn))
        return n + z * (h_prev - n)          # == (1 - z) * n + z * h_prev

    h1 = h1_ref[...]
    h2 = h2_ref[...]
    h1b = h1.astype(jnp.bfloat16)

    # S is small and static -> fully unrolled recurrence (static offsets).
    # TODO(synk): if S grows enough to spill vregs, switch to
    # lax.fori_loop(..., unroll=4) with pl.ds(pl.multiple_of(t*Bg, 8), Bg).
    for t in range(S):
        # Layer 1: only the h @ W_hh matmul is on the serial path.
        gh1 = jnp.dot(h1b, whh1_ref[...], preferred_element_type=jnp.float32)
        h1 = gru_update(gx1_scr[t * Bg:(t + 1) * Bg, :], gh1, b1hn, h1)
        h1b = h1.astype(jnp.bfloat16)

        # Layer 2: two independent matmuls (no per-step concat, no zero blocks).
        gx2 = jnp.dot(h1b, wih2_ref[...],
                      preferred_element_type=jnp.float32) + b2x
        gh2 = jnp.dot(h2.astype(jnp.bfloat16), whh2_ref[...],
                      preferred_element_type=jnp.float32)
        h2 = gru_update(gx2, gh2, b2hn, h2)

        h2all_scr[t * Bg:(t + 1) * Bg, :] = h2

    h1o_ref[...] = h1
    h2o_ref[...] = h2

    # ---- Hoisted fc head: one (FOLD, L) x (S*Bg, L)^T contraction, store with
    # the long (S*Bg) axis in lanes.
    y = lax.dot_general(wfc_ref[...], h2all_scr[...],
                        (((1,), (1,)), ((), ())),
                        preferred_element_type=jnp.float32)
    out_ref[...] = y + bfc_ref[...]


# ---------------------------------------------------------------------------
# Weight / bias folding helpers (wrapper side, plain XLA)
# ---------------------------------------------------------------------------
def _fold_gate_weight(w, in_dim, hidden_dim):
    """PyTorch (3H, in_dim) gate weight -> slot-block-diag (FOLD*in_dim, 3*FOLD*H).

    Row s*in_dim + u, lane g*FOLD*H + s*H + j holds w[g*H + j, u] (zero for
    mismatched slots), so folded_x @ folded_w == x_s @ w.T per batch slot with
    gate-major, slot-major-within-gate output lanes.
    """
    H = hidden_dim
    wt = w.T.reshape(in_dim, 3, H)                          # [u, g, j]
    out = jnp.zeros((FOLD, in_dim, 3, FOLD, H), w.dtype)
    idx = jnp.arange(FOLD)
    out = out.at[idx, :, :, idx, :].set(
        jnp.broadcast_to(wt, (FOLD, in_dim, 3, H)))
    return out.reshape(FOLD * in_dim, 3 * FOLD * H)


def _fold_gate_bias(b, hidden_dim):
    """(3H,) -> (1, 3*FOLD*H): gate-major, replicated across the FOLD slots."""
    H = hidden_dim
    return jnp.broadcast_to(b.reshape(3, 1, H),
                            (3, FOLD, H)).reshape(1, 3 * FOLD * H)


def _fold_lane_bias(b_h, hidden_dim):
    """(H,) -> (1, FOLD*H): replicated across the FOLD slots."""
    H = hidden_dim
    return jnp.broadcast_to(b_h.reshape(1, H), (FOLD, H)).reshape(1, FOLD * H)


# ---------------------------------------------------------------------------
# Wrapper (window stacking, layout folding, weight prep, output unfolding)
# ---------------------------------------------------------------------------
def shallow_regression_gru(x, h_1, h_2, params, *,
                           time_steps, sequence_len, hidden_dim):
    B = x.shape[0]
    T, S, H = time_steps, sequence_len, hidden_dim
    assert B % FOLD == 0, "batch must be a multiple of 8 (f32 sublane tile)"
    Bg, L = B // FOLD, FOLD * H

    # Sliding windows, folded: row = t*Bg + bg, lane = slot*T + u.
    xw = jnp.stack([x[:, t:t + T] for t in range(S)], axis=0)      # (S, B, T)
    xw_f = xw.reshape(S * Bg, FOLD * T).astype(jnp.bfloat16)

    # Folded hidden state: (B, H) -> (Bg, FOLD*H), lane = slot*H + j.
    h1f = h_1.reshape(Bg, L)
    h2f = h_2.reshape(Bg, L)

    # Slot-block-diagonal, gate-major weights (bf16 MXU operands).
    wih1_f = _fold_gate_weight(params["w_ih1"], T, H).astype(jnp.bfloat16)
    whh1_f = _fold_gate_weight(params["w_hh1"], H, H).astype(jnp.bfloat16)
    wih2_f = _fold_gate_weight(params["w_ih2"], H, H).astype(jnp.bfloat16)
    whh2_f = _fold_gate_weight(params["w_hh2"], H, H).astype(jnp.bfloat16)

    # Fold r/z halves of b_hh into the x-projection bias; only the n-gate half
    # must stay on the recurrent side (GRU semantics).
    zero_n = jnp.zeros((H,), jnp.float32)
    b1x = params["b_ih1"] + jnp.concatenate([params["b_hh1"][:2 * H], zero_n])
    b2x = params["b_ih2"] + jnp.concatenate([params["b_hh2"][:2 * H], zero_n])
    b1x_f = _fold_gate_bias(b1x, H)
    b2x_f = _fold_gate_bias(b2x, H)
    b1hn_f = _fold_lane_bias(params["b_hh1"][2 * H:], H)
    b2hn_f = _fold_lane_bias(params["b_hh2"][2 * H:], H)

    # fc head, folded: wfc_f[s, s*H + j] = w_fc[0, j]  (kept f32: off the loop).
    idx = jnp.arange(FOLD)
    wfc_f = jnp.zeros((FOLD, FOLD, H), jnp.float32)
    wfc_f = wfc_f.at[idx, idx, :].set(
        jnp.broadcast_to(params["w_fc"][0], (FOLD, H)))
    wfc_f = wfc_f.reshape(FOLD, L)
    bfc = params["b_fc"].reshape(1, 1)

    inputs = (xw_f, h1f, h2f, wih1_f, whh1_f, wih2_f, whh2_f,
              b1x_f, b1hn_f, b2x_f, b2hn_f, wfc_f, bfc)

    vmem = lambda: pl.BlockSpec(memory_space=pltpu.MemorySpace.VMEM)
    out_shapes = (
        jax.ShapeDtypeStruct((FOLD, S * Bg), jnp.float32),   # fc outputs
        jax.ShapeDtypeStruct((Bg, L), jnp.float32),          # h_1 (folded)
        jax.ShapeDtypeStruct((Bg, L), jnp.float32),          # h_2 (folded)
    )

    out_flat, h1n_f, h2n_f = pl.pallas_call(
        _shallow_gru_kernel,
        out_shape=out_shapes,
        in_specs=[vmem() for _ in inputs],
        out_specs=[vmem() for _ in out_shapes],
        scratch_shapes=[pltpu.VMEM((S * Bg, 3 * L), jnp.float32),   # hoisted gx1
                        pltpu.VMEM((S * Bg, L), jnp.float32)],      # all h2 steps
        input_output_aliases={1: 1, 2: 2},   # h_1 -> h1_out, h_2 -> h2_out
    )(*inputs)

    # out_flat[s, t*Bg + bg] = y[b = bg*FOLD + s, t]  ->  (B, S)
    output_seq = out_flat.reshape(FOLD, S, Bg).transpose(2, 0, 1).reshape(B, S)
    return output_seq, h1n_f.reshape(B, H), h2n_f.reshape(B, H)


# ---------------------------------------------------------------------------
# Deterministic parameter init (PyTorch GRUCell/Linear shapes; U(-1/sqrt(H), 1/sqrt(H)))
# ---------------------------------------------------------------------------
def init_params(key, *, time_steps, hidden_dim):
    H, T = hidden_dim, time_steps
    bound = 1.0 / float(np.sqrt(H))
    ks = jax.random.split(key, 10)
    u = lambda k, s: jax.random.uniform(k, s, jnp.float32, -bound, bound)
    return dict(
        w_ih1=u(ks[0], (3 * H, T)),
        w_hh1=u(ks[1], (3 * H, H)),
        b_ih1=u(ks[2], (3 * H,)),
        b_hh1=u(ks[3], (3 * H,)),
        w_ih2=u(ks[4], (3 * H, H)),
        w_hh2=u(ks[5], (3 * H, H)),
        b_ih2=u(ks[6], (3 * H,)),
        b_hh2=u(ks[7], (3 * H,)),
        w_fc=u(ks[8], (1, H)),
        b_fc=u(ks[9], (1,)),
    )


# ---------------------------------------------------------------------------
# Pure-JAX f32 reference (PyTorch nn.GRUCell semantics) for correctness check
# ---------------------------------------------------------------------------
def reference_forward(x, h_1, h_2, params, *, time_steps, sequence_len):
    def gru_cell(xt, h, w_ih, w_hh, b_ih, b_hh):
        gx = xt @ w_ih.T + b_ih
        gh = h @ w_hh.T + b_hh
        xr, xz, xn = jnp.split(gx, 3, axis=1)
        hr, hz, hn = jnp.split(gh, 3, axis=1)
        r = jax.nn.sigmoid(xr + hr)
        z = jax.nn.sigmoid(xz + hz)
        n = jnp.tanh(xn + r * hn)
        return (1.0 - z) * n + z * h

    h1, h2 = h_1, h_2
    outs = []
    for t in range(sequence_len):
        xt = x[:, t:t + time_steps]
        h1 = gru_cell(xt, h1, params["w_ih1"], params["w_hh1"],
                      params["b_ih1"], params["b_hh1"])
        h2 = gru_cell(h1, h2, params["w_ih2"], params["w_hh2"],
                      params["b_ih2"], params["b_hh2"])
        y = h2 @ params["w_fc"].T + params["b_fc"]
        outs.append(y[:, 0])
    return jnp.stack(outs, axis=1), h1, h2


# ---------------------------------------------------------------------------
if __name__ == "__main__":
    # Small shapes consistent with the module (defaults: B=64, T=96, S=24, H=16).
    B, T, S, H = 8, 32, 8, 16

    key = jax.random.PRNGKey(0)
    k_params, k_x = jax.random.split(key)
    params = init_params(k_params, time_steps=T, hidden_dim=H)

    x = jax.random.normal(k_x, (B, T + S - 1), dtype=jnp.float32)
    h_1 = jnp.zeros((B, H), jnp.float32)   # init_hidden()
    h_2 = jnp.zeros((B, H), jnp.float32)

    fwd = jax.jit(lambda xx, hh1, hh2, pp: shallow_regression_gru(
        xx, hh1, hh2, pp, time_steps=T, sequence_len=S, hidden_dim=H))
    out, h1n, h2n = fwd(x, h_1, h_2, params)
    jax.block_until_ready((out, h1n, h2n))

    ref_out, rh1, rh2 = reference_forward(
        x, h_1, h_2, params, time_steps=T, sequence_len=S)

    # Tolerance relaxed because matmul operands are bf16 (f32 accumulation);
    # the recurrence compounds the ~3e-3 per-step rounding over S steps.
    np.testing.assert_allclose(np.asarray(out), np.asarray(ref_out),
                               atol=5e-2, rtol=5e-2)
    np.testing.assert_allclose(np.asarray(h1n), np.asarray(rh1),
                               atol=5e-2, rtol=5e-2)
    np.testing.assert_allclose(np.asarray(h2n), np.asarray(rh2),
                               atol=5e-2, rtol=5e-2)

    print("KERNEL_OK")
</pallas_src>

<mosaic_0001>
module attributes {stable_mosaic.version = 11 : i64} {
  func.func @_shallow_gru_kernel(%arg0: memref<8x256xbf16, #tpu.memory_space<vmem>>, %arg1: memref<1x128xf32, #tpu.memory_space<vmem>>, %arg2: memref<1x128xf32, #tpu.memory_space<vmem>>, %arg3: memref<256x384xbf16, #tpu.memory_space<vmem>>, %arg4: memref<128x384xbf16, #tpu.memory_space<vmem>>, %arg5: memref<128x384xbf16, #tpu.memory_space<vmem>>, %arg6: memref<128x384xbf16, #tpu.memory_space<vmem>>, %arg7: memref<1x384xf32, #tpu.memory_space<vmem>>, %arg8: memref<1x128xf32, #tpu.memory_space<vmem>>, %arg9: memref<1x384xf32, #tpu.memory_space<vmem>>, %arg10: memref<1x128xf32, #tpu.memory_space<vmem>>, %arg11: memref<8x128xf32, #tpu.memory_space<vmem>>, %arg12: memref<1x1xf32, #tpu.memory_space<vmem>>, %arg13: memref<8x8xf32, #tpu.memory_space<vmem>>, %arg14: memref<1x128xf32, #tpu.memory_space<vmem>>, %arg15: memref<1x128xf32, #tpu.memory_space<vmem>>, %arg16: memref<8x384xf32, #tpu.memory_space<vmem>>, %arg17: memref<8x128xf32, #tpu.memory_space<vmem>>) attributes {dimension_semantics = [], scalar_prefetch = 0 : i64, scratch_operands = 2 : i64, tpu.core_type = #tpu.core_type<tc>} {
    %c0 = arith.constant 0 : index
    %c0_0 = arith.constant 0 : index
    %0 = vector.load %arg0[%c0, %c0_0] : memref<8x256xbf16, #tpu.memory_space<vmem>>, vector<8x256xbf16>
    %c0_1 = arith.constant 0 : index
    %c0_2 = arith.constant 0 : index
    %1 = vector.load %arg3[%c0_1, %c0_2] : memref<256x384xbf16, #tpu.memory_space<vmem>>, vector<256x384xbf16>
    %cst = arith.constant dense<0.000000e+00> : vector<8x384xf32>
    %2 = tpu.matmul %0, %1, %cst {dimension_numbers = #tpu.dot_dimension_numbers<[1], [0], [0], [1], [0, 0, 1, 1], [], []>} : vector<8x256xbf16>, vector<256x384xbf16>, vector<8x384xf32> -> vector<8x384xf32>
    %c0_3 = arith.constant 0 : index
    %c0_4 = arith.constant 0 : index
    %3 = vector.load %arg7[%c0_3, %c0_4] : memref<1x384xf32, #tpu.memory_space<vmem>>, vector<1x384xf32>
    %4 = vector.broadcast %3 : vector<1x384xf32> to vector<8x384xf32>
    %5 = arith.addf %2, %4 : vector<8x384xf32>
    %c0_5 = arith.constant 0 : index
    %c0_6 = arith.constant 0 : index
    %6 = vector.load %arg16[%c0_5, %c0_6] : memref<8x384xf32, #tpu.memory_space<vmem>>, vector<8x384xf32>
    tpu.vector_store %arg16[%c0_5, %c0_6], %5 {strides = array<i32>} : memref<8x384xf32, #tpu.memory_space<vmem>>, vector<8x384xf32>,
    %c0_7 = arith.constant 0 : index
    %c0_8 = arith.constant 0 : index
    %7 = vector.load %arg8[%c0_7, %c0_8] : memref<1x128xf32, #tpu.memory_space<vmem>>, vector<1x128xf32>
    %c0_9 = arith.constant 0 : index
    %c0_10 = arith.constant 0 : index
    %8 = vector.load %arg9[%c0_9, %c0_10] : memref<1x384xf32, #tpu.memory_space<vmem>>, vector<1x384xf32>
    %c0_11 = arith.constant 0 : index
    %c0_12 = arith.constant 0 : index
    %9 = vector.load %arg10[%c0_11, %c0_12] : memref<1x128xf32, #tpu.memory_space<vmem>>, vector<1x128xf32>
    %c0_13 = arith.constant 0 : index
    %c0_14 = arith.constant 0 : index
    %10 = vector.load %arg1[%c0_13, %c0_14] : memref<1x128xf32, #tpu.memory_space<vmem>>, vector<1x128xf32>
    %c0_15 = arith.constant 0 : index
    %c0_16 = arith.constant 0 : index
    %11 = vector.load %arg2[%c0_15, %c0_16] : memref<1x128xf32, #tpu.memory_space<vmem>>, vector<1x128xf32>
    %12 = arith.truncf %10 : vector<1x128xf32> to vector<1x128xbf16>
    %c0_17 = arith.constant 0 : index
    %c0_18 = arith.constant 0 : index
    %13 = vector.load %arg4[%c0_17, %c0_18] : memref<128x384xbf16, #tpu.memory_space<vmem>>, vector<128x384xbf16>
    %cst_19 = arith.constant dense<0.000000e+00> : vector<1x384xf32>
    %14 = tpu.matmul %12, %13, %cst_19 {dimension_numbers = #tpu.dot_dimension_numbers<[1], [0], [0], [1], [0, 0, 1, 1], [], []>} : vector<1x128xbf16>, vector<128x384xbf16>, vector<1x384xf32> -> vector<1x384xf32>
    %c0_20 = arith.constant 0 : index
    %c0_21 = arith.constant 0 : index
    %15 = vector.load %arg16[%c0_20, %c0_21] : memref<8x384xf32, #tpu.memory_space<vmem>>, vector<1x384xf32>
    %16 = vector.extract_strided_slice %15 {offsets = [0, 0], sizes = [1, 256], strides = [1, 1]} : vector<1x384xf32> to vector<1x256xf32>
    %17 = vector.extract_strided_slice %14 {offsets = [0, 0], sizes = [1, 256], strides = [1, 1]} : vector<1x384xf32> to vector<1x256xf32>
    %18 = arith.addf %16, %17 : vector<1x256xf32>
    %19 = arith.negf %18 : vector<1x256xf32>
    %20 = math.exp %19 : vector<1x256xf32>
    %cst_22 = arith.constant 1.000000e+00 : f32
    %21 = vector.broadcast %cst_22 : f32 to vector<1x256xf32>
    %22 = arith.addf %21, %20 : vector<1x256xf32>
    %23 = arith.divf %21, %22 : vector<1x256xf32>
    %24 = vector.extract_strided_slice %23 {offsets = [0, 0], sizes = [1, 128], strides = [1, 1]} : vector<1x256xf32> to vector<1x128xf32>
    %25 = vector.extract_strided_slice %23 {offsets = [0, 128], sizes = [1, 128], strides = [1, 1]} : vector<1x256xf32> to vector<1x128xf32>
    %26 = vector.extract_strided_slice %15 {offsets = [0, 256], sizes = [1, 128], strides = [1, 1]} : vector<1x384xf32> to vector<1x128xf32>
    %27 = vector.extract_strided_slice %14 {offsets = [0, 256], sizes = [1, 128], strides = [1, 1]} : vector<1x384xf32> to vector<1x128xf32>
    %28 = arith.addf %27, %7 : vector<1x128xf32>
    %29 = arith.mulf %24, %28 : vector<1x128xf32>
    %30 = arith.addf %26, %29 : vector<1x128xf32>
    %31 = math.tanh %30 : vector<1x128xf32>
    %32 = arith.subf %10, %31 : vector<1x128xf32>
    %33 = arith.mulf %25, %32 : vector<1x128xf32>
    %34 = arith.addf %31, %33 : vector<1x128xf32>
    %35 = arith.truncf %34 : vector<1x128xf32> to vector<1x128xbf16>
    %c0_23 = arith.constant 0 : index
    %c0_24 = arith.constant 0 : index
    %36 = vector.load %arg5[%c0_23, %c0_24] : memref<128x384xbf16, #tpu.memory_space<vmem>>, vector<128x384xbf16>
    %cst_25 = arith.constant dense<0.000000e+00> : vector<1x384xf32>
    %37 = tpu.matmul %35, %36, %cst_25 {dimension_numbers = #tpu.dot_dimension_numbers<[1], [0], [0], [1], [0, 0, 1, 1], [], []>} : vector<1x128xbf16>, vector<128x384xbf16>, vector<1x384xf32> -> vector<1x384xf32>
    %38 = arith.addf %37, %8 : vector<1x384xf32>
    %39 = arith.truncf %11 : vector<1x128xf32> to vector<1x128xbf16>
    %c0_26 = arith.constant 0 : index
    %c0_27 = arith.constant 0 : index
    %40 = vector.load %arg6[%c0_26, %c0_27] : memref<128x384xbf16, #tpu.memory_space<vmem>>, vector<128x384xbf16>
    %cst_28 = arith.constant dense<0.000000e+00> : vector<1x384xf32>
    %41 = tpu.matmul %39, %40, %cst_28 {dimension_numbers = #tpu.dot_dimension_numbers<[1], [0], [0], [1], [0, 0, 1, 1], [], []>} : vector<1x128xbf16>, vector<128x384xbf16>, vector<1x384xf32> -> vector<1x384xf32>
    %42 = vector.extract_strided_slice %38 {offsets = [0, 0], sizes = [1, 256], strides = [1, 1]} : vector<1x384xf32> to vector<1x256xf32>
    %43 = vector.extract_strided_slice %41 {offsets = [0, 0], sizes = [1, 256], strides = [1, 1]} : vector<1x384xf32> to vector<1x256xf32>
    %44 = arith.addf %42, %43 : vector<1x256xf32>
    %45 = arith.negf %44 : vector<1x256xf32>
    %46 = math.exp %45 : vector<1x256xf32>
    %cst_29 = arith.constant 1.000000e+00 : f32
    %47 = vector.broadcast %cst_29 : f32 to vector<1x256xf32>
    %48 = arith.addf %47, %46 : vector<1x256xf32>
    %49 = arith.divf %47, %48 : vector<1x256xf32>
    %50 = vector.extract_strided_slice %49 {offsets = [0, 0], sizes = [1, 128], strides = [1, 1]} : vector<1x256xf32> to vector<1x128xf32>
    %51 = vector.extract_strided_slice %49 {offsets = [0, 128], sizes = [1, 128], strides = [1, 1]} : vector<1x256xf32> to vector<1x128xf32>
    %52 = vector.extract_strided_slice %38 {offsets = [0, 256], sizes = [1, 128], strides = [1, 1]} : vector<1x384xf32> to vector<1x128xf32>
    %53 = vector.extract_strided_slice %41 {offsets = [0, 256], sizes = [1, 128], strides = [1, 1]} : vector<1x384xf32> to vector<1x128xf32>
    %54 = arith.addf %53, %9 : vector<1x128xf32>
    %55 = arith.mulf %50, %54 : vector<1x128xf32>
    %56 = arith.addf %52, %55 : vector<1x128xf32>
    %57 = math.tanh %56 : vector<1x128xf32>
    %58 = arith.subf %11, %57 : vector<1x128xf32>
    %59 = arith.mulf %51, %58 : vector<1x128xf32>
    %60 = arith.addf %57, %59 : vector<1x128xf32>
    %c0_30 = arith.constant 0 : index
    %c0_31 = arith.constant 0 : index
    %61 = vector.load %arg17[%c0_30, %c0_31] : memref<8x128xf32, #tpu.memory_space<vmem>>, vector<1x128xf32>
    tpu.vector_store %arg17[%c0_30, %c0_31], %60 {strides = array<i32>} : memref<8x128xf32, #tpu.memory_space<vmem>>, vector<1x128xf32>,
    %c0_32 = arith.constant 0 : index
    %c0_33 = arith.constant 0 : index
    %62 = vector.load %arg4[%c0_32, %c0_33] : memref<128x384xbf16, #tpu.memory_space<vmem>>, vector<128x384xbf16>
    %cst_34 = arith.constant dense<0.000000e+00> : vector<1x384xf32>
    %63 = tpu.matmul %35, %62, %cst_34 {dimension_numbers = #tpu.dot_dimension_numbers<[1], [0], [0], [1], [0, 0, 1, 1], [], []>} : vector<1x128xbf16>, vector<128x384xbf16>, vector<1x384xf32> -> vector<1x384xf32>
    %c1 = arith.constant 1 : index
    %c0_35 = arith.constant 0 : index
    %64 = vector.load %arg16[%c1, %c0_35] : memref<8x384xf32, #tpu.memory_space<vmem>>, vector<1x384xf32>
    %65 = vector.extract_strided_slice %64 {offsets = [0, 0], sizes = [1, 256], strides = [1, 1]} : vector<1x384xf32> to vector<1x256xf32>
    %66 = vector.extract_strided_slice %63 {offsets = [0, 0], sizes = [1, 256], strides = [1, 1]} : vector<1x384xf32> to vector<1x256xf32>
    %67 = arith.addf %65, %66 : vector<1x256xf32>
    %68 = arith.negf %67 : vector<1x256xf32>
    %69 = math.exp %68 : vector<1x256xf32>
    %cst_36 = arith.constant 1.000000e+00 : f32
    %70 = vector.broadcast %cst_36 : f32 to vector<1x256xf32>
    %71 = arith.addf %70, %69 : vector<1x256xf32>
    %72 = arith.divf %70, %71 : vector<1x256xf32>
    %73 = vector.extract_strided_slice %72 {offsets = [0, 0], sizes = [1, 128], strides = [1, 1]} : vector<1x256xf32> to vector<1x128xf32>
    %74 = vector.extract_strided_slice %72 {offsets = [0, 128], sizes = [1, 128], strides = [1, 1]} : vector<1x256xf32> to vector<1x128xf32>
    %75 = vector.extract_strided_slice %64 {offsets = [0, 256], sizes = [1, 128], strides = [1, 1]} : vector<1x384xf32> to vector<1x128xf32>
    %76 = vector.extract_strided_slice %63 {offsets = [0, 256], sizes = [1, 128], strides = [1, 1]} : vector<1x384xf32> to vector<1x128xf32>
    %77 = arith.addf %76, %7 : vector<1x128xf32>
    %78 = arith.mulf %73, %77 : vector<1x128xf32>
    %79 = arith.addf %75, %78 : vector<1x128xf32>
    %80 = math.tanh %79 : vector<1x128xf32>
    %81 = arith.subf %34, %80 : vector<1x128xf32>
    %82 = arith.mulf %74, %81 : vector<1x128xf32>
    %83 = arith.addf %80, %82 : vector<1x128xf32>
    %84 = arith.truncf %83 : vector<1x128xf32> to vector<1x128xbf16>
    %c0_37 = arith.constant 0 : index
    %c0_38 = arith.constant 0 : index
    %85 = vector.load %arg5[%c0_37, %c0_38] : memref<128x384xbf16, #tpu.memory_space<vmem>>, vector<128x384xbf16>
    %cst_39 = arith.constant dense<0.000000e+00> : vector<1x384xf32>
    %86 = tpu.matmul %84, %85, %cst_39 {dimension_numbers = #tpu.dot_dimension_numbers<[1], [0], [0], [1], [0, 0, 1, 1], [], []>} : vector<1x128xbf16>, vector<128x384xbf16>, vector<1x384xf32> -> vector<1x384xf32>
    %87 = arith.addf %86, %8 : vector<1x384xf32>
    %88 = arith.truncf %60 : vector<1x128xf32> to vector<1x128xbf16>
    %c0_40 = arith.constant 0 : index
    %c0_41 = arith.constant 0 : index
    %89 = vector.load %arg6[%c0_40, %c0_41] : memref<128x384xbf16, #tpu.memory_space<vmem>>, vector<128x384xbf16>
    %cst_42 = arith.constant dense<0.000000e+00> : vector<1x384xf32>
    %90 = tpu.matmul %88, %89, %cst_42 {dimension_numbers = #tpu.dot_dimension_numbers<[1], [0], [0], [1], [0, 0, 1, 1], [], []>} : vector<1x128xbf16>, vector<128x384xbf16>, vector<1x384xf32> -> vector<1x384xf32>
    %91 = vector.extract_strided_slice %87 {offsets = [0, 0], sizes = [1, 256], strides = [1, 1]} : vector<1x384xf32> to vector<1x256xf32>
    %92 = vector.extract_strided_slice %90 {offsets = [0, 0], sizes = [1, 256], strides = [1, 1]} : vector<1x384xf32> to vector<1x256xf32>
    %93 = arith.addf %91, %92 : vector<1x256xf32>
    %94 = arith.negf %93 : vector<1x256xf32>
    %95 = math.exp %94 : vector<1x256xf32>
    %cst_43 = arith.constant 1.000000e+00 : f32
    %96 = vector.broadcast %cst_43 : f32 to vector<1x256xf32>
    %97 = arith.addf %96, %95 : vector<1x256xf32>
    %98 = arith.divf %96, %97 : vector<1x256xf32>
    %99 = vector.extract_strided_slice %98 {offsets = [0, 0], sizes = [1, 128], strides = [1, 1]} : vector<1x256xf32> to vector<1x128xf32>
    %100 = vector.extract_strided_slice %98 {offsets = [0, 128], sizes = [1, 128], strides = [1, 1]} : vector<1x256xf32> to vector<1x128xf32>
    %101 = vector.extract_strided_slice %87 {offsets = [0, 256], sizes = [1, 128], strides = [1, 1]} : vector<1x384xf32> to vector<1x128xf32>
    %102 = vector.extract_strided_slice %90 {offsets = [0, 256], sizes = [1, 128], strides = [1, 1]} : vector<1x384xf32> to vector<1x128xf32>
    %103 = arith.addf %102, %9 : vector<1x128xf32>
    %104 = arith.mulf %99, %103 : vector<1x128xf32>
    %105 = arith.addf %101, %104 : vector<1x128xf32>
    %106 = math.tanh %105 : vector<1x128xf32>
    %107 = arith.subf %60, %106 : vector<1x128xf32>
    %108 = arith.mulf %100, %107 : vector<1x128xf32>
    %109 = arith.addf %106, %108 : vector<1x128xf32>
    %c1_44 = arith.constant 1 : index
    %c0_45 = arith.constant 0 : index
    %110 = vector.load %arg17[%c1_44, %c0_45] : memref<8x128xf32, #tpu.memory_space<vmem>>, vector<1x128xf32>
    tpu.vector_store %arg17[%c1_44, %c0_45], %109 {strides = array<i32>} : memref<8x128xf32, #tpu.memory_space<vmem>>, vector<1x128xf32>,
    %c0_46 = arith.constant 0 : index
    %c0_47 = arith.constant 0 : index
    %111 = vector.load %arg4[%c0_46, %c0_47] : memref<128x384xbf16, #tpu.memory_space<vmem>>, vector<128x384xbf16>
    %cst_48 = arith.constant dense<0.000000e+00> : vector<1x384xf32>
    %112 = tpu.matmul %84, %111, %cst_48 {dimension_numbers = #tpu.dot_dimension_numbers<[1], [0], [0], [1], [0, 0, 1, 1], [], []>} : vector<1x128xbf16>, vector<128x384xbf16>, vector<1x384xf32> -> vector<1x384xf32>
    %c2 = arith.constant 2 : index
    %c0_49 = arith.constant 0 : index
    %113 = vector.load %arg16[%c2, %c0_49] : memref<8x384xf32, #tpu.memory_space<vmem>>, vector<1x384xf32>
    %114 = vector.extract_strided_slice %113 {offsets = [0, 0], sizes = [1, 256], strides = [1, 1]} : vector<1x384xf32> to vector<1x256xf32>
    %115 = vector.extract_strided_slice %112 {offsets = [0, 0], sizes = [1, 256], strides = [1, 1]} : vector<1x384xf32> to vector<1x256xf32>
    %116 = arith.addf %114, %115 : vector<1x256xf32>
    %117 = arith.negf %116 : vector<1x256xf32>
    %118 = math.exp %117 : vector<1x256xf32>
    %cst_50 = arith.constant 1.000000e+00 : f32
    %119 = vector.broadcast %cst_50 : f32 to vector<1x256xf32>
    %120 = arith.addf %119, %118 : vector<1x256xf32>
    %121 = arith.divf %119, %120 : vector<1x256xf32>
    %122 = vector.extract_strided_slice %121 {offsets = [0, 0], sizes = [1, 128], strides = [1, 1]} : vector<1x256xf32> to vector<1x128xf32>
    %123 = vector.extract_strided_slice %121 {offsets = [0, 128], sizes = [1, 128], strides = [1, 1]} : vector<1x256xf32> to vector<1x128xf32>
    %124 = vector.extract_strided_slice %113 {offsets = [0, 256], sizes = [1, 128], strides = [1, 1]} : vector<1x384xf32> to vector<1x128xf32>
    %125 = vector.extract_strided_slice %112 {offsets = [0, 256], sizes = [1, 128], strides = [1, 1]} : vector<1x384xf32> to vector<1x128xf32>
    %126 = arith.addf %125, %7 : vector<1x128xf32>
    %127 = arith.mulf %122, %126 : vector<1x128xf32>
    %128 = arith.addf %124, %127 : vector<1x128xf32>
    %129 = math.tanh %128 : vector<1x128xf32>
    %130 = arith.subf %83, %129 : vector<1x128xf32>
    %131 = arith.mulf %123, %130 : vector<1x128xf32>
    %132 = arith.addf %129, %131 : vector<1x128xf32>
    %133 = arith.truncf %132 : vector<1x128xf32> to vector<1x128xbf16>
    %c0_51 = arith.constant 0 : index
    %c0_52 = arith.constant 0 : index
    %134 = vector.load %arg5[%c0_51, %c0_52] : memref<128x384xbf16, #tpu.memory_space<vmem>>, vector<128x384xbf16>
    %cst_53 = arith.constant dense<0.000000e+00> : vector<1x384xf32>
    %135 = tpu.matmul %133, %134, %cst_53 {dimension_numbers = #tpu.dot_dimension_numbers<[1], [0], [0], [1], [0, 0, 1, 1], [], []>} : vector<1x128xbf16>, vector<128x384xbf16>, vector<1x384xf32> -> vector<1x384xf32>
    %136 = arith.addf %135, %8 : vector<1x384xf32>
    %137 = arith.truncf %109 : vector<1x128xf32> to vector<1x128xbf16>
    %c0_54 = arith.constant 0 : index
    %c0_55 = arith.constant 0 : index
    %138 = vector.load %arg6[%c0_54, %c0_55] : memref<128x384xbf16, #tpu.memory_space<vmem>>, vector<128x384xbf16>
    %cst_56 = arith.constant dense<0.000000e+00> : vector<1x384xf32>
    %139 = tpu.matmul %137, %138, %cst_56 {dimension_numbers = #tpu.dot_dimension_numbers<[1], [0], [0], [1], [0, 0, 1, 1], [], []>} : vector<1x128xbf16>, vector<128x384xbf16>, vector<1x384xf32> -> vector<1x384xf32>
    %140 = vector.extract_strided_slice %136 {offsets = [0, 0], sizes = [1, 256], strides = [1, 1]} : vector<1x384xf32> to vector<1x256xf32>
    %141 = vector.extract_strided_slice %139 {offsets = [0, 0], sizes = [1, 256], strides = [1, 1]} : vector<1x384xf32> to vector<1x256xf32>
    %142 = arith.addf %140, %141 : vector<1x256xf32>
    %143 = arith.negf %142 : vector<1x256xf32>
    %144 = math.exp %143 : vector<1x256xf32>
    %cst_57 = arith.constant 1.000000e+00 : f32
    %145 = vector.broadcast %cst_57 : f32 to vector<1x256xf32>
    %146 = arith.addf %145, %144 : vector<1x256xf32>
    %147 = arith.divf %145, %146 : vector<1x256xf32>
    %148 = vector.extract_strided_slice %147 {offsets = [0, 0], sizes = [1, 128], strides = [1, 1]} : vector<1x256xf32> to vector<1x128xf32>
    %149 = vector.extract_strided_slice %147 {offsets = [0, 128], sizes = [1, 128], strides = [1, 1]} : vector<1x256xf32> to vector<1x128xf32>
    %150 = vector.extract_strided_slice %136 {offsets = [0, 256], sizes = [1, 128], strides = [1, 1]} : vector<1x384xf32> to vector<1x128xf32>
    %151 = vector.extract_strided_slice %139 {offsets = [0, 256], sizes = [1, 128], strides = [1, 1]} : vector<1x384xf32> to vector<1x128xf32>
    %152 = arith.addf %151, %9 : vector<1x128xf32>
    %153 = arith.mulf %148, %152 : vector<1x128xf32>
    %154 = arith.addf %150, %153 : vector<1x128xf32>
    %155 = math.tanh %154 : vector<1x128xf32>
    %156 = arith.subf %109, %155 : vector<1x128xf32>
    %157 = arith.mulf %149, %156 : vector<1x128xf32>
    %158 = arith.addf %155, %157 : vector<1x128xf32>
    %c2_58 = arith.constant 2 : index
    %c0_59 = arith.constant 0 : index
    %159 = vector.load %arg17[%c2_58, %c0_59] : memref<8x128xf32, #tpu.memory_space<vmem>>, vector<1x128xf32>
    tpu.vector_store %arg17[%c2_58, %c0_59], %158 {strides = array<i32>} : memref<8x128xf32, #tpu.memory_space<vmem>>, vector<1x128xf32>,
    %c0_60 = arith.constant 0 : index
    %c0_61 = arith.constant 0 : index
    %160 = vector.load %arg4[%c0_60, %c0_61] : memref<128x384xbf16, #tpu.memory_space<vmem>>, vector<128x384xbf16>
    %cst_62 = arith.constant dense<0.000000e+00> : vector<1x384xf32>
    %161 = tpu.matmul %133, %160, %cst_62 {dimension_numbers = #tpu.dot_dimension_numbers<[1], [0], [0], [1], [0, 0, 1, 1], [], []>} : vector<1x128xbf16>, vector<128x384xbf16>, vector<1x384xf32> -> vector<1x384xf32>
    %c3 = arith.constant 3 : index
    %c0_63 = arith.constant 0 : index
    %162 = vector.load %arg16[%c3, %c0_63] : memref<8x384xf32, #tpu.memory_space<vmem>>, vector<1x384xf32>
    %163 = vector.extract_strided_slice %162 {offsets = [0, 0], sizes = [1, 256], strides = [1, 1]} : vector<1x384xf32> to vector<1x256xf32>
    %164 = vector.extract_strided_slice %161 {offsets = [0, 0], sizes = [1, 256], strides = [1, 1]} : vector<1x384xf32> to vector<1x256xf32>
    %165 = arith.addf %163, %164 : vector<1x256xf32>
    %166 = arith.negf %165 : vector<1x256xf32>
    %167 = math.exp %166 : vector<1x256xf32>
    %cst_64 = arith.constant 1.000000e+00 : f32
    %168 = vector.broadcast %cst_64 : f32 to vector<1x256xf32>
    %169 = arith.addf %168, %167 : vector<1x256xf32>
    %170 = arith.divf %168, %169 : vector<1x256xf32>
    %171 = vector.extract_strided_slice %170 {offsets = [0, 0], sizes = [1, 128], strides = [1, 1]} : vector<1x256xf32> to vector<1x128xf32>
    %172 = vector.extract_strided_slice %170 {offsets = [0, 128], sizes = [1, 128], strides = [1, 1]} : vector<1x256xf32> to vector<1x128xf32>
    %173 = vector.extract_strided_slice %162 {offsets = [0, 256], sizes = [1, 128], strides = [1, 1]} : vector<1x384xf32> to vector<1x128xf32>
    %174 = vector.extract_strided_slice %161 {offsets = [0, 256], sizes = [1, 128], strides = [1, 1]} : vector<1x384xf32> to vector<1x128xf32>
    %175 = arith.addf %174, %7 : vector<1x128xf32>
    %176 = arith.mulf %171, %175 : vector<1x128xf32>
    %177 = arith.addf %173, %176 : vector<1x128xf32>
    %178 = math.tanh %177 : vector<1x128xf32>
    %179 = arith.subf %132, %178 : vector<1x128xf32>
    %180 = arith.mulf %172, %179 : vector<1x128xf32>
    %181 = arith.addf %178, %180 : vector<1x128xf32>
    %182 = arith.truncf %181 : vector<1x128xf32> to vector<1x128xbf16>
    %c0_65 = arith.constant 0 : index
    %c0_66 = arith.constant 0 : index
    %183 = vector.load %arg5[%c0_65, %c0_66] : memref<128x384xbf16, #tpu.memory_space<vmem>>, vector<128x384xbf16>
    %cst_67 = arith.constant dense<0.000000e+00> : vector<1x384xf32>
    %184 = tpu.matmul %182, %183, %cst_67 {dimension_numbers = #tpu.dot_dimension_numbers<[1], [0], [0], [1], [0, 0, 1, 1], [], []>} : vector<1x128xbf16>, vector<128x384xbf16>, vector<1x384xf32> -> vector<1x384xf32>
    %185 = arith.addf %184, %8 : vector<1x384xf32>
    %186 = arith.truncf %158 : vector<1x128xf32> to vector<1x128xbf16>
    %c0_68 = arith.constant 0 : index
    %c0_69 = arith.constant 0 : index
    %187 = vector.load %arg6[%c0_68, %c0_69] : memref<128x384xbf16, #tpu.memory_space<vmem>>, vector<128x384xbf16>
    %cst_70 = arith.constant dense<0.000000e+00> : vector<1x384xf32>
    %188 = tpu.matmul %186, %187, %cst_70 {dimension_numbers = #tpu.dot_dimension_numbers<[1], [0], [0], [1], [0, 0, 1, 1], [], []>} : vector<1x128xbf16>, vector<128x384xbf16>, vector<1x384xf32> -> vector<1x384xf32>
    %189 = vector.extract_strided_slice %185 {offsets = [0, 0], sizes = [1, 256], strides = [1, 1]} : vector<1x384xf32> to vector<1x256xf32>
    %190 = vector.extract_strided_slice %188 {offsets = [0, 0], sizes = [1, 256], strides = [1, 1]} : vector<1x384xf32> to vector<1x256xf32>
    %191 = arith.addf %189, %190 : vector<1x256xf32>
    %192 = arith.negf %191 : vector<1x256xf32>
    %193 = math.exp %192 : vector<1x256xf32>
    %cst_71 = arith.constant 1.000000e+00 : f32
    %194 = vector.broadcast %cst_71 : f32 to vector<1x256xf32>
    %195 = arith.addf %194, %193 : vector<1x256xf32>
    %196 = arith.divf %194, %195 : vector<1x256xf32>
    %197 = vector.extract_strided_slice %196 {offsets = [0, 0], sizes = [1, 128], strides = [1, 1]} : vector<1x256xf32> to vector<1x128xf32>
    %198 = vector.extract_strided_slice %196 {offsets = [0, 128], sizes = [1, 128], strides = [1, 1]} : vector<1x256xf32> to vector<1x128xf32>
    %199 = vector.extract_strided_slice %185 {offsets = [0, 256], sizes = [1, 128], strides = [1, 1]} : vector<1x384xf32> to vector<1x128xf32>
    %200 = vector.extract_strided_slice %188 {offsets = [0, 256], sizes = [1, 128], strides = [1, 1]} : vector<1x384xf32> to vector<1x128xf32>
    %201 = arith.addf %200, %9 : vector<1x128xf32>
    %202 = arith.mulf %197, %201 : vector<1x128xf32>
    %203 = arith.addf %199, %202 : vector<1x128xf32>
    %204 = math.tanh %203 : vector<1x128xf32>
    %205 = arith.subf %158, %204 : vector<1x128xf32>
    %206 = arith.mulf %198, %205 : vector<1x128xf32>
    %207 = arith.addf %204, %206 : vector<1x128xf32>
    %c3_72 = arith.constant 3 : index
    %c0_73 = arith.constant 0 : index
    %208 = vector.load %arg17[%c3_72, %c0_73] : memref<8x128xf32, #tpu.memory_space<vmem>>, vector<1x128xf32>
    tpu.vector_store %arg17[%c3_72, %c0_73], %207 {strides = array<i32>} : memref<8x128xf32, #tpu.memory_space<vmem>>, vector<1x128xf32>,
    %c0_74 = arith.constant 0 : index
    %c0_75 = arith.constant 0 : index
    %209 = vector.load %arg4[%c0_74, %c0_75] : memref<128x384xbf16, #tpu.memory_space<vmem>>, vector<128x384xbf16>
    %cst_76 = arith.constant dense<0.000000e+00> : vector<1x384xf32>
    %210 = tpu.matmul %182, %209, %cst_76 {dimension_numbers = #tpu.dot_dimension_numbers<[1], [0], [0], [1], [0, 0, 1, 1], [], []>} : vector<1x128xbf16>, vector<128x384xbf16>, vector<1x384xf32> -> vector<1x384xf32>
    %c4 = arith.constant 4 : index
    %c0_77 = arith.constant 0 : index
    %211 = vector.load %arg16[%c4, %c0_77] : memref<8x384xf32, #tpu.memory_space<vmem>>, vector<1x384xf32>
    %212 = vector.extract_strided_slice %211 {offsets = [0, 0], sizes = [1, 256], strides = [1, 1]} : vector<1x384xf32> to vector<1x256xf32>
    %213 = vector.extract_strided_slice %210 {offsets = [0, 0], sizes = [1, 256], strides = [1, 1]} : vector<1x384xf32> to vector<1x256xf32>
    %214 = arith.addf %212, %213 : vector<1x256xf32>
    %215 = arith.negf %214 : vector<1x256xf32>
    %216 = math.exp %215 : vector<1x256xf32>
    %cst_78 = arith.constant 1.000000e+00 : f32
    %217 = vector.broadcast %cst_78 : f32 to vector<1x256xf32>
    %218 = arith.addf %217, %216 : vector<1x256xf32>
    %219 = arith.divf %217, %218 : vector<1x256xf32>
    %220 = vector.extract_strided_slice %219 {offsets = [0, 0], sizes = [1, 128], strides = [1, 1]} : vector<1x256xf32> to vector<1x128xf32>
    %221 = vector.extract_strided_slice %219 {offsets = [0, 128], sizes = [1, 128], strides = [1, 1]} : vector<1x256xf32> to vector<1x128xf32>
    %222 = vector.extract_strided_slice %211 {offsets = [0, 256], sizes = [1, 128], strides = [1, 1]} : vector<1x384xf32> to vector<1x128xf32>
    %223 = vector.extract_strided_slice %210 {offsets = [0, 256], sizes = [1, 128], strides = [1, 1]} : vector<1x384xf32> to vector<1x128xf32>
    %224 = arith.addf %223, %7 : vector<1x128xf32>
    %225 = arith.mulf %220, %224 : vector<1x128xf32>
    %226 = arith.addf %222, %225 : vector<1x128xf32>
    %227 = math.tanh %226 : vector<1x128xf32>
    %228 = arith.subf %181, %227 : vector<1x128xf32>
    %229 = arith.mulf %221, %228 : vector<1x128xf32>
    %230 = arith.addf %227, %229 : vector<1x128xf32>
    %231 = arith.truncf %230 : vector<1x128xf32> to vector<1x128xbf16>
    %c0_79 = arith.constant 0 : index
    %c0_80 = arith.constant 0 : index
    %232 = vector.load %arg5[%c0_79, %c0_80] : memref<128x384xbf16, #tpu.memory_space<vmem>>, vector<128x384xbf16>
    %cst_81 = arith.constant dense<0.000000e+00> : vector<1x384xf32>
    %233 = tpu.matmul %231, %232, %cst_81 {dimension_numbers = #tpu.dot_dimension_numbers<[1], [0], [0], [1], [0, 0, 1, 1], [], []>} : vector<1x128xbf16>, vector<128x384xbf16>, vector<1x384xf32> -> vector<1x384xf32>
    %234 = arith.addf %233, %8 : vector<1x384xf32>
    %235 = arith.truncf %207 : vector<1x128xf32> to vector<1x128xbf16>
    %c0_82 = arith.constant 0 : index
    %c0_83 = arith.constant 0 : index
    %236 = vector.load %arg6[%c0_82, %c0_83] : memref<128x384xbf16, #tpu.memory_space<vmem>>, vector<128x384xbf16>
    %cst_84 = arith.constant dense<0.000000e+00> : vector<1x384xf32>
    %237 = tpu.matmul %235, %236, %cst_84 {dimension_numbers = #tpu.dot_dimension_numbers<[1], [0], [0], [1], [0, 0, 1, 1], [], []>} : vector<1x128xbf16>, vector<128x384xbf16>, vector<1x384xf32> -> vector<1x384xf32>
    %238 = vector.extract_strided_slice %234 {offsets = [0, 0], sizes = [1, 256], strides = [1, 1]} : vector<1x384xf32> to vector<1x256xf32>
    %239 = vector.extract_strided_slice %237 {offsets = [0, 0], sizes = [1, 256], strides = [1, 1]} : vector<1x384xf32> to vector<1x256xf32>
    %240 = arith.addf %238, %239 : vector<1x256xf32>
    %241 = arith.negf %240 : vector<1x256xf32>
    %242 = math.exp %241 : vector<1x256xf32>
    %cst_85 = arith.constant 1.000000e+00 : f32
    %243 = vector.broadcast %cst_85 : f32 to vector<1x256xf32>
    %244 = arith.addf %243, %242 : vector<1x256xf32>
    %245 = arith.divf %243, %244 : vector<1x256xf32>
    %246 = vector.extract_strided_slice %245 {offsets = [0, 0], sizes = [1, 128], strides = [1, 1]} : vector<1x256xf32> to vector<1x128xf32>
    %247 = vector.extract_strided_slice %245 {offsets = [0, 128], sizes = [1, 128], strides = [1, 1]} : vector<1x256xf32> to vector<1x128xf32>
    %248 = vector.extract_strided_slice %234 {offsets = [0, 256], sizes = [1, 128], strides = [1, 1]} : vector<1x384xf32> to vector<1x128xf32>
    %249 = vector.extract_strided_slice %237 {offsets = [0, 256], sizes = [1, 128], strides = [1, 1]} : vector<1x384xf32> to vector<1x128xf32>
    %250 = arith.addf %249, %9 : vector<1x128xf32>
    %251 = arith.mulf %246, %250 : vector<1x128xf32>
    %252 = arith.addf %248, %251 : vector<1x128xf32>
    %253 = math.tanh %252 : vector<1x128xf32>
    %254 = arith.subf %207, %253 : vector<1x128xf32>
    %255 = arith.mulf %247, %254 : vector<1x128xf32>
    %256 = arith.addf %253, %255 : vector<1x128xf32>
    %c4_86 = arith.constant 4 : index
    %c0_87 = arith.constant 0 : index
    %257 = vector.load %arg17[%c4_86, %c0_87] : memref<8x128xf32, #tpu.memory_space<vmem>>, vector<1x128xf32>
    tpu.vector_store %arg17[%c4_86, %c0_87], %256 {strides = array<i32>} : memref<8x128xf32, #tpu.memory_space<vmem>>, vector<1x128xf32>,
    %c0_88 = arith.constant 0 : index
    %c0_89 = arith.constant 0 : index
    %258 = vector.load %arg4[%c0_88, %c0_89] : memref<128x384xbf16, #tpu.memory_space<vmem>>, vector<128x384xbf16>
    %cst_90 = arith.constant dense<0.000000e+00> : vector<1x384xf32>
    %259 = tpu.matmul %231, %258, %cst_90 {dimension_numbers = #tpu.dot_dimension_numbers<[1], [0], [0], [1], [0, 0, 1, 1], [], []>} : vector<1x128xbf16>, vector<128x384xbf16>, vector<1x384xf32> -> vector<1x384xf32>
    %c5 = arith.constant 5 : index
    %c0_91 = arith.constant 0 : index
    %260 = vector.load %arg16[%c5, %c0_91] : memref<8x384xf32, #tpu.memory_space<vmem>>, vector<1x384xf32>
    %261 = vector.extract_strided_slice %260 {offsets = [0, 0], sizes = [1, 256], strides = [1, 1]} : vector<1x384xf32> to vector<1x256xf32>
    %262 = vector.extract_strided_slice %259 {offsets = [0, 0], sizes = [1, 256], strides = [1, 1]} : vector<1x384xf32> to vector<1x256xf32>
    %263 = arith.addf %261, %262 : vector<1x256xf32>
    %264 = arith.negf %263 : vector<1x256xf32>
    %265 = math.exp %264 : vector<1x256xf32>
    %cst_92 = arith.constant 1.000000e+00 : f32
    %266 = vector.broadcast %cst_92 : f32 to vector<1x256xf32>
    %267 = arith.addf %266, %265 : vector<1x256xf32>
    %268 = arith.divf %266, %267 : vector<1x256xf32>
    %269 = vector.extract_strided_slice %268 {offsets = [0, 0], sizes = [1, 128], strides = [1, 1]} : vector<1x256xf32> to vector<1x128xf32>
    %270 = vector.extract_strided_slice %268 {offsets = [0, 128], sizes = [1, 128], strides = [1, 1]} : vector<1x256xf32> to vector<1x128xf32>
    %271 = vector.extract_strided_slice %260 {offsets = [0, 256], sizes = [1, 128], strides = [1, 1]} : vector<1x384xf32> to vector<1x128xf32>
    %272 = vector.extract_strided_slice %259 {offsets = [0, 256], sizes = [1, 128], strides = [1, 1]} : vector<1x384xf32> to vector<1x128xf32>
    %273 = arith.addf %272, %7 : vector<1x128xf32>
    %274 = arith.mulf %269, %273 : vector<1x128xf32>
    %275 = arith.addf %271, %274 : vector<1x128xf32>
    %276 = math.tanh %275 : vector<1x128xf32>
    %277 = arith.subf %230, %276 : vector<1x128xf32>
    %278 = arith.mulf %270, %277 : vector<1x128xf32>
    %279 = arith.addf %276, %278 : vector<1x128xf32>
    %280 = arith.truncf %279 : vector<1x128xf32> to vector<1x128xbf16>
    %c0_93 = arith.constant 0 : index
    %c0_94 = arith.constant 0 : index
    %281 = vector.load %arg5[%c0_93, %c0_94] : memref<128x384xbf16, #tpu.memory_space<vmem>>, vector<128x384xbf16>
    %cst_95 = arith.constant dense<0.000000e+00> : vector<1x384xf32>
    %282 = tpu.matmul %280, %281, %cst_95 {dimension_numbers = #tpu.dot_dimension_numbers<[1], [0], [0], [1], [0, 0, 1, 1], [], []>} : vector<1x128xbf16>, vector<128x384xbf16>, vector<1x384xf32> -> vector<1x384xf32>
    %283 = arith.addf %282, %8 : vector<1x384xf32>
    %284 = arith.truncf %256 : vector<1x128xf32> to vector<1x128xbf16>
    %c0_96 = arith.constant 0 : index
    %c0_97 = arith.constant 0 : index
    %285 = vector.load %arg6[%c0_96, %c0_97] : memref<128x384xbf16, #tpu.memory_space<vmem>>, vector<128x384xbf16>
    %cst_98 = arith.constant dense<0.000000e+00> : vector<1x384xf32>
    %286 = tpu.matmul %284, %285, %cst_98 {dimension_numbers = #tpu.dot_dimension_numbers<[1], [0], [0], [1], [0, 0, 1, 1], [], []>} : vector<1x128xbf16>, vector<128x384xbf16>, vector<1x384xf32> -> vector<1x384xf32>
    %287 = vector.extract_strided_slice %283 {offsets = [0, 0], sizes = [1, 256], strides = [1, 1]} : vector<1x384xf32> to vector<1x256xf32>
    %288 = vector.extract_strided_slice %286 {offsets = [0, 0], sizes = [1, 256], strides = [1, 1]} : vector<1x384xf32> to vector<1x256xf32>
    %289 = arith.addf %287, %288 : vector<1x256xf32>
    %290 = arith.negf %289 : vector<1x256xf32>
    %291 = math.exp %290 : vector<1x256xf32>
    %cst_99 = arith.constant 1.000000e+00 : f32
    %292 = vector.broadcast %cst_99 : f32 to vector<1x256xf32>
    %293 = arith.addf %292, %291 : vector<1x256xf32>
    %294 = arith.divf %292, %293 : vector<1x256xf32>
    %295 = vector.extract_strided_slice %294 {offsets = [0, 0], sizes = [1, 128], strides = [1, 1]} : vector<1x256xf32> to vector<1x128xf32>
    %296 = vector.extract_strided_slice %294 {offsets = [0, 128], sizes = [1, 128], strides = [1, 1]} : vector<1x256xf32> to vector<1x128xf32>
    %297 = vector.extract_strided_slice %283 {offsets = [0, 256], sizes = [1, 128], strides = [1, 1]} : vector<1x384xf32> to vector<1x128xf32>
    %298 = vector.extract_strided_slice %286 {offsets = [0, 256], sizes = [1, 128], strides = [1, 1]} : vector<1x384xf32> to vector<1x128xf32>
    %299 = arith.addf %298, %9 : vector<1x128xf32>
    %300 = arith.mulf %295, %299 : vector<1x128xf32>
    %301 = arith.addf %297, %300 : vector<1x128xf32>
    %302 = math.tanh %301 : vector<1x128xf32>
    %303 = arith.subf %256, %302 : vector<1x128xf32>
    %304 = arith.mulf %296, %303 : vector<1x128xf32>
    %305 = arith.addf %302, %304 : vector<1x128xf32>
    %c5_100 = arith.constant 5 : index
    %c0_101 = arith.constant 0 : index
    %306 = vector.load %arg17[%c5_100, %c0_101] : memref<8x128xf32, #tpu.memory_space<vmem>>, vector<1x128xf32>
    tpu.vector_store %arg17[%c5_100, %c0_101], %305 {strides = array<i32>} : memref<8x128xf32, #tpu.memory_space<vmem>>, vector<1x128xf32>,
    %c0_102 = arith.constant 0 : index
    %c0_103 = arith.constant 0 : index
    %307 = vector.load %arg4[%c0_102, %c0_103] : memref<128x384xbf16, #tpu.memory_space<vmem>>, vector<128x384xbf16>
    %cst_104 = arith.constant dense<0.000000e+00> : vector<1x384xf32>
    %308 = tpu.matmul %280, %307, %cst_104 {dimension_numbers = #tpu.dot_dimension_numbers<[1], [0], [0], [1], [0, 0, 1, 1], [], []>} : vector<1x128xbf16>, vector<128x384xbf16>, vector<1x384xf32> -> vector<1x384xf32>
    %c6 = arith.constant 6 : index
    %c0_105 = arith.constant 0 : index
    %309 = vector.load %arg16[%c6, %c0_105] : memref<8x384xf32, #tpu.memory_space<vmem>>, vector<1x384xf32>
    %310 = vector.extract_strided_slice %309 {offsets = [0, 0], sizes = [1, 256], strides = [1, 1]} : vector<1x384xf32> to vector<1x256xf32>
    %311 = vector.extract_strided_slice %308 {offsets = [0, 0], sizes = [1, 256], strides = [1, 1]} : vector<1x384xf32> to vector<1x256xf32>
    %312 = arith.addf %310, %311 : vector<1x256xf32>
    %313 = arith.negf %312 : vector<1x256xf32>
    %314 = math.exp %313 : vector<1x256xf32>
    %cst_106 = arith.constant 1.000000e+00 : f32
    %315 = vector.broadcast %cst_106 : f32 to vector<1x256xf32>
    %316 = arith.addf %315, %314 : vector<1x256xf32>
    %317 = arith.divf %315, %316 : vector<1x256xf32>
    %318 = vector.extract_strided_slice %317 {offsets = [0, 0], sizes = [1, 128], strides = [1, 1]} : vector<1x256xf32> to vector<1x128xf32>
    %319 = vector.extract_strided_slice %317 {offsets = [0, 128], sizes = [1, 128], strides = [1, 1]} : vector<1x256xf32> to vector<1x128xf32>
    %320 = vector.extract_strided_slice %309 {offsets = [0, 256], sizes = [1, 128], strides = [1, 1]} : vector<1x384xf32> to vector<1x128xf32>
    %321 = vector.extract_strided_slice %308 {offsets = [0, 256], sizes = [1, 128], strides = [1, 1]} : vector<1x384xf32> to vector<1x128xf32>
    %322 = arith.addf %321, %7 : vector<1x128xf32>
    %323 = arith.mulf %318, %322 : vector<1x128xf32>
    %324 = arith.addf %320, %323 : vector<1x128xf32>
    %325 = math.tanh %324 : vector<1x128xf32>
    %326 = arith.subf %279, %325 : vector<1x128xf32>
    %327 = arith.mulf %319, %326 : vector<1x128xf32>
    %328 = arith.addf %325, %327 : vector<1x128xf32>
    %329 = arith.truncf %328 : vector<1x128xf32> to vector<1x128xbf16>
    %c0_107 = arith.constant 0 : index
    %c0_108 = arith.constant 0 : index
    %330 = vector.load %arg5[%c0_107, %c0_108] : memref<128x384xbf16, #tpu.memory_space<vmem>>, vector<128x384xbf16>
    %cst_109 = arith.constant dense<0.000000e+00> : vector<1x384xf32>
    %331 = tpu.matmul %329, %330, %cst_109 {dimension_numbers = #tpu.dot_dimension_numbers<[1], [0], [0], [1], [0, 0, 1, 1], [], []>} : vector<1x128xbf16>, vector<128x384xbf16>, vector<1x384xf32> -> vector<1x384xf32>
    %332 = arith.addf %331, %8 : vector<1x384xf32>
    %333 = arith.truncf %305 : vector<1x128xf32> to vector<1x128xbf16>
    %c0_110 = arith.constant 0 : index
    %c0_111 = arith.constant 0 : index
    %334 = vector.load %arg6[%c0_110, %c0_111] : memref<128x384xbf16, #tpu.memory_space<vmem>>, vector<128x384xbf16>
    %cst_112 = arith.constant dense<0.000000e+00> : vector<1x384xf32>
    %335 = tpu.matmul %333, %334, %cst_112 {dimension_numbers = #tpu.dot_dimension_numbers<[1], [0], [0], [1], [0, 0, 1, 1], [], []>} : vector<1x128xbf16>, vector<128x384xbf16>, vector<1x384xf32> -> vector<1x384xf32>
    %336 = vector.extract_strided_slice %332 {offsets = [0, 0], sizes = [1, 256], strides = [1, 1]} : vector<1x384xf32> to vector<1x256xf32>
    %337 = vector.extract_strided_slice %335 {offsets = [0, 0], sizes = [1, 256], strides = [1, 1]} : vector<1x384xf32> to vector<1x256xf32>
    %338 = arith.addf %336, %337 : vector<1x256xf32>
    %339 = arith.negf %338 : vector<1x256xf32>
    %340 = math.exp %339 : vector<1x256xf32>
    %cst_113 = arith.constant 1.000000e+00 : f32
    %341 = vector.broadcast %cst_113 : f32 to vector<1x256xf32>
    %342 = arith.addf %341, %340 : vector<1x256xf32>
    %343 = arith.divf %341, %342 : vector<1x256xf32>
    %344 = vector.extract_strided_slice %343 {offsets = [0, 0], sizes = [1, 128], strides = [1, 1]} : vector<1x256xf32> to vector<1x128xf32>
    %345 = vector.extract_strided_slice %343 {offsets = [0, 128], sizes = [1, 128], strides = [1, 1]} : vector<1x256xf32> to vector<1x128xf32>
    %346 = vector.extract_strided_slice %332 {offsets = [0, 256], sizes = [1, 128], strides = [1, 1]} : vector<1x384xf32> to vector<1x128xf32>
    %347 = vector.extract_strided_slice %335 {offsets = [0, 256], sizes = [1, 128], strides = [1, 1]} : vector<1x384xf32> to vector<1x128xf32>
    %348 = arith.addf %347, %9 : vector<1x128xf32>
    %349 = arith.mulf %344, %348 : vector<1x128xf32>
    %350 = arith.addf %346, %349 : vector<1x128xf32>
    %351 = math.tanh %350 : vector<1x128xf32>
    %352 = arith.subf %305, %351 : vector<1x128xf32>
    %353 = arith.mulf %345, %352 : vector<1x128xf32>
    %354 = arith.addf %351, %353 : vector<1x128xf32>
    %c6_114 = arith.constant 6 : index
    %c0_115 = arith.constant 0 : index
    %355 = vector.load %arg17[%c6_114, %c0_115] : memref<8x128xf32, #tpu.memory_space<vmem>>, vector<1x128xf32>
    tpu.vector_store %arg17[%c6_114, %c0_115], %354 {strides = array<i32>} : memref<8x128xf32, #tpu.memory_space<vmem>>, vector<1x128xf32>,
    %c0_116 = arith.constant 0 : index
    %c0_117 = arith.constant 0 : index
    %356 = vector.load %arg4[%c0_116, %c0_117] : memref<128x384xbf16, #tpu.memory_space<vmem>>, vector<128x384xbf16>
    %cst_118 = arith.constant dense<0.000000e+00> : vector<1x384xf32>
    %357 = tpu.matmul %329, %356, %cst_118 {dimension_numbers = #tpu.dot_dimension_numbers<[1], [0], [0], [1], [0, 0, 1, 1], [], []>} : vector<1x128xbf16>, vector<128x384xbf16>, vector<1x384xf32> -> vector<1x384xf32>
    %c7 = arith.constant 7 : index
    %c0_119 = arith.constant 0 : index
    %358 = vector.load %arg16[%c7, %c0_119] : memref<8x384xf32, #tpu.memory_space<vmem>>, vector<1x384xf32>
    %359 = vector.extract_strided_slice %358 {offsets = [0, 0], sizes = [1, 256], strides = [1, 1]} : vector<1x384xf32> to vector<1x256xf32>
    %360 = vector.extract_strided_slice %357 {offsets = [0, 0], sizes = [1, 256], strides = [1, 1]} : vector<1x384xf32> to vector<1x256xf32>
    %361 = arith.addf %359, %360 : vector<1x256xf32>
    %362 = arith.negf %361 : vector<1x256xf32>
    %363 = math.exp %362 : vector<1x256xf32>
    %cst_120 = arith.constant 1.000000e+00 : f32
    %364 = vector.broadcast %cst_120 : f32 to vector<1x256xf32>
    %365 = arith.addf %364, %363 : vector<1x256xf32>
    %366 = arith.divf %364, %365 : vector<1x256xf32>
    %367 = vector.extract_strided_slice %366 {offsets = [0, 0], sizes = [1, 128], strides = [1, 1]} : vector<1x256xf32> to vector<1x128xf32>
    %368 = vector.extract_strided_slice %366 {offsets = [0, 128], sizes = [1, 128], strides = [1, 1]} : vector<1x256xf32> to vector<1x128xf32>
    %369 = vector.extract_strided_slice %358 {offsets = [0, 256], sizes = [1, 128], strides = [1, 1]} : vector<1x384xf32> to vector<1x128xf32>
    %370 = vector.extract_strided_slice %357 {offsets = [0, 256], sizes = [1, 128], strides = [1, 1]} : vector<1x384xf32> to vector<1x128xf32>
    %371 = arith.addf %370, %7 : vector<1x128xf32>
    %372 = arith.mulf %367, %371 : vector<1x128xf32>
    %373 = arith.addf %369, %372 : vector<1x128xf32>
    %374 = math.tanh %373 : vector<1x128xf32>
    %375 = arith.subf %328, %374 : vector<1x128xf32>
    %376 = arith.mulf %368, %375 : vector<1x128xf32>
    %377 = arith.addf %374, %376 : vector<1x128xf32>
    %378 = arith.truncf %377 : vector<1x128xf32> to vector<1x128xbf16>
    %c0_121 = arith.constant 0 : index
    %c0_122 = arith.constant 0 : index
    %379 = vector.load %arg5[%c0_121, %c0_122] : memref<128x384xbf16, #tpu.memory_space<vmem>>, vector<128x384xbf16>
    %cst_123 = arith.constant dense<0.000000e+00> : vector<1x384xf32>
    %380 = tpu.matmul %378, %379, %cst_123 {dimension_numbers = #tpu.dot_dimension_numbers<[1], [0], [0], [1], [0, 0, 1, 1], [], []>} : vector<1x128xbf16>, vector<128x384xbf16>, vector<1x384xf32> -> vector<1x384xf32>
    %381 = arith.addf %380, %8 : vector<1x384xf32>
    %382 = arith.truncf %354 : vector<1x128xf32> to vector<1x128xbf16>
    %c0_124 = arith.constant 0 : index
    %c0_125 = arith.constant 0 : index
    %383 = vector.load %arg6[%c0_124, %c0_125] : memref<128x384xbf16, #tpu.memory_space<vmem>>, vector<128x384xbf16>
    %cst_126 = arith.constant dense<0.000000e+00> : vector<1x384xf32>
    %384 = tpu.matmul %382, %383, %cst_126 {dimension_numbers = #tpu.dot_dimension_numbers<[1], [0], [0], [1], [0, 0, 1, 1], [], []>} : vector<1x128xbf16>, vector<128x384xbf16>, vector<1x384xf32> -> vector<1x384xf32>
    %385 = vector.extract_strided_slice %381 {offsets = [0, 0], sizes = [1, 256], strides = [1, 1]} : vector<1x384xf32> to vector<1x256xf32>
    %386 = vector.extract_strided_slice %384 {offsets = [0, 0], sizes = [1, 256], strides = [1, 1]} : vector<1x384xf32> to vector<1x256xf32>
    %387 = arith.addf %385, %386 : vector<1x256xf32>
    %388 = arith.negf %387 : vector<1x256xf32>
    %389 = math.exp %388 : vector<1x256xf32>
    %cst_127 = arith.constant 1.000000e+00 : f32
    %390 = vector.broadcast %cst_127 : f32 to vector<1x256xf32>
    %391 = arith.addf %390, %389 : vector<1x256xf32>
    %392 = arith.divf %390, %391 : vector<1x256xf32>
    %393 = vector.extract_strided_slice %392 {offsets = [0, 0], sizes = [1, 128], strides = [1, 1]} : vector<1x256xf32> to vector<1x128xf32>
    %394 = vector.extract_strided_slice %392 {offsets = [0, 128], sizes = [1, 128], strides = [1, 1]} : vector<1x256xf32> to vector<1x128xf32>
    %395 = vector.extract_strided_slice %381 {offsets = [0, 256], sizes = [1, 128], strides = [1, 1]} : vector<1x384xf32> to vector<1x128xf32>
    %396 = vector.extract_strided_slice %384 {offsets = [0, 256], sizes = [1, 128], strides = [1, 1]} : vector<1x384xf32> to vector<1x128xf32>
    %397 = arith.addf %396, %9 : vector<1x128xf32>
    %398 = arith.mulf %393, %397 : vector<1x128xf32>
    %399 = arith.addf %395, %398 : vector<1x128xf32>
    %400 = math.tanh %399 : vector<1x128xf32>
    %401 = arith.subf %354, %400 : vector<1x128xf32>
    %402 = arith.mulf %394, %401 : vector<1x128xf32>
    %403 = arith.addf %400, %402 : vector<1x128xf32>
    %c7_128 = arith.constant 7 : index
    %c0_129 = arith.constant 0 : index
    %404 = vector.load %arg17[%c7_128, %c0_129] : memref<8x128xf32, #tpu.memory_space<vmem>>, vector<1x128xf32>
    tpu.vector_store %arg17[%c7_128, %c0_129], %403 {strides = array<i32>} : memref<8x128xf32, #tpu.memory_space<vmem>>, vector<1x128xf32>,
    %c0_130 = arith.constant 0 : index
    %c0_131 = arith.constant 0 : index
    %405 = vector.load %arg14[%c0_130, %c0_131] : memref<1x128xf32, #tpu.memory_space<vmem>>, vector<1x128xf32>
    tpu.vector_store %arg14[%c0_130, %c0_131], %377 {strides = array<i32>} : memref<1x128xf32, #tpu.memory_space<vmem>>, vector<1x128xf32>,
    %c0_132 = arith.constant 0 : index
    %c0_133 = arith.constant 0 : index
    %406 = vector.load %arg15[%c0_132, %c0_133] : memref<1x128xf32, #tpu.memory_space<vmem>>, vector<1x128xf32>
    tpu.vector_store %arg15[%c0_132, %c0_133], %403 {strides = array<i32>} : memref<1x128xf32, #tpu.memory_space<vmem>>, vector<1x128xf32>,
    %c0_134 = arith.constant 0 : index
    %c0_135 = arith.constant 0 : index
    %407 = vector.load %arg11[%c0_134, %c0_135] : memref<8x128xf32, #tpu.memory_space<vmem>>, vector<8x128xf32>
    %c0_136 = arith.constant 0 : index
    %c0_137 = arith.constant 0 : index
    %408 = vector.load %arg17[%c0_136, %c0_137] : memref<8x128xf32, #tpu.memory_space<vmem>>, vector<8x128xf32>
    %cst_138 = arith.constant dense<0.000000e+00> : vector<8x8xf32>
    %409 = tpu.matmul %407, %408, %cst_138 {dimension_numbers = #tpu.dot_dimension_numbers<[1], [1], [0], [0], [0, 0, 1, 0], [], []>} : vector<8x128xf32>, vector<8x128xf32>, vector<8x8xf32> -> vector<8x8xf32>
    %c0_139 = arith.constant 0 : index
    %c0_140 = arith.constant 0 : index
    %410 = vector.load %arg12[%c0_139, %c0_140] : memref<1x1xf32, #tpu.memory_space<vmem>>, vector<1x1xf32>
    %411 = vector.broadcast %410 : vector<1x1xf32> to vector<8x8xf32>
    %412 = arith.addf %409, %411 : vector<8x8xf32>
    %c0_141 = arith.constant 0 : index
    %c0_142 = arith.constant 0 : index
    %413 = vector.load %arg13[%c0_141, %c0_142] : memref<8x8xf32, #tpu.memory_space<vmem>>, vector<8x8xf32>
    tpu.vector_store %arg13[%c0_141, %c0_142], %412 {strides = array<i32>} : memref<8x8xf32, #tpu.memory_space<vmem>>, vector<8x8xf32>,
    return
  }
}

</mosaic_0001>

<llo_original>
// kernel: _lambda_.1
$region0: #{_lambda_.1}
  #allocation0 [shape = 'u32[]', space=smem, size = 0x4, offset = 0x4, fixed_abs, tag = 'smem constant byte address 0x4 - core index']
  #allocation1 [shape = 'u32[144,128]{1,0:T(1,128)}', space=vmem, size = 0x12000, scoped, tag = 'internal scratch']
  #allocation2 [shape = 'f32[8,384]{1,0:T(8,128)}', space=vmem, size = 0x3000, scoped, tag = 'scratch operand']
  #allocation3 [shape = 'f32[8,128]{1,0:T(8,128)}', space=vmem, size = 0x1000, scoped, tag = 'scratch operand']
  #allocation4 [shape = 'f32[1,1]{1,0:T(1,128)S(1)}', space=vmem, size = 0x200, scoped, tag = 'scoped memory for _lambda_.1']
  %s0 = inlined_call_operand.vmem [shape: bf16[8,256], index: 0, kind: input, shape index: {}]
  %s1 = inlined_call_operand.vmem [shape: f32[1,128], index: 1, kind: input, shape index: {}, may-alias: {1,14}]
  %s2 = inlined_call_operand.vmem [shape: f32[1,128], index: 2, kind: input, shape index: {}, may-alias: {2,15}]
  %s3 = inlined_call_operand.vmem [shape: bf16[256,384], index: 3, kind: input, shape index: {}]
  %s4 = inlined_call_operand.vmem [shape: bf16[128,384], index: 4, kind: input, shape index: {}]
  %s5 = inlined_call_operand.vmem [shape: bf16[128,384], index: 5, kind: input, shape index: {}]
  %s6 = inlined_call_operand.vmem [shape: bf16[128,384], index: 6, kind: input, shape index: {}]
  %s7 = inlined_call_operand.vmem [shape: f32[1,384], index: 7, kind: input, shape index: {}]
  %s8 = inlined_call_operand.vmem [shape: f32[1,128], index: 8, kind: input, shape index: {}]
  %s9 = inlined_call_operand.vmem [shape: f32[1,384], index: 9, kind: input, shape index: {}]
  %s10 = inlined_call_operand.vmem [shape: f32[1,128], index: 10, kind: input, shape index: {}]
  %s11 = inlined_call_operand.vmem [shape: f32[8,128], index: 11, kind: input, shape index: {}]
  %s12 = inlined_call_operand.<no memory space> [shape: f32[1,1], index: 12, kind: input, shape index: {}]
  %s13 = inlined_call_operand.hbm [shape: f32[8,8], index: 13, kind: output, shape index: {0}]
  %s14 = inlined_call_operand.vmem [shape: f32[1,128], index: 14, kind: output, shape index: {1}, may-alias: {1,14}]
  %s15 = inlined_call_operand.vmem [shape: f32[1,128], index: 15, kind: output, shape index: {2}, may-alias: {2,15}]
  %16 = xla_tuple %s13, %s14, %s15
  %s17 = sld [smem:[#allocation0]]
  $region78: #{_lambda_.1} parent=0
    _
  %s19 = ssub.s32 1, %s17
  %s20 = scalar_select 0, %s19, %s17
  %v21 = vstv %s12
  %22 = vst [vmem:[#allocation4] sm:$0x1] %v21
  $region1: #{_lambda_.1} parent=0
    #allocation5 [shape = 'u8[4096]{0}', space=vmem, size = 0x1000, scoped, tag = 'output window, operand 0, single buffered']
    #allocation6 [shape = 's32[1]{0}', space=sflag, size = 0x4, scoped, tag = 'scoped memory for _lambda_.1']
    %23 = vsyncpa [#allocation6], 0
    // Predicated region
    $region2: #{_lambda_.1} parent=1 // pred_check
      _
    $region3: #{_lambda_.1} parent=1 // pred_check_branch
      %25 = sbr.rel (0) target = $region5
    $region4: #{_lambda_.1} parent=1 // pred_region
      _
    $region5: #{_lambda_.1} parent=1 // pred_fallthru
      _
    // Predicated region
    $region6: #{_lambda_.1} parent=1 // pred_check
      _
    $region7: #{_lambda_.1} parent=1 // pred_check_branch
      %27 = sbr.rel (0) target = $region9
    $region8: #{_lambda_.1} parent=1 // pred_region
      _
    $region9: #{_lambda_.1} parent=1 // pred_fallthru
      _
    // Predicated region
    $region10: #{_lambda_.1} parent=1 // pred_check
      _
    $region11: #{_lambda_.1} parent=1 // pred_check_branch
      %29 = sbr.rel (0) target = $region13
    $region12: #{_lambda_.1} parent=1 // pred_region
      _
    $region13: #{_lambda_.1} parent=1 // pred_fallthru
      _
    // Predicated region
    $region14: #{_lambda_.1} parent=1 // pred_check
      _
    $region15: #{_lambda_.1} parent=1 // pred_check_branch
      %31 = sbr.rel (0) target = $region17
    $region16: #{_lambda_.1} parent=1 // pred_region
      _
    $region17: #{_lambda_.1} parent=1 // pred_fallthru
      _
    // Predicated region
    $region18: #{_lambda_.1} parent=1 // pred_check
      _
    $region19: #{_lambda_.1} parent=1 // pred_check_branch
      %33 = sbr.rel (0) target = $region21
    $region20: #{_lambda_.1} parent=1 // pred_region
      _
    $region21: #{_lambda_.1} parent=1 // pred_fallthru
      _
    // Predicated region
    $region22: #{_lambda_.1} parent=1 // pred_check
      _
    $region23: #{_lambda_.1} parent=1 // pred_check_branch
      %35 = sbr.rel (0) target = $region25
    $region24: #{_lambda_.1} parent=1 // pred_region
      _
    $region25: #{_lambda_.1} parent=1 // pred_fallthru
      _
    // Predicated region
    $region26: #{_lambda_.1} parent=1 // pred_check
      _
    $region27: #{_lambda_.1} parent=1 // pred_check_branch
      %37 = sbr.rel (0) target = $region29
    $region28: #{_lambda_.1} parent=1 // pred_region
      _
    $region29: #{_lambda_.1} parent=1 // pred_fallthru
      _
    // Predicated region
    $region30: #{_lambda_.1} parent=1 // pred_check
      _
    $region31: #{_lambda_.1} parent=1 // pred_check_branch
      %39 = sbr.rel (0) target = $region33
    $region32: #{_lambda_.1} parent=1 // pred_region
      _
    $region33: #{_lambda_.1} parent=1 // pred_fallthru
      _
    // Predicated region
    $region34: #{_lambda_.1} parent=1 // pred_check
      _
    $region35: #{_lambda_.1} parent=1 // pred_check_branch
      %41 = sbr.rel (0) target = $region37
    $region36: #{_lambda_.1} parent=1 // pred_region
      _
    $region37: #{_lambda_.1} parent=1 // pred_fallthru
      _
    // Predicated region
    $region38: #{_lambda_.1} parent=1 // pred_check
      _
    $region39: #{_lambda_.1} parent=1 // pred_check_branch
      %43 = sbr.rel (0) target = $region41
    $region40: #{_lambda_.1} parent=1 // pred_region
      _
    $region41: #{_lambda_.1} parent=1 // pred_fallthru
      _
    // Predicated region
    $region42: #{_lambda_.1} parent=1 // pred_check
      _
    $region43: #{_lambda_.1} parent=1 // pred_check_branch
      %45 = sbr.rel (0) target = $region45
    $region44: #{_lambda_.1} parent=1 // pred_region
      _
    $region45: #{_lambda_.1} parent=1 // pred_fallthru
      _
    // Predicated region
    $region46: #{_lambda_.1} parent=1 // pred_check
      _
    $region47: #{_lambda_.1} parent=1 // pred_check_branch
      %47 = sbr.rel (0) target = $region49
    $region48: #{_lambda_.1} parent=1 // pred_region
      _
    $region49: #{_lambda_.1} parent=1 // pred_fallthru
      _
    // Predicated region
    $region50: #{_lambda_.1} parent=1 // pred_check
      _
    $region51: #{_lambda_.1} parent=1 // pred_check_branch
      %49 = sbr.rel (0) target = $region53
    $region52: #{_lambda_.1} parent=1 // pred_region
      _
    $region53: #{_lambda_.1} parent=1 // pred_fallthru
      _
    %v51 = vld [vmem:[%s0] sm:$0xff]
    %v52 = vld [vmem:[%s3] sm:$0xff]
    %v53 = vld [vmem:[%s3 + $0x8] sm:$0xf]
    %v54 = vld [vmem:[%s3 + $0xc] sm:$0xff]
    %v55 = vld [vmem:[%s3 + $0x14] sm:$0xf]
    %v56 = vld [vmem:[%s3 + $0x18] sm:$0xff]
    %v57 = vld [vmem:[%s3 + $0x20] sm:$0xf]
    %v58 = vld [vmem:[%s3 + $0x24] sm:$0xff]
    %v59 = vld [vmem:[%s3 + $0x2c] sm:$0xf]
    %v60 = vld [vmem:[%s3 + $0x30] sm:$0xff]
    %v61 = vld [vmem:[%s3 + $0x38] sm:$0xf]
    %v62 = vld [vmem:[%s3 + $0x3c] sm:$0xff]
    %v63 = vld [vmem:[%s3 + $0x44] sm:$0xf]
    %v64 = vld [vmem:[%s3 + $0x48] sm:$0xff]
    %v65 = vld [vmem:[%s3 + $0x50] sm:$0xf]
    %v66 = vld [vmem:[%s3 + $0x54] sm:$0xff]
    %v67 = vld [vmem:[%s3 + $0x5c] sm:$0xf]
    %v68 = vld [vmem:[%s3 + $0x60] sm:$0xff]
    %v69 = vld [vmem:[%s3 + $0x68] sm:$0xf]
    %v70 = vld [vmem:[%s3 + $0x6c] sm:$0xff]
    %v71 = vld [vmem:[%s3 + $0x74] sm:$0xf]
    %v72 = vld [vmem:[%s3 + $0x78] sm:$0xff]
    %v73 = vld [vmem:[%s3 + $0x80] sm:$0xf]
    %v74 = vld [vmem:[%s3 + $0x84] sm:$0xff]
    %v75 = vld [vmem:[%s3 + $0x8c] sm:$0xf]
    %v76 = vld [vmem:[%s3 + $0x90] sm:$0xff]
    %v77 = vld [vmem:[%s3 + $0x98] sm:$0xf]
    %v78 = vld [vmem:[%s3 + $0x9c] sm:$0xff]
    %v79 = vld [vmem:[%s3 + $0xa4] sm:$0xf]
    %v80 = vld [vmem:[%s3 + $0xa8] sm:$0xff]
    %v81 = vld [vmem:[%s3 + $0xb0] sm:$0xf]
    %v82 = vld [vmem:[%s3 + $0xb4] sm:$0xff]
    %v83 = vld [vmem:[%s3 + $0xbc] sm:$0xf]
    %v84 = vld [vmem:[%s3 + $0xc0] sm:$0xff]
    %v85 = vld [vmem:[%s3 + $0xc8] sm:$0xf]
    %v86 = vld [vmem:[%s3 + $0xcc] sm:$0xff]
    %v87 = vld [vmem:[%s3 + $0xd4] sm:$0xf]
    %v88 = vld [vmem:[%s3 + $0xd8] sm:$0xff]
    %v89 = vld [vmem:[%s3 + $0xe0] sm:$0xf]
    %v90 = vld [vmem:[%s3 + $0xe4] sm:$0xff]
    %v91 = vld [vmem:[%s3 + $0xec] sm:$0xf]
    %v92 = vld [vmem:[%s3 + $0xf0] sm:$0xff]
    %v93 = vld [vmem:[%s3 + $0xf8] sm:$0xf]
    %v94 = vld [vmem:[%s3 + $0xfc] sm:$0xff]
    %v95 = vld [vmem:[%s3 + $0x104] sm:$0xf]
    %v96 = vld [vmem:[%s3 + $0x108] sm:$0xff]
    %v97 = vld [vmem:[%s3 + $0x110] sm:$0xf]
    %v98 = vld [vmem:[%s3 + $0x114] sm:$0xff]
    %v99 = vld [vmem:[%s3 + $0x11c] sm:$0xf]
    %v100 = vld [vmem:[%s3 + $0x120] sm:$0xff]
    %v101 = vld [vmem:[%s3 + $0x128] sm:$0xf]
    %v102 = vld [vmem:[%s3 + $0x12c] sm:$0xff]
    %v103 = vld [vmem:[%s3 + $0x134] sm:$0xf]
    %v104 = vld [vmem:[%s3 + $0x138] sm:$0xff]
    %v105 = vld [vmem:[%s3 + $0x140] sm:$0xf]
    %v106 = vld [vmem:[%s3 + $0x144] sm:$0xff]
    %v107 = vld [vmem:[%s3 + $0x14c] sm:$0xf]
    %v108 = vld [vmem:[%s3 + $0x150] sm:$0xff]
    %v109 = vld [vmem:[%s3 + $0x158] sm:$0xf]
    %v110 = vld [vmem:[%s3 + $0x15c] sm:$0xff]
    %v111 = vld [vmem:[%s3 + $0x164] sm:$0xf]
    %v112 = vld [vmem:[%s3 + $0x168] sm:$0xff]
    %v113 = vld [vmem:[%s3 + $0x170] sm:$0xf]
    %v114 = vld [vmem:[%s3 + $0x174] sm:$0xff]
    %v115 = vld [vmem:[%s3 + $0x17c] sm:$0xf]
    %v116 = vld [vmem:[%s7] sm:$0x7]
    %v118 = vlaneseq
    %v119 = vshrl.u32 %v118, 7
    %v120 = vsub.s32 0, %v119
    %v121 = vrot.slane %v116, %v120
    %v122 = vlaneseq
    %v123 = vshrl.u32 %v122, 7
    %v124 = vsub.s32 1, %v123
    %v125 = vrot.slane %v116, %v124
    %v126 = vlaneseq
    %v127 = vshrl.u32 %v126, 7
    %v128 = vsub.s32 2, %v127
    %v129 = vrot.slane %v116, %v128
    %v134 = vunpack.c.l.b16 %v51
    %v135 = vunpack.c.h.b16 %v51
    %v136 = vpack.c.b16 %v134, %v134
    %v137 = vpack.c.b16 %v135, %v135
    %v204 = vunpack.c.l.b16 %v52
    %v205 = vunpack.c.h.b16 %v52
    %v206 = vunpack.c.l.b16 %v53
    %v207 = vunpack.c.l.b16 %v54
    %v208 = vunpack.c.h.b16 %v54
    %v209 = vunpack.c.l.b16 %v55
    %v210 = vunpack.c.l.b16 %v56
    %v211 = vunpack.c.h.b16 %v56
    %v212 = vunpack.c.l.b16 %v57
    %v213 = vunpack.c.l.b16 %v58
    %v214 = vunpack.c.h.b16 %v58
    %v215 = vunpack.c.l.b16 %v59
    %v216 = vunpack.c.l.b16 %v60
    %v217 = vunpack.c.h.b16 %v60
    %v218 = vunpack.c.l.b16 %v61
    %v219 = vunpack.c.l.b16 %v62
    %v220 = vunpack.c.h.b16 %v62
    %v221 = vunpack.c.l.b16 %v63
    %v222 = vunpack.c.l.b16 %v64
    %v223 = vunpack.c.h.b16 %v64
    %v224 = vunpack.c.l.b16 %v65
    %v225 = vunpack.c.l.b16 %v66
    %v226 = vunpack.c.h.b16 %v66
    %v227 = vunpack.c.l.b16 %v67
    %v228 = vunpack.c.l.b16 %v68
    %v229 = vunpack.c.h.b16 %v68
    %v230 = vunpack.c.l.b16 %v69
    %v231 = vunpack.c.l.b16 %v70
    %v232 = vunpack.c.h.b16 %v70
    %v233 = vunpack.c.l.b16 %v71
    %v234 = vunpack.c.l.b16 %v72
    %v235 = vunpack.c.h.b16 %v72
    %v236 = vunpack.c.l.b16 %v73
    %v237 = vunpack.c.l.b16 %v74
    %v238 = vunpack.c.h.b16 %v74
    %v239 = vunpack.c.l.b16 %v75
    %v240 = vunpack.c.l.b16 %v76
    %v241 = vunpack.c.h.b16 %v76
    %v242 = vunpack.c.l.b16 %v77
    %v243 = vunpack.c.l.b16 %v78
    %v244 = vunpack.c.h.b16 %v78
    %v245 = vunpack.c.l.b16 %v79
    %v246 = vunpack.c.l.b16 %v80
    %v247 = vunpack.c.h.b16 %v80
    %v248 = vunpack.c.l.b16 %v81
    %v249 = vunpack.c.l.b16 %v82
    %v250 = vunpack.c.h.b16 %v82
    %v251 = vunpack.c.l.b16 %v83
    %v252 = vunpack.c.l.b16 %v84
    %v253 = vunpack.c.h.b16 %v84
    %v254 = vunpack.c.l.b16 %v85
    %v255 = vunpack.c.l.b16 %v86
    %v256 = vunpack.c.h.b16 %v86
    %v257 = vunpack.c.l.b16 %v87
    %v258 = vunpack.c.l.b16 %v88
    %v259 = vunpack.c.h.b16 %v88
    %v260 = vunpack.c.l.b16 %v89
    %v261 = vunpack.c.l.b16 %v90
    %v262 = vunpack.c.h.b16 %v90
    %v263 = vunpack.c.l.b16 %v91
    %v264 = vunpack.c.l.b16 %v92
    %v265 = vunpack.c.h.b16 %v92
    %v266 = vunpack.c.l.b16 %v93
    %v267 = vunpack.c.l.b16 %v94
    %v268 = vunpack.c.h.b16 %v94
    %v269 = vunpack.c.l.b16 %v95
    %v270 = vunpack.c.l.b16 %v96
    %v271 = vunpack.c.h.b16 %v96
    %v272 = vunpack.c.l.b16 %v97
    %v273 = vunpack.c.l.b16 %v98
    %v274 = vunpack.c.h.b16 %v98
    %v275 = vunpack.c.l.b16 %v99
    %v276 = vunpack.c.l.b16 %v100
    %v277 = vunpack.c.h.b16 %v100
    %v278 = vunpack.c.l.b16 %v101
    %v279 = vunpack.c.l.b16 %v102
    %v280 = vunpack.c.h.b16 %v102
    %v281 = vunpack.c.l.b16 %v103
    %v282 = vunpack.c.l.b16 %v104
    %v283 = vunpack.c.h.b16 %v104
    %v284 = vunpack.c.l.b16 %v105
    %v285 = vunpack.c.l.b16 %v106
    %v286 = vunpack.c.h.b16 %v106
    %v287 = vunpack.c.l.b16 %v107
    %v288 = vunpack.c.l.b16 %v108
    %v289 = vunpack.c.h.b16 %v108
    %v290 = vunpack.c.l.b16 %v109
    %v291 = vunpack.c.l.b16 %v110
    %v292 = vunpack.c.h.b16 %v110
    %v293 = vunpack.c.l.b16 %v111
    %v294 = vunpack.c.l.b16 %v112
    %v295 = vunpack.c.h.b16 %v112
    %v296 = vunpack.c.l.b16 %v113
    %v297 = vunpack.c.l.b16 %v114
    %v298 = vunpack.c.h.b16 %v114
    %v299 = vunpack.c.l.b16 %v115
    %v300 = vpack.c.b16 %v207, %v204
    %v301 = vpack.c.b16 %v208, %v205
    %v302 = vpack.c.b16 %v209, %v206
    %v303 = vpack.c.b16 %v213, %v210
    %v304 = vpack.c.b16 %v214, %v211
    %v305 = vpack.c.b16 %v215, %v212
    %v306 = vpack.c.b16 %v219, %v216
    %v307 = vpack.c.b16 %v220, %v217
    %v308 = vpack.c.b16 %v221, %v218
    %v309 = vpack.c.b16 %v225, %v222
    %v310 = vpack.c.b16 %v226, %v223
    %v311 = vpack.c.b16 %v227, %v224
    %v312 = vpack.c.b16 %v231, %v228
    %v313 = vpack.c.b16 %v232, %v229
    %v314 = vpack.c.b16 %v233, %v230
    %v315 = vpack.c.b16 %v237, %v234
    %v316 = vpack.c.b16 %v238, %v235
    %v317 = vpack.c.b16 %v239, %v236
    %v318 = vpack.c.b16 %v243, %v240
    %v319 = vpack.c.b16 %v244, %v241
    %v320 = vpack.c.b16 %v245, %v242
    %v321 = vpack.c.b16 %v249, %v246
    %v322 = vpack.c.b16 %v250, %v247
    %v323 = vpack.c.b16 %v251, %v248
    %v324 = vpack.c.b16 %v255, %v252
    %v325 = vpack.c.b16 %v256, %v253
    %v326 = vpack.c.b16 %v257, %v254
    %v327 = vpack.c.b16 %v261, %v258
    %v328 = vpack.c.b16 %v262, %v259
    %v329 = vpack.c.b16 %v263, %v260
    %v330 = vpack.c.b16 %v267, %v264
    %v331 = vpack.c.b16 %v268, %v265
    %v332 = vpack.c.b16 %v269, %v266
    %v333 = vpack.c.b16 %v273, %v270
    %v334 = vpack.c.b16 %v274, %v271
    %v335 = vpack.c.b16 %v275, %v272
    %v336 = vpack.c.b16 %v279, %v276
    %v337 = vpack.c.b16 %v280, %v277
    %v338 = vpack.c.b16 %v281, %v278
    %v339 = vpack.c.b16 %v285, %v282
    %v340 = vpack.c.b16 %v286, %v283
    %v341 = vpack.c.b16 %v287, %v284
    %v342 = vpack.c.b16 %v291, %v288
    %v343 = vpack.c.b16 %v292, %v289
    %v344 = vpack.c.b16 %v293, %v290
    %v345 = vpack.c.b16 %v297, %v294
    %v346 = vpack.c.b16 %v298, %v295
    %v347 = vpack.c.b16 %v299, %v296
    %396 = vmatprep.subr.bf16.mxu0 %v301
    %397 = vmatpush1.bf16.msra.mxu0 %v300
    %398 = vmatprep.subr.bf16.mxu0 %v304
    %399 = vmatpush1.bf16.msra.mxu0 %v303
    %400 = vmatprep.subr.bf16.mxu0 %v307
    %401 = vmatpush1.bf16.msra.mxu0 %v306
    %402 = vmatprep.subr.bf16.mxu0 %v310
    %403 = vmatpush1.bf16.msra.mxu0 %v309
    %404 = vmatprep.subr.bf16.mxu0 %v313
    %405 = vmatpush1.bf16.msra.mxu0 %v312
    %406 = vmatprep.subr.bf16.mxu0 %v316
    %407 = vmatpush1.bf16.msra.mxu0 %v315
    %408 = vmatprep.subr.bf16.mxu0 %v319
    %409 = vmatpush1.bf16.msra.mxu0 %v318
    %410 = vmatprep.subr.bf16.mxu0 %v322
    %411 = vmatpush1.bf16.msra.mxu0 %v321
    %412 = vmatprep.subr.bf16.mxu0 %v325
    %413 = vmatpush1.bf16.msra.mxu0 %v324
    %414 = vmatprep.subr.bf16.mxu0 %v328
    %415 = vmatpush1.bf16.msra.mxu0 %v327
    %416 = vmatprep.subr.bf16.mxu0 %v331
    %417 = vmatpush1.bf16.msra.mxu0 %v330
    %418 = vmatprep.subr.bf16.mxu0 %v334
    %419 = vmatpush1.bf16.msra.mxu0 %v333
    %420 = vmatprep.subr.bf16.mxu0 %v337
    %421 = vmatpush1.bf16.msra.mxu0 %v336
    %422 = vmatprep.subr.bf16.mxu0 %v340
    %423 = vmatpush1.bf16.msra.mxu0 %v339
    %424 = vmatprep.subr.bf16.mxu0 %v343
    %425 = vmatpush1.bf16.msra.mxu0 %v342
    %426 = vmatprep.subr.bf16.mxu0 %v346
    %427 = vmatpush1.bf16.msra.mxu0 %v345
    %428 = vmatprep.mubr.bf16.mxu0 %v137
    %429 = vmatmul.mubr.bf16.gmra.mrb[0].mxu0 %v136
    %v430 = vpop.f32.mrb[0].mxu0
    %v431 = vadd.f32 %v121, %v430
    %v432 = vpop.f32.mrb[0].mxu0
    %v433 = vadd.f32 %v125, %v432
    %v434 = vpop.f32.mrb[0].mxu0
    %v435 = vpop.f32.mrb[0].mxu0
    %436 = vdwg.mxu0
    %437 = vmatprep.subr.bf16.mxu0 0
    %438 = vmatpush1.bf16.msra.mxu0 %v302
    %439 = vmatprep.subr.bf16.mxu0 0
    %440 = vmatpush1.bf16.msra.mxu0 %v305
    %441 = vmatprep.subr.bf16.mxu0 0
    %442 = vmatpush1.bf16.msra.mxu0 %v308
    %443 = vmatprep.subr.bf16.mxu0 0
    %444 = vmatpush1.bf16.msra.mxu0 %v311
    %445 = vmatprep.subr.bf16.mxu0 0
    %446 = vmatpush1.bf16.msra.mxu0 %v314
    %447 = vmatprep.subr.bf16.mxu0 0
    %448 = vmatpush1.bf16.msra.mxu0 %v317
    %449 = vmatprep.subr.bf16.mxu0 0
    %450 = vmatpush1.bf16.msra.mxu0 %v320
    %451 = vmatprep.subr.bf16.mxu0 0
    %452 = vmatpush1.bf16.msra.mxu0 %v323
    %453 = vmatprep.subr.bf16.mxu0 0
    %454 = vmatpush1.bf16.msra.mxu0 %v326
    %455 = vmatprep.subr.bf16.mxu0 0
    %456 = vmatpush1.bf16.msra.mxu0 %v329
    %457 = vmatprep.subr.bf16.mxu0 0
    %458 = vmatpush1.bf16.msra.mxu0 %v332
    %459 = vmatprep.subr.bf16.mxu0 0
    %460 = vmatpush1.bf16.msra.mxu0 %v335
    %461 = vmatprep.subr.bf16.mxu0 0
    %462 = vmatpush1.bf16.msra.mxu0 %v338
    %463 = vmatprep.subr.bf16.mxu0 0
    %464 = vmatpush1.bf16.msra.mxu0 %v341
    %465 = vmatprep.subr.bf16.mxu0 0
    %466 = vmatpush1.bf16.msra.mxu0 %v344
    %467 = vmatprep.subr.bf16.mxu0 0
    %468 = vmatpush1.bf16.msra.mxu0 %v347
    %469 = vmatprep.mubr.bf16.mxu0 %v137
    %470 = vmatmul.mubr.bf16.gmra.mrb[0].mxu0 %v136
    %v471 = vpop.f32.mrb[0].mxu0
    %v472 = vadd.f32 %v129, %v471
    %v473 = vpop.f32.mrb[0].mxu0
    %v474 = vpop.f32.mrb[0].mxu0
    %v475 = vpop.f32.mrb[0].mxu0
    %476 = vdwg.mxu0
    %477 = vst [vmem:[#allocation2] sm:$0xff] %v431
    %478 = vst [vmem:[#allocation2 + $0x8] sm:$0xff] %v433
    %479 = vst [vmem:[#allocation2 + $0x10] sm:$0xff] %v472
    %v480 = vld [vmem:[%s8] sm:$0x1]
    %v481 = vld [vmem:[%s9] sm:$0x7]
    %v482 = vld [vmem:[%s10] sm:$0x1]
    %v483 = vld [vmem:[%s1] sm:$0x1]
    %v484 = vld [vmem:[%s2] sm:$0x1]
    %v485 = vpack.c.bf16 %v483, %v483
    %v486 = vld [vmem:[%s4] sm:$0xff]
    %v487 = vld [vmem:[%s4 + $0x8] sm:$0xf]
    %v488 = vld [vmem:[%s4 + $0xc] sm:$0xff]
    %v489 = vld [vmem:[%s4 + $0x14] sm:$0xf]
    %v490 = vld [vmem:[%s4 + $0x18] sm:$0xff]
    %v491 = vld [vmem:[%s4 + $0x20] sm:$0xf]
    %v492 = vld [vmem:[%s4 + $0x24] sm:$0xff]
    %v493 = vld [vmem:[%s4 + $0x2c] sm:$0xf]
    %v494 = vld [vmem:[%s4 + $0x30] sm:$0xff]
    %v495 = vld [vmem:[%s4 + $0x38] sm:$0xf]
    %v496 = vld [vmem:[%s4 + $0x3c] sm:$0xff]
    %v497 = vld [vmem:[%s4 + $0x44] sm:$0xf]
    %v498 = vld [vmem:[%s4 + $0x48] sm:$0xff]
    %v499 = vld [vmem:[%s4 + $0x50] sm:$0xf]
    %v500 = vld [vmem:[%s4 + $0x54] sm:$0xff]
    %v501 = vld [vmem:[%s4 + $0x5c] sm:$0xf]
    %v502 = vld [vmem:[%s4 + $0x60] sm:$0xff]
    %v503 = vld [vmem:[%s4 + $0x68] sm:$0xf]
    %v504 = vld [vmem:[%s4 + $0x6c] sm:$0xff]
    %v505 = vld [vmem:[%s4 + $0x74] sm:$0xf]
    %v506 = vld [vmem:[%s4 + $0x78] sm:$0xff]
    %v507 = vld [vmem:[%s4 + $0x80] sm:$0xf]
    %v508 = vld [vmem:[%s4 + $0x84] sm:$0xff]
    %v509 = vld [vmem:[%s4 + $0x8c] sm:$0xf]
    %v510 = vld [vmem:[%s4 + $0x90] sm:$0xff]
    %v511 = vld [vmem:[%s4 + $0x98] sm:$0xf]
    %v512 = vld [vmem:[%s4 + $0x9c] sm:$0xff]
    %v513 = vld [vmem:[%s4 + $0xa4] sm:$0xf]
    %v514 = vld [vmem:[%s4 + $0xa8] sm:$0xff]
    %v515 = vld [vmem:[%s4 + $0xb0] sm:$0xf]
    %v516 = vld [vmem:[%s4 + $0xb4] sm:$0xff]
    %v517 = vld [vmem:[%s4 + $0xbc] sm:$0xf]
    %v550 = vunpack.c.l.b16 %v486
    %v551 = vunpack.c.h.b16 %v486
    %v552 = vunpack.c.l.b16 %v487
    %v553 = vunpack.c.l.b16 %v488
    %v554 = vunpack.c.h.b16 %v488
    %v555 = vunpack.c.l.b16 %v489
    %v556 = vunpack.c.l.b16 %v490
    %v557 = vunpack.c.h.b16 %v490
    %v558 = vunpack.c.l.b16 %v491
    %v559 = vunpack.c.l.b16 %v492
    %v560 = vunpack.c.h.b16 %v492
    %v561 = vunpack.c.l.b16 %v493
    %v562 = vunpack.c.l.b16 %v494
    %v563 = vunpack.c.h.b16 %v494
    %v564 = vunpack.c.l.b16 %v495
    %v565 = vunpack.c.l.b16 %v496
    %v566 = vunpack.c.h.b16 %v496
    %v567 = vunpack.c.l.b16 %v497
    %v568 = vunpack.c.l.b16 %v498
    %v569 = vunpack.c.h.b16 %v498
    %v570 = vunpack.c.l.b16 %v499
    %v571 = vunpack.c.l.b16 %v500
    %v572 = vunpack.c.h.b16 %v500
    %v573 = vunpack.c.l.b16 %v501
    %v574 = vunpack.c.l.b16 %v502
    %v575 = vunpack.c.h.b16 %v502
    %v576 = vunpack.c.l.b16 %v503
    %v577 = vunpack.c.l.b16 %v504
    %v578 = vunpack.c.h.b16 %v504
    %v579 = vunpack.c.l.b16 %v505
    %v580 = vunpack.c.l.b16 %v506
    %v581 = vunpack.c.h.b16 %v506
    %v582 = vunpack.c.l.b16 %v507
    %v583 = vunpack.c.l.b16 %v508
    %v584 = vunpack.c.h.b16 %v508
    %v585 = vunpack.c.l.b16 %v509
    %v586 = vunpack.c.l.b16 %v510
    %v587 = vunpack.c.h.b16 %v510
    %v588 = vunpack.c.l.b16 %v511
    %v589 = vunpack.c.l.b16 %v512
    %v590 = vunpack.c.h.b16 %v512
    %v591 = vunpack.c.l.b16 %v513
    %v592 = vunpack.c.l.b16 %v514
    %v593 = vunpack.c.h.b16 %v514
    %v594 = vunpack.c.l.b16 %v515
    %v595 = vunpack.c.l.b16 %v516
    %v596 = vunpack.c.h.b16 %v516
    %v597 = vunpack.c.l.b16 %v517
    %v598 = vpack.c.b16 %v553, %v550
    %v599 = vpack.c.b16 %v554, %v551
    %v600 = vpack.c.b16 %v555, %v552
    %v601 = vpack.c.b16 %v559, %v556
    %v602 = vpack.c.b16 %v560, %v557
    %v603 = vpack.c.b16 %v561, %v558
    %v604 = vpack.c.b16 %v565, %v562
    %v605 = vpack.c.b16 %v566, %v563
    %v606 = vpack.c.b16 %v567, %v564
    %v607 = vpack.c.b16 %v571, %v568
    %v608 = vpack.c.b16 %v572, %v569
    %v609 = vpack.c.b16 %v573, %v570
    %v610 = vpack.c.b16 %v577, %v574
    %v611 = vpack.c.b16 %v578, %v575
    %v612 = vpack.c.b16 %v579, %v576
    %v613 = vpack.c.b16 %v583, %v580
    %v614 = vpack.c.b16 %v584, %v581
    %v615 = vpack.c.b16 %v585, %v582
    %v616 = vpack.c.b16 %v589, %v586
    %v617 = vpack.c.b16 %v590, %v587
    %v618 = vpack.c.b16 %v591, %v588
    %v619 = vpack.c.b16 %v595, %v592
    %v620 = vpack.c.b16 %v596, %v593
    %v621 = vpack.c.b16 %v597, %v594
    %646 = vmatprep.subr.bf16.mxu0 %v599
    %647 = vmatpush1.bf16.msra.mxu0 %v598
    %648 = vmatprep.subr.bf16.mxu0 %v602
    %649 = vmatpush1.bf16.msra.mxu0 %v601
    %650 = vmatprep.subr.bf16.mxu0 %v605
    %651 = vmatpush1.bf16.msra.mxu0 %v604
    %652 = vmatprep.subr.bf16.mxu0 %v608
    %653 = vmatpush1.bf16.msra.mxu0 %v607
    %654 = vmatprep.subr.bf16.mxu0 %v611
    %655 = vmatpush1.bf16.msra.mxu0 %v610
    %656 = vmatprep.subr.bf16.mxu0 %v614
    %657 = vmatpush1.bf16.msra.mxu0 %v613
    %658 = vmatprep.subr.bf16.mxu0 %v617
    %659 = vmatpush1.bf16.msra.mxu0 %v616
    %660 = vmatprep.subr.bf16.mxu0 %v620
    %661 = vmatpush1.bf16.msra.mxu0 %v619
    %662 = vmatprep.subr.bf16.mxu0 0
    %663 = vmatpush1.bf16.msra.mxu0 0
    %664 = vmatprep.subr.bf16.mxu0 0
    %665 = vmatpush1.bf16.msra.mxu0 0
    %666 = vmatprep.subr.bf16.mxu0 0
    %667 = vmatpush1.bf16.msra.mxu0 0
    %668 = vmatprep.subr.bf16.mxu0 0
    %669 = vmatpush1.bf16.msra.mxu0 0
    %670 = vmatprep.subr.bf16.mxu0 0
    %671 = vmatpush1.bf16.msra.mxu0 0
    %672 = vmatprep.subr.bf16.mxu0 0
    %673 = vmatpush1.bf16.msra.mxu0 0
    %674 = vmatprep.subr.bf16.mxu0 0
    %675 = vmatpush1.bf16.msra.mxu0 0
    %676 = vmatprep.subr.bf16.mxu0 0
    %677 = vmatpush1.bf16.msra.mxu0 0
    %678 = vmatprep.mubr.bf16.mxu0 0
    %679 = vmatmul.mubr.bf16.gmra.mrb[0].mxu0 %v485
    %v680 = vpop.f32.mrb[0].mxu0
    %v681 = vadd.f32 0.0, %v680
    %v682 = vpop.f32.mrb[0].mxu0
    %v683 = vadd.f32 0.0, %v682
    %v684 = vpop.f32.mrb[0].mxu0
    %v685 = vpop.f32.mrb[0].mxu0
    %686 = vdwg.mxu0
    %687 = vmatprep.subr.bf16.mxu0 0
    %688 = vmatpush1.bf16.msra.mxu0 %v600
    %689 = vmatprep.subr.bf16.mxu0 0
    %690 = vmatpush1.bf16.msra.mxu0 %v603
    %691 = vmatprep.subr.bf16.mxu0 0
    %692 = vmatpush1.bf16.msra.mxu0 %v606
    %693 = vmatprep.subr.bf16.mxu0 0
    %694 = vmatpush1.bf16.msra.mxu0 %v609
    %695 = vmatprep.subr.bf16.mxu0 0
    %696 = vmatpush1.bf16.msra.mxu0 %v612
    %697 = vmatprep.subr.bf16.mxu0 0
    %698 = vmatpush1.bf16.msra.mxu0 %v615
    %699 = vmatprep.subr.bf16.mxu0 0
    %700 = vmatpush1.bf16.msra.mxu0 %v618
    %701 = vmatprep.subr.bf16.mxu0 0
    %702 = vmatpush1.bf16.msra.mxu0 %v621
    %703 = vmatprep.subr.bf16.mxu0 0
    %704 = vmatpush1.bf16.msra.mxu0 0
    %705 = vmatprep.subr.bf16.mxu0 0
    %706 = vmatpush1.bf16.msra.mxu0 0
    %707 = vmatprep.subr.bf16.mxu0 0
    %708 = vmatpush1.bf16.msra.mxu0 0
    %709 = vmatprep.subr.bf16.mxu0 0
    %710 = vmatpush1.bf16.msra.mxu0 0
    %711 = vmatprep.subr.bf16.mxu0 0
    %712 = vmatpush1.bf16.msra.mxu0 0
    %713 = vmatprep.subr.bf16.mxu0 0
    %714 = vmatpush1.bf16.msra.mxu0 0
    %715 = vmatprep.subr.bf16.mxu0 0
    %716 = vmatpush1.bf16.msra.mxu0 0
    %717 = vmatprep.subr.bf16.mxu0 0
    %718 = vmatpush1.bf16.msra.mxu0 0
    %719 = vmatprep.mubr.bf16.mxu0 0
    %720 = vmatmul.mubr.bf16.gmra.mrb[0].mxu0 %v485
    %v721 = vpop.f32.mrb[0].mxu0
    %v722 = vadd.f32 0.0, %v721
    %v723 = vpop.f32.mrb[0].mxu0
    %v724 = vpop.f32.mrb[0].mxu0
    %v725 = vpop.f32.mrb[0].mxu0
    %726 = vdwg.mxu0
    %v727 = vld [vmem:[#allocation2] ss:$8 sm:$0x7]
    %v730 = vcombine.low %v681, %v683
    %v732 = vunpack.c.l.s4 1966171168
    %v733 = vunpack.c.0.s8 %v732
    %v734 = vlaneseq
    %v735 = vshrl.u32 %v734, 7
    %v736 = vsub.s32 %v733, %v735
    %v737 = vrot.slane %v730, %v736
    %v739 = vunpack.c.l.s4 1966171168
    %v740 = vunpack.c.0.s8 %v739
    %v741 = vlaneseq
    %v742 = vshrl.u32 %v741, 7
    %v743 = vsub.s32 %v740, %v742
    %v744 = vrot.slane %v737, %v743
    %v746 = vadd.f32 %v727, %v744
    %v747 = vxor.u32 %v746, 2147483648
    %v748 = vmul.f32 %v747, 1.442695
    %v749 = vpow.pop %v748
    %v750 = vadd.f32 %v749, 1.0
    %v751 = vrcp.pop %v750
    %v752 = vmul.f32 1.0, %v751
    %v753 = vadd.f32 %v722, %v480
    %v754 = vmul.f32 %v752, %v753
    %v756 = vrot.slane %v727, 2
    %v758 = vadd.f32 %v756, %v754
    %v759 = vtanh.pop %v758
    %v760 = vsub.f32 %v483, %v759
    %v762 = vrot.slane %v752, 1
    %v764 = vmul.f32 %v762, %v760
    %v765 = vadd.f32 %v759, %v764
    %v766 = vpack.c.bf16 %v765, %v765
    %v767 = vld [vmem:[%s5] sm:$0xff]
    %v768 = vld [vmem:[%s5 + $0x8] sm:$0xf]
    %v769 = vld [vmem:[%s5 + $0xc] sm:$0xff]
    %v770 = vld [vmem:[%s5 + $0x14] sm:$0xf]
    %v771 = vld [vmem:[%s5 + $0x18] sm:$0xff]
    %v772 = vld [vmem:[%s5 + $0x20] sm:$0xf]
    %v773 = vld [vmem:[%s5 + $0x24] sm:$0xff]
    %v774 = vld [vmem:[%s5 + $0x2c] sm:$0xf]
    %v775 = vld [vmem:[%s5 + $0x30] sm:$0xff]
    %v776 = vld [vmem:[%s5 + $0x38] sm:$0xf]
    %v777 = vld [vmem:[%s5 + $0x3c] sm:$0xff]
    %v778 = vld [vmem:[%s5 + $0x44] sm:$0xf]
    %v779 = vld [vmem:[%s5 + $0x48] sm:$0xff]
    %v780 = vld [vmem:[%s5 + $0x50] sm:$0xf]
    %v781 = vld [vmem:[%s5 + $0x54] sm:$0xff]
    %v782 = vld [vmem:[%s5 + $0x5c] sm:$0xf]
    %v783 = vld [vmem:[%s5 + $0x60] sm:$0xff]
    %v784 = vld [vmem:[%s5 + $0x68] sm:$0xf]
    %v785 = vld [vmem:[%s5 + $0x6c] sm:$0xff]
    %v786 = vld [vmem:[%s5 + $0x74] sm:$0xf]
    %v787 = vld [vmem:[%s5 + $0x78] sm:$0xff]
    %v788 = vld [vmem:[%s5 + $0x80] sm:$0xf]
    %v789 = vld [vmem:[%s5 + $0x84] sm:$0xff]
    %v790 = vld [vmem:[%s5 + $0x8c] sm:$0xf]
    %v791 = vld [vmem:[%s5 + $0x90] sm:$0xff]
    %v792 = vld [vmem:[%s5 + $0x98] sm:$0xf]
    %v793 = vld [vmem:[%s5 + $0x9c] sm:$0xff]
    %v794 = vld [vmem:[%s5 + $0xa4] sm:$0xf]
    %v795 = vld [vmem:[%s5 + $0xa8] sm:$0xff]
    %v796 = vld [vmem:[%s5 + $0xb0] sm:$0xf]
    %v797 = vld [vmem:[%s5 + $0xb4] sm:$0xff]
    %v798 = vld [vmem:[%s5 + $0xbc] sm:$0xf]
    %v831 = vunpack.c.l.b16 %v767
    %v832 = vunpack.c.h.b16 %v767
    %v833 = vunpack.c.l.b16 %v768
    %v834 = vunpack.c.l.b16 %v769
    %v835 = vunpack.c.h.b16 %v769
    %v836 = vunpack.c.l.b16 %v770
    %v837 = vunpack.c.l.b16 %v771
    %v838 = vunpack.c.h.b16 %v771
    %v839 = vunpack.c.l.b16 %v772
    %v840 = vunpack.c.l.b16 %v773
    %v841 = vunpack.c.h.b16 %v773
    %v842 = vunpack.c.l.b16 %v774
    %v843 = vunpack.c.l.b16 %v775
    %v844 = vunpack.c.h.b16 %v775
    %v845 = vunpack.c.l.b16 %v776
    %v846 = vunpack.c.l.b16 %v777
    %v847 = vunpack.c.h.b16 %v777
    %v848 = vunpack.c.l.b16 %v778
    %v849 = vunpack.c.l.b16 %v779
    %v850 = vunpack.c.h.b16 %v779
    %v851 = vunpack.c.l.b16 %v780
    %v852 = vunpack.c.l.b16 %v781
    %v853 = vunpack.c.h.b16 %v781
    %v854 = vunpack.c.l.b16 %v782
    %v855 = vunpack.c.l.b16 %v783
    %v856 = vunpack.c.h.b16 %v783
    %v857 = vunpack.c.l.b16 %v784
    %v858 = vunpack.c.l.b16 %v785
    %v859 = vunpack.c.h.b16 %v785
    %v860 = vunpack.c.l.b16 %v786
    %v861 = vunpack.c.l.b16 %v787
    %v862 = vunpack.c.h.b16 %v787
    %v863 = vunpack.c.l.b16 %v788
    %v864 = vunpack.c.l.b16 %v789
    %v865 = vunpack.c.h.b16 %v789
    %v866 = vunpack.c.l.b16 %v790
    %v867 = vunpack.c.l.b16 %v791
    %v868 = vunpack.c.h.b16 %v791
    %v869 = vunpack.c.l.b16 %v792
    %v870 = vunpack.c.l.b16 %v793
    %v871 = vunpack.c.h.b16 %v793
    %v872 = vunpack.c.l.b16 %v794
    %v873 = vunpack.c.l.b16 %v795
    %v874 = vunpack.c.h.b16 %v795
    %v875 = vunpack.c.l.b16 %v796
    %v876 = vunpack.c.l.b16 %v797
    %v877 = vunpack.c.h.b16 %v797
    %v878 = vunpack.c.l.b16 %v798
    %v879 = vpack.c.b16 %v834, %v831
    %v880 = vpack.c.b16 %v835, %v832
    %v881 = vpack.c.b16 %v836, %v833
    %v882 = vpack.c.b16 %v840, %v837
    %v883 = vpack.c.b16 %v841, %v838
    %v884 = vpack.c.b16 %v842, %v839
    %v885 = vpack.c.b16 %v846, %v843
    %v886 = vpack.c.b16 %v847, %v844
    %v887 = vpack.c.b16 %v848, %v845
    %v888 = vpack.c.b16 %v852, %v849
    %v889 = vpack.c.b16 %v853, %v850
    %v890 = vpack.c.b16 %v854, %v851
    %v891 = vpack.c.b16 %v858, %v855
    %v892 = vpack.c.b16 %v859, %v856
    %v893 = vpack.c.b16 %v860, %v857
    %v894 = vpack.c.b16 %v864, %v861
    %v895 = vpack.c.b16 %v865, %v862
    %v896 = vpack.c.b16 %v866, %v863
    %v897 = vpack.c.b16 %v870, %v867
    %v898 = vpack.c.b16 %v871, %v868
    %v899 = vpack.c.b16 %v872, %v869
    %v900 = vpack.c.b16 %v876, %v873
    %v901 = vpack.c.b16 %v877, %v874
    %v902 = vpack.c.b16 %v878, %v875
    %v928 = vlaneseq
    %v929 = vshrl.u32 %v928, 7
    %v930 = vsub.s32 0, %v929
    %v931 = vrot.slane %v481, %v930
    %v932 = vlaneseq
    %v933 = vshrl.u32 %v932, 7
    %v934 = vsub.s32 1, %v933
    %v935 = vrot.slane %v481, %v934
    %v936 = vlaneseq
    %v937 = vshrl.u32 %v936, 7
    %v938 = vsub.s32 2, %v937
    %v939 = vrot.slane %v481, %v938
    %943 = vmatprep.subr.bf16.mxu0 %v880
    %944 = vmatpush1.bf16.msra.mxu0 %v879
    %945 = vmatprep.subr.bf16.mxu0 %v883
    %946 = vmatpush1.bf16.msra.mxu0 %v882
    %947 = vmatprep.subr.bf16.mxu0 %v886
    %948 = vmatpush1.bf16.msra.mxu0 %v885
    %949 = vmatprep.subr.bf16.mxu0 %v889
    %950 = vmatpush1.bf16.msra.mxu0 %v888
    %951 = vmatprep.subr.bf16.mxu0 %v892
    %952 = vmatpush1.bf16.msra.mxu0 %v891
    %953 = vmatprep.subr.bf16.mxu0 %v895
    %954 = vmatpush1.bf16.msra.mxu0 %v894
    %955 = vmatprep.subr.bf16.mxu0 %v898
    %956 = vmatpush1.bf16.msra.mxu0 %v897
    %957 = vmatprep.subr.bf16.mxu0 %v901
    %958 = vmatpush1.bf16.msra.mxu0 %v900
    %959 = vmatprep.subr.bf16.mxu0 0
    %960 = vmatpush1.bf16.msra.mxu0 0
    %961 = vmatprep.subr.bf16.mxu0 0
    %962 = vmatpush1.bf16.msra.mxu0 0
    %963 = vmatprep.subr.bf16.mxu0 0
    %964 = vmatpush1.bf16.msra.mxu0 0
    %965 = vmatprep.subr.bf16.mxu0 0
    %966 = vmatpush1.bf16.msra.mxu0 0
    %967 = vmatprep.subr.bf16.mxu0 0
    %968 = vmatpush1.bf16.msra.mxu0 0
    %969 = vmatprep.subr.bf16.mxu0 0
    %970 = vmatpush1.bf16.msra.mxu0 0
    %971 = vmatprep.subr.bf16.mxu0 0
    %972 = vmatpush1.bf16.msra.mxu0 0
    %973 = vmatprep.subr.bf16.mxu0 0
    %974 = vmatpush1.bf16.msra.mxu0 0
    %975 = vmatprep.mubr.bf16.mxu0 0
    %976 = vmatmul.mubr.bf16.gmra.mrb[0].mxu0 %v766
    %v977 = vpop.f32.mrb[0].mxu0
    %v978 = vadd.f32 %v931, %v977
    %v979 = vpop.f32.mrb[0].mxu0
    %v980 = vadd.f32 %v935, %v979
    %v981 = vpop.f32.mrb[0].mxu0
    %v982 = vpop.f32.mrb[0].mxu0
    %983 = vdwg.mxu0
    %984 = vmatprep.subr.bf16.mxu0 0
    %985 = vmatpush1.bf16.msra.mxu0 %v881
    %986 = vmatprep.subr.bf16.mxu0 0
    %987 = vmatpush1.bf16.msra.mxu0 %v884
    %988 = vmatprep.subr.bf16.mxu0 0
    %989 = vmatpush1.bf16.msra.mxu0 %v887
    %990 = vmatprep.subr.bf16.mxu0 0
    %991 = vmatpush1.bf16.msra.mxu0 %v890
    %992 = vmatprep.subr.bf16.mxu0 0
    %993 = vmatpush1.bf16.msra.mxu0 %v893
    %994 = vmatprep.subr.bf16.mxu0 0
    %995 = vmatpush1.bf16.msra.mxu0 %v896
    %996 = vmatprep.subr.bf16.mxu0 0
    %997 = vmatpush1.bf16.msra.mxu0 %v899
    %998 = vmatprep.subr.bf16.mxu0 0
    %999 = vmatpush1.bf16.msra.mxu0 %v902
    %1000 = vmatprep.subr.bf16.mxu0 0
    %1001 = vmatpush1.bf16.msra.mxu0 0
    %1002 = vmatprep.subr.bf16.mxu0 0
    %1003 = vmatpush1.bf16.msra.mxu0 0
    %1004 = vmatprep.subr.bf16.mxu0 0
    %1005 = vmatpush1.bf16.msra.mxu0 0
    %1006 = vmatprep.subr.bf16.mxu0 0
    %1007 = vmatpush1.bf16.msra.mxu0 0
    %1008 = vmatprep.subr.bf16.mxu0 0
    %1009 = vmatpush1.bf16.msra.mxu0 0
    %1010 = vmatprep.subr.bf16.mxu0 0
    %1011 = vmatpush1.bf16.msra.mxu0 0
    %1012 = vmatprep.subr.bf16.mxu0 0
    %1013 = vmatpush1.bf16.msra.mxu0 0
    %1014 = vmatprep.subr.bf16.mxu0 0
    %1015 = vmatpush1.bf16.msra.mxu0 0
    %1016 = vmatprep.mubr.bf16.mxu0 0
    %1017 = vmatmul.mubr.bf16.gmra.mrb[0].mxu0 %v766
    %v1018 = vpop.f32.mrb[0].mxu0
    %v1019 = vadd.f32 %v939, %v1018
    %v1020 = vpop.f32.mrb[0].mxu0
    %v1021 = vpop.f32.mrb[0].mxu0
    %v1022 = vpop.f32.mrb[0].mxu0
    %1023 = vdwg.mxu0
    %v1024 = vpack.c.bf16 %v484, %v484
    %v1025 = vld [vmem:[%s6] sm:$0xff]
    %v1026 = vld [vmem:[%s6 + $0x8] sm:$0xf]
    %v1027 = vld [vmem:[%s6 + $0xc] sm:$0xff]
    %v1028 = vld [vmem:[%s6 + $0x14] sm:$0xf]
    %v1029 = vld [vmem:[%s6 + $0x18] sm:$0xff]
    %v1030 = vld [vmem:[%s6 + $0x20] sm:$0xf]
    %v1031 = vld [vmem:[%s6 + $0x24] sm:$0xff]
    %v1032 = vld [vmem:[%s6 + $0x2c] sm:$0xf]
    %v1033 = vld [vmem:[%s6 + $0x30] sm:$0xff]
    %v1034 = vld [vmem:[%s6 + $0x38] sm:$0xf]
    %v1035 = vld [vmem:[%s6 + $0x3c] sm:$0xff]
    %v1036 = vld [vmem:[%s6 + $0x44] sm:$0xf]
    %v1037 = vld [vmem:[%s6 + $0x48] sm:$0xff]
    %v1038 = vld [vmem:[%s6 + $0x50] sm:$0xf]
    %v1039 = vld [vmem:[%s6 + $0x54] sm:$0xff]
    %v1040 = vld [vmem:[%s6 + $0x5c] sm:$0xf]
    %v1041 = vld [vmem:[%s6 + $0x60] sm:$0xff]
    %v1042 = vld [vmem:[%s6 + $0x68] sm:$0xf]
    %v1043 = vld [vmem:[%s6 + $0x6c] sm:$0xff]
    %v1044 = vld [vmem:[%s6 + $0x74] sm:$0xf]
    %v1045 = vld [vmem:[%s6 + $0x78] sm:$0xff]
    %v1046 = vld [vmem:[%s6 + $0x80] sm:$0xf]
    %v1047 = vld [vmem:[%s6 + $0x84] sm:$0xff]
    %v1048 = vld [vmem:[%s6 + $0x8c] sm:$0xf]
    %v1049 = vld [vmem:[%s6 + $0x90] sm:$0xff]
    %v1050 = vld [vmem:[%s6 + $0x98] sm:$0xf]
    %v1051 = vld [vmem:[%s6 + $0x9c] sm:$0xff]
    %v1052 = vld [vmem:[%s6 + $0xa4] sm:$0xf]
    %v1053 = vld [vmem:[%s6 + $0xa8] sm:$0xff]
    %v1054 = vld [vmem:[%s6 + $0xb0] sm:$0xf]
    %v1055 = vld [vmem:[%s6 + $0xb4] sm:$0xff]
    %v1056 = vld [vmem:[%s6 + $0xbc] sm:$0xf]
    %v1089 = vunpack.c.l.b16 %v1025
    %v1090 = vunpack.c.h.b16 %v1025
    %v1091 = vunpack.c.l.b16 %v1026
    %v1092 = vunpack.c.l.b16 %v1027
    %v1093 = vunpack.c.h.b16 %v1027
    %v1094 = vunpack.c.l.b16 %v1028
    %v1095 = vunpack.c.l.b16 %v1029
    %v1096 = vunpack.c.h.b16 %v1029
    %v1097 = vunpack.c.l.b16 %v1030
    %v1098 = vunpack.c.l.b16 %v1031
    %v1099 = vunpack.c.h.b16 %v1031
    %v1100 = vunpack.c.l.b16 %v1032
    %v1101 = vunpack.c.l.b16 %v1033
    %v1102 = vunpack.c.h.b16 %v1033
    %v1103 = vunpack.c.l.b16 %v1034
    %v1104 = vunpack.c.l.b16 %v1035
    %v1105 = vunpack.c.h.b16 %v1035
    %v1106 = vunpack.c.l.b16 %v1036
    %v1107 = vunpack.c.l.b16 %v1037
    %v1108 = vunpack.c.h.b16 %v1037
    %v1109 = vunpack.c.l.b16 %v1038
    %v1110 = vunpack.c.l.b16 %v1039
    %v1111 = vunpack.c.h.b16 %v1039
    %v1112 = vunpack.c.l.b16 %v1040
    %v1113 = vunpack.c.l.b16 %v1041
    %v1114 = vunpack.c.h.b16 %v1041
    %v1115 = vunpack.c.l.b16 %v1042
    %v1116 = vunpack.c.l.b16 %v1043
    %v1117 = vunpack.c.h.b16 %v1043
    %v1118 = vunpack.c.l.b16 %v1044
    %v1119 = vunpack.c.l.b16 %v1045
    %v1120 = vunpack.c.h.b16 %v1045
    %v1121 = vunpack.c.l.b16 %v1046
    %v1122 = vunpack.c.l.b16 %v1047
    %v1123 = vunpack.c.h.b16 %v1047
    %v1124 = vunpack.c.l.b16 %v1048
    %v1125 = vunpack.c.l.b16 %v1049
    %v1126 = vunpack.c.h.b16 %v1049
    %v1127 = vunpack.c.l.b16 %v1050
    %v1128 = vunpack.c.l.b16 %v1051
    %v1129 = vunpack.c.h.b16 %v1051
    %v1130 = vunpack.c.l.b16 %v1052
    %v1131 = vunpack.c.l.b16 %v1053
    %v1132 = vunpack.c.h.b16 %v1053
    %v1133 = vunpack.c.l.b16 %v1054
    %v1134 = vunpack.c.l.b16 %v1055
    %v1135 = vunpack.c.h.b16 %v1055
    %v1136 = vunpack.c.l.b16 %v1056
    %v1137 = vpack.c.b16 %v1092, %v1089
    %v1138 = vpack.c.b16 %v1093, %v1090
    %v1139 = vpack.c.b16 %v1094, %v1091
    %v1140 = vpack.c.b16 %v1098, %v1095
    %v1141 = vpack.c.b16 %v1099, %v1096
    %v1142 = vpack.c.b16 %v1100, %v1097
    %v1143 = vpack.c.b16 %v1104, %v1101
    %v1144 = vpack.c.b16 %v1105, %v1102
    %v1145 = vpack.c.b16 %v1106, %v1103
    %v1146 = vpack.c.b16 %v1110, %v1107
    %v1147 = vpack.c.b16 %v1111, %v1108
    %v1148 = vpack.c.b16 %v1112, %v1109
    %v1149 = vpack.c.b16 %v1116, %v1113
    %v1150 = vpack.c.b16 %v1117, %v1114
    %v1151 = vpack.c.b16 %v1118, %v1115
    %v1152 = vpack.c.b16 %v1122, %v1119
    %v1153 = vpack.c.b16 %v1123, %v1120
    %v1154 = vpack.c.b16 %v1124, %v1121
    %v1155 = vpack.c.b16 %v1128, %v1125
    %v1156 = vpack.c.b16 %v1129, %v1126
    %v1157 = vpack.c.b16 %v1130, %v1127
    %v1158 = vpack.c.b16 %v1134, %v1131
    %v1159 = vpack.c.b16 %v1135, %v1132
    %v1160 = vpack.c.b16 %v1136, %v1133
    %1185 = vmatprep.subr.bf16.mxu0 %v1138
    %1186 = vmatpush1.bf16.msra.mxu0 %v1137
    %1187 = vmatprep.subr.bf16.mxu0 %v1141
    %1188 = vmatpush1.bf16.msra.mxu0 %v1140
    %1189 = vmatprep.subr.bf16.mxu0 %v1144
    %1190 = vmatpush1.bf16.msra.mxu0 %v1143
    %1191 = vmatprep.subr.bf16.mxu0 %v1147
    %1192 = vmatpush1.bf16.msra.mxu0 %v1146
    %1193 = vmatprep.subr.bf16.mxu0 %v1150
    %1194 = vmatpush1.bf16.msra.mxu0 %v1149
    %1195 = vmatprep.subr.bf16.mxu0 %v1153
    %1196 = vmatpush1.bf16.msra.mxu0 %v1152
    %1197 = vmatprep.subr.bf16.mxu0 %v1156
    %1198 = vmatpush1.bf16.msra.mxu0 %v1155
    %1199 = vmatprep.subr.bf16.mxu0 %v1159
    %1200 = vmatpush1.bf16.msra.mxu0 %v1158
    %1201 = vmatprep.subr.bf16.mxu0 0
    %1202 = vmatpush1.bf16.msra.mxu0 0
    %1203 = vmatprep.subr.bf16.mxu0 0
    %1204 = vmatpush1.bf16.msra.mxu0 0
    %1205 = vmatprep.subr.bf16.mxu0 0
    %1206 = vmatpush1.bf16.msra.mxu0 0
    %1207 = vmatprep.subr.bf16.mxu0 0
    %1208 = vmatpush1.bf16.msra.mxu0 0
    %1209 = vmatprep.subr.bf16.mxu0 0
    %1210 = vmatpush1.bf16.msra.mxu0 0
    %1211 = vmatprep.subr.bf16.mxu0 0
    %1212 = vmatpush1.bf16.msra.mxu0 0
    %1213 = vmatprep.subr.bf16.mxu0 0
    %1214 = vmatpush1.bf16.msra.mxu0 0
    %1215 = vmatprep.subr.bf16.mxu0 0
    %1216 = vmatpush1.bf16.msra.mxu0 0
    %1217 = vmatprep.mubr.bf16.mxu0 0
    %1218 = vmatmul.mubr.bf16.gmra.mrb[0].mxu0 %v1024
    %v1219 = vpop.f32.mrb[0].mxu0
    %v1220 = vadd.f32 0.0, %v1219
    %v1221 = vpop.f32.mrb[0].mxu0
    %v1222 = vadd.f32 0.0, %v1221
    %v1223 = vpop.f32.mrb[0].mxu0
    %v1224 = vpop.f32.mrb[0].mxu0
    %1225 = vdwg.mxu0
    %1226 = vmatprep.subr.bf16.mxu0 0
    %1227 = vmatpush1.bf16.msra.mxu0 %v1139
    %1228 = vmatprep.subr.bf16.mxu0 0
    %1229 = vmatpush1.bf16.msra.mxu0 %v1142
    %1230 = vmatprep.subr.bf16.mxu0 0
    %1231 = vmatpush1.bf16.msra.mxu0 %v1145
    %1232 = vmatprep.subr.bf16.mxu0 0
    %1233 = vmatpush1.bf16.msra.mxu0 %v1148
    %1234 = vmatprep.subr.bf16.mxu0 0
    %1235 = vmatpush1.bf16.msra.mxu0 %v1151
    %1236 = vmatprep.subr.bf16.mxu0 0
    %1237 = vmatpush1.bf16.msra.mxu0 %v1154
    %1238 = vmatprep.subr.bf16.mxu0 0
    %1239 = vmatpush1.bf16.msra.mxu0 %v1157
    %1240 = vmatprep.subr.bf16.mxu0 0
    %1241 = vmatpush1.bf16.msra.mxu0 %v1160
    %1242 = vmatprep.subr.bf16.mxu0 0
    %1243 = vmatpush1.bf16.msra.mxu0 0
    %1244 = vmatprep.subr.bf16.mxu0 0
    %1245 = vmatpush1.bf16.msra.mxu0 0
    %1246 = vmatprep.subr.bf16.mxu0 0
    %1247 = vmatpush1.bf16.msra.mxu0 0
    %1248 = vmatprep.subr.bf16.mxu0 0
    %1249 = vmatpush1.bf16.msra.mxu0 0
    %1250 = vmatprep.subr.bf16.mxu0 0
    %1251 = vmatpush1.bf16.msra.mxu0 0
    %1252 = vmatprep.subr.bf16.mxu0 0
    %1253 = vmatpush1.bf16.msra.mxu0 0
    %1254 = vmatprep.subr.bf16.mxu0 0
    %1255 = vmatpush1.bf16.msra.mxu0 0
    %1256 = vmatprep.subr.bf16.mxu0 0
    %1257 = vmatpush1.bf16.msra.mxu0 0
    %1258 = vmatprep.mubr.bf16.mxu0 0
    %1259 = vmatmul.mubr.bf16.gmra.mrb[0].mxu0 %v1024
    %v1260 = vpop.f32.mrb[0].mxu0
    %v1261 = vadd.f32 0.0, %v1260
    %v1262 = vpop.f32.mrb[0].mxu0
    %v1263 = vpop.f32.mrb[0].mxu0
    %v1264 = vpop.f32.mrb[0].mxu0
    %1265 = vdwg.mxu0
    %v1266 = vadd.f32 %v978, %v1220
    %v1267 = vadd.f32 %v980, %v1222
    %v1268 = vxor.u32 %v1266, 2147483648
    %v1269 = vxor.u32 %v1267, 2147483648
    %v1270 = vmul.f32 %v1268, 1.442695
    %v1271 = vpow.pop %v1270
    %v1272 = vmul.f32 %v1269, 1.442695
    %v1273 = vpow.pop %v1272
    %v1274 = vadd.f32 %v1271, 1.0
    %v1275 = vadd.f32 %v1273, 1.0
    %v1276 = vrcp.pop %v1274
    %v1277 = vmul.f32 1.0, %v1276
    %v1278 = vrcp.pop %v1275
    %v1279 = vmul.f32 1.0, %v1278
    %v1280 = vadd.f32 %v1261, %v482
    %v1281 = vmul.f32 %v1277, %v1280
    %v1282 = vadd.f32 %v1019, %v1281
    %v1283 = vtanh.pop %v1282
    %v1284 = vsub.f32 %v484, %v1283
    %v1285 = vmul.f32 %v1279, %v1284
    %v1286 = vadd.f32 %v1283, %v1285
    %1287 = vst [vmem:[#allocation3] sm:$0x1] %v1286
    %v1288 = vld [vmem:[%s4] sm:$0xff]
    %v1289 = vld [vmem:[%s4 + $0x8] sm:$0xf]
    %v1290 = vld [vmem:[%s4 + $0xc] sm:$0xff]
    %v1291 = vld [vmem:[%s4 + $0x14] sm:$0xf]
    %v1292 = vld [vmem:[%s4 + $0x18] sm:$0xff]
    %v1293 = vld [vmem:[%s4 + $0x20] sm:$0xf]
    %v1294 = vld [vmem:[%s4 + $0x24] sm:$0xff]
    %v1295 = vld [vmem:[%s4 + $0x2c] sm:$0xf]
    %v1296 = vld [vmem:[%s4 + $0x30] sm:$0xff]
    %v1297 = vld [vmem:[%s4 + $0x38] sm:$0xf]
    %v1298 = vld [vmem:[%s4 + $0x3c] sm:$0xff]
    %v1299 = vld [vmem:[%s4 + $0x44] sm:$0xf]
    %v1300 = vld [vmem:[%s4 + $0x48] sm:$0xff]
    %v1301 = vld [vmem:[%s4 + $0x50] sm:$0xf]
    %v1302 = vld [vmem:[%s4 + $0x54] sm:$0xff]
    %v1303 = vld [vmem:[%s4 + $0x5c] sm:$0xf]
    %v1304 = vld [vmem:[%s4 + $0x60] sm:$0xff]
    %v1305 = vld [vmem:[%s4 + $0x68] sm:$0xf]
    %v1306 = vld [vmem:[%s4 + $0x6c] sm:$0xff]
    %v1307 = vld [vmem:[%s4 + $0x74] sm:$0xf]
    %v1308 = vld [vmem:[%s4 + $0x78] sm:$0xff]
    %v1309 = vld [vmem:[%s4 + $0x80] sm:$0xf]
    %v1310 = vld [vmem:[%s4 + $0x84] sm:$0xff]
    %v1311 = vld [vmem:[%s4 + $0x8c] sm:$0xf]
    %v1312 = vld [vmem:[%s4 + $0x90] sm:$0xff]
    %v1313 = vld [vmem:[%s4 + $0x98] sm:$0xf]
    %v1314 = vld [vmem:[%s4 + $0x9c] sm:$0xff]
    %v1315 = vld [vmem:[%s4 + $0xa4] sm:$0xf]
    %v1316 = vld [vmem:[%s4 + $0xa8] sm:$0xff]
    %v1317 = vld [vmem:[%s4 + $0xb0] sm:$0xf]
    %v1318 = vld [vmem:[%s4 + $0xb4] sm:$0xff]
    %v1319 = vld [vmem:[%s4 + $0xbc] sm:$0xf]
    %v1352 = vunpack.c.l.b16 %v1288
    %v1353 = vunpack.c.h.b16 %v1288
    %v1354 = vunpack.c.l.b16 %v1289
    %v1355 = vunpack.c.l.b16 %v1290
    %v1356 = vunpack.c.h.b16 %v1290
    %v1357 = vunpack.c.l.b16 %v1291
    %v1358 = vunpack.c.l.b16 %v1292
    %v1359 = vunpack.c.h.b16 %v1292
    %v1360 = vunpack.c.l.b16 %v1293
    %v1361 = vunpack.c.l.b16 %v1294
    %v1362 = vunpack.c.h.b16 %v1294
    %v1363 = vunpack.c.l.b16 %v1295
    %v1364 = vunpack.c.l.b16 %v1296
    %v1365 = vunpack.c.h.b16 %v1296
    %v1366 = vunpack.c.l.b16 %v1297
    %v1367 = vunpack.c.l.b16 %v1298
    %v1368 = vunpack.c.h.b16 %v1298
    %v1369 = vunpack.c.l.b16 %v1299
    %v1370 = vunpack.c.l.b16 %v1300
    %v1371 = vunpack.c.h.b16 %v1300
    %v1372 = vunpack.c.l.b16 %v1301
    %v1373 = vunpack.c.l.b16 %v1302
    %v1374 = vunpack.c.h.b16 %v1302
    %v1375 = vunpack.c.l.b16 %v1303
    %v1376 = vunpack.c.l.b16 %v1304
    %v1377 = vunpack.c.h.b16 %v1304
    %v1378 = vunpack.c.l.b16 %v1305
    %v1379 = vunpack.c.l.b16 %v1306
    %v1380 = vunpack.c.h.b16 %v1306
    %v1381 = vunpack.c.l.b16 %v1307
    %v1382 = vunpack.c.l.b16 %v1308
    %v1383 = vunpack.c.h.b16 %v1308
    %v1384 = vunpack.c.l.b16 %v1309
    %v1385 = vunpack.c.l.b16 %v1310
    %v1386 = vunpack.c.h.b16 %v1310
    %v1387 = vunpack.c.l.b16 %v1311
    %v1388 = vunpack.c.l.b16 %v1312
    %v1389 = vunpack.c.h.b16 %v1312
    %v1390 = vunpack.c.l.b16 %v1313
    %v1391 = vunpack.c.l.b16 %v1314
    %v1392 = vunpack.c.h.b16 %v1314
    %v1393 = vunpack.c.l.b16 %v1315
    %v1394 = vunpack.c.l.b16 %v1316
    %v1395 = vunpack.c.h.b16 %v1316
    %v1396 = vunpack.c.l.b16 %v1317
    %v1397 = vunpack.c.l.b16 %v1318
    %v1398 = vunpack.c.h.b16 %v1318
    %v1399 = vunpack.c.l.b16 %v1319
    %v1400 = vpack.c.b16 %v1355, %v1352
    %v1401 = vpack.c.b16 %v1356, %v1353
    %v1402 = vpack.c.b16 %v1357, %v1354
    %v1403 = vpack.c.b16 %v1361, %v1358
    %v1404 = vpack.c.b16 %v1362, %v1359
    %v1405 = vpack.c.b16 %v1363, %v1360
    %v1406 = vpack.c.b16 %v1367, %v1364
    %v1407 = vpack.c.b16 %v1368, %v1365
    %v1408 = vpack.c.b16 %v1369, %v1366
    %v1409 = vpack.c.b16 %v1373, %v1370
    %v1410 = vpack.c.b16 %v1374, %v1371
    %v1411 = vpack.c.b16 %v1375, %v1372
    %v1412 = vpack.c.b16 %v1379, %v1376
    %v1413 = vpack.c.b16 %v1380, %v1377
    %v1414 = vpack.c.b16 %v1381, %v1378
    %v1415 = vpack.c.b16 %v1385, %v1382
    %v1416 = vpack.c.b16 %v1386, %v1383
    %v1417 = vpack.c.b16 %v1387, %v1384
    %v1418 = vpack.c.b16 %v1391, %v1388
    %v1419 = vpack.c.b16 %v1392, %v1389
    %v1420 = vpack.c.b16 %v1393, %v1390
    %v1421 = vpack.c.b16 %v1397, %v1394
    %v1422 = vpack.c.b16 %v1398, %v1395
    %v1423 = vpack.c.b16 %v1399, %v1396
    %1448 = vmatprep.subr.bf16.mxu0 %v1401
    %1449 = vmatpush1.bf16.msra.mxu0 %v1400
    %1450 = vmatprep.subr.bf16.mxu0 %v1404
    %1451 = vmatpush1.bf16.msra.mxu0 %v1403
    %1452 = vmatprep.subr.bf16.mxu0 %v1407
    %1453 = vmatpush1.bf16.msra.mxu0 %v1406
    %1454 = vmatprep.subr.bf16.mxu0 %v1410
    %1455 = vmatpush1.bf16.msra.mxu0 %v1409
    %1456 = vmatprep.subr.bf16.mxu0 %v1413
    %1457 = vmatpush1.bf16.msra.mxu0 %v1412
    %1458 = vmatprep.subr.bf16.mxu0 %v1416
    %1459 = vmatpush1.bf16.msra.mxu0 %v1415
    %1460 = vmatprep.subr.bf16.mxu0 %v1419
    %1461 = vmatpush1.bf16.msra.mxu0 %v1418
    %1462 = vmatprep.subr.bf16.mxu0 %v1422
    %1463 = vmatpush1.bf16.msra.mxu0 %v1421
    %1464 = vmatprep.subr.bf16.mxu0 0
    %1465 = vmatpush1.bf16.msra.mxu0 0
    %1466 = vmatprep.subr.bf16.mxu0 0
    %1467 = vmatpush1.bf16.msra.mxu0 0
    %1468 = vmatprep.subr.bf16.mxu0 0
    %1469 = vmatpush1.bf16.msra.mxu0 0
    %1470 = vmatprep.subr.bf16.mxu0 0
    %1471 = vmatpush1.bf16.msra.mxu0 0
    %1472 = vmatprep.subr.bf16.mxu0 0
    %1473 = vmatpush1.bf16.msra.mxu0 0
    %1474 = vmatprep.subr.bf16.mxu0 0
    %1475 = vmatpush1.bf16.msra.mxu0 0
    %1476 = vmatprep.subr.bf16.mxu0 0
    %1477 = vmatpush1.bf16.msra.mxu0 0
    %1478 = vmatprep.subr.bf16.mxu0 0
    %1479 = vmatpush1.bf16.msra.mxu0 0
    %1480 = vmatprep.mubr.bf16.mxu0 0
    %1481 = vmatmul.mubr.bf16.gmra.mrb[0].mxu0 %v766
    %v1482 = vpop.f32.mrb[0].mxu0
    %v1483 = vadd.f32 0.0, %v1482
    %v1484 = vpop.f32.mrb[0].mxu0
    %v1485 = vadd.f32 0.0, %v1484
    %v1486 = vpop.f32.mrb[0].mxu0
    %v1487 = vpop.f32.mrb[0].mxu0
    %1488 = vdwg.mxu0
    %1489 = vmatprep.subr.bf16.mxu0 0
    %1490 = vmatpush1.bf16.msra.mxu0 %v1402
    %1491 = vmatprep.subr.bf16.mxu0 0
    %1492 = vmatpush1.bf16.msra.mxu0 %v1405
    %1493 = vmatprep.subr.bf16.mxu0 0
    %1494 = vmatpush1.bf16.msra.mxu0 %v1408
    %1495 = vmatprep.subr.bf16.mxu0 0
    %1496 = vmatpush1.bf16.msra.mxu0 %v1411
    %1497 = vmatprep.subr.bf16.mxu0 0
    %1498 = vmatpush1.bf16.msra.mxu0 %v1414
    %1499 = vmatprep.subr.bf16.mxu0 0
    %1500 = vmatpush1.bf16.msra.mxu0 %v1417
    %1501 = vmatprep.subr.bf16.mxu0 0
    %1502 = vmatpush1.bf16.msra.mxu0 %v1420
    %1503 = vmatprep.subr.bf16.mxu0 0
    %1504 = vmatpush1.bf16.msra.mxu0 %v1423
    %1505 = vmatprep.subr.bf16.mxu0 0
    %1506 = vmatpush1.bf16.msra.mxu0 0
    %1507 = vmatprep.subr.bf16.mxu0 0
    %1508 = vmatpush1.bf16.msra.mxu0 0
    %1509 = vmatprep.subr.bf16.mxu0 0
    %1510 = vmatpush1.bf16.msra.mxu0 0
    %1511 = vmatprep.subr.bf16.mxu0 0
    %1512 = vmatpush1.bf16.msra.mxu0 0
    %1513 = vmatprep.subr.bf16.mxu0 0
    %1514 = vmatpush1.bf16.msra.mxu0 0
    %1515 = vmatprep.subr.bf16.mxu0 0
    %1516 = vmatpush1.bf16.msra.mxu0 0
    %1517 = vmatprep.subr.bf16.mxu0 0
    %1518 = vmatpush1.bf16.msra.mxu0 0
    %1519 = vmatprep.subr.bf16.mxu0 0
    %1520 = vmatpush1.bf16.msra.mxu0 0
    %1521 = vmatprep.mubr.bf16.mxu0 0
    %1522 = vmatmul.mubr.bf16.gmra.mrb[0].mxu0 %v766
    %v1523 = vpop.f32.mrb[0].mxu0
    %v1524 = vadd.f32 0.0, %v1523
    %v1525 = vpop.f32.mrb[0].mxu0
    %v1526 = vpop.f32.mrb[0].mxu0
    %v1527 = vpop.f32.mrb[0].mxu0
    %1528 = vdwg.mxu0
    %s1529 = scalar_lea.vmem [#allocation2], 1
    %v1530 = vld [vmem:[%s1529] ss:$8 sm:$0x7]
    %v1533 = vcombine.low %v1483, %v1485
    %v1535 = vunpack.c.l.s4 1966171168
    %v1536 = vunpack.c.0.s8 %v1535
    %v1537 = vlaneseq
    %v1538 = vshrl.u32 %v1537, 7
    %v1539 = vsub.s32 %v1536, %v1538
    %v1540 = vrot.slane %v1533, %v1539
    %v1542 = vunpack.c.l.s4 1966171168
    %v1543 = vunpack.c.0.s8 %v1542
    %v1544 = vlaneseq
    %v1545 = vshrl.u32 %v1544, 7
    %v1546 = vsub.s32 %v1543, %v1545
    %v1547 = vrot.slane %v1540, %v1546
    %v1549 = vadd.f32 %v1530, %v1547
    %v1550 = vxor.u32 %v1549, 2147483648
    %v1551 = vmul.f32 %v1550, 1.442695
    %v1552 = vpow.pop %v1551
    %v1553 = vadd.f32 %v1552, 1.0
    %v1554 = vrcp.pop %v1553
    %v1555 = vmul.f32 1.0, %v1554
    %v1556 = vadd.f32 %v1524, %v480
    %v1557 = vmul.f32 %v1555, %v1556
    %v1559 = vrot.slane %v1530, 2
    %v1561 = vadd.f32 %v1559, %v1557
    %v1562 = vtanh.pop %v1561
    %v1563 = vsub.f32 %v765, %v1562
    %v1565 = vrot.slane %v1555, 1
    %v1567 = vmul.f32 %v1565, %v1563
    %v1568 = vadd.f32 %v1562, %v1567
    %v1569 = vpack.c.bf16 %v1568, %v1568
    %v1570 = vld [vmem:[%s5] sm:$0xff]
    %v1571 = vld [vmem:[%s5 + $0x8] sm:$0xf]
    %v1572 = vld [vmem:[%s5 + $0xc] sm:$0xff]
    %v1573 = vld [vmem:[%s5 + $0x14] sm:$0xf]
    %v1574 = vld [vmem:[%s5 + $0x18] sm:$0xff]
    %v1575 = vld [vmem:[%s5 + $0x20] sm:$0xf]
    %v1576 = vld [vmem:[%s5 + $0x24] sm:$0xff]
    %v1577 = vld [vmem:[%s5 + $0x2c] sm:$0xf]
    %v1578 = vld [vmem:[%s5 + $0x30] sm:$0xff]
    %v1579 = vld [vmem:[%s5 + $0x38] sm:$0xf]
    %v1580 = vld [vmem:[%s5 + $0x3c] sm:$0xff]
    %v1581 = vld [vmem:[%s5 + $0x44] sm:$0xf]
    %v1582 = vld [vmem:[%s5 + $0x48] sm:$0xff]
    %v1583 = vld [vmem:[%s5 + $0x50] sm:$0xf]
    %v1584 = vld [vmem:[%s5 + $0x54] sm:$0xff]
    %v1585 = vld [vmem:[%s5 + $0x5c] sm:$0xf]
    %v1586 = vld [vmem:[%s5 + $0x60] sm:$0xff]
    %v1587 = vld [vmem:[%s5 + $0x68] sm:$0xf]
    %v1588 = vld [vmem:[%s5 + $0x6c] sm:$0xff]
    %v1589 = vld [vmem:[%s5 + $0x74] sm:$0xf]
    %v1590 = vld [vmem:[%s5 + $0x78] sm:$0xff]
    %v1591 = vld [vmem:[%s5 + $0x80] sm:$0xf]
    %v1592 = vld [vmem:[%s5 + $0x84] sm:$0xff]
    %v1593 = vld [vmem:[%s5 + $0x8c] sm:$0xf]
    %v1594 = vld [vmem:[%s5 + $0x90] sm:$0xff]
    %v1595 = vld [vmem:[%s5 + $0x98] sm:$0xf]
    %v1596 = vld [vmem:[%s5 + $0x9c] sm:$0xff]
    %v1597 = vld [vmem:[%s5 + $0xa4] sm:$0xf]
    %v1598 = vld [vmem:[%s5 + $0xa8] sm:$0xff]
    %v1599 = vld [vmem:[%s5 + $0xb0] sm:$0xf]
    %v1600 = vld [vmem:[%s5 + $0xb4] sm:$0xff]
    %v1601 = vld [vmem:[%s5 + $0xbc] sm:$0xf]
    %v1634 = vunpack.c.l.b16 %v1570
    %v1635 = vunpack.c.h.b16 %v1570
    %v1636 = vunpack.c.l.b16 %v1571
    %v1637 = vunpack.c.l.b16 %v1572
    %v1638 = vunpack.c.h.b16 %v1572
    %v1639 = vunpack.c.l.b16 %v1573
    %v1640 = vunpack.c.l.b16 %v1574
    %v1641 = vunpack.c.h.b16 %v1574
    %v1642 = vunpack.c.l.b16 %v1575
    %v1643 = vunpack.c.l.b16 %v1576
    %v1644 = vunpack.c.h.b16 %v1576
    %v1645 = vunpack.c.l.b16 %v1577
    %v1646 = vunpack.c.l.b16 %v1578
    %v1647 = vunpack.c.h.b16 %v1578
    %v1648 = vunpack.c.l.b16 %v1579
    %v1649 = vunpack.c.l.b16 %v1580
    %v1650 = vunpack.c.h.b16 %v1580
    %v1651 = vunpack.c.l.b16 %v1581
    %v1652 = vunpack.c.l.b16 %v1582
    %v1653 = vunpack.c.h.b16 %v1582
    %v1654 = vunpack.c.l.b16 %v1583
    %v1655 = vunpack.c.l.b16 %v1584
    %v1656 = vunpack.c.h.b16 %v1584
    %v1657 = vunpack.c.l.b16 %v1585
    %v1658 = vunpack.c.l.b16 %v1586
    %v1659 = vunpack.c.h.b16 %v1586
    %v1660 = vunpack.c.l.b16 %v1587
    %v1661 = vunpack.c.l.b16 %v1588
    %v1662 = vunpack.c.h.b16 %v1588
    %v1663 = vunpack.c.l.b16 %v1589
    %v1664 = vunpack.c.l.b16 %v1590
    %v1665 = vunpack.c.h.b16 %v1590
    %v1666 = vunpack.c.l.b16 %v1591
    %v1667 = vunpack.c.l.b16 %v1592
    %v1668 = vunpack.c.h.b16 %v1592
    %v1669 = vunpack.c.l.b16 %v1593
    %v1670 = vunpack.c.l.b16 %v1594
    %v1671 = vunpack.c.h.b16 %v1594
    %v1672 = vunpack.c.l.b16 %v1595
    %v1673 = vunpack.c.l.b16 %v1596
    %v1674 = vunpack.c.h.b16 %v1596
    %v1675 = vunpack.c.l.b16 %v1597
    %v1676 = vunpack.c.l.b16 %v1598
    %v1677 = vunpack.c.h.b16 %v1598
    %v1678 = vunpack.c.l.b16 %v1599
    %v1679 = vunpack.c.l.b16 %v1600
    %v1680 = vunpack.c.h.b16 %v1600
    %v1681 = vunpack.c.l.b16 %v1601
    %v1682 = vpack.c.b16 %v1637, %v1634
    %v1683 = vpack.c.b16 %v1638, %v1635
    %v1684 = vpack.c.b16 %v1639, %v1636
    %v1685 = vpack.c.b16 %v1643, %v1640
    %v1686 = vpack.c.b16 %v1644, %v1641
    %v1687 = vpack.c.b16 %v1645, %v1642
    %v1688 = vpack.c.b16 %v1649, %v1646
    %v1689 = vpack.c.b16 %v1650, %v1647
    %v1690 = vpack.c.b16 %v1651, %v1648
    %v1691 = vpack.c.b16 %v1655, %v1652
    %v1692 = vpack.c.b16 %v1656, %v1653
    %v1693 = vpack.c.b16 %v1657, %v1654
    %v1694 = vpack.c.b16 %v1661, %v1658
    %v1695 = vpack.c.b16 %v1662, %v1659
    %v1696 = vpack.c.b16 %v1663, %v1660
    %v1697 = vpack.c.b16 %v1667, %v1664
    %v1698 = vpack.c.b16 %v1668, %v1665
    %v1699 = vpack.c.b16 %v1669, %v1666
    %v1700 = vpack.c.b16 %v1673, %v1670
    %v1701 = vpack.c.b16 %v1674, %v1671
    %v1702 = vpack.c.b16 %v1675, %v1672
    %v1703 = vpack.c.b16 %v1679, %v1676
    %v1704 = vpack.c.b16 %v1680, %v1677
    %v1705 = vpack.c.b16 %v1681, %v1678
    %1730 = vmatprep.subr.bf16.mxu0 %v1683
    %1731 = vmatpush1.bf16.msra.mxu0 %v1682
    %1732 = vmatprep.subr.bf16.mxu0 %v1686
    %1733 = vmatpush1.bf16.msra.mxu0 %v1685
    %1734 = vmatprep.subr.bf16.mxu0 %v1689
    %1735 = vmatpush1.bf16.msra.mxu0 %v1688
    %1736 = vmatprep.subr.bf16.mxu0 %v1692
    %1737 = vmatpush1.bf16.msra.mxu0 %v1691
    %1738 = vmatprep.subr.bf16.mxu0 %v1695
    %1739 = vmatpush1.bf16.msra.mxu0 %v1694
    %1740 = vmatprep.subr.bf16.mxu0 %v1698
    %1741 = vmatpush1.bf16.msra.mxu0 %v1697
    %1742 = vmatprep.subr.bf16.mxu0 %v1701
    %1743 = vmatpush1.bf16.msra.mxu0 %v1700
    %1744 = vmatprep.subr.bf16.mxu0 %v1704
    %1745 = vmatpush1.bf16.msra.mxu0 %v1703
    %1746 = vmatprep.subr.bf16.mxu0 0
    %1747 = vmatpush1.bf16.msra.mxu0 0
    %1748 = vmatprep.subr.bf16.mxu0 0
    %1749 = vmatpush1.bf16.msra.mxu0 0
    %1750 = vmatprep.subr.bf16.mxu0 0
    %1751 = vmatpush1.bf16.msra.mxu0 0
    %1752 = vmatprep.subr.bf16.mxu0 0
    %1753 = vmatpush1.bf16.msra.mxu0 0
    %1754 = vmatprep.subr.bf16.mxu0 0
    %1755 = vmatpush1.bf16.msra.mxu0 0
    %1756 = vmatprep.subr.bf16.mxu0 0
    %1757 = vmatpush1.bf16.msra.mxu0 0
    %1758 = vmatprep.subr.bf16.mxu0 0
    %1759 = vmatpush1.bf16.msra.mxu0 0
    %1760 = vmatprep.subr.bf16.mxu0 0
    %1761 = vmatpush1.bf16.msra.mxu0 0
    %1762 = vmatprep.mubr.bf16.mxu0 0
    %1763 = vmatmul.mubr.bf16.gmra.mrb[0].mxu0 %v1569
    %v1764 = vpop.f32.mrb[0].mxu0
    %v1765 = vadd.f32 %v931, %v1764
    %v1766 = vpop.f32.mrb[0].mxu0
    %v1767 = vadd.f32 %v935, %v1766
    %v1768 = vpop.f32.mrb[0].mxu0
    %v1769 = vpop.f32.mrb[0].mxu0
    %1770 = vdwg.mxu0
    %1771 = vmatprep.subr.bf16.mxu0 0
    %1772 = vmatpush1.bf16.msra.mxu0 %v1684
    %1773 = vmatprep.subr.bf16.mxu0 0
    %1774 = vmatpush1.bf16.msra.mxu0 %v1687
    %1775 = vmatprep.subr.bf16.mxu0 0
    %1776 = vmatpush1.bf16.msra.mxu0 %v1690
    %1777 = vmatprep.subr.bf16.mxu0 0
    %1778 = vmatpush1.bf16.msra.mxu0 %v1693
    %1779 = vmatprep.subr.bf16.mxu0 0
    %1780 = vmatpush1.bf16.msra.mxu0 %v1696
    %1781 = vmatprep.subr.bf16.mxu0 0
    %1782 = vmatpush1.bf16.msra.mxu0 %v1699
    %1783 = vmatprep.subr.bf16.mxu0 0
    %1784 = vmatpush1.bf16.msra.mxu0 %v1702
    %1785 = vmatprep.subr.bf16.mxu0 0
    %1786 = vmatpush1.bf16.msra.mxu0 %v1705
    %1787 = vmatprep.subr.bf16.mxu0 0
    %1788 = vmatpush1.bf16.msra.mxu0 0
    %1789 = vmatprep.subr.bf16.mxu0 0
    %1790 = vmatpush1.bf16.msra.mxu0 0
    %1791 = vmatprep.subr.bf16.mxu0 0
    %1792 = vmatpush1.bf16.msra.mxu0 0
    %1793 = vmatprep.subr.bf16.mxu0 0
    %1794 = vmatpush1.bf16.msra.mxu0 0
    %1795 = vmatprep.subr.bf16.mxu0 0
    %1796 = vmatpush1.bf16.msra.mxu0 0
    %1797 = vmatprep.subr.bf16.mxu0 0
    %1798 = vmatpush1.bf16.msra.mxu0 0
    %1799 = vmatprep.subr.bf16.mxu0 0
    %1800 = vmatpush1.bf16.msra.mxu0 0
    %1801 = vmatprep.subr.bf16.mxu0 0
    %1802 = vmatpush1.bf16.msra.mxu0 0
    %1803 = vmatprep.mubr.bf16.mxu0 0
    %1804 = vmatmul.mubr.bf16.gmra.mrb[0].mxu0 %v1569
    %v1805 = vpop.f32.mrb[0].mxu0
    %v1806 = vadd.f32 %v939, %v1805
    %v1807 = vpop.f32.mrb[0].mxu0
    %v1808 = vpop.f32.mrb[0].mxu0
    %v1809 = vpop.f32.mrb[0].mxu0
    %1810 = vdwg.mxu0
    %v1811 = vpack.c.bf16 %v1286, %v1286
    %v1812 = vld [vmem:[%s6] sm:$0xff]
    %v1813 = vld [vmem:[%s6 + $0x8] sm:$0xf]
    %v1814 = vld [vmem:[%s6 + $0xc] sm:$0xff]
    %v1815 = vld [vmem:[%s6 + $0x14] sm:$0xf]
    %v1816 = vld [vmem:[%s6 + $0x18] sm:$0xff]
    %v1817 = vld [vmem:[%s6 + $0x20] sm:$0xf]
    %v1818 = vld [vmem:[%s6 + $0x24] sm:$0xff]
    %v1819 = vld [vmem:[%s6 + $0x2c] sm:$0xf]
    %v1820 = vld [vmem:[%s6 + $0x30] sm:$0xff]
    %v1821 = vld [vmem:[%s6 + $0x38] sm:$0xf]
    %v1822 = vld [vmem:[%s6 + $0x3c] sm:$0xff]
    %v1823 = vld [vmem:[%s6 + $0x44] sm:$0xf]
    %v1824 = vld [vmem:[%s6 + $0x48] sm:$0xff]
    %v1825 = vld [vmem:[%s6 + $0x50] sm:$0xf]
    %v1826 = vld [vmem:[%s6 + $0x54] sm:$0xff]
    %v1827 = vld [vmem:[%s6 + $0x5c] sm:$0xf]
    %v1828 = vld [vmem:[%s6 + $0x60] sm:$0xff]
    %v1829 = vld [vmem:[%s6 + $0x68] sm:$0xf]
    %v1830 = vld [vmem:[%s6 + $0x6c] sm:$0xff]
    %v1831 = vld [vmem:[%s6 + $0x74] sm:$0xf]
    %v1832 = vld [vmem:[%s6 + $0x78] sm:$0xff]
    %v1833 = vld [vmem:[%s6 + $0x80] sm:$0xf]
    %v1834 = vld [vmem:[%s6 + $0x84] sm:$0xff]
    %v1835 = vld [vmem:[%s6 + $0x8c] sm:$0xf]
    %v1836 = vld [vmem:[%s6 + $0x90] sm:$0xff]
    %v1837 = vld [vmem:[%s6 + $0x98] sm:$0xf]
    %v1838 = vld [vmem:[%s6 + $0x9c] sm:$0xff]
    %v1839 = vld [vmem:[%s6 + $0xa4] sm:$0xf]
    %v1840 = vld [vmem:[%s6 + $0xa8] sm:$0xff]
    %v1841 = vld [vmem:[%s6 + $0xb0] sm:$0xf]
    %v1842 = vld [vmem:[%s6 + $0xb4] sm:$0xff]
    %v1843 = vld [vmem:[%s6 + $0xbc] sm:$0xf]
    %v1876 = vunpack.c.l.b16 %v1812
    %v1877 = vunpack.c.h.b16 %v1812
    %v1878 = vunpack.c.l.b16 %v1813
    %v1879 = vunpack.c.l.b16 %v1814
    %v1880 = vunpack.c.h.b16 %v1814
    %v1881 = vunpack.c.l.b16 %v1815
    %v1882 = vunpack.c.l.b16 %v1816
    %v1883 = vunpack.c.h.b16 %v1816
    %v1884 = vunpack.c.l.b16 %v1817
    %v1885 = vunpack.c.l.b16 %v1818
    %v1886 = vunpack.c.h.b16 %v1818
    %v1887 = vunpack.c.l.b16 %v1819
    %v1888 = vunpack.c.l.b16 %v1820
    %v1889 = vunpack.c.h.b16 %v1820
    %v1890 = vunpack.c.l.b16 %v1821
    %v1891 = vunpack.c.l.b16 %v1822
    %v1892 = vunpack.c.h.b16 %v1822
    %v1893 = vunpack.c.l.b16 %v1823
    %v1894 = vunpack.c.l.b16 %v1824
    %v1895 = vunpack.c.h.b16 %v1824
    %v1896 = vunpack.c.l.b16 %v1825
    %v1897 = vunpack.c.l.b16 %v1826
    %v1898 = vunpack.c.h.b16 %v1826
    %v1899 = vunpack.c.l.b16 %v1827
    %v1900 = vunpack.c.l.b16 %v1828
    %v1901 = vunpack.c.h.b16 %v1828
    %v1902 = vunpack.c.l.b16 %v1829
    %v1903 = vunpack.c.l.b16 %v1830
    %v1904 = vunpack.c.h.b16 %v1830
    %v1905 = vunpack.c.l.b16 %v1831
    %v1906 = vunpack.c.l.b16 %v1832
    %v1907 = vunpack.c.h.b16 %v1832
    %v1908 = vunpack.c.l.b16 %v1833
    %v1909 = vunpack.c.l.b16 %v1834
    %v1910 = vunpack.c.h.b16 %v1834
    %v1911 = vunpack.c.l.b16 %v1835
    %v1912 = vunpack.c.l.b16 %v1836
    %v1913 = vunpack.c.h.b16 %v1836
    %v1914 = vunpack.c.l.b16 %v1837
    %v1915 = vunpack.c.l.b16 %v1838
    %v1916 = vunpack.c.h.b16 %v1838
    %v1917 = vunpack.c.l.b16 %v1839
    %v1918 = vunpack.c.l.b16 %v1840
    %v1919 = vunpack.c.h.b16 %v1840
    %v1920 = vunpack.c.l.b16 %v1841
    %v1921 = vunpack.c.l.b16 %v1842
    %v1922 = vunpack.c.h.b16 %v1842
    %v1923 = vunpack.c.l.b16 %v1843
    %v1924 = vpack.c.b16 %v1879, %v1876
    %v1925 = vpack.c.b16 %v1880, %v1877
    %v1926 = vpack.c.b16 %v1881, %v1878
    %v1927 = vpack.c.b16 %v1885, %v1882
    %v1928 = vpack.c.b16 %v1886, %v1883
    %v1929 = vpack.c.b16 %v1887, %v1884
    %v1930 = vpack.c.b16 %v1891, %v1888
    %v1931 = vpack.c.b16 %v1892, %v1889
    %v1932 = vpack.c.b16 %v1893, %v1890
    %v1933 = vpack.c.b16 %v1897, %v1894
    %v1934 = vpack.c.b16 %v1898, %v1895
    %v1935 = vpack.c.b16 %v1899, %v1896
    %v1936 = vpack.c.b16 %v1903, %v1900
    %v1937 = vpack.c.b16 %v1904, %v1901
    %v1938 = vpack.c.b16 %v1905, %v1902
    %v1939 = vpack.c.b16 %v1909, %v1906
    %v1940 = vpack.c.b16 %v1910, %v1907
    %v1941 = vpack.c.b16 %v1911, %v1908
    %v1942 = vpack.c.b16 %v1915, %v1912
    %v1943 = vpack.c.b16 %v1916, %v1913
    %v1944 = vpack.c.b16 %v1917, %v1914
    %v1945 = vpack.c.b16 %v1921, %v1918
    %v1946 = vpack.c.b16 %v1922, %v1919
    %v1947 = vpack.c.b16 %v1923, %v1920
    %1972 = vmatprep.subr.bf16.mxu0 %v1925
    %1973 = vmatpush1.bf16.msra.mxu0 %v1924
    %1974 = vmatprep.subr.bf16.mxu0 %v1928
    %1975 = vmatpush1.bf16.msra.mxu0 %v1927
    %1976 = vmatprep.subr.bf16.mxu0 %v1931
    %1977 = vmatpush1.bf16.msra.mxu0 %v1930
    %1978 = vmatprep.subr.bf16.mxu0 %v1934
    %1979 = vmatpush1.bf16.msra.mxu0 %v1933
    %1980 = vmatprep.subr.bf16.mxu0 %v1937
    %1981 = vmatpush1.bf16.msra.mxu0 %v1936
    %1982 = vmatprep.subr.bf16.mxu0 %v1940
    %1983 = vmatpush1.bf16.msra.mxu0 %v1939
    %1984 = vmatprep.subr.bf16.mxu0 %v1943
    %1985 = vmatpush1.bf16.msra.mxu0 %v1942
    %1986 = vmatprep.subr.bf16.mxu0 %v1946
    %1987 = vmatpush1.bf16.msra.mxu0 %v1945
    %1988 = vmatprep.subr.bf16.mxu0 0
    %1989 = vmatpush1.bf16.msra.mxu0 0
    %1990 = vmatprep.subr.bf16.mxu0 0
    %1991 = vmatpush1.bf16.msra.mxu0 0
    %1992 = vmatprep.subr.bf16.mxu0 0
    %1993 = vmatpush1.bf16.msra.mxu0 0
    %1994 = vmatprep.subr.bf16.mxu0 0
    %1995 = vmatpush1.bf16.msra.mxu0 0
    %1996 = vmatprep.subr.bf16.mxu0 0
    %1997 = vmatpush1.bf16.msra.mxu0 0
    %1998 = vmatprep.subr.bf16.mxu0 0
    %1999 = vmatpush1.bf16.msra.mxu0 0
    %2000 = vmatprep.subr.bf16.mxu0 0
    %2001 = vmatpush1.bf16.msra.mxu0 0
    %2002 = vmatprep.subr.bf16.mxu0 0
    %2003 = vmatpush1.bf16.msra.mxu0 0
    %2004 = vmatprep.mubr.bf16.mxu0 0
    %2005 = vmatmul.mubr.bf16.gmra.mrb[0].mxu0 %v1811
    %v2006 = vpop.f32.mrb[0].mxu0
    %v2007 = vadd.f32 0.0, %v2006
    %v2008 = vpop.f32.mrb[0].mxu0
    %v2009 = vadd.f32 0.0, %v2008
    %v2010 = vpop.f32.mrb[0].mxu0
    %v2011 = vpop.f32.mrb[0].mxu0
    %2012 = vdwg.mxu0
    %2013 = vmatprep.subr.bf16.mxu0 0
    %2014 = vmatpush1.bf16.msra.mxu0 %v1926
    %2015 = vmatprep.subr.bf16.mxu0 0
    %2016 = vmatpush1.bf16.msra.mxu0 %v1929
    %2017 = vmatprep.subr.bf16.mxu0 0
    %2018 = vmatpush1.bf16.msra.mxu0 %v1932
    %2019 = vmatprep.subr.bf16.mxu0 0
    %2020 = vmatpush1.bf16.msra.mxu0 %v1935
    %2021 = vmatprep.subr.bf16.mxu0 0
    %2022 = vmatpush1.bf16.msra.mxu0 %v1938
    %2023 = vmatprep.subr.bf16.mxu0 0
    %2024 = vmatpush1.bf16.msra.mxu0 %v1941
    %2025 = vmatprep.subr.bf16.mxu0 0
    %2026 = vmatpush1.bf16.msra.mxu0 %v1944
    %2027 = vmatprep.subr.bf16.mxu0 0
    %2028 = vmatpush1.bf16.msra.mxu0 %v1947
    %2029 = vmatprep.subr.bf16.mxu0 0
    %2030 = vmatpush1.bf16.msra.mxu0 0
    %2031 = vmatprep.subr.bf16.mxu0 0
    %2032 = vmatpush1.bf16.msra.mxu0 0
    %2033 = vmatprep.subr.bf16.mxu0 0
    %2034 = vmatpush1.bf16.msra.mxu0 0
    %2035 = vmatprep.subr.bf16.mxu0 0
    %2036 = vmatpush1.bf16.msra.mxu0 0
    %2037 = vmatprep.subr.bf16.mxu0 0
    %2038 = vmatpush1.bf16.msra.mxu0 0
    %2039 = vmatprep.subr.bf16.mxu0 0
    %2040 = vmatpush1.bf16.msra.mxu0 0
    %2041 = vmatprep.subr.bf16.mxu0 0
    %2042 = vmatpush1.bf16.msra.mxu0 0
    %2043 = vmatprep.subr.bf16.mxu0 0
    %2044 = vmatpush1.bf16.msra.mxu0 0
    %2045 = vmatprep.mubr.bf16.mxu0 0
    %2046 = vmatmul.mubr.bf16.gmra.mrb[0].mxu0 %v1811
    %v2047 = vpop.f32.mrb[0].mxu0
    %v2048 = vadd.f32 0.0, %v2047
    %v2049 = vpop.f32.mrb[0].mxu0
    %v2050 = vpop.f32.mrb[0].mxu0
    %v2051 = vpop.f32.mrb[0].mxu0
    %2052 = vdwg.mxu0
    %v2053 = vadd.f32 %v1765, %v2007
    %v2054 = vadd.f32 %v1767, %v2009
    %v2055 = vxor.u32 %v2053, 2147483648
    %v2056 = vxor.u32 %v2054, 2147483648
    %v2057 = vmul.f32 %v2055, 1.442695
    %v2058 = vpow.pop %v2057
    %v2059 = vmul.f32 %v2056, 1.442695
    %v2060 = vpow.pop %v2059
    %v2061 = vadd.f32 %v2058, 1.0
    %v2062 = vadd.f32 %v2060, 1.0
    %v2063 = vrcp.pop %v2061
    %v2064 = vmul.f32 1.0, %v2063
    %v2065 = vrcp.pop %v2062
    %v2066 = vmul.f32 1.0, %v2065
    %v2067 = vadd.f32 %v2048, %v482
    %v2068 = vmul.f32 %v2064, %v2067
    %v2069 = vadd.f32 %v1806, %v2068
    %v2070 = vtanh.pop %v2069
    %v2071 = vsub.f32 %v1286, %v2070
    %v2072 = vmul.f32 %v2066, %v2071
    %v2073 = vadd.f32 %v2070, %v2072
    %2074 = vst [vmem:[#allocation3 + $0x1] sm:$0x1] %v2073
    %v2075 = vld [vmem:[%s4] sm:$0xff]
    %v2076 = vld [vmem:[%s4 + $0x8] sm:$0xf]
    %v2077 = vld [vmem:[%s4 + $0xc] sm:$0xff]
    %v2078 = vld [vmem:[%s4 + $0x14] sm:$0xf]
    %v2079 = vld [vmem:[%s4 + $0x18] sm:$0xff]
    %v2080 = vld [vmem:[%s4 + $0x20] sm:$0xf]
    %v2081 = vld [vmem:[%s4 + $0x24] sm:$0xff]
    %v2082 = vld [vmem:[%s4 + $0x2c] sm:$0xf]
    %v2083 = vld [vmem:[%s4 + $0x30] sm:$0xff]
    %v2084 = vld [vmem:[%s4 + $0x38] sm:$0xf]
    %v2085 = vld [vmem:[%s4 + $0x3c] sm:$0xff]
    %v2086 = vld [vmem:[%s4 + $0x44] sm:$0xf]
    %v2087 = vld [vmem:[%s4 + $0x48] sm:$0xff]
    %v2088 = vld [vmem:[%s4 + $0x50] sm:$0xf]
    %v2089 = vld [vmem:[%s4 + $0x54] sm:$0xff]
    %v2090 = vld [vmem:[%s4 + $0x5c] sm:$0xf]
    %v2091 = vld [vmem:[%s4 + $0x60] sm:$0xff]
    %v2092 = vld [vmem:[%s4 + $0x68] sm:$0xf]
    %v2093 = vld [vmem:[%s4 + $0x6c] sm:$0xff]
    %v2094 = vld [vmem:[%s4 + $0x74] sm:$0xf]
    %v2095 = vld [vmem:[%s4 + $0x78] sm:$0xff]
    %v2096 = vld [vmem:[%s4 + $0x80] sm:$0xf]
    %v2097 = vld [vmem:[%s4 + $0x84] sm:$0xff]
    %v2098 = vld [vmem:[%s4 + $0x8c] sm:$0xf]
    %v2099 = vld [vmem:[%s4 + $0x90] sm:$0xff]
    %v2100 = vld [vmem:[%s4 + $0x98] sm:$0xf]
    %v2101 = vld [vmem:[%s4 + $0x9c] sm:$0xff]
    %v2102 = vld [vmem:[%s4 + $0xa4] sm:$0xf]
    %v2103 = vld [vmem:[%s4 + $0xa8] sm:$0xff]
    %v2104 = vld [vmem:[%s4 + $0xb0] sm:$0xf]
    %v2105 = vld [vmem:[%s4 + $0xb4] sm:$0xff]
    %v2106 = vld [vmem:[%s4 + $0xbc] sm:$0xf]
    %v2139 = vunpack.c.l.b16 %v2075
    %v2140 = vunpack.c.h.b16 %v2075
    %v2141 = vunpack.c.l.b16 %v2076
    %v2142 = vunpack.c.l.b16 %v2077
    %v2143 = vunpack.c.h.b16 %v2077
    %v2144 = vunpack.c.l.b16 %v2078
    %v2145 = vunpack.c.l.b16 %v2079
    %v2146 = vunpack.c.h.b16 %v2079
    %v2147 = vunpack.c.l.b16 %v2080
    %v2148 = vunpack.c.l.b16 %v2081
    %v2149 = vunpack.c.h.b16 %v2081
    %v2150 = vunpack.c.l.b16 %v2082
    %v2151 = vunpack.c.l.b16 %v2083
    %v2152 = vunpack.c.h.b16 %v2083
    %v2153 = vunpack.c.l.b16 %v2084
    %v2154 = vunpack.c.l.b16 %v2085
    %v2155 = vunpack.c.h.b16 %v2085
    %v2156 = vunpack.c.l.b16 %v2086
    %v2157 = vunpack.c.l.b16 %v2087
    %v2158 = vunpack.c.h.b16 %v2087
    %v2159 = vunpack.c.l.b16 %v2088
    %v2160 = vunpack.c.l.b16 %v2089
    %v2161 = vunpack.c.h.b16 %v2089
    %v2162 = vunpack.c.l.b16 %v2090
    %v2163 = vunpack.c.l.b16 %v2091
    %v2164 = vunpack.c.h.b16 %v2091
    %v2165 = vunpack.c.l.b16 %v2092
    %v2166 = vunpack.c.l.b16 %v2093
    %v2167 = vunpack.c.h.b16 %v2093
    %v2168 = vunpack.c.l.b16 %v2094
    %v2169 = vunpack.c.l.b16 %v2095
    %v2170 = vunpack.c.h.b16 %v2095
    %v2171 = vunpack.c.l.b16 %v2096
    %v2172 = vunpack.c.l.b16 %v2097
    %v2173 = vunpack.c.h.b16 %v2097
    %v2174 = vunpack.c.l.b16 %v2098
    %v2175 = vunpack.c.l.b16 %v2099
    %v2176 = vunpack.c.h.b16 %v2099
    %v2177 = vunpack.c.l.b16 %v2100
    %v2178 = vunpack.c.l.b16 %v2101
    %v2179 = vunpack.c.h.b16 %v2101
    %v2180 = vunpack.c.l.b16 %v2102
    %v2181 = vunpack.c.l.b16 %v2103
    %v2182 = vunpack.c.h.b16 %v2103
    %v2183 = vunpack.c.l.b16 %v2104
    %v2184 = vunpack.c.l.b16 %v2105
    %v2185 = vunpack.c.h.b16 %v2105
    %v2186 = vunpack.c.l.b16 %v2106
    %v2187 = vpack.c.b16 %v2142, %v2139
    %v2188 = vpack.c.b16 %v2143, %v2140
    %v2189 = vpack.c.b16 %v2144, %v2141
    %v2190 = vpack.c.b16 %v2148, %v2145
    %v2191 = vpack.c.b16 %v2149, %v2146
    %v2192 = vpack.c.b16 %v2150, %v2147
    %v2193 = vpack.c.b16 %v2154, %v2151
    %v2194 = vpack.c.b16 %v2155, %v2152
    %v2195 = vpack.c.b16 %v2156, %v2153
    %v2196 = vpack.c.b16 %v2160, %v2157
    %v2197 = vpack.c.b16 %v2161, %v2158
    %v2198 = vpack.c.b16 %v2162, %v2159
    %v2199 = vpack.c.b16 %v2166, %v2163
    %v2200 = vpack.c.b16 %v2167, %v2164
    %v2201 = vpack.c.b16 %v2168, %v2165
    %v2202 = vpack.c.b16 %v2172, %v2169
    %v2203 = vpack.c.b16 %v2173, %v2170
    %v2204 = vpack.c.b16 %v2174, %v2171
    %v2205 = vpack.c.b16 %v2178, %v2175
    %v2206 = vpack.c.b16 %v2179, %v2176
    %v2207 = vpack.c.b16 %v2180, %v2177
    %v2208 = vpack.c.b16 %v2184, %v2181
    %v2209 = vpack.c.b16 %v2185, %v2182
    %v2210 = vpack.c.b16 %v2186, %v2183
    %2235 = vmatprep.subr.bf16.mxu0 %v2188
    %2236 = vmatpush1.bf16.msra.mxu0 %v2187
    %2237 = vmatprep.subr.bf16.mxu0 %v2191
    %2238 = vmatpush1.bf16.msra.mxu0 %v2190
    %2239 = vmatprep.subr.bf16.mxu0 %v2194
    %2240 = vmatpush1.bf16.msra.mxu0 %v2193
    %2241 = vmatprep.subr.bf16.mxu0 %v2197
    %2242 = vmatpush1.bf16.msra.mxu0 %v2196
    %2243 = vmatprep.subr.bf16.mxu0 %v2200
    %2244 = vmatpush1.bf16.msra.mxu0 %v2199
    %2245 = vmatprep.subr.bf16.mxu0 %v2203
    %2246 = vmatpush1.bf16.msra.mxu0 %v2202
    %2247 = vmatprep.subr.bf16.mxu0 %v2206
    %2248 = vmatpush1.bf16.msra.mxu0 %v2205
    %2249 = vmatprep.subr.bf16.mxu0 %v2209
    %2250 = vmatpush1.bf16.msra.mxu0 %v2208
    %2251 = vmatprep.subr.bf16.mxu0 0
    %2252 = vmatpush1.bf16.msra.mxu0 0
    %2253 = vmatprep.subr.bf16.mxu0 0
    %2254 = vmatpush1.bf16.msra.mxu0 0
    %2255 = vmatprep.subr.bf16.mxu0 0
    %2256 = vmatpush1.bf16.msra.mxu0 0
    %2257 = vmatprep.subr.bf16.mxu0 0
    %2258 = vmatpush1.bf16.msra.mxu0 0
    %2259 = vmatprep.subr.bf16.mxu0 0
    %2260 = vmatpush1.bf16.msra.mxu0 0
    %2261 = vmatprep.subr.bf16.mxu0 0
    %2262 = vmatpush1.bf16.msra.mxu0 0
    %2263 = vmatprep.subr.bf16.mxu0 0
    %2264 = vmatpush1.bf16.msra.mxu0 0
    %2265 = vmatprep.subr.bf16.mxu0 0
    %2266 = vmatpush1.bf16.msra.mxu0 0
    %2267 = vmatprep.mubr.bf16.mxu0 0
    %2268 = vmatmul.mubr.bf16.gmra.mrb[0].mxu0 %v1569
    %v2269 = vpop.f32.mrb[0].mxu0
    %v2270 = vadd.f32 0.0, %v2269
    %v2271 = vpop.f32.mrb[0].mxu0
    %v2272 = vadd.f32 0.0, %v2271
    %v2273 = vpop.f32.mrb[0].mxu0
    %v2274 = vpop.f32.mrb[0].mxu0
    %2275 = vdwg.mxu0
    %2276 = vmatprep.subr.bf16.mxu0 0
    %2277 = vmatpush1.bf16.msra.mxu0 %v2189
    %2278 = vmatprep.subr.bf16.mxu0 0
    %2279 = vmatpush1.bf16.msra.mxu0 %v2192
    %2280 = vmatprep.subr.bf16.mxu0 0
    %2281 = vmatpush1.bf16.msra.mxu0 %v2195
    %2282 = vmatprep.subr.bf16.mxu0 0
    %2283 = vmatpush1.bf16.msra.mxu0 %v2198
    %2284 = vmatprep.subr.bf16.mxu0 0
    %2285 = vmatpush1.bf16.msra.mxu0 %v2201
    %2286 = vmatprep.subr.bf16.mxu0 0
    %2287 = vmatpush1.bf16.msra.mxu0 %v2204
    %2288 = vmatprep.subr.bf16.mxu0 0
    %2289 = vmatpush1.bf16.msra.mxu0 %v2207
    %2290 = vmatprep.subr.bf16.mxu0 0
    %2291 = vmatpush1.bf16.msra.mxu0 %v2210
    %2292 = vmatprep.subr.bf16.mxu0 0
    %2293 = vmatpush1.bf16.msra.mxu0 0
    %2294 = vmatprep.subr.bf16.mxu0 0
    %2295 = vmatpush1.bf16.msra.mxu0 0
    %2296 = vmatprep.subr.bf16.mxu0 0
    %2297 = vmatpush1.bf16.msra.mxu0 0
    %2298 = vmatprep.subr.bf16.mxu0 0
    %2299 = vmatpush1.bf16.msra.mxu0 0
    %2300 = vmatprep.subr.bf16.mxu0 0
    %2301 = vmatpush1.bf16.msra.mxu0 0
    %2302 = vmatprep.subr.bf16.mxu0 0
    %2303 = vmatpush1.bf16.msra.mxu0 0
    %2304 = vmatprep.subr.bf16.mxu0 0
    %2305 = vmatpush1.bf16.msra.mxu0 0
    %2306 = vmatprep.subr.bf16.mxu0 0
    %2307 = vmatpush1.bf16.msra.mxu0 0
    %2308 = vmatprep.mubr.bf16.mxu0 0
    %2309 = vmatmul.mubr.bf16.gmra.mrb[0].mxu0 %v1569
    %v2310 = vpop.f32.mrb[0].mxu0
    %v2311 = vadd.f32 0.0, %v2310
    %v2312 = vpop.f32.mrb[0].mxu0
    %v2313 = vpop.f32.mrb[0].mxu0
    %v2314 = vpop.f32.mrb[0].mxu0
    %2315 = vdwg.mxu0
    %s2316 = scalar_lea.vmem [#allocation2], 2
    %v2317 = vld [vmem:[%s2316] ss:$8 sm:$0x7]
    %v2320 = vcombine.low %v2270, %v2272
    %v2322 = vunpack.c.l.s4 1966171168
    %v2323 = vunpack.c.0.s8 %v2322
    %v2324 = vlaneseq
    %v2325 = vshrl.u32 %v2324, 7
    %v2326 = vsub.s32 %v2323, %v2325
    %v2327 = vrot.slane %v2320, %v2326
    %v2329 = vunpack.c.l.s4 1966171168
    %v2330 = vunpack.c.0.s8 %v2329
    %v2331 = vlaneseq
    %v2332 = vshrl.u32 %v2331, 7
    %v2333 = vsub.s32 %v2330, %v2332
    %v2334 = vrot.slane %v2327, %v2333
    %v2336 = vadd.f32 %v2317, %v2334
    %v2337 = vxor.u32 %v2336, 2147483648
    %v2338 = vmul.f32 %v2337, 1.442695
    %v2339 = vpow.pop %v2338
    %v2340 = vadd.f32 %v2339, 1.0
    %v2341 = vrcp.pop %v2340
    %v2342 = vmul.f32 1.0, %v2341
    %v2343 = vadd.f32 %v2311, %v480
    %v2344 = vmul.f32 %v2342, %v2343
    %v2346 = vrot.slane %v2317, 2
    %v2348 = vadd.f32 %v2346, %v2344
    %v2349 = vtanh.pop %v2348
    %v2350 = vsub.f32 %v1568, %v2349
    %v2352 = vrot.slane %v2342, 1
    %v2354 = vmul.f32 %v2352, %v2350
    %v2355 = vadd.f32 %v2349, %v2354
    %v2356 = vpack.c.bf16 %v2355, %v2355
    %v2357 = vld [vmem:[%s5] sm:$0xff]
    %v2358 = vld [vmem:[%s5 + $0x8] sm:$0xf]
    %v2359 = vld [vmem:[%s5 + $0xc] sm:$0xff]
    %v2360 = vld [vmem:[%s5 + $0x14] sm:$0xf]
    %v2361 = vld [vmem:[%s5 + $0x18] sm:$0xff]
    %v2362 = vld [vmem:[%s5 + $0x20] sm:$0xf]
    %v2363 = vld [vmem:[%s5 + $0x24] sm:$0xff]
    %v2364 = vld [vmem:[%s5 + $0x2c] sm:$0xf]
    %v2365 = vld [vmem:[%s5 + $0x30] sm:$0xff]
    %v2366 = vld [vmem:[%s5 + $0x38] sm:$0xf]
    %v2367 = vld [vmem:[%s5 + $0x3c] sm:$0xff]
    %v2368 = vld [vmem:[%s5 + $0x44] sm:$0xf]
    %v2369 = vld [vmem:[%s5 + $0x48] sm:$0xff]
    %v2370 = vld [vmem:[%s5 + $0x50] sm:$0xf]
    %v2371 = vld [vmem:[%s5 + $0x54] sm:$0xff]
    %v2372 = vld [vmem:[%s5 + $0x5c] sm:$0xf]
    %v2373 = vld [vmem:[%s5 + $0x60] sm:$0xff]
    %v2374 = vld [vmem:[%s5 + $0x68] sm:$0xf]
    %v2375 = vld [vmem:[%s5 + $0x6c] sm:$0xff]
    %v2376 = vld [vmem:[%s5 + $0x74] sm:$0xf]
    %v2377 = vld [vmem:[%s5 + $0x78] sm:$0xff]
    %v2378 = vld [vmem:[%s5 + $0x80] sm:$0xf]
    %v2379 = vld [vmem:[%s5 + $0x84] sm:$0xff]
    %v2380 = vld [vmem:[%s5 + $0x8c] sm:$0xf]
    %v2381 = vld [vmem:[%s5 + $0x90] sm:$0xff]
    %v2382 = vld [vmem:[%s5 + $0x98] sm:$0xf]
    %v2383 = vld [vmem:[%s5 + $0x9c] sm:$0xff]
    %v2384 = vld [vmem:[%s5 + $0xa4] sm:$0xf]
    %v2385 = vld [vmem:[%s5 + $0xa8] sm:$0xff]
    %v2386 = vld [vmem:[%s5 + $0xb0] sm:$0xf]
    %v2387 = vld [vmem:[%s5 + $0xb4] sm:$0xff]
    %v2388 = vld [vmem:[%s5 + $0xbc] sm:$0xf]
    %v2421 = vunpack.c.l.b16 %v2357
    %v2422 = vunpack.c.h.b16 %v2357
    %v2423 = vunpack.c.l.b16 %v2358
    %v2424 = vunpack.c.l.b16 %v2359
    %v2425 = vunpack.c.h.b16 %v2359
    %v2426 = vunpack.c.l.b16 %v2360
    %v2427 = vunpack.c.l.b16 %v2361
    %v2428 = vunpack.c.h.b16 %v2361
    %v2429 = vunpack.c.l.b16 %v2362
    %v2430 = vunpack.c.l.b16 %v2363
    %v2431 = vunpack.c.h.b16 %v2363
    %v2432 = vunpack.c.l.b16 %v2364
    %v2433 = vunpack.c.l.b16 %v2365
    %v2434 = vunpack.c.h.b16 %v2365
    %v2435 = vunpack.c.l.b16 %v2366
    %v2436 = vunpack.c.l.b16 %v2367
    %v2437 = vunpack.c.h.b16 %v2367
    %v2438 = vunpack.c.l.b16 %v2368
    %v2439 = vunpack.c.l.b16 %v2369
    %v2440 = vunpack.c.h.b16 %v2369
    %v2441 = vunpack.c.l.b16 %v2370
    %v2442 = vunpack.c.l.b16 %v2371
    %v2443 = vunpack.c.h.b16 %v2371
    %v2444 = vunpack.c.l.b16 %v2372
    %v2445 = vunpack.c.l.b16 %v2373
    %v2446 = vunpack.c.h.b16 %v2373
    %v2447 = vunpack.c.l.b16 %v2374
    %v2448 = vunpack.c.l.b16 %v2375
    %v2449 = vunpack.c.h.b16 %v2375
    %v2450 = vunpack.c.l.b16 %v2376
    %v2451 = vunpack.c.l.b16 %v2377
    %v2452 = vunpack.c.h.b16 %v2377
    %v2453 = vunpack.c.l.b16 %v2378
    %v2454 = vunpack.c.l.b16 %v2379
    %v2455 = vunpack.c.h.b16 %v2379
    %v2456 = vunpack.c.l.b16 %v2380
    %v2457 = vunpack.c.l.b16 %v2381
    %v2458 = vunpack.c.h.b16 %v2381
    %v2459 = vunpack.c.l.b16 %v2382
    %v2460 = vunpack.c.l.b16 %v2383
    %v2461 = vunpack.c.h.b16 %v2383
    %v2462 = vunpack.c.l.b16 %v2384
    %v2463 = vunpack.c.l.b16 %v2385
    %v2464 = vunpack.c.h.b16 %v2385
    %v2465 = vunpack.c.l.b16 %v2386
    %v2466 = vunpack.c.l.b16 %v2387
    %v2467 = vunpack.c.h.b16 %v2387
    %v2468 = vunpack.c.l.b16 %v2388
    %v2469 = vpack.c.b16 %v2424, %v2421
    %v2470 = vpack.c.b16 %v2425, %v2422
    %v2471 = vpack.c.b16 %v2426, %v2423
    %v2472 = vpack.c.b16 %v2430, %v2427
    %v2473 = vpack.c.b16 %v2431, %v2428
    %v2474 = vpack.c.b16 %v2432, %v2429
    %v2475 = vpack.c.b16 %v2436, %v2433
    %v2476 = vpack.c.b16 %v2437, %v2434
    %v2477 = vpack.c.b16 %v2438, %v2435
    %v2478 = vpack.c.b16 %v2442, %v2439
    %v2479 = vpack.c.b16 %v2443, %v2440
    %v2480 = vpack.c.b16 %v2444, %v2441
    %v2481 = vpack.c.b16 %v2448, %v2445
    %v2482 = vpack.c.b16 %v2449, %v2446
    %v2483 = vpack.c.b16 %v2450, %v2447
    %v2484 = vpack.c.b16 %v2454, %v2451
    %v2485 = vpack.c.b16 %v2455, %v2452
    %v2486 = vpack.c.b16 %v2456, %v2453
    %v2487 = vpack.c.b16 %v2460, %v2457
    %v2488 = vpack.c.b16 %v2461, %v2458
    %v2489 = vpack.c.b16 %v2462, %v2459
    %v2490 = vpack.c.b16 %v2466, %v2463
    %v2491 = vpack.c.b16 %v2467, %v2464
    %v2492 = vpack.c.b16 %v2468, %v2465
    %2517 = vmatprep.subr.bf16.mxu0 %v2470
    %2518 = vmatpush1.bf16.msra.mxu0 %v2469
    %2519 = vmatprep.subr.bf16.mxu0 %v2473
    %2520 = vmatpush1.bf16.msra.mxu0 %v2472
    %2521 = vmatprep.subr.bf16.mxu0 %v2476
    %2522 = vmatpush1.bf16.msra.mxu0 %v2475
    %2523 = vmatprep.subr.bf16.mxu0 %v2479
    %2524 = vmatpush1.bf16.msra.mxu0 %v2478
    %2525 = vmatprep.subr.bf16.mxu0 %v2482
    %2526 = vmatpush1.bf16.msra.mxu0 %v2481
    %2527 = vmatprep.subr.bf16.mxu0 %v2485
    %2528 = vmatpush1.bf16.msra.mxu0 %v2484
    %2529 = vmatprep.subr.bf16.mxu0 %v2488
    %2530 = vmatpush1.bf16.msra.mxu0 %v2487
    %2531 = vmatprep.subr.bf16.mxu0 %v2491
    %2532 = vmatpush1.bf16.msra.mxu0 %v2490
    %2533 = vmatprep.subr.bf16.mxu0 0
    %2534 = vmatpush1.bf16.msra.mxu0 0
    %2535 = vmatprep.subr.bf16.mxu0 0
    %2536 = vmatpush1.bf16.msra.mxu0 0
    %2537 = vmatprep.subr.bf16.mxu0 0
    %2538 = vmatpush1.bf16.msra.mxu0 0
    %2539 = vmatprep.subr.bf16.mxu0 0
    %2540 = vmatpush1.bf16.msra.mxu0 0
    %2541 = vmatprep.subr.bf16.mxu0 0
    %2542 = vmatpush1.bf16.msra.mxu0 0
    %2543 = vmatprep.subr.bf16.mxu0 0
    %2544 = vmatpush1.bf16.msra.mxu0 0
    %2545 = vmatprep.subr.bf16.mxu0 0
    %2546 = vmatpush1.bf16.msra.mxu0 0
    %2547 = vmatprep.subr.bf16.mxu0 0
    %2548 = vmatpush1.bf16.msra.mxu0 0
    %2549 = vmatprep.mubr.bf16.mxu0 0
    %2550 = vmatmul.mubr.bf16.gmra.mrb[0].mxu0 %v2356
    %v2551 = vpop.f32.mrb[0].mxu0
    %v2552 = vadd.f32 %v931, %v2551
    %v2553 = vpop.f32.mrb[0].mxu0
    %v2554 = vadd.f32 %v935, %v2553
    %v2555 = vpop.f32.mrb[0].mxu0
    %v2556 = vpop.f32.mrb[0].mxu0
    %2557 = vdwg.mxu0
    %2558 = vmatprep.subr.bf16.mxu0 0
    %2559 = vmatpush1.bf16.msra.mxu0 %v2471
    %2560 = vmatprep.subr.bf16.mxu0 0
    %2561 = vmatpush1.bf16.msra.mxu0 %v2474
    %2562 = vmatprep.subr.bf16.mxu0 0
    %2563 = vmatpush1.bf16.msra.mxu0 %v2477
    %2564 = vmatprep.subr.bf16.mxu0 0
    %2565 = vmatpush1.bf16.msra.mxu0 %v2480
    %2566 = vmatprep.subr.bf16.mxu0 0
    %2567 = vmatpush1.bf16.msra.mxu0 %v2483
    %2568 = vmatprep.subr.bf16.mxu0 0
    %2569 = vmatpush1.bf16.msra.mxu0 %v2486
    %2570 = vmatprep.subr.bf16.mxu0 0
    %2571 = vmatpush1.bf16.msra.mxu0 %v2489
    %2572 = vmatprep.subr.bf16.mxu0 0
    %2573 = vmatpush1.bf16.msra.mxu0 %v2492
    %2574 = vmatprep.subr.bf16.mxu0 0
    %2575 = vmatpush1.bf16.msra.mxu0 0
    %2576 = vmatprep.subr.bf16.mxu0 0
    %2577 = vmatpush1.bf16.msra.mxu0 0
    %2578 = vmatprep.subr.bf16.mxu0 0
    %2579 = vmatpush1.bf16.msra.mxu0 0
    %2580 = vmatprep.subr.bf16.mxu0 0
    %2581 = vmatpush1.bf16.msra.mxu0 0
    %2582 = vmatprep.subr.bf16.mxu0 0
    %2583 = vmatpush1.bf16.msra.mxu0 0
    %2584 = vmatprep.subr.bf16.mxu0 0
    %2585 = vmatpush1.bf16.msra.mxu0 0
    %2586 = vmatprep.subr.bf16.mxu0 0
    %2587 = vmatpush1.bf16.msra.mxu0 0
    %2588 = vmatprep.subr.bf16.mxu0 0
    %2589 = vmatpush1.bf16.msra.mxu0 0
    %2590 = vmatprep.mubr.bf16.mxu0 0
    %2591 = vmatmul.mubr.bf16.gmra.mrb[0].mxu0 %v2356
    %v2592 = vpop.f32.mrb[0].mxu0
    %v2593 = vadd.f32 %v939, %v2592
    %v2594 = vpop.f32.mrb[0].mxu0
    %v2595 = vpop.f32.mrb[0].mxu0
    %v2596 = vpop.f32.mrb[0].mxu0
    %2597 = vdwg.mxu0
    %v2598 = vpack.c.bf16 %v2073, %v2073
    %v2599 = vld [vmem:[%s6] sm:$0xff]
    %v2600 = vld [vmem:[%s6 + $0x8] sm:$0xf]
    %v2601 = vld [vmem:[%s6 + $0xc] sm:$0xff]
    %v2602 = vld [vmem:[%s6 + $0x14] sm:$0xf]
    %v2603 = vld [vmem:[%s6 + $0x18] sm:$0xff]
    %v2604 = vld [vmem:[%s6 + $0x20] sm:$0xf]
    %v2605 = vld [vmem:[%s6 + $0x24] sm:$0xff]
    %v2606 = vld [vmem:[%s6 + $0x2c] sm:$0xf]
    %v2607 = vld [vmem:[%s6 + $0x30] sm:$0xff]
    %v2608 = vld [vmem:[%s6 + $0x38] sm:$0xf]
    %v2609 = vld [vmem:[%s6 + $0x3c] sm:$0xff]
    %v2610 = vld [vmem:[%s6 + $0x44] sm:$0xf]
    %v2611 = vld [vmem:[%s6 + $0x48] sm:$0xff]
    %v2612 = vld [vmem:[%s6 + $0x50] sm:$0xf]
    %v2613 = vld [vmem:[%s6 + $0x54] sm:$0xff]
    %v2614 = vld [vmem:[%s6 + $0x5c] sm:$0xf]
    %v2615 = vld [vmem:[%s6 + $0x60] sm:$0xff]
    %v2616 = vld [vmem:[%s6 + $0x68] sm:$0xf]
    %v2617 = vld [vmem:[%s6 + $0x6c] sm:$0xff]
    %v2618 = vld [vmem:[%s6 + $0x74] sm:$0xf]
    %v2619 = vld [vmem:[%s6 + $0x78] sm:$0xff]
    %v2620 = vld [vmem:[%s6 + $0x80] sm:$0xf]
    %v2621 = vld [vmem:[%s6 + $0x84] sm:$0xff]
    %v2622 = vld [vmem:[%s6 + $0x8c] sm:$0xf]
    %v2623 = vld [vmem:[%s6 + $0x90] sm:$0xff]
    %v2624 = vld [vmem:[%s6 + $0x98] sm:$0xf]
    %v2625 = vld [vmem:[%s6 + $0x9c] sm:$0xff]
    %v2626 = vld [vmem:[%s6 + $0xa4] sm:$0xf]
    %v2627 = vld [vmem:[%s6 + $0xa8] sm:$0xff]
    %v2628 = vld [vmem:[%s6 + $0xb0] sm:$0xf]
    %v2629 = vld [vmem:[%s6 + $0xb4] sm:$0xff]
    %v2630 = vld [vmem:[%s6 + $0xbc] sm:$0xf]
    %v2663 = vunpack.c.l.b16 %v2599
    %v2664 = vunpack.c.h.b16 %v2599
    %v2665 = vunpack.c.l.b16 %v2600
    %v2666 = vunpack.c.l.b16 %v2601
    %v2667 = vunpack.c.h.b16 %v2601
    %v2668 = vunpack.c.l.b16 %v2602
    %v2669 = vunpack.c.l.b16 %v2603
    %v2670 = vunpack.c.h.b16 %v2603
    %v2671 = vunpack.c.l.b16 %v2604
    %v2672 = vunpack.c.l.b16 %v2605
    %v2673 = vunpack.c.h.b16 %v2605
    %v2674 = vunpack.c.l.b16 %v2606
    %v2675 = vunpack.c.l.b16 %v2607
    %v2676 = vunpack.c.h.b16 %v2607
    %v2677 = vunpack.c.l.b16 %v2608
    %v2678 = vunpack.c.l.b16 %v2609
    %v2679 = vunpack.c.h.b16 %v2609
    %v2680 = vunpack.c.l.b16 %v2610
    %v2681 = vunpack.c.l.b16 %v2611
    %v2682 = vunpack.c.h.b16 %v2611
    %v2683 = vunpack.c.l.b16 %v2612
    %v2684 = vunpack.c.l.b16 %v2613
    %v2685 = vunpack.c.h.b16 %v2613
    %v2686 = vunpack.c.l.b16 %v2614
    %v2687 = vunpack.c.l.b16 %v2615
    %v2688 = vunpack.c.h.b16 %v2615
    %v2689 = vunpack.c.l.b16 %v2616
    %v2690 = vunpack.c.l.b16 %v2617
    %v2691 = vunpack.c.h.b16 %v2617
    %v2692 = vunpack.c.l.b16 %v2618
    %v2693 = vunpack.c.l.b16 %v2619
    %v2694 = vunpack.c.h.b16 %v2619
    %v2695 = vunpack.c.l.b16 %v2620
    %v2696 = vunpack.c.l.b16 %v2621
    %v2697 = vunpack.c.h.b16 %v2621
    %v2698 = vunpack.c.l.b16 %v2622
    %v2699 = vunpack.c.l.b16 %v2623
    %v2700 = vunpack.c.h.b16 %v2623
    %v2701 = vunpack.c.l.b16 %v2624
    %v2702 = vunpack.c.l.b16 %v2625
    %v2703 = vunpack.c.h.b16 %v2625
    %v2704 = vunpack.c.l.b16 %v2626
    %v2705 = vunpack.c.l.b16 %v2627
    %v2706 = vunpack.c.h.b16 %v2627
    %v2707 = vunpack.c.l.b16 %v2628
    %v2708 = vunpack.c.l.b16 %v2629
    %v2709 = vunpack.c.h.b16 %v2629
    %v2710 = vunpack.c.l.b16 %v2630
    %v2711 = vpack.c.b16 %v2666, %v2663
    %v2712 = vpack.c.b16 %v2667, %v2664
    %v2713 = vpack.c.b16 %v2668, %v2665
    %v2714 = vpack.c.b16 %v2672, %v2669
    %v2715 = vpack.c.b16 %v2673, %v2670
    %v2716 = vpack.c.b16 %v2674, %v2671
    %v2717 = vpack.c.b16 %v2678, %v2675
    %v2718 = vpack.c.b16 %v2679, %v2676
    %v2719 = vpack.c.b16 %v2680, %v2677
    %v2720 = vpack.c.b16 %v2684, %v2681
    %v2721 = vpack.c.b16 %v2685, %v2682
    %v2722 = vpack.c.b16 %v2686, %v2683
    %v2723 = vpack.c.b16 %v2690, %v2687
    %v2724 = vpack.c.b16 %v2691, %v2688
    %v2725 = vpack.c.b16 %v2692, %v2689
    %v2726 = vpack.c.b16 %v2696, %v2693
    %v2727 = vpack.c.b16 %v2697, %v2694
    %v2728 = vpack.c.b16 %v2698, %v2695
    %v2729 = vpack.c.b16 %v2702, %v2699
    %v2730 = vpack.c.b16 %v2703, %v2700
    %v2731 = vpack.c.b16 %v2704, %v2701
    %v2732 = vpack.c.b16 %v2708, %v2705
    %v2733 = vpack.c.b16 %v2709, %v2706
    %v2734 = vpack.c.b16 %v2710, %v2707
    %2759 = vmatprep.subr.bf16.mxu0 %v2712
    %2760 = vmatpush1.bf16.msra.mxu0 %v2711
    %2761 = vmatprep.subr.bf16.mxu0 %v2715
    %2762 = vmatpush1.bf16.msra.mxu0 %v2714
    %2763 = vmatprep.subr.bf16.mxu0 %v2718
    %2764 = vmatpush1.bf16.msra.mxu0 %v2717
    %2765 = vmatprep.subr.bf16.mxu0 %v2721
    %2766 = vmatpush1.bf16.msra.mxu0 %v2720
    %2767 = vmatprep.subr.bf16.mxu0 %v2724
    %2768 = vmatpush1.bf16.msra.mxu0 %v2723
    %2769 = vmatprep.subr.bf16.mxu0 %v2727
    %2770 = vmatpush1.bf16.msra.mxu0 %v2726
    %2771 = vmatprep.subr.bf16.mxu0 %v2730
    %2772 = vmatpush1.bf16.msra.mxu0 %v2729
    %2773 = vmatprep.subr.bf16.mxu0 %v2733
    %2774 = vmatpush1.bf16.msra.mxu0 %v2732
    %2775 = vmatprep.subr.bf16.mxu0 0
    %2776 = vmatpush1.bf16.msra.mxu0 0
    %2777 = vmatprep.subr.bf16.mxu0 0
    %2778 = vmatpush1.bf16.msra.mxu0 0
    %2779 = vmatprep.subr.bf16.mxu0 0
    %2780 = vmatpush1.bf16.msra.mxu0 0
    %2781 = vmatprep.subr.bf16.mxu0 0
    %2782 = vmatpush1.bf16.msra.mxu0 0
    %2783 = vmatprep.subr.bf16.mxu0 0
    %2784 = vmatpush1.bf16.msra.mxu0 0
    %2785 = vmatprep.subr.bf16.mxu0 0
    %2786 = vmatpush1.bf16.msra.mxu0 0
    %2787 = vmatprep.subr.bf16.mxu0 0
    %2788 = vmatpush1.bf16.msra.mxu0 0
    %2789 = vmatprep.subr.bf16.mxu0 0
    %2790 = vmatpush1.bf16.msra.mxu0 0
    %2791 = vmatprep.mubr.bf16.mxu0 0
    %2792 = vmatmul.mubr.bf16.gmra.mrb[0].mxu0 %v2598
    %v2793 = vpop.f32.mrb[0].mxu0
    %v2794 = vadd.f32 0.0, %v2793
    %v2795 = vpop.f32.mrb[0].mxu0
    %v2796 = vadd.f32 0.0, %v2795
    %v2797 = vpop.f32.mrb[0].mxu0
    %v2798 = vpop.f32.mrb[0].mxu0
    %2799 = vdwg.mxu0
    %2800 = vmatprep.subr.bf16.mxu0 0
    %2801 = vmatpush1.bf16.msra.mxu0 %v2713
    %2802 = vmatprep.subr.bf16.mxu0 0
    %2803 = vmatpush1.bf16.msra.mxu0 %v2716
    %2804 = vmatprep.subr.bf16.mxu0 0
    %2805 = vmatpush1.bf16.msra.mxu0 %v2719
    %2806 = vmatprep.subr.bf16.mxu0 0
    %2807 = vmatpush1.bf16.msra.mxu0 %v2722
    %2808 = vmatprep.subr.bf16.mxu0 0
    %2809 = vmatpush1.bf16.msra.mxu0 %v2725
    %2810 = vmatprep.subr.bf16.mxu0 0
    %2811 = vmatpush1.bf16.msra.mxu0 %v2728
    %2812 = vmatprep.subr.bf16.mxu0 0
    %2813 = vmatpush1.bf16.msra.mxu0 %v2731
    %2814 = vmatprep.subr.bf16.mxu0 0
    %2815 = vmatpush1.bf16.msra.mxu0 %v2734
    %2816 = vmatprep.subr.bf16.mxu0 0
    %2817 = vmatpush1.bf16.msra.mxu0 0
    %2818 = vmatprep.subr.bf16.mxu0 0
    %2819 = vmatpush1.bf16.msra.mxu0 0
    %2820 = vmatprep.subr.bf16.mxu0 0
    %2821 = vmatpush1.bf16.msra.mxu0 0
    %2822 = vmatprep.subr.bf16.mxu0 0
    %2823 = vmatpush1.bf16.msra.mxu0 0
    %2824 = vmatprep.subr.bf16.mxu0 0
    %2825 = vmatpush1.bf16.msra.mxu0 0
    %2826 = vmatprep.subr.bf16.mxu0 0
    %2827 = vmatpush1.bf16.msra.mxu0 0
    %2828 = vmatprep.subr.bf16.mxu0 0
    %2829 = vmatpush1.bf16.msra.mxu0 0
    %2830 = vmatprep.subr.bf16.mxu0 0
    %2831 = vmatpush1.bf16.msra.mxu0 0
    %2832 = vmatprep.mubr.bf16.mxu0 0
    %2833 = vmatmul.mubr.bf16.gmra.mrb[0].mxu0 %v2598
    %v2834 = vpop.f32.mrb[0].mxu0
    %v2835 = vadd.f32 0.0, %v2834
    %v2836 = vpop.f32.mrb[0].mxu0
    %v2837 = vpop.f32.mrb[0].mxu0
    %v2838 = vpop.f32.mrb[0].mxu0
    %2839 = vdwg.mxu0
    %v2840 = vadd.f32 %v2552, %v2794
    %v2841 = vadd.f32 %v2554, %v2796
    %v2842 = vxor.u32 %v2840, 2147483648
    %v2843 = vxor.u32 %v2841, 2147483648
    %v2844 = vmul.f32 %v2842, 1.442695
    %v2845 = vpow.pop %v2844
    %v2846 = vmul.f32 %v2843, 1.442695
    %v2847 = vpow.pop %v2846
    %v2848 = vadd.f32 %v2845, 1.0
    %v2849 = vadd.f32 %v2847, 1.0
    %v2850 = vrcp.pop %v2848
    %v2851 = vmul.f32 1.0, %v2850
    %v2852 = vrcp.pop %v2849
    %v2853 = vmul.f32 1.0, %v2852
    %v2854 = vadd.f32 %v2835, %v482
    %v2855 = vmul.f32 %v2851, %v2854
    %v2856 = vadd.f32 %v2593, %v2855
    %v2857 = vtanh.pop %v2856
    %v2858 = vsub.f32 %v2073, %v2857
    %v2859 = vmul.f32 %v2853, %v2858
    %v2860 = vadd.f32 %v2857, %v2859
    %2861 = vst [vmem:[#allocation3 + $0x2] sm:$0x1] %v2860
    %v2862 = vld [vmem:[%s4] sm:$0xff]
    %v2863 = vld [vmem:[%s4 + $0x8] sm:$0xf]
    %v2864 = vld [vmem:[%s4 + $0xc] sm:$0xff]
    %v2865 = vld [vmem:[%s4 + $0x14] sm:$0xf]
    %v2866 = vld [vmem:[%s4 + $0x18] sm:$0xff]
    %v2867 = vld [vmem:[%s4 + $0x20] sm:$0xf]
    %v2868 = vld [vmem:[%s4 + $0x24] sm:$0xff]
    %v2869 = vld [vmem:[%s4 + $0x2c] sm:$0xf]
    %v2870 = vld [vmem:[%s4 + $0x30] sm:$0xff]
    %v2871 = vld [vmem:[%s4 + $0x38] sm:$0xf]
    %v2872 = vld [vmem:[%s4 + $0x3c] sm:$0xff]
    %v2873 = vld [vmem:[%s4 + $0x44] sm:$0xf]
    %v2874 = vld [vmem:[%s4 + $0x48] sm:$0xff]
    %v2875 = vld [vmem:[%s4 + $0x50] sm:$0xf]
    %v2876 = vld [vmem:[%s4 + $0x54] sm:$0xff]
    %v2877 = vld [vmem:[%s4 + $0x5c] sm:$0xf]
    %v2878 = vld [vmem:[%s4 + $0x60] sm:$0xff]
    %v2879 = vld [vmem:[%s4 + $0x68] sm:$0xf]
    %v2880 = vld [vmem:[%s4 + $0x6c] sm:$0xff]
    %v2881 = vld [vmem:[%s4 + $0x74] sm:$0xf]
    %v2882 = vld [vmem:[%s4 + $0x78] sm:$0xff]
    %v2883 = vld [vmem:[%s4 + $0x80] sm:$0xf]
    %v2884 = vld [vmem:[%s4 + $0x84] sm:$0xff]
    %v2885 = vld [vmem:[%s4 + $0x8c] sm:$0xf]
    %v2886 = vld [vmem:[%s4 + $0x90] sm:$0xff]
    %v2887 = vld [vmem:[%s4 + $0x98] sm:$0xf]
    %v2888 = vld [vmem:[%s4 + $0x9c] sm:$0xff]
    %v2889 = vld [vmem:[%s4 + $0xa4] sm:$0xf]
    %v2890 = vld [vmem:[%s4 + $0xa8] sm:$0xff]
    %v2891 = vld [vmem:[%s4 + $0xb0] sm:$0xf]
    %v2892 = vld [vmem:[%s4 + $0xb4] sm:$0xff]
    %v2893 = vld [vmem:[%s4 + $0xbc] sm:$0xf]
    %v2926 = vunpack.c.l.b16 %v2862
    %v2927 = vunpack.c.h.b16 %v2862
    %v2928 = vunpack.c.l.b16 %v2863
    %v2929 = vunpack.c.l.b16 %v2864
    %v2930 = vunpack.c.h.b16 %v2864
    %v2931 = vunpack.c.l.b16 %v2865
    %v2932 = vunpack.c.l.b16 %v2866
    %v2933 = vunpack.c.h.b16 %v2866
    %v2934 = vunpack.c.l.b16 %v2867
    %v2935 = vunpack.c.l.b16 %v2868
    %v2936 = vunpack.c.h.b16 %v2868
    %v2937 = vunpack.c.l.b16 %v2869
    %v2938 = vunpack.c.l.b16 %v2870
    %v2939 = vunpack.c.h.b16 %v2870
    %v2940 = vunpack.c.l.b16 %v2871
    %v2941 = vunpack.c.l.b16 %v2872
    %v2942 = vunpack.c.h.b16 %v2872
    %v2943 = vunpack.c.l.b16 %v2873
    %v2944 = vunpack.c.l.b16 %v2874
    %v2945 = vunpack.c.h.b16 %v2874
    %v2946 = vunpack.c.l.b16 %v2875
    %v2947 = vunpack.c.l.b16 %v2876
    %v2948 = vunpack.c.h.b16 %v2876
    %v2949 = vunpack.c.l.b16 %v2877
    %v2950 = vunpack.c.l.b16 %v2878
    %v2951 = vunpack.c.h.b16 %v2878
    %v2952 = vunpack.c.l.b16 %v2879
    %v2953 = vunpack.c.l.b16 %v2880
    %v2954 = vunpack.c.h.b16 %v2880
    %v2955 = vunpack.c.l.b16 %v2881
    %v2956 = vunpack.c.l.b16 %v2882
    %v2957 = vunpack.c.h.b16 %v2882
    %v2958 = vunpack.c.l.b16 %v2883
    %v2959 = vunpack.c.l.b16 %v2884
    %v2960 = vunpack.c.h.b16 %v2884
    %v2961 = vunpack.c.l.b16 %v2885
    %v2962 = vunpack.c.l.b16 %v2886
    %v2963 = vunpack.c.h.b16 %v2886
    %v2964 = vunpack.c.l.b16 %v2887
    %v2965 = vunpack.c.l.b16 %v2888
    %v2966 = vunpack.c.h.b16 %v2888
    %v2967 = vunpack.c.l.b16 %v2889
    %v2968 = vunpack.c.l.b16 %v2890
    %v2969 = vunpack.c.h.b16 %v2890
    %v2970 = vunpack.c.l.b16 %v2891
    %v2971 = vunpack.c.l.b16 %v2892
    %v2972 = vunpack.c.h.b16 %v2892
    %v2973 = vunpack.c.l.b16 %v2893
    %v2974 = vpack.c.b16 %v2929, %v2926
    %v2975 = vpack.c.b16 %v2930, %v2927
    %v2976 = vpack.c.b16 %v2931, %v2928
    %v2977 = vpack.c.b16 %v2935, %v2932
    %v2978 = vpack.c.b16 %v2936, %v2933
    %v2979 = vpack.c.b16 %v2937, %v2934
    %v2980 = vpack.c.b16 %v2941, %v2938
    %v2981 = vpack.c.b16 %v2942, %v2939
    %v2982 = vpack.c.b16 %v2943, %v2940
    %v2983 = vpack.c.b16 %v2947, %v2944
    %v2984 = vpack.c.b16 %v2948, %v2945
    %v2985 = vpack.c.b16 %v2949, %v2946
    %v2986 = vpack.c.b16 %v2953, %v2950
    %v2987 = vpack.c.b16 %v2954, %v2951
    %v2988 = vpack.c.b16 %v2955, %v2952
    %v2989 = vpack.c.b16 %v2959, %v2956
    %v2990 = vpack.c.b16 %v2960, %v2957
    %v2991 = vpack.c.b16 %v2961, %v2958
    %v2992 = vpack.c.b16 %v2965, %v2962
    %v2993 = vpack.c.b16 %v2966, %v2963
    %v2994 = vpack.c.b16 %v2967, %v2964
    %v2995 = vpack.c.b16 %v2971, %v2968
    %v2996 = vpack.c.b16 %v2972, %v2969
    %v2997 = vpack.c.b16 %v2973, %v2970
    %3022 = vmatprep.subr.bf16.mxu0 %v2975
    %3023 = vmatpush1.bf16.msra.mxu0 %v2974
    %3024 = vmatprep.subr.bf16.mxu0 %v2978
    %3025 = vmatpush1.bf16.msra.mxu0 %v2977
    %3026 = vmatprep.subr.bf16.mxu0 %v2981
    %3027 = vmatpush1.bf16.msra.mxu0 %v2980
    %3028 = vmatprep.subr.bf16.mxu0 %v2984
    %3029 = vmatpush1.bf16.msra.mxu0 %v2983
    %3030 = vmatprep.subr.bf16.mxu0 %v2987
    %3031 = vmatpush1.bf16.msra.mxu0 %v2986
    %3032 = vmatprep.subr.bf16.mxu0 %v2990
    %3033 = vmatpush1.bf16.msra.mxu0 %v2989
    %3034 = vmatprep.subr.bf16.mxu0 %v2993
    %3035 = vmatpush1.bf16.msra.mxu0 %v2992
    %3036 = vmatprep.subr.bf16.mxu0 %v2996
    %3037 = vmatpush1.bf16.msra.mxu0 %v2995
    %3038 = vmatprep.subr.bf16.mxu0 0
    %3039 = vmatpush1.bf16.msra.mxu0 0
    %3040 = vmatprep.subr.bf16.mxu0 0
    %3041 = vmatpush1.bf16.msra.mxu0 0
    %3042 = vmatprep.subr.bf16.mxu0 0
    %3043 = vmatpush1.bf16.msra.mxu0 0
    %3044 = vmatprep.subr.bf16.mxu0 0
    %3045 = vmatpush1.bf16.msra.mxu0 0
    %3046 = vmatprep.subr.bf16.mxu0 0
    %3047 = vmatpush1.bf16.msra.mxu0 0
    %3048 = vmatprep.subr.bf16.mxu0 0
    %3049 = vmatpush1.bf16.msra.mxu0 0
    %3050 = vmatprep.subr.bf16.mxu0 0
    %3051 = vmatpush1.bf16.msra.mxu0 0
    %3052 = vmatprep.subr.bf16.mxu0 0
    %3053 = vmatpush1.bf16.msra.mxu0 0
    %3054 = vmatprep.mubr.bf16.mxu0 0
    %3055 = vmatmul.mubr.bf16.gmra.mrb[0].mxu0 %v2356
    %v3056 = vpop.f32.mrb[0].mxu0
    %v3057 = vadd.f32 0.0, %v3056
    %v3058 = vpop.f32.mrb[0].mxu0
    %v3059 = vadd.f32 0.0, %v3058
    %v3060 = vpop.f32.mrb[0].mxu0
    %v3061 = vpop.f32.mrb[0].mxu0
    %3062 = vdwg.mxu0
    %3063 = vmatprep.subr.bf16.mxu0 0
    %3064 = vmatpush1.bf16.msra.mxu0 %v2976
    %3065 = vmatprep.subr.bf16.mxu0 0
    %3066 = vmatpush1.bf16.msra.mxu0 %v2979
    %3067 = vmatprep.subr.bf16.mxu0 0
    %3068 = vmatpush1.bf16.msra.mxu0 %v2982
    %3069 = vmatprep.subr.bf16.mxu0 0
    %3070 = vmatpush1.bf16.msra.mxu0 %v2985
    %3071 = vmatprep.subr.bf16.mxu0 0
    %3072 = vmatpush1.bf16.msra.mxu0 %v2988
    %3073 = vmatprep.subr.bf16.mxu0 0
    %3074 = vmatpush1.bf16.msra.mxu0 %v2991
    %3075 = vmatprep.subr.bf16.mxu0 0
    %3076 = vmatpush1.bf16.msra.mxu0 %v2994
    %3077 = vmatprep.subr.bf16.mxu0 0
    %3078 = vmatpush1.bf16.msra.mxu0 %v2997
    %3079 = vmatprep.subr.bf16.mxu0 0
    %3080 = vmatpush1.bf16.msra.mxu0 0
    %3081 = vmatprep.subr.bf16.mxu0 0
    %3082 = vmatpush1.bf16.msra.mxu0 0
    %3083 = vmatprep.subr.bf16.mxu0 0
    %3084 = vmatpush1.bf16.msra.mxu0 0
    %3085 = vmatprep.subr.bf16.mxu0 0
    %3086 = vmatpush1.bf16.msra.mxu0 0
    %3087 = vmatprep.subr.bf16.mxu0 0
    %3088 = vmatpush1.bf16.msra.mxu0 0
    %3089 = vmatprep.subr.bf16.mxu0 0
    %3090 = vmatpush1.bf16.msra.mxu0 0
    %3091 = vmatprep.subr.bf16.mxu0 0
    %3092 = vmatpush1.bf16.msra.mxu0 0
    %3093 = vmatprep.subr.bf16.mxu0 0
    %3094 = vmatpush1.bf16.msra.mxu0 0
    %3095 = vmatprep.mubr.bf16.mxu0 0
    %3096 = vmatmul.mubr.bf16.gmra.mrb[0].mxu0 %v2356
    %v3097 = vpop.f32.mrb[0].mxu0
    %v3098 = vadd.f32 0.0, %v3097
    %v3099 = vpop.f32.mrb[0].mxu0
    %v3100 = vpop.f32.mrb[0].mxu0
    %v3101 = vpop.f32.mrb[0].mxu0
    %3102 = vdwg.mxu0
    %s3103 = scalar_lea.vmem [#allocation2], 3
    %v3104 = vld [vmem:[%s3103] ss:$8 sm:$0x7]
    %v3107 = vcombine.low %v3057, %v3059
    %v3109 = vunpack.c.l.s4 1966171168
    %v3110 = vunpack.c.0.s8 %v3109
    %v3111 = vlaneseq
    %v3112 = vshrl.u32 %v3111, 7
    %v3113 = vsub.s32 %v3110, %v3112
    %v3114 = vrot.slane %v3107, %v3113
    %v3116 = vunpack.c.l.s4 1966171168
    %v3117 = vunpack.c.0.s8 %v3116
    %v3118 = vlaneseq
    %v3119 = vshrl.u32 %v3118, 7
    %v3120 = vsub.s32 %v3117, %v3119
    %v3121 = vrot.slane %v3114, %v3120
    %v3123 = vadd.f32 %v3104, %v3121
    %v3124 = vxor.u32 %v3123, 2147483648
    %v3125 = vmul.f32 %v3124, 1.442695
    %v3126 = vpow.pop %v3125
    %v3127 = vadd.f32 %v3126, 1.0
    %v3128 = vrcp.pop %v3127
    %v3129 = vmul.f32 1.0, %v3128
    %v3130 = vadd.f32 %v3098, %v480
    %v3131 = vmul.f32 %v3129, %v3130
    %v3133 = vrot.slane %v3104, 2
    %v3135 = vadd.f32 %v3133, %v3131
    %v3136 = vtanh.pop %v3135
    %v3137 = vsub.f32 %v2355, %v3136
    %v3139 = vrot.slane %v3129, 1
    %v3141 = vmul.f32 %v3139, %v3137
    %v3142 = vadd.f32 %v3136, %v3141
    %v3143 = vpack.c.bf16 %v3142, %v3142
    %v3144 = vld [vmem:[%s5] sm:$0xff]
    %v3145 = vld [vmem:[%s5 + $0x8] sm:$0xf]
    %v3146 = vld [vmem:[%s5 + $0xc] sm:$0xff]
    %v3147 = vld [vmem:[%s5 + $0x14] sm:$0xf]
    %v3148 = vld [vmem:[%s5 + $0x18] sm:$0xff]
    %v3149 = vld [vmem:[%s5 + $0x20] sm:$0xf]
    %v3150 = vld [vmem:[%s5 + $0x24] sm:$0xff]
    %v3151 = vld [vmem:[%s5 + $0x2c] sm:$0xf]
    %v3152 = vld [vmem:[%s5 + $0x30] sm:$0xff]
    %v3153 = vld [vmem:[%s5 + $0x38] sm:$0xf]
    %v3154 = vld [vmem:[%s5 + $0x3c] sm:$0xff]
    %v3155 = vld [vmem:[%s5 + $0x44] sm:$0xf]
    %v3156 = vld [vmem:[%s5 + $0x48] sm:$0xff]
    %v3157 = vld [vmem:[%s5 + $0x50] sm:$0xf]
    %v3158 = vld [vmem:[%s5 + $0x54] sm:$0xff]
    %v3159 = vld [vmem:[%s5 + $0x5c] sm:$0xf]
    %v3160 = vld [vmem:[%s5 + $0x60] sm:$0xff]
    %v3161 = vld [vmem:[%s5 + $0x68] sm:$0xf]
    %v3162 = vld [vmem:[%s5 + $0x6c] sm:$0xff]
    %v3163 = vld [vmem:[%s5 + $0x74] sm:$0xf]
    %v3164 = vld [vmem:[%s5 + $0x78] sm:$0xff]
    %v3165 = vld [vmem:[%s5 + $0x80] sm:$0xf]
    %v3166 = vld [vmem:[%s5 + $0x84] sm:$0xff]
    %v3167 = vld [vmem:[%s5 + $0x8c] sm:$0xf]
    %v3168 = vld [vmem:[%s5 + $0x90] sm:$0xff]
    %v3169 = vld [vmem:[%s5 + $0x98] sm:$0xf]
    %v3170 = vld [vmem:[%s5 + $0x9c] sm:$0xff]
    %v3171 = vld [vmem:[%s5 + $0xa4] sm:$0xf]
    %v3172 = vld [vmem:[%s5 + $0xa8] sm:$0xff]
    %v3173 = vld [vmem:[%s5 + $0xb0] sm:$0xf]
    %v3174 = vld [vmem:[%s5 + $0xb4] sm:$0xff]
    %v3175 = vld [vmem:[%s5 + $0xbc] sm:$0xf]
    %v3208 = vunpack.c.l.b16 %v3144
    %v3209 = vunpack.c.h.b16 %v3144
    %v3210 = vunpack.c.l.b16 %v3145
    %v3211 = vunpack.c.l.b16 %v3146
    %v3212 = vunpack.c.h.b16 %v3146
    %v3213 = vunpack.c.l.b16 %v3147
    %v3214 = vunpack.c.l.b16 %v3148
    %v3215 = vunpack.c.h.b16 %v3148
    %v3216 = vunpack.c.l.b16 %v3149
    %v3217 = vunpack.c.l.b16 %v3150
    %v3218 = vunpack.c.h.b16 %v3150
    %v3219 = vunpack.c.l.b16 %v3151
    %v3220 = vunpack.c.l.b16 %v3152
    %v3221 = vunpack.c.h.b16 %v3152
    %v3222 = vunpack.c.l.b16 %v3153
    %v3223 = vunpack.c.l.b16 %v3154
    %v3224 = vunpack.c.h.b16 %v3154
    %v3225 = vunpack.c.l.b16 %v3155
    %v3226 = vunpack.c.l.b16 %v3156
    %v3227 = vunpack.c.h.b16 %v3156
    %v3228 = vunpack.c.l.b16 %v3157
    %v3229 = vunpack.c.l.b16 %v3158
    %v3230 = vunpack.c.h.b16 %v3158
    %v3231 = vunpack.c.l.b16 %v3159
    %v3232 = vunpack.c.l.b16 %v3160
    %v3233 = vunpack.c.h.b16 %v3160
    %v3234 = vunpack.c.l.b16 %v3161
    %v3235 = vunpack.c.l.b16 %v3162
    %v3236 = vunpack.c.h.b16 %v3162
    %v3237 = vunpack.c.l.b16 %v3163
    %v3238 = vunpack.c.l.b16 %v3164
    %v3239 = vunpack.c.h.b16 %v3164
    %v3240 = vunpack.c.l.b16 %v3165
    %v3241 = vunpack.c.l.b16 %v3166
    %v3242 = vunpack.c.h.b16 %v3166
    %v3243 = vunpack.c.l.b16 %v3167
    %v3244 = vunpack.c.l.b16 %v3168
    %v3245 = vunpack.c.h.b16 %v3168
    %v3246 = vunpack.c.l.b16 %v3169
    %v3247 = vunpack.c.l.b16 %v3170
    %v3248 = vunpack.c.h.b16 %v3170
    %v3249 = vunpack.c.l.b16 %v3171
    %v3250 = vunpack.c.l.b16 %v3172
    %v3251 = vunpack.c.h.b16 %v3172
    %v3252 = vunpack.c.l.b16 %v3173
    %v3253 = vunpack.c.l.b16 %v3174
    %v3254 = vunpack.c.h.b16 %v3174
    %v3255 = vunpack.c.l.b16 %v3175
    %v3256 = vpack.c.b16 %v3211, %v3208
    %v3257 = vpack.c.b16 %v3212, %v3209
    %v3258 = vpack.c.b16 %v3213, %v3210
    %v3259 = vpack.c.b16 %v3217, %v3214
    %v3260 = vpack.c.b16 %v3218, %v3215
    %v3261 = vpack.c.b16 %v3219, %v3216
    %v3262 = vpack.c.b16 %v3223, %v3220
    %v3263 = vpack.c.b16 %v3224, %v3221
    %v3264 = vpack.c.b16 %v3225, %v3222
    %v3265 = vpack.c.b16 %v3229, %v3226
    %v3266 = vpack.c.b16 %v3230, %v3227
    %v3267 = vpack.c.b16 %v3231, %v3228
    %v3268 = vpack.c.b16 %v3235, %v3232
    %v3269 = vpack.c.b16 %v3236, %v3233
    %v3270 = vpack.c.b16 %v3237, %v3234
    %v3271 = vpack.c.b16 %v3241, %v3238
    %v3272 = vpack.c.b16 %v3242, %v3239
    %v3273 = vpack.c.b16 %v3243, %v3240
    %v3274 = vpack.c.b16 %v3247, %v3244
    %v3275 = vpack.c.b16 %v3248, %v3245
    %v3276 = vpack.c.b16 %v3249, %v3246
    %v3277 = vpack.c.b16 %v3253, %v3250
    %v3278 = vpack.c.b16 %v3254, %v3251
    %v3279 = vpack.c.b16 %v3255, %v3252
    %3304 = vmatprep.subr.bf16.mxu0 %v3257
    %3305 = vmatpush1.bf16.msra.mxu0 %v3256
    %3306 = vmatprep.subr.bf16.mxu0 %v3260
    %3307 = vmatpush1.bf16.msra.mxu0 %v3259
    %3308 = vmatprep.subr.bf16.mxu0 %v3263
    %3309 = vmatpush1.bf16.msra.mxu0 %v3262
    %3310 = vmatprep.subr.bf16.mxu0 %v3266
    %3311 = vmatpush1.bf16.msra.mxu0 %v3265
    %3312 = vmatprep.subr.bf16.mxu0 %v3269
    %3313 = vmatpush1.bf16.msra.mxu0 %v3268
    %3314 = vmatprep.subr.bf16.mxu0 %v3272
    %3315 = vmatpush1.bf16.msra.mxu0 %v3271
    %3316 = vmatprep.subr.bf16.mxu0 %v3275
    %3317 = vmatpush1.bf16.msra.mxu0 %v3274
    %3318 = vmatprep.subr.bf16.mxu0 %v3278
    %3319 = vmatpush1.bf16.msra.mxu0 %v3277
    %3320 = vmatprep.subr.bf16.mxu0 0
    %3321 = vmatpush1.bf16.msra.mxu0 0
    %3322 = vmatprep.subr.bf16.mxu0 0
    %3323 = vmatpush1.bf16.msra.mxu0 0
    %3324 = vmatprep.subr.bf16.mxu0 0
    %3325 = vmatpush1.bf16.msra.mxu0 0
    %3326 = vmatprep.subr.bf16.mxu0 0
    %3327 = vmatpush1.bf16.msra.mxu0 0
    %3328 = vmatprep.subr.bf16.mxu0 0
    %3329 = vmatpush1.bf16.msra.mxu0 0
    %3330 = vmatprep.subr.bf16.mxu0 0
    %3331 = vmatpush1.bf16.msra.mxu0 0
    %3332 = vmatprep.subr.bf16.mxu0 0
    %3333 = vmatpush1.bf16.msra.mxu0 0
    %3334 = vmatprep.subr.bf16.mxu0 0
    %3335 = vmatpush1.bf16.msra.mxu0 0
    %3336 = vmatprep.mubr.bf16.mxu0 0
    %3337 = vmatmul.mubr.bf16.gmra.mrb[0].mxu0 %v3143
    %v3338 = vpop.f32.mrb[0].mxu0
    %v3339 = vadd.f32 %v931, %v3338
    %v3340 = vpop.f32.mrb[0].mxu0
    %v3341 = vadd.f32 %v935, %v3340
    %v3342 = vpop.f32.mrb[0].mxu0
    %v3343 = vpop.f32.mrb[0].mxu0
    %3344 = vdwg.mxu0
    %3345 = vmatprep.subr.bf16.mxu0 0
    %3346 = vmatpush1.bf16.msra.mxu0 %v3258
    %3347 = vmatprep.subr.bf16.mxu0 0
    %3348 = vmatpush1.bf16.msra.mxu0 %v3261
    %3349 = vmatprep.subr.bf16.mxu0 0
    %3350 = vmatpush1.bf16.msra.mxu0 %v3264
    %3351 = vmatprep.subr.bf16.mxu0 0
    %3352 = vmatpush1.bf16.msra.mxu0 %v3267
    %3353 = vmatprep.subr.bf16.mxu0 0
    %3354 = vmatpush1.bf16.msra.mxu0 %v3270
    %3355 = vmatprep.subr.bf16.mxu0 0
    %3356 = vmatpush1.bf16.msra.mxu0 %v3273
    %3357 = vmatprep.subr.bf16.mxu0 0
    %3358 = vmatpush1.bf16.msra.mxu0 %v3276
    %3359 = vmatprep.subr.bf16.mxu0 0
    %3360 = vmatpush1.bf16.msra.mxu0 %v3279
    %3361 = vmatprep.subr.bf16.mxu0 0
    %3362 = vmatpush1.bf16.msra.mxu0 0
    %3363 = vmatprep.subr.bf16.mxu0 0
    %3364 = vmatpush1.bf16.msra.mxu0 0
    %3365 = vmatprep.subr.bf16.mxu0 0
    %3366 = vmatpush1.bf16.msra.mxu0 0
    %3367 = vmatprep.subr.bf16.mxu0 0
    %3368 = vmatpush1.bf16.msra.mxu0 0
    %3369 = vmatprep.subr.bf16.mxu0 0
    %3370 = vmatpush1.bf16.msra.mxu0 0
    %3371 = vmatprep.subr.bf16.mxu0 0
    %3372 = vmatpush1.bf16.msra.mxu0 0
    %3373 = vmatprep.subr.bf16.mxu0 0
    %3374 = vmatpush1.bf16.msra.mxu0 0
    %3375 = vmatprep.subr.bf16.mxu0 0
    %3376 = vmatpush1.bf16.msra.mxu0 0
    %3377 = vmatprep.mubr.bf16.mxu0 0
    %3378 = vmatmul.mubr.bf16.gmra.mrb[0].mxu0 %v3143
    %v3379 = vpop.f32.mrb[0].mxu0
    %v3380 = vadd.f32 %v939, %v3379
    %v3381 = vpop.f32.mrb[0].mxu0
    %v3382 = vpop.f32.mrb[0].mxu0
    %v3383 = vpop.f32.mrb[0].mxu0
    %3384 = vdwg.mxu0
    %v3385 = vpack.c.bf16 %v2860, %v2860
    %v3386 = vld [vmem:[%s6] sm:$0xff]
    %v3387 = vld [vmem:[%s6 + $0x8] sm:$0xf]
    %v3388 = vld [vmem:[%s6 + $0xc] sm:$0xff]
    %v3389 = vld [vmem:[%s6 + $0x14] sm:$0xf]
    %v3390 = vld [vmem:[%s6 + $0x18] sm:$0xff]
    %v3391 = vld [vmem:[%s6 + $0x20] sm:$0xf]
    %v3392 = vld [vmem:[%s6 + $0x24] sm:$0xff]
    %v3393 = vld [vmem:[%s6 + $0x2c] sm:$0xf]
    %v3394 = vld [vmem:[%s6 + $0x30] sm:$0xff]
    %v3395 = vld [vmem:[%s6 + $0x38] sm:$0xf]
    %v3396 = vld [vmem:[%s6 + $0x3c] sm:$0xff]
    %v3397 = vld [vmem:[%s6 + $0x44] sm:$0xf]
    %v3398 = vld [vmem:[%s6 + $0x48] sm:$0xff]
    %v3399 = vld [vmem:[%s6 + $0x50] sm:$0xf]
    %v3400 = vld [vmem:[%s6 + $0x54] sm:$0xff]
    %v3401 = vld [vmem:[%s6 + $0x5c] sm:$0xf]
    %v3402 = vld [vmem:[%s6 + $0x60] sm:$0xff]
    %v3403 = vld [vmem:[%s6 + $0x68] sm:$0xf]
    %v3404 = vld [vmem:[%s6 + $0x6c] sm:$0xff]
    %v3405 = vld [vmem:[%s6 + $0x74] sm:$0xf]
    %v3406 = vld [vmem:[%s6 + $0x78] sm:$0xff]
    %v3407 = vld [vmem:[%s6 + $0x80] sm:$0xf]
    %v3408 = vld [vmem:[%s6 + $0x84] sm:$0xff]
    %v3409 = vld [vmem:[%s6 + $0x8c] sm:$0xf]
    %v3410 = vld [vmem:[%s6 + $0x90] sm:$0xff]
    %v3411 = vld [vmem:[%s6 + $0x98] sm:$0xf]
    %v3412 = vld [vmem:[%s6 + $0x9c] sm:$0xff]
    %v3413 = vld [vmem:[%s6 + $0xa4] sm:$0xf]
    %v3414 = vld [vmem:[%s6 + $0xa8] sm:$0xff]
    %v3415 = vld [vmem:[%s6 + $0xb0] sm:$0xf]
    %v3416 = vld [vmem:[%s6 + $0xb4] sm:$0xff]
    %v3417 = vld [vmem:[%s6 + $0xbc] sm:$0xf]
    %v3450 = vunpack.c.l.b16 %v3386
    %v3451 = vunpack.c.h.b16 %v3386
    %v3452 = vunpack.c.l.b16 %v3387
    %v3453 = vunpack.c.l.b16 %v3388
    %v3454 = vunpack.c.h.b16 %v3388
    %v3455 = vunpack.c.l.b16 %v3389
    %v3456 = vunpack.c.l.b16 %v3390
    %v3457 = vunpack.c.h.b16 %v3390
    %v3458 = vunpack.c.l.b16 %v3391
    %v3459 = vunpack.c.l.b16 %v3392
    %v3460 = vunpack.c.h.b16 %v3392
    %v3461 = vunpack.c.l.b16 %v3393
    %v3462 = vunpack.c.l.b16 %v3394
    %v3463 = vunpack.c.h.b16 %v3394
    %v3464 = vunpack.c.l.b16 %v3395
    %v3465 = vunpack.c.l.b16 %v3396
    %v3466 = vunpack.c.h.b16 %v3396
    %v3467 = vunpack.c.l.b16 %v3397
    %v3468 = vunpack.c.l.b16 %v3398
    %v3469 = vunpack.c.h.b16 %v3398
    %v3470 = vunpack.c.l.b16 %v3399
    %v3471 = vunpack.c.l.b16 %v3400
    %v3472 = vunpack.c.h.b16 %v3400
    %v3473 = vunpack.c.l.b16 %v3401
    %v3474 = vunpack.c.l.b16 %v3402
    %v3475 = vunpack.c.h.b16 %v3402
    %v3476 = vunpack.c.l.b16 %v3403
    %v3477 = vunpack.c.l.b16 %v3404
    %v3478 = vunpack.c.h.b16 %v3404
    %v3479 = vunpack.c.l.b16 %v3405
    %v3480 = vunpack.c.l.b16 %v3406
    %v3481 = vunpack.c.h.b16 %v3406
    %v3482 = vunpack.c.l.b16 %v3407
    %v3483 = vunpack.c.l.b16 %v3408
    %v3484 = vunpack.c.h.b16 %v3408
    %v3485 = vunpack.c.l.b16 %v3409
    %v3486 = vunpack.c.l.b16 %v3410
    %v3487 = vunpack.c.h.b16 %v3410
    %v3488 = vunpack.c.l.b16 %v3411
    %v3489 = vunpack.c.l.b16 %v3412
    %v3490 = vunpack.c.h.b16 %v3412
    %v3491 = vunpack.c.l.b16 %v3413
    %v3492 = vunpack.c.l.b16 %v3414
    %v3493 = vunpack.c.h.b16 %v3414
    %v3494 = vunpack.c.l.b16 %v3415
    %v3495 = vunpack.c.l.b16 %v3416
    %v3496 = vunpack.c.h.b16 %v3416
    %v3497 = vunpack.c.l.b16 %v3417
    %v3498 = vpack.c.b16 %v3453, %v3450
    %v3499 = vpack.c.b16 %v3454, %v3451
    %v3500 = vpack.c.b16 %v3455, %v3452
    %v3501 = vpack.c.b16 %v3459, %v3456
    %v3502 = vpack.c.b16 %v3460, %v3457
    %v3503 = vpack.c.b16 %v3461, %v3458
    %v3504 = vpack.c.b16 %v3465, %v3462
    %v3505 = vpack.c.b16 %v3466, %v3463
    %v3506 = vpack.c.b16 %v3467, %v3464
    %v3507 = vpack.c.b16 %v3471, %v3468
    %v3508 = vpack.c.b16 %v3472, %v3469
    %v3509 = vpack.c.b16 %v3473, %v3470
    %v3510 = vpack.c.b16 %v3477, %v3474
    %v3511 = vpack.c.b16 %v3478, %v3475
    %v3512 = vpack.c.b16 %v3479, %v3476
    %v3513 = vpack.c.b16 %v3483, %v3480
    %v3514 = vpack.c.b16 %v3484, %v3481
    %v3515 = vpack.c.b16 %v3485, %v3482
    %v3516 = vpack.c.b16 %v3489, %v3486
    %v3517 = vpack.c.b16 %v3490, %v3487
    %v3518 = vpack.c.b16 %v3491, %v3488
    %v3519 = vpack.c.b16 %v3495, %v3492
    %v3520 = vpack.c.b16 %v3496, %v3493
    %v3521 = vpack.c.b16 %v3497, %v3494
    %3546 = vmatprep.subr.bf16.mxu0 %v3499
    %3547 = vmatpush1.bf16.msra.mxu0 %v3498
    %3548 = vmatprep.subr.bf16.mxu0 %v3502
    %3549 = vmatpush1.bf16.msra.mxu0 %v3501
    %3550 = vmatprep.subr.bf16.mxu0 %v3505
    %3551 = vmatpush1.bf16.msra.mxu0 %v3504
    %3552 = vmatprep.subr.bf16.mxu0 %v3508
    %3553 = vmatpush1.bf16.msra.mxu0 %v3507
    %3554 = vmatprep.subr.bf16.mxu0 %v3511
    %3555 = vmatpush1.bf16.msra.mxu0 %v3510
    %3556 = vmatprep.subr.bf16.mxu0 %v3514
    %3557 = vmatpush1.bf16.msra.mxu0 %v3513
    %3558 = vmatprep.subr.bf16.mxu0 %v3517
    %3559 = vmatpush1.bf16.msra.mxu0 %v3516
    %3560 = vmatprep.subr.bf16.mxu0 %v3520
    %3561 = vmatpush1.bf16.msra.mxu0 %v3519
    %3562 = vmatprep.subr.bf16.mxu0 0
    %3563 = vmatpush1.bf16.msra.mxu0 0
    %3564 = vmatprep.subr.bf16.mxu0 0
    %3565 = vmatpush1.bf16.msra.mxu0 0
    %3566 = vmatprep.subr.bf16.mxu0 0
    %3567 = vmatpush1.bf16.msra.mxu0 0
    %3568 = vmatprep.subr.bf16.mxu0 0
    %3569 = vmatpush1.bf16.msra.mxu0 0
    %3570 = vmatprep.subr.bf16.mxu0 0
    %3571 = vmatpush1.bf16.msra.mxu0 0
    %3572 = vmatprep.subr.bf16.mxu0 0
    %3573 = vmatpush1.bf16.msra.mxu0 0
    %3574 = vmatprep.subr.bf16.mxu0 0
    %3575 = vmatpush1.bf16.msra.mxu0 0
    %3576 = vmatprep.subr.bf16.mxu0 0
    %3577 = vmatpush1.bf16.msra.mxu0 0
    %3578 = vmatprep.mubr.bf16.mxu0 0
    %3579 = vmatmul.mubr.bf16.gmra.mrb[0].mxu0 %v3385
    %v3580 = vpop.f32.mrb[0].mxu0
    %v3581 = vadd.f32 0.0, %v3580
    %v3582 = vpop.f32.mrb[0].mxu0
    %v3583 = vadd.f32 0.0, %v3582
    %v3584 = vpop.f32.mrb[0].mxu0
    %v3585 = vpop.f32.mrb[0].mxu0
    %3586 = vdwg.mxu0
    %3587 = vmatprep.subr.bf16.mxu0 0
    %3588 = vmatpush1.bf16.msra.mxu0 %v3500
    %3589 = vmatprep.subr.bf16.mxu0 0
    %3590 = vmatpush1.bf16.msra.mxu0 %v3503
    %3591 = vmatprep.subr.bf16.mxu0 0
    %3592 = vmatpush1.bf16.msra.mxu0 %v3506
    %3593 = vmatprep.subr.bf16.mxu0 0
    %3594 = vmatpush1.bf16.msra.mxu0 %v3509
    %3595 = vmatprep.subr.bf16.mxu0 0
    %3596 = vmatpush1.bf16.msra.mxu0 %v3512
    %3597 = vmatprep.subr.bf16.mxu0 0
    %3598 = vmatpush1.bf16.msra.mxu0 %v3515
    %3599 = vmatprep.subr.bf16.mxu0 0
    %3600 = vmatpush1.bf16.msra.mxu0 %v3518
    %3601 = vmatprep.subr.bf16.mxu0 0
    %3602 = vmatpush1.bf16.msra.mxu0 %v3521
    %3603 = vmatprep.subr.bf16.mxu0 0
    %3604 = vmatpush1.bf16.msra.mxu0 0
    %3605 = vmatprep.subr.bf16.mxu0 0
    %3606 = vmatpush1.bf16.msra.mxu0 0
    %3607 = vmatprep.subr.bf16.mxu0 0
    %3608 = vmatpush1.bf16.msra.mxu0 0
    %3609 = vmatprep.subr.bf16.mxu0 0
    %3610 = vmatpush1.bf16.msra.mxu0 0
    %3611 = vmatprep.subr.bf16.mxu0 0
    %3612 = vmatpush1.bf16.msra.mxu0 0
    %3613 = vmatprep.subr.bf16.mxu0 0
    %3614 = vmatpush1.bf16.msra.mxu0 0
    %3615 = vmatprep.subr.bf16.mxu0 0
    %3616 = vmatpush1.bf16.msra.mxu0 0
    %3617 = vmatprep.subr.bf16.mxu0 0
    %3618 = vmatpush1.bf16.msra.mxu0 0
    %3619 = vmatprep.mubr.bf16.mxu0 0
    %3620 = vmatmul.mubr.bf16.gmra.mrb[0].mxu0 %v3385
    %v3621 = vpop.f32.mrb[0].mxu0
    %v3622 = vadd.f32 0.0, %v3621
    %v3623 = vpop.f32.mrb[0].mxu0
    %v3624 = vpop.f32.mrb[0].mxu0
    %v3625 = vpop.f32.mrb[0].mxu0
    %3626 = vdwg.mxu0
    %v3627 = vadd.f32 %v3339, %v3581
    %v3628 = vadd.f32 %v3341, %v3583
    %v3629 = vxor.u32 %v3627, 2147483648
    %v3630 = vxor.u32 %v3628, 2147483648
    %v3631 = vmul.f32 %v3629, 1.442695
    %v3632 = vpow.pop %v3631
    %v3633 = vmul.f32 %v3630, 1.442695
    %v3634 = vpow.pop %v3633
    %v3635 = vadd.f32 %v3632, 1.0
    %v3636 = vadd.f32 %v3634, 1.0
    %v3637 = vrcp.pop %v3635
    %v3638 = vmul.f32 1.0, %v3637
    %v3639 = vrcp.pop %v3636
    %v3640 = vmul.f32 1.0, %v3639
    %v3641 = vadd.f32 %v3622, %v482
    %v3642 = vmul.f32 %v3638, %v3641
    %v3643 = vadd.f32 %v3380, %v3642
    %v3644 = vtanh.pop %v3643
    %v3645 = vsub.f32 %v2860, %v3644
    %v3646 = vmul.f32 %v3640, %v3645
    %v3647 = vadd.f32 %v3644, %v3646
    %3648 = vst [vmem:[#allocation3 + $0x3] sm:$0x1] %v3647
    %v3649 = vld [vmem:[%s4] sm:$0xff]
    %v3650 = vld [vmem:[%s4 + $0x8] sm:$0xf]
    %v3651 = vld [vmem:[%s4 + $0xc] sm:$0xff]
    %v3652 = vld [vmem:[%s4 + $0x14] sm:$0xf]
    %v3653 = vld [vmem:[%s4 + $0x18] sm:$0xff]
    %v3654 = vld [vmem:[%s4 + $0x20] sm:$0xf]
    %v3655 = vld [vmem:[%s4 + $0x24] sm:$0xff]
    %v3656 = vld [vmem:[%s4 + $0x2c] sm:$0xf]
    %v3657 = vld [vmem:[%s4 + $0x30] sm:$0xff]
    %v3658 = vld [vmem:[%s4 + $0x38] sm:$0xf]
    %v3659 = vld [vmem:[%s4 + $0x3c] sm:$0xff]
    %v3660 = vld [vmem:[%s4 + $0x44] sm:$0xf]
    %v3661 = vld [vmem:[%s4 + $0x48] sm:$0xff]
    %v3662 = vld [vmem:[%s4 + $0x50] sm:$0xf]
    %v3663 = vld [vmem:[%s4 + $0x54] sm:$0xff]
    %v3664 = vld [vmem:[%s4 + $0x5c] sm:$0xf]
    %v3665 = vld [vmem:[%s4 + $0x60] sm:$0xff]
    %v3666 = vld [vmem:[%s4 + $0x68] sm:$0xf]
    %v3667 = vld [vmem:[%s4 + $0x6c] sm:$0xff]
    %v3668 = vld [vmem:[%s4 + $0x74] sm:$0xf]
    %v3669 = vld [vmem:[%s4 + $0x78] sm:$0xff]
    %v3670 = vld [vmem:[%s4 + $0x80] sm:$0xf]
    %v3671 = vld [vmem:[%s4 + $0x84] sm:$0xff]
    %v3672 = vld [vmem:[%s4 + $0x8c] sm:$0xf]
    %v3673 = vld [vmem:[%s4 + $0x90] sm:$0xff]
    %v3674 = vld [vmem:[%s4 + $0x98] sm:$0xf]
    %v3675 = vld [vmem:[%s4 + $0x9c] sm:$0xff]
    %v3676 = vld [vmem:[%s4 + $0xa4] sm:$0xf]
    %v3677 = vld [vmem:[%s4 + $0xa8] sm:$0xff]
    %v3678 = vld [vmem:[%s4 + $0xb0] sm:$0xf]
    %v3679 = vld [vmem:[%s4 + $0xb4] sm:$0xff]
    %v3680 = vld [vmem:[%s4 + $0xbc] sm:$0xf]
    %v3713 = vunpack.c.l.b16 %v3649
    %v3714 = vunpack.c.h.b16 %v3649
    %v3715 = vunpack.c.l.b16 %v3650
    %v3716 = vunpack.c.l.b16 %v3651
    %v3717 = vunpack.c.h.b16 %v3651
    %v3718 = vunpack.c.l.b16 %v3652
    %v3719 = vunpack.c.l.b16 %v3653
    %v3720 = vunpack.c.h.b16 %v3653
    %v3721 = vunpack.c.l.b16 %v3654
    %v3722 = vunpack.c.l.b16 %v3655
    %v3723 = vunpack.c.h.b16 %v3655
    %v3724 = vunpack.c.l.b16 %v3656
    %v3725 = vunpack.c.l.b16 %v3657
    %v3726 = vunpack.c.h.b16 %v3657
    %v3727 = vunpack.c.l.b16 %v3658
    %v3728 = vunpack.c.l.b16 %v3659
    %v3729 = vunpack.c.h.b16 %v3659
    %v3730 = vunpack.c.l.b16 %v3660
    %v3731 = vunpack.c.l.b16 %v3661
    %v3732 = vunpack.c.h.b16 %v3661
    %v3733 = vunpack.c.l.b16 %v3662
    %v3734 = vunpack.c.l.b16 %v3663
    %v3735 = vunpack.c.h.b16 %v3663
    %v3736 = vunpack.c.l.b16 %v3664
    %v3737 = vunpack.c.l.b16 %v3665
    %v3738 = vunpack.c.h.b16 %v3665
    %v3739 = vunpack.c.l.b16 %v3666
    %v3740 = vunpack.c.l.b16 %v3667
    %v3741 = vunpack.c.h.b16 %v3667
    %v3742 = vunpack.c.l.b16 %v3668
    %v3743 = vunpack.c.l.b16 %v3669
    %v3744 = vunpack.c.h.b16 %v3669
    %v3745 = vunpack.c.l.b16 %v3670
    %v3746 = vunpack.c.l.b16 %v3671
    %v3747 = vunpack.c.h.b16 %v3671
    %v3748 = vunpack.c.l.b16 %v3672
    %v3749 = vunpack.c.l.b16 %v3673
    %v3750 = vunpack.c.h.b16 %v3673
    %v3751 = vunpack.c.l.b16 %v3674
    %v3752 = vunpack.c.l.b16 %v3675
    %v3753 = vunpack.c.h.b16 %v3675
    %v3754 = vunpack.c.l.b16 %v3676
    %v3755 = vunpack.c.l.b16 %v3677
    %v3756 = vunpack.c.h.b16 %v3677
    %v3757 = vunpack.c.l.b16 %v3678
    %v3758 = vunpack.c.l.b16 %v3679
    %v3759 = vunpack.c.h.b16 %v3679
    %v3760 = vunpack.c.l.b16 %v3680
    %v3761 = vpack.c.b16 %v3716, %v3713
    %v3762 = vpack.c.b16 %v3717, %v3714
    %v3763 = vpack.c.b16 %v3718, %v3715
    %v3764 = vpack.c.b16 %v3722, %v3719
    %v3765 = vpack.c.b16 %v3723, %v3720
    %v3766 = vpack.c.b16 %v3724, %v3721
    %v3767 = vpack.c.b16 %v3728, %v3725
    %v3768 = vpack.c.b16 %v3729, %v3726
    %v3769 = vpack.c.b16 %v3730, %v3727
    %v3770 = vpack.c.b16 %v3734, %v3731
    %v3771 = vpack.c.b16 %v3735, %v3732
    %v3772 = vpack.c.b16 %v3736, %v3733
    %v3773 = vpack.c.b16 %v3740, %v3737
    %v3774 = vpack.c.b16 %v3741, %v3738
    %v3775 = vpack.c.b16 %v3742, %v3739
    %v3776 = vpack.c.b16 %v3746, %v3743
    %v3777 = vpack.c.b16 %v3747, %v3744
    %v3778 = vpack.c.b16 %v3748, %v3745
    %v3779 = vpack.c.b16 %v3752, %v3749
    %v3780 = vpack.c.b16 %v3753, %v3750
    %v3781 = vpack.c.b16 %v3754, %v3751
    %v3782 = vpack.c.b16 %v3758, %v3755
    %v3783 = vpack.c.b16 %v3759, %v3756
    %v3784 = vpack.c.b16 %v3760, %v3757
    %3809 = vmatprep.subr.bf16.mxu0 %v3762
    %3810 = vmatpush1.bf16.msra.mxu0 %v3761
    %3811 = vmatprep.subr.bf16.mxu0 %v3765
    %3812 = vmatpush1.bf16.msra.mxu0 %v3764
    %3813 = vmatprep.subr.bf16.mxu0 %v3768
    %3814 = vmatpush1.bf16.msra.mxu0 %v3767
    %3815 = vmatprep.subr.bf16.mxu0 %v3771
    %3816 = vmatpush1.bf16.msra.mxu0 %v3770
    %3817 = vmatprep.subr.bf16.mxu0 %v3774
    %3818 = vmatpush1.bf16.msra.mxu0 %v3773
    %3819 = vmatprep.subr.bf16.mxu0 %v3777
    %3820 = vmatpush1.bf16.msra.mxu0 %v3776
    %3821 = vmatprep.subr.bf16.mxu0 %v3780
    %3822 = vmatpush1.bf16.msra.mxu0 %v3779
    %3823 = vmatprep.subr.bf16.mxu0 %v3783
    %3824 = vmatpush1.bf16.msra.mxu0 %v3782
    %3825 = vmatprep.subr.bf16.mxu0 0
    %3826 = vmatpush1.bf16.msra.mxu0 0
    %3827 = vmatprep.subr.bf16.mxu0 0
    %3828 = vmatpush1.bf16.msra.mxu0 0
    %3829 = vmatprep.subr.bf16.mxu0 0
    %3830 = vmatpush1.bf16.msra.mxu0 0
    %3831 = vmatprep.subr.bf16.mxu0 0
    %3832 = vmatpush1.bf16.msra.mxu0 0
    %3833 = vmatprep.subr.bf16.mxu0 0
    %3834 = vmatpush1.bf16.msra.mxu0 0
    %3835 = vmatprep.subr.bf16.mxu0 0
    %3836 = vmatpush1.bf16.msra.mxu0 0
    %3837 = vmatprep.subr.bf16.mxu0 0
    %3838 = vmatpush1.bf16.msra.mxu0 0
    %3839 = vmatprep.subr.bf16.mxu0 0
    %3840 = vmatpush1.bf16.msra.mxu0 0
    %3841 = vmatprep.mubr.bf16.mxu0 0
    %3842 = vmatmul.mubr.bf16.gmra.mrb[0].mxu0 %v3143
    %v3843 = vpop.f32.mrb[0].mxu0
    %v3844 = vadd.f32 0.0, %v3843
    %v3845 = vpop.f32.mrb[0].mxu0
    %v3846 = vadd.f32 0.0, %v3845
    %v3847 = vpop.f32.mrb[0].mxu0
    %v3848 = vpop.f32.mrb[0].mxu0
    %3849 = vdwg.mxu0
    %3850 = vmatprep.subr.bf16.mxu0 0
    %3851 = vmatpush1.bf16.msra.mxu0 %v3763
    %3852 = vmatprep.subr.bf16.mxu0 0
    %3853 = vmatpush1.bf16.msra.mxu0 %v3766
    %3854 = vmatprep.subr.bf16.mxu0 0
    %3855 = vmatpush1.bf16.msra.mxu0 %v3769
    %3856 = vmatprep.subr.bf16.mxu0 0
    %3857 = vmatpush1.bf16.msra.mxu0 %v3772
    %3858 = vmatprep.subr.bf16.mxu0 0
    %3859 = vmatpush1.bf16.msra.mxu0 %v3775
    %3860 = vmatprep.subr.bf16.mxu0 0
    %3861 = vmatpush1.bf16.msra.mxu0 %v3778
    %3862 = vmatprep.subr.bf16.mxu0 0
    %3863 = vmatpush1.bf16.msra.mxu0 %v3781
    %3864 = vmatprep.subr.bf16.mxu0 0
    %3865 = vmatpush1.bf16.msra.mxu0 %v3784
    %3866 = vmatprep.subr.bf16.mxu0 0
    %3867 = vmatpush1.bf16.msra.mxu0 0
    %3868 = vmatprep.subr.bf16.mxu0 0
    %3869 = vmatpush1.bf16.msra.mxu0 0
    %3870 = vmatprep.subr.bf16.mxu0 0
    %3871 = vmatpush1.bf16.msra.mxu0 0
    %3872 = vmatprep.subr.bf16.mxu0 0
    %3873 = vmatpush1.bf16.msra.mxu0 0
    %3874 = vmatprep.subr.bf16.mxu0 0
    %3875 = vmatpush1.bf16.msra.mxu0 0
    %3876 = vmatprep.subr.bf16.mxu0 0
    %3877 = vmatpush1.bf16.msra.mxu0 0
    %3878 = vmatprep.subr.bf16.mxu0 0
    %3879 = vmatpush1.bf16.msra.mxu0 0
    %3880 = vmatprep.subr.bf16.mxu0 0
    %3881 = vmatpush1.bf16.msra.mxu0 0
    %3882 = vmatprep.mubr.bf16.mxu0 0
    %3883 = vmatmul.mubr.bf16.gmra.mrb[0].mxu0 %v3143
    %v3884 = vpop.f32.mrb[0].mxu0
    %v3885 = vadd.f32 0.0, %v3884
    %v3886 = vpop.f32.mrb[0].mxu0
    %v3887 = vpop.f32.mrb[0].mxu0
    %v3888 = vpop.f32.mrb[0].mxu0
    %3889 = vdwg.mxu0
    %s3890 = scalar_lea.vmem [#allocation2], 4
    %v3891 = vld [vmem:[%s3890] ss:$8 sm:$0x7]
    %v3894 = vcombine.low %v3844, %v3846
    %v3896 = vunpack.c.l.s4 1966171168
    %v3897 = vunpack.c.0.s8 %v3896
    %v3898 = vlaneseq
    %v3899 = vshrl.u32 %v3898, 7
    %v3900 = vsub.s32 %v3897, %v3899
    %v3901 = vrot.slane %v3894, %v3900
    %v3903 = vunpack.c.l.s4 1966171168
    %v3904 = vunpack.c.0.s8 %v3903
    %v3905 = vlaneseq
    %v3906 = vshrl.u32 %v3905, 7
    %v3907 = vsub.s32 %v3904, %v3906
    %v3908 = vrot.slane %v3901, %v3907
    %v3910 = vadd.f32 %v3891, %v3908
    %v3911 = vxor.u32 %v3910, 2147483648
    %v3912 = vmul.f32 %v3911, 1.442695
    %v3913 = vpow.pop %v3912
    %v3914 = vadd.f32 %v3913, 1.0
    %v3915 = vrcp.pop %v3914
    %v3916 = vmul.f32 1.0, %v3915
    %v3917 = vadd.f32 %v3885, %v480
    %v3918 = vmul.f32 %v3916, %v3917
    %v3920 = vrot.slane %v3891, 2
    %v3922 = vadd.f32 %v3920, %v3918
    %v3923 = vtanh.pop %v3922
    %v3924 = vsub.f32 %v3142, %v3923
    %v3926 = vrot.slane %v3916, 1
    %v3928 = vmul.f32 %v3926, %v3924
    %v3929 = vadd.f32 %v3923, %v3928
    %v3930 = vpack.c.bf16 %v3929, %v3929
    %v3931 = vld [vmem:[%s5] sm:$0xff]
    %v3932 = vld [vmem:[%s5 + $0x8] sm:$0xf]
    %v3933 = vld [vmem:[%s5 + $0xc] sm:$0xff]
    %v3934 = vld [vmem:[%s5 + $0x14] sm:$0xf]
    %v3935 = vld [vmem:[%s5 + $0x18] sm:$0xff]
    %v3936 = vld [vmem:[%s5 + $0x20] sm:$0xf]
    %v3937 = vld [vmem:[%s5 + $0x24] sm:$0xff]
    %v3938 = vld [vmem:[%s5 + $0x2c] sm:$0xf]
    %v3939 = vld [vmem:[%s5 + $0x30] sm:$0xff]
    %v3940 = vld [vmem:[%s5 + $0x38] sm:$0xf]
    %v3941 = vld [vmem:[%s5 + $0x3c] sm:$0xff]
    %v3942 = vld [vmem:[%s5 + $0x44] sm:$0xf]
    %v3943 = vld [vmem:[%s5 + $0x48] sm:$0xff]
    %v3944 = vld [vmem:[%s5 + $0x50] sm:$0xf]
    %v3945 = vld [vmem:[%s5 + $0x54] sm:$0xff]
    %v3946 = vld [vmem:[%s5 + $0x5c] sm:$0xf]
    %v3947 = vld [vmem:[%s5 + $0x60] sm:$0xff]
    %v3948 = vld [vmem:[%s5 + $0x68] sm:$0xf]
    %v3949 = vld [vmem:[%s5 + $0x6c] sm:$0xff]
    %v3950 = vld [vmem:[%s5 + $0x74] sm:$0xf]
    %v3951 = vld [vmem:[%s5 + $0x78] sm:$0xff]
    %v3952 = vld [vmem:[%s5 + $0x80] sm:$0xf]
    %v3953 = vld [vmem:[%s5 + $0x84] sm:$0xff]
    %v3954 = vld [vmem:[%s5 + $0x8c] sm:$0xf]
    %v3955 = vld [vmem:[%s5 + $0x90] sm:$0xff]
    %v3956 = vld [vmem:[%s5 + $0x98] sm:$0xf]
    %v3957 = vld [vmem:[%s5 + $0x9c] sm:$0xff]
    %v3958 = vld [vmem:[%s5 + $0xa4] sm:$0xf]
    %v3959 = vld [vmem:[%s5 + $0xa8] sm:$0xff]
    %v3960 = vld [vmem:[%s5 + $0xb0] sm:$0xf]
    %v3961 = vld [vmem:[%s5 + $0xb4] sm:$0xff]
    %v3962 = vld [vmem:[%s5 + $0xbc] sm:$0xf]
    %v3995 = vunpack.c.l.b16 %v3931
    %v3996 = vunpack.c.h.b16 %v3931
    %v3997 = vunpack.c.l.b16 %v3932
    %v3998 = vunpack.c.l.b16 %v3933
    %v3999 = vunpack.c.h.b16 %v3933
    %v4000 = vunpack.c.l.b16 %v3934
    %v4001 = vunpack.c.l.b16 %v3935
    %v4002 = vunpack.c.h.b16 %v3935
    %v4003 = vunpack.c.l.b16 %v3936
    %v4004 = vunpack.c.l.b16 %v3937
    %v4005 = vunpack.c.h.b16 %v3937
    %v4006 = vunpack.c.l.b16 %v3938
    %v4007 = vunpack.c.l.b16 %v3939
    %v4008 = vunpack.c.h.b16 %v3939
    %v4009 = vunpack.c.l.b16 %v3940
    %v4010 = vunpack.c.l.b16 %v3941
    %v4011 = vunpack.c.h.b16 %v3941
    %v4012 = vunpack.c.l.b16 %v3942
    %v4013 = vunpack.c.l.b16 %v3943
    %v4014 = vunpack.c.h.b16 %v3943
    %v4015 = vunpack.c.l.b16 %v3944
    %v4016 = vunpack.c.l.b16 %v3945
    %v4017 = vunpack.c.h.b16 %v3945
    %v4018 = vunpack.c.l.b16 %v3946
    %v4019 = vunpack.c.l.b16 %v3947
    %v4020 = vunpack.c.h.b16 %v3947
    %v4021 = vunpack.c.l.b16 %v3948
    %v4022 = vunpack.c.l.b16 %v3949
    %v4023 = vunpack.c.h.b16 %v3949
    %v4024 = vunpack.c.l.b16 %v3950
    %v4025 = vunpack.c.l.b16 %v3951
    %v4026 = vunpack.c.h.b16 %v3951
    %v4027 = vunpack.c.l.b16 %v3952
    %v4028 = vunpack.c.l.b16 %v3953
    %v4029 = vunpack.c.h.b16 %v3953
    %v4030 = vunpack.c.l.b16 %v3954
    %v4031 = vunpack.c.l.b16 %v3955
    %v4032 = vunpack.c.h.b16 %v3955
    %v4033 = vunpack.c.l.b16 %v3956
    %v4034 = vunpack.c.l.b16 %v3957
    %v4035 = vunpack.c.h.b16 %v3957
    %v4036 = vunpack.c.l.b16 %v3958
    %v4037 = vunpack.c.l.b16 %v3959
    %v4038 = vunpack.c.h.b16 %v3959
    %v4039 = vunpack.c.l.b16 %v3960
    %v4040 = vunpack.c.l.b16 %v3961
    %v4041 = vunpack.c.h.b16 %v3961
    %v4042 = vunpack.c.l.b16 %v3962
    %v4043 = vpack.c.b16 %v3998, %v3995
    %v4044 = vpack.c.b16 %v3999, %v3996
    %v4045 = vpack.c.b16 %v4000, %v3997
    %v4046 = vpack.c.b16 %v4004, %v4001
    %v4047 = vpack.c.b16 %v4005, %v4002
    %v4048 = vpack.c.b16 %v4006, %v4003
    %v4049 = vpack.c.b16 %v4010, %v4007
    %v4050 = vpack.c.b16 %v4011, %v4008
    %v4051 = vpack.c.b16 %v4012, %v4009
    %v4052 = vpack.c.b16 %v4016, %v4013
    %v4053 = vpack.c.b16 %v4017, %v4014
    %v4054 = vpack.c.b16 %v4018, %v4015
    %v4055 = vpack.c.b16 %v4022, %v4019
    %v4056 = vpack.c.b16 %v4023, %v4020
    %v4057 = vpack.c.b16 %v4024, %v4021
    %v4058 = vpack.c.b16 %v4028, %v4025
    %v4059 = vpack.c.b16 %v4029, %v4026
    %v4060 = vpack.c.b16 %v4030, %v4027
    %v4061 = vpack.c.b16 %v4034, %v4031
    %v4062 = vpack.c.b16 %v4035, %v4032
    %v4063 = vpack.c.b16 %v4036, %v4033
    %v4064 = vpack.c.b16 %v4040, %v4037
    %v4065 = vpack.c.b16 %v4041, %v4038
    %v4066 = vpack.c.b16 %v4042, %v4039
    %4091 = vmatprep.subr.bf16.mxu0 %v4044
    %4092 = vmatpush1.bf16.msra.mxu0 %v4043
    %4093 = vmatprep.subr.bf16.mxu0 %v4047
    %4094 = vmatpush1.bf16.msra.mxu0 %v4046
    %4095 = vmatprep.subr.bf16.mxu0 %v4050
    %4096 = vmatpush1.bf16.msra.mxu0 %v4049
    %4097 = vmatprep.subr.bf16.mxu0 %v4053
    %4098 = vmatpush1.bf16.msra.mxu0 %v4052
    %4099 = vmatprep.subr.bf16.mxu0 %v4056
    %4100 = vmatpush1.bf16.msra.mxu0 %v4055
    %4101 = vmatprep.subr.bf16.mxu0 %v4059
    %4102 = vmatpush1.bf16.msra.mxu0 %v4058
    %4103 = vmatprep.subr.bf16.mxu0 %v4062
    %4104 = vmatpush1.bf16.msra.mxu0 %v4061
    %4105 = vmatprep.subr.bf16.mxu0 %v4065
    %4106 = vmatpush1.bf16.msra.mxu0 %v4064
    %4107 = vmatprep.subr.bf16.mxu0 0
    %4108 = vmatpush1.bf16.msra.mxu0 0
    %4109 = vmatprep.subr.bf16.mxu0 0
    %4110 = vmatpush1.bf16.msra.mxu0 0
    %4111 = vmatprep.subr.bf16.mxu0 0
    %4112 = vmatpush1.bf16.msra.mxu0 0
    %4113 = vmatprep.subr.bf16.mxu0 0
    %4114 = vmatpush1.bf16.msra.mxu0 0
    %4115 = vmatprep.subr.bf16.mxu0 0
    %4116 = vmatpush1.bf16.msra.mxu0 0
    %4117 = vmatprep.subr.bf16.mxu0 0
    %4118 = vmatpush1.bf16.msra.mxu0 0
    %4119 = vmatprep.subr.bf16.mxu0 0
    %4120 = vmatpush1.bf16.msra.mxu0 0
    %4121 = vmatprep.subr.bf16.mxu0 0
    %4122 = vmatpush1.bf16.msra.mxu0 0
    %4123 = vmatprep.mubr.bf16.mxu0 0
    %4124 = vmatmul.mubr.bf16.gmra.mrb[0].mxu0 %v3930
    %v4125 = vpop.f32.mrb[0].mxu0
    %v4126 = vadd.f32 %v931, %v4125
    %v4127 = vpop.f32.mrb[0].mxu0
    %v4128 = vadd.f32 %v935, %v4127
    %v4129 = vpop.f32.mrb[0].mxu0
    %v4130 = vpop.f32.mrb[0].mxu0
    %4131 = vdwg.mxu0
    %4132 = vmatprep.subr.bf16.mxu0 0
    %4133 = vmatpush1.bf16.msra.mxu0 %v4045
    %4134 = vmatprep.subr.bf16.mxu0 0
    %4135 = vmatpush1.bf16.msra.mxu0 %v4048
    %4136 = vmatprep.subr.bf16.mxu0 0
    %4137 = vmatpush1.bf16.msra.mxu0 %v4051
    %4138 = vmatprep.subr.bf16.mxu0 0
    %4139 = vmatpush1.bf16.msra.mxu0 %v4054
    %4140 = vmatprep.subr.bf16.mxu0 0
    %4141 = vmatpush1.bf16.msra.mxu0 %v4057
    %4142 = vmatprep.subr.bf16.mxu0 0
    %4143 = vmatpush1.bf16.msra.mxu0 %v4060
    %4144 = vmatprep.subr.bf16.mxu0 0
    %4145 = vmatpush1.bf16.msra.mxu0 %v4063
    %4146 = vmatprep.subr.bf16.mxu0 0
    %4147 = vmatpush1.bf16.msra.mxu0 %v4066
    %4148 = vmatprep.subr.bf16.mxu0 0
    %4149 = vmatpush1.bf16.msra.mxu0 0
    %4150 = vmatprep.subr.bf16.mxu0 0
    %4151 = vmatpush1.bf16.msra.mxu0 0
    %4152 = vmatprep.subr.bf16.mxu0 0
    %4153 = vmatpush1.bf16.msra.mxu0 0
    %4154 = vmatprep.subr.bf16.mxu0 0
    %4155 = vmatpush1.bf16.msra.mxu0 0
    %4156 = vmatprep.subr.bf16.mxu0 0
    %4157 = vmatpush1.bf16.msra.mxu0 0
    %4158 = vmatprep.subr.bf16.mxu0 0
    %4159 = vmatpush1.bf16.msra.mxu0 0
    %4160 = vmatprep.subr.bf16.mxu0 0
    %4161 = vmatpush1.bf16.msra.mxu0 0
    %4162 = vmatprep.subr.bf16.mxu0 0
    %4163 = vmatpush1.bf16.msra.mxu0 0
    %4164 = vmatprep.mubr.bf16.mxu0 0
    %4165 = vmatmul.mubr.bf16.gmra.mrb[0].mxu0 %v3930
    %v4166 = vpop.f32.mrb[0].mxu0
    %v4167 = vadd.f32 %v939, %v4166
    %v4168 = vpop.f32.mrb[0].mxu0
    %v4169 = vpop.f32.mrb[0].mxu0
    %v4170 = vpop.f32.mrb[0].mxu0
    %4171 = vdwg.mxu0
    %v4172 = vpack.c.bf16 %v3647, %v3647
    %v4173 = vld [vmem:[%s6] sm:$0xff]
    %v4174 = vld [vmem:[%s6 + $0x8] sm:$0xf]
    %v4175 = vld [vmem:[%s6 + $0xc] sm:$0xff]
    %v4176 = vld [vmem:[%s6 + $0x14] sm:$0xf]
    %v4177 = vld [vmem:[%s6 + $0x18] sm:$0xff]
    %v4178 = vld [vmem:[%s6 + $0x20] sm:$0xf]
    %v4179 = vld [vmem:[%s6 + $0x24] sm:$0xff]
    %v4180 = vld [vmem:[%s6 + $0x2c] sm:$0xf]
    %v4181 = vld [vmem:[%s6 + $0x30] sm:$0xff]
    %v4182 = vld [vmem:[%s6 + $0x38] sm:$0xf]
    %v4183 = vld [vmem:[%s6 + $0x3c] sm:$0xff]
    %v4184 = vld [vmem:[%s6 + $0x44] sm:$0xf]
    %v4185 = vld [vmem:[%s6 + $0x48] sm:$0xff]
    %v4186 = vld [vmem:[%s6 + $0x50] sm:$0xf]
    %v4187 = vld [vmem:[%s6 + $0x54] sm:$0xff]
    %v4188 = vld [vmem:[%s6 + $0x5c] sm:$0xf]
    %v4189 = vld [vmem:[%s6 + $0x60] sm:$0xff]
    %v4190 = vld [vmem:[%s6 + $0x68] sm:$0xf]
    %v4191 = vld [vmem:[%s6 + $0x6c] sm:$0xff]
    %v4192 = vld [vmem:[%s6 + $0x74] sm:$0xf]
    %v4193 = vld [vmem:[%s6 + $0x78] sm:$0xff]
    %v4194 = vld [vmem:[%s6 + $0x80] sm:$0xf]
    %v4195 = vld [vmem:[%s6 + $0x84] sm:$0xff]
    %v4196 = vld [vmem:[%s6 + $0x8c] sm:$0xf]
    %v4197 = vld [vmem:[%s6 + $0x90] sm:$0xff]
    %v4198 = vld [vmem:[%s6 + $0x98] sm:$0xf]
    %v4199 = vld [vmem:[%s6 + $0x9c] sm:$0xff]
    %v4200 = vld [vmem:[%s6 + $0xa4] sm:$0xf]
    %v4201 = vld [vmem:[%s6 + $0xa8] sm:$0xff]
    %v4202 = vld [vmem:[%s6 + $0xb0] sm:$0xf]
    %v4203 = vld [vmem:[%s6 + $0xb4] sm:$0xff]
    %v4204 = vld [vmem:[%s6 + $0xbc] sm:$0xf]
    %v4237 = vunpack.c.l.b16 %v4173
    %v4238 = vunpack.c.h.b16 %v4173
    %v4239 = vunpack.c.l.b16 %v4174
    %v4240 = vunpack.c.l.b16 %v4175
    %v4241 = vunpack.c.h.b16 %v4175
    %v4242 = vunpack.c.l.b16 %v4176
    %v4243 = vunpack.c.l.b16 %v4177
    %v4244 = vunpack.c.h.b16 %v4177
    %v4245 = vunpack.c.l.b16 %v4178
    %v4246 = vunpack.c.l.b16 %v4179
    %v4247 = vunpack.c.h.b16 %v4179
    %v4248 = vunpack.c.l.b16 %v4180
    %v4249 = vunpack.c.l.b16 %v4181
    %v4250 = vunpack.c.h.b16 %v4181
    %v4251 = vunpack.c.l.b16 %v4182
    %v4252 = vunpack.c.l.b16 %v4183
    %v4253 = vunpack.c.h.b16 %v4183
    %v4254 = vunpack.c.l.b16 %v4184
    %v4255 = vunpack.c.l.b16 %v4185
    %v4256 = vunpack.c.h.b16 %v4185
    %v4257 = vunpack.c.l.b16 %v4186
    %v4258 = vunpack.c.l.b16 %v4187
    %v4259 = vunpack.c.h.b16 %v4187
    %v4260 = vunpack.c.l.b16 %v4188
    %v4261 = vunpack.c.l.b16 %v4189
    %v4262 = vunpack.c.h.b16 %v4189
    %v4263 = vunpack.c.l.b16 %v4190
    %v4264 = vunpack.c.l.b16 %v4191
    %v4265 = vunpack.c.h.b16 %v4191
    %v4266 = vunpack.c.l.b16 %v4192
    %v4267 = vunpack.c.l.b16 %v4193
    %v4268 = vunpack.c.h.b16 %v4193
    %v4269 = vunpack.c.l.b16 %v4194
    %v4270 = vunpack.c.l.b16 %v4195
    %v4271 = vunpack.c.h.b16 %v4195
    %v4272 = vunpack.c.l.b16 %v4196
    %v4273 = vunpack.c.l.b16 %v4197
    %v4274 = vunpack.c.h.b16 %v4197
    %v4275 = vunpack.c.l.b16 %v4198
    %v4276 = vunpack.c.l.b16 %v4199
    %v4277 = vunpack.c.h.b16 %v4199
    %v4278 = vunpack.c.l.b16 %v4200
    %v4279 = vunpack.c.l.b16 %v4201
    %v4280 = vunpack.c.h.b16 %v4201
    %v4281 = vunpack.c.l.b16 %v4202
    %v4282 = vunpack.c.l.b16 %v4203
    %v4283 = vunpack.c.h.b16 %v4203
    %v4284 = vunpack.c.l.b16 %v4204
    %v4285 = vpack.c.b16 %v4240, %v4237
    %v4286 = vpack.c.b16 %v4241, %v4238
    %v4287 = vpack.c.b16 %v4242, %v4239
    %v4288 = vpack.c.b16 %v4246, %v4243
    %v4289 = vpack.c.b16 %v4247, %v4244
    %v4290 = vpack.c.b16 %v4248, %v4245
    %v4291 = vpack.c.b16 %v4252, %v4249
    %v4292 = vpack.c.b16 %v4253, %v4250
    %v4293 = vpack.c.b16 %v4254, %v4251
    %v4294 = vpack.c.b16 %v4258, %v4255
    %v4295 = vpack.c.b16 %v4259, %v4256
    %v4296 = vpack.c.b16 %v4260, %v4257
    %v4297 = vpack.c.b16 %v4264, %v4261
    %v4298 = vpack.c.b16 %v4265, %v4262
    %v4299 = vpack.c.b16 %v4266, %v4263
    %v4300 = vpack.c.b16 %v4270, %v4267
    %v4301 = vpack.c.b16 %v4271, %v4268
    %v4302 = vpack.c.b16 %v4272, %v4269
    %v4303 = vpack.c.b16 %v4276, %v4273
    %v4304 = vpack.c.b16 %v4277, %v4274
    %v4305 = vpack.c.b16 %v4278, %v4275
    %v4306 = vpack.c.b16 %v4282, %v4279
    %v4307 = vpack.c.b16 %v4283, %v4280
    %v4308 = vpack.c.b16 %v4284, %v4281
    %4333 = vmatprep.subr.bf16.mxu0 %v4286
    %4334 = vmatpush1.bf16.msra.mxu0 %v4285
    %4335 = vmatprep.subr.bf16.mxu0 %v4289
    %4336 = vmatpush1.bf16.msra.mxu0 %v4288
    %4337 = vmatprep.subr.bf16.mxu0 %v4292
    %4338 = vmatpush1.bf16.msra.mxu0 %v4291
    %4339 = vmatprep.subr.bf16.mxu0 %v4295
    %4340 = vmatpush1.bf16.msra.mxu0 %v4294
    %4341 = vmatprep.subr.bf16.mxu0 %v4298
    %4342 = vmatpush1.bf16.msra.mxu0 %v4297
    %4343 = vmatprep.subr.bf16.mxu0 %v4301
    %4344 = vmatpush1.bf16.msra.mxu0 %v4300
    %4345 = vmatprep.subr.bf16.mxu0 %v4304
    %4346 = vmatpush1.bf16.msra.mxu0 %v4303
    %4347 = vmatprep.subr.bf16.mxu0 %v4307
    %4348 = vmatpush1.bf16.msra.mxu0 %v4306
    %4349 = vmatprep.subr.bf16.mxu0 0
    %4350 = vmatpush1.bf16.msra.mxu0 0
    %4351 = vmatprep.subr.bf16.mxu0 0
    %4352 = vmatpush1.bf16.msra.mxu0 0
    %4353 = vmatprep.subr.bf16.mxu0 0
    %4354 = vmatpush1.bf16.msra.mxu0 0
    %4355 = vmatprep.subr.bf16.mxu0 0
    %4356 = vmatpush1.bf16.msra.mxu0 0
    %4357 = vmatprep.subr.bf16.mxu0 0
    %4358 = vmatpush1.bf16.msra.mxu0 0
    %4359 = vmatprep.subr.bf16.mxu0 0
    %4360 = vmatpush1.bf16.msra.mxu0 0
    %4361 = vmatprep.subr.bf16.mxu0 0
    %4362 = vmatpush1.bf16.msra.mxu0 0
    %4363 = vmatprep.subr.bf16.mxu0 0
    %4364 = vmatpush1.bf16.msra.mxu0 0
    %4365 = vmatprep.mubr.bf16.mxu0 0
    %4366 = vmatmul.mubr.bf16.gmra.mrb[0].mxu0 %v4172
    %v4367 = vpop.f32.mrb[0].mxu0
    %v4368 = vadd.f32 0.0, %v4367
    %v4369 = vpop.f32.mrb[0].mxu0
    %v4370 = vadd.f32 0.0, %v4369
    %v4371 = vpop.f32.mrb[0].mxu0
    %v4372 = vpop.f32.mrb[0].mxu0
    %4373 = vdwg.mxu0
    %4374 = vmatprep.subr.bf16.mxu0 0
    %4375 = vmatpush1.bf16.msra.mxu0 %v4287
    %4376 = vmatprep.subr.bf16.mxu0 0
    %4377 = vmatpush1.bf16.msra.mxu0 %v4290
    %4378 = vmatprep.subr.bf16.mxu0 0
    %4379 = vmatpush1.bf16.msra.mxu0 %v4293
    %4380 = vmatprep.subr.bf16.mxu0 0
    %4381 = vmatpush1.bf16.msra.mxu0 %v4296
    %4382 = vmatprep.subr.bf16.mxu0 0
    %4383 = vmatpush1.bf16.msra.mxu0 %v4299
    %4384 = vmatprep.subr.bf16.mxu0 0
    %4385 = vmatpush1.bf16.msra.mxu0 %v4302
    %4386 = vmatprep.subr.bf16.mxu0 0
    %4387 = vmatpush1.bf16.msra.mxu0 %v4305
    %4388 = vmatprep.subr.bf16.mxu0 0
    %4389 = vmatpush1.bf16.msra.mxu0 %v4308
    %4390 = vmatprep.subr.bf16.mxu0 0
    %4391 = vmatpush1.bf16.msra.mxu0 0
    %4392 = vmatprep.subr.bf16.mxu0 0
    %4393 = vmatpush1.bf16.msra.mxu0 0
    %4394 = vmatprep.subr.bf16.mxu0 0
    %4395 = vmatpush1.bf16.msra.mxu0 0
    %4396 = vmatprep.subr.bf16.mxu0 0
    %4397 = vmatpush1.bf16.msra.mxu0 0
    %4398 = vmatprep.subr.bf16.mxu0 0
    %4399 = vmatpush1.bf16.msra.mxu0 0
    %4400 = vmatprep.subr.bf16.mxu0 0
    %4401 = vmatpush1.bf16.msra.mxu0 0
    %4402 = vmatprep.subr.bf16.mxu0 0
    %4403 = vmatpush1.bf16.msra.mxu0 0
    %4404 = vmatprep.subr.bf16.mxu0 0
    %4405 = vmatpush1.bf16.msra.mxu0 0
    %4406 = vmatprep.mubr.bf16.mxu0 0
    %4407 = vmatmul.mubr.bf16.gmra.mrb[0].mxu0 %v4172
    %v4408 = vpop.f32.mrb[0].mxu0
    %v4409 = vadd.f32 0.0, %v4408
    %v4410 = vpop.f32.mrb[0].mxu0
    %v4411 = vpop.f32.mrb[0].mxu0
    %v4412 = vpop.f32.mrb[0].mxu0
    %4413 = vdwg.mxu0
    %v4414 = vadd.f32 %v4126, %v4368
    %v4415 = vadd.f32 %v4128, %v4370
    %v4416 = vxor.u32 %v4414, 2147483648
    %v4417 = vxor.u32 %v4415, 2147483648
    %v4418 = vmul.f32 %v4416, 1.442695
    %v4419 = vpow.pop %v4418
    %v4420 = vmul.f32 %v4417, 1.442695
    %v4421 = vpow.pop %v4420
    %v4422 = vadd.f32 %v4419, 1.0
    %v4423 = vadd.f32 %v4421, 1.0
    %v4424 = vrcp.pop %v4422
    %v4425 = vmul.f32 1.0, %v4424
    %v4426 = vrcp.pop %v4423
    %v4427 = vmul.f32 1.0, %v4426
    %v4428 = vadd.f32 %v4409, %v482
    %v4429 = vmul.f32 %v4425, %v4428
    %v4430 = vadd.f32 %v4167, %v4429
    %v4431 = vtanh.pop %v4430
    %v4432 = vsub.f32 %v3647, %v4431
    %v4433 = vmul.f32 %v4427, %v4432
    %v4434 = vadd.f32 %v4431, %v4433
    %4435 = vst [vmem:[#allocation3 + $0x4] sm:$0x1] %v4434
    %v4436 = vld [vmem:[%s4] sm:$0xff]
    %v4437 = vld [vmem:[%s4 + $0x8] sm:$0xf]
    %v4438 = vld [vmem:[%s4 + $0xc] sm:$0xff]
    %v4439 = vld [vmem:[%s4 + $0x14] sm:$0xf]
    %v4440 = vld [vmem:[%s4 + $0x18] sm:$0xff]
    %v4441 = vld [vmem:[%s4 + $0x20] sm:$0xf]
    %v4442 = vld [vmem:[%s4 + $0x24] sm:$0xff]
    %v4443 = vld [vmem:[%s4 + $0x2c] sm:$0xf]
    %v4444 = vld [vmem:[%s4 + $0x30] sm:$0xff]
    %v4445 = vld [vmem:[%s4 + $0x38] sm:$0xf]
    %v4446 = vld [vmem:[%s4 + $0x3c] sm:$0xff]
    %v4447 = vld [vmem:[%s4 + $0x44] sm:$0xf]
    %v4448 = vld [vmem:[%s4 + $0x48] sm:$0xff]
    %v4449 = vld [vmem:[%s4 + $0x50] sm:$0xf]
    %v4450 = vld [vmem:[%s4 + $0x54] sm:$0xff]
    %v4451 = vld [vmem:[%s4 + $0x5c] sm:$0xf]
    %v4452 = vld [vmem:[%s4 + $0x60] sm:$0xff]
    %v4453 = vld [vmem:[%s4 + $0x68] sm:$0xf]
    %v4454 = vld [vmem:[%s4 + $0x6c] sm:$0xff]
    %v4455 = vld [vmem:[%s4 + $0x74] sm:$0xf]
    %v4456 = vld [vmem:[%s4 + $0x78] sm:$0xff]
    %v4457 = vld [vmem:[%s4 + $0x80] sm:$0xf]
    %v4458 = vld [vmem:[%s4 + $0x84] sm:$0xff]
    %v4459 = vld [vmem:[%s4 + $0x8c] sm:$0xf]
    %v4460 = vld [vmem:[%s4 + $0x90] sm:$0xff]
    %v4461 = vld [vmem:[%s4 + $0x98] sm:$0xf]
    %v4462 = vld [vmem:[%s4 + $0x9c] sm:$0xff]
    %v4463 = vld [vmem:[%s4 + $0xa4] sm:$0xf]
    %v4464 = vld [vmem:[%s4 + $0xa8] sm:$0xff]
    %v4465 = vld [vmem:[%s4 + $0xb0] sm:$0xf]
    %v4466 = vld [vmem:[%s4 + $0xb4] sm:$0xff]
    %v4467 = vld [vmem:[%s4 + $0xbc] sm:$0xf]
    %v4500 = vunpack.c.l.b16 %v4436
    %v4501 = vunpack.c.h.b16 %v4436
    %v4502 = vunpack.c.l.b16 %v4437
    %v4503 = vunpack.c.l.b16 %v4438
    %v4504 = vunpack.c.h.b16 %v4438
    %v4505 = vunpack.c.l.b16 %v4439
    %v4506 = vunpack.c.l.b16 %v4440
    %v4507 = vunpack.c.h.b16 %v4440
    %v4508 = vunpack.c.l.b16 %v4441
    %v4509 = vunpack.c.l.b16 %v4442
    %v4510 = vunpack.c.h.b16 %v4442
    %v4511 = vunpack.c.l.b16 %v4443
    %v4512 = vunpack.c.l.b16 %v4444
    %v4513 = vunpack.c.h.b16 %v4444
    %v4514 = vunpack.c.l.b16 %v4445
    %v4515 = vunpack.c.l.b16 %v4446
    %v4516 = vunpack.c.h.b16 %v4446
    %v4517 = vunpack.c.l.b16 %v4447
    %v4518 = vunpack.c.l.b16 %v4448
    %v4519 = vunpack.c.h.b16 %v4448
    %v4520 = vunpack.c.l.b16 %v4449
    %v4521 = vunpack.c.l.b16 %v4450
    %v4522 = vunpack.c.h.b16 %v4450
    %v4523 = vunpack.c.l.b16 %v4451
    %v4524 = vunpack.c.l.b16 %v4452
    %v4525 = vunpack.c.h.b16 %v4452
    %v4526 = vunpack.c.l.b16 %v4453
    %v4527 = vunpack.c.l.b16 %v4454
    %v4528 = vunpack.c.h.b16 %v4454
    %v4529 = vunpack.c.l.b16 %v4455
    %v4530 = vunpack.c.l.b16 %v4456
    %v4531 = vunpack.c.h.b16 %v4456
    %v4532 = vunpack.c.l.b16 %v4457
    %v4533 = vunpack.c.l.b16 %v4458
    %v4534 = vunpack.c.h.b16 %v4458
    %v4535 = vunpack.c.l.b16 %v4459
    %v4536 = vunpack.c.l.b16 %v4460
    %v4537 = vunpack.c.h.b16 %v4460
    %v4538 = vunpack.c.l.b16 %v4461
    %v4539 = vunpack.c.l.b16 %v4462
    %v4540 = vunpack.c.h.b16 %v4462
    %v4541 = vunpack.c.l.b16 %v4463
    %v4542 = vunpack.c.l.b16 %v4464
    %v4543 = vunpack.c.h.b16 %v4464
    %v4544 = vunpack.c.l.b16 %v4465
    %v4545 = vunpack.c.l.b16 %v4466
    %v4546 = vunpack.c.h.b16 %v4466
    %v4547 = vunpack.c.l.b16 %v4467
    %v4548 = vpack.c.b16 %v4503, %v4500
    %v4549 = vpack.c.b16 %v4504, %v4501
    %v4550 = vpack.c.b16 %v4505, %v4502
    %v4551 = vpack.c.b16 %v4509, %v4506
    %v4552 = vpack.c.b16 %v4510, %v4507
    %v4553 = vpack.c.b16 %v4511, %v4508
    %v4554 = vpack.c.b16 %v4515, %v4512
    %v4555 = vpack.c.b16 %v4516, %v4513
    %v4556 = vpack.c.b16 %v4517, %v4514
    %v4557 = vpack.c.b16 %v4521, %v4518
    %v4558 = vpack.c.b16 %v4522, %v4519
    %v4559 = vpack.c.b16 %v4523, %v4520
    %v4560 = vpack.c.b16 %v4527, %v4524
    %v4561 = vpack.c.b16 %v4528, %v4525
    %v4562 = vpack.c.b16 %v4529, %v4526
    %v4563 = vpack.c.b16 %v4533, %v4530
    %v4564 = vpack.c.b16 %v4534, %v4531
    %v4565 = vpack.c.b16 %v4535, %v4532
    %v4566 = vpack.c.b16 %v4539, %v4536
    %v4567 = vpack.c.b16 %v4540, %v4537
    %v4568 = vpack.c.b16 %v4541, %v4538
    %v4569 = vpack.c.b16 %v4545, %v4542
    %v4570 = vpack.c.b16 %v4546, %v4543
    %v4571 = vpack.c.b16 %v4547, %v4544
    %4596 = vmatprep.subr.bf16.mxu0 %v4549
    %4597 = vmatpush1.bf16.msra.mxu0 %v4548
    %4598 = vmatprep.subr.bf16.mxu0 %v4552
    %4599 = vmatpush1.bf16.msra.mxu0 %v4551
    %4600 = vmatprep.subr.bf16.mxu0 %v4555
    %4601 = vmatpush1.bf16.msra.mxu0 %v4554
    %4602 = vmatprep.subr.bf16.mxu0 %v4558
    %4603 = vmatpush1.bf16.msra.mxu0 %v4557
    %4604 = vmatprep.subr.bf16.mxu0 %v4561
    %4605 = vmatpush1.bf16.msra.mxu0 %v4560
    %4606 = vmatprep.subr.bf16.mxu0 %v4564
    %4607 = vmatpush1.bf16.msra.mxu0 %v4563
    %4608 = vmatprep.subr.bf16.mxu0 %v4567
    %4609 = vmatpush1.bf16.msra.mxu0 %v4566
    %4610 = vmatprep.subr.bf16.mxu0 %v4570
    %4611 = vmatpush1.bf16.msra.mxu0 %v4569
    %4612 = vmatprep.subr.bf16.mxu0 0
    %4613 = vmatpush1.bf16.msra.mxu0 0
    %4614 = vmatprep.subr.bf16.mxu0 0
    %4615 = vmatpush1.bf16.msra.mxu0 0
    %4616 = vmatprep.subr.bf16.mxu0 0
    %4617 = vmatpush1.bf16.msra.mxu0 0
    %4618 = vmatprep.subr.bf16.mxu0 0
    %4619 = vmatpush1.bf16.msra.mxu0 0
    %4620 = vmatprep.subr.bf16.mxu0 0
    %4621 = vmatpush1.bf16.msra.mxu0 0
    %4622 = vmatprep.subr.bf16.mxu0 0
    %4623 = vmatpush1.bf16.msra.mxu0 0
    %4624 = vmatprep.subr.bf16.mxu0 0
    %4625 = vmatpush1.bf16.msra.mxu0 0
    %4626 = vmatprep.subr.bf16.mxu0 0
    %4627 = vmatpush1.bf16.msra.mxu0 0
    %4628 = vmatprep.mubr.bf16.mxu0 0
    %4629 = vmatmul.mubr.bf16.gmra.mrb[0].mxu0 %v3930
    %v4630 = vpop.f32.mrb[0].mxu0
    %v4631 = vadd.f32 0.0, %v4630
    %v4632 = vpop.f32.mrb[0].mxu0
    %v4633 = vadd.f32 0.0, %v4632
    %v4634 = vpop.f32.mrb[0].mxu0
    %v4635 = vpop.f32.mrb[0].mxu0
    %4636 = vdwg.mxu0
    %4637 = vmatprep.subr.bf16.mxu0 0
    %4638 = vmatpush1.bf16.msra.mxu0 %v4550
    %4639 = vmatprep.subr.bf16.mxu0 0
    %4640 = vmatpush1.bf16.msra.mxu0 %v4553
    %4641 = vmatprep.subr.bf16.mxu0 0
    %4642 = vmatpush1.bf16.msra.mxu0 %v4556
    %4643 = vmatprep.subr.bf16.mxu0 0
    %4644 = vmatpush1.bf16.msra.mxu0 %v4559
    %4645 = vmatprep.subr.bf16.mxu0 0
    %4646 = vmatpush1.bf16.msra.mxu0 %v4562
    %4647 = vmatprep.subr.bf16.mxu0 0
    %4648 = vmatpush1.bf16.msra.mxu0 %v4565
    %4649 = vmatprep.subr.bf16.mxu0 0
    %4650 = vmatpush1.bf16.msra.mxu0 %v4568
    %4651 = vmatprep.subr.bf16.mxu0 0
    %4652 = vmatpush1.bf16.msra.mxu0 %v4571
    %4653 = vmatprep.subr.bf16.mxu0 0
    %4654 = vmatpush1.bf16.msra.mxu0 0
    %4655 = vmatprep.subr.bf16.mxu0 0
    %4656 = vmatpush1.bf16.msra.mxu0 0
    %4657 = vmatprep.subr.bf16.mxu0 0
    %4658 = vmatpush1.bf16.msra.mxu0 0
    %4659 = vmatprep.subr.bf16.mxu0 0
    %4660 = vmatpush1.bf16.msra.mxu0 0
    %4661 = vmatprep.subr.bf16.mxu0 0
    %4662 = vmatpush1.bf16.msra.mxu0 0
    %4663 = vmatprep.subr.bf16.mxu0 0
    %4664 = vmatpush1.bf16.msra.mxu0 0
    %4665 = vmatprep.subr.bf16.mxu0 0
    %4666 = vmatpush1.bf16.msra.mxu0 0
    %4667 = vmatprep.subr.bf16.mxu0 0
    %4668 = vmatpush1.bf16.msra.mxu0 0
    %4669 = vmatprep.mubr.bf16.mxu0 0
    %4670 = vmatmul.mubr.bf16.gmra.mrb[0].mxu0 %v3930
    %v4671 = vpop.f32.mrb[0].mxu0
    %v4672 = vadd.f32 0.0, %v4671
    %v4673 = vpop.f32.mrb[0].mxu0
    %v4674 = vpop.f32.mrb[0].mxu0
    %v4675 = vpop.f32.mrb[0].mxu0
    %4676 = vdwg.mxu0
    %s4677 = scalar_lea.vmem [#allocation2], 5
    %v4678 = vld [vmem:[%s4677] ss:$8 sm:$0x7]
    %v4681 = vcombine.low %v4631, %v4633
    %v4683 = vunpack.c.l.s4 1966171168
    %v4684 = vunpack.c.0.s8 %v4683
    %v4685 = vlaneseq
    %v4686 = vshrl.u32 %v4685, 7
    %v4687 = vsub.s32 %v4684, %v4686
    %v4688 = vrot.slane %v4681, %v4687
    %v4690 = vunpack.c.l.s4 1966171168
    %v4691 = vunpack.c.0.s8 %v4690
    %v4692 = vlaneseq
    %v4693 = vshrl.u32 %v4692, 7
    %v4694 = vsub.s32 %v4691, %v4693
    %v4695 = vrot.slane %v4688, %v4694
    %v4697 = vadd.f32 %v4678, %v4695
    %v4698 = vxor.u32 %v4697, 2147483648
    %v4699 = vmul.f32 %v4698, 1.442695
    %v4700 = vpow.pop %v4699
    %v4701 = vadd.f32 %v4700, 1.0
    %v4702 = vrcp.pop %v4701
    %v4703 = vmul.f32 1.0, %v4702
    %v4704 = vadd.f32 %v4672, %v480
    %v4705 = vmul.f32 %v4703, %v4704
    %v4707 = vrot.slane %v4678, 2
    %v4709 = vadd.f32 %v4707, %v4705
    %v4710 = vtanh.pop %v4709
    %v4711 = vsub.f32 %v3929, %v4710
    %v4713 = vrot.slane %v4703, 1
    %v4715 = vmul.f32 %v4713, %v4711
    %v4716 = vadd.f32 %v4710, %v4715
    %v4717 = vpack.c.bf16 %v4716, %v4716
    %v4718 = vld [vmem:[%s5] sm:$0xff]
    %v4719 = vld [vmem:[%s5 + $0x8] sm:$0xf]
    %v4720 = vld [vmem:[%s5 + $0xc] sm:$0xff]
    %v4721 = vld [vmem:[%s5 + $0x14] sm:$0xf]
    %v4722 = vld [vmem:[%s5 + $0x18] sm:$0xff]
    %v4723 = vld [vmem:[%s5 + $0x20] sm:$0xf]
    %v4724 = vld [vmem:[%s5 + $0x24] sm:$0xff]
    %v4725 = vld [vmem:[%s5 + $0x2c] sm:$0xf]
    %v4726 = vld [vmem:[%s5 + $0x30] sm:$0xff]
    %v4727 = vld [vmem:[%s5 + $0x38] sm:$0xf]
    %v4728 = vld [vmem:[%s5 + $0x3c] sm:$0xff]
    %v4729 = vld [vmem:[%s5 + $0x44] sm:$0xf]
    %v4730 = vld [vmem:[%s5 + $0x48] sm:$0xff]
    %v4731 = vld [vmem:[%s5 + $0x50] sm:$0xf]
    %v4732 = vld [vmem:[%s5 + $0x54] sm:$0xff]
    %v4733 = vld [vmem:[%s5 + $0x5c] sm:$0xf]
    %v4734 = vld [vmem:[%s5 + $0x60] sm:$0xff]
    %v4735 = vld [vmem:[%s5 + $0x68] sm:$0xf]
    %v4736 = vld [vmem:[%s5 + $0x6c] sm:$0xff]
    %v4737 = vld [vmem:[%s5 + $0x74] sm:$0xf]
    %v4738 = vld [vmem:[%s5 + $0x78] sm:$0xff]
    %v4739 = vld [vmem:[%s5 + $0x80] sm:$0xf]
    %v4740 = vld [vmem:[%s5 + $0x84] sm:$0xff]
    %v4741 = vld [vmem:[%s5 + $0x8c] sm:$0xf]
    %v4742 = vld [vmem:[%s5 + $0x90] sm:$0xff]
    %v4743 = vld [vmem:[%s5 + $0x98] sm:$0xf]
    %v4744 = vld [vmem:[%s5 + $0x9c] sm:$0xff]
    %v4745 = vld [vmem:[%s5 + $0xa4] sm:$0xf]
    %v4746 = vld [vmem:[%s5 + $0xa8] sm:$0xff]
    %v4747 = vld [vmem:[%s5 + $0xb0] sm:$0xf]
    %v4748 = vld [vmem:[%s5 + $0xb4] sm:$0xff]
    %v4749 = vld [vmem:[%s5 + $0xbc] sm:$0xf]
    %v4782 = vunpack.c.l.b16 %v4718
    %v4783 = vunpack.c.h.b16 %v4718
    %v4784 = vunpack.c.l.b16 %v4719
    %v4785 = vunpack.c.l.b16 %v4720
    %v4786 = vunpack.c.h.b16 %v4720
    %v4787 = vunpack.c.l.b16 %v4721
    %v4788 = vunpack.c.l.b16 %v4722
    %v4789 = vunpack.c.h.b16 %v4722
    %v4790 = vunpack.c.l.b16 %v4723
    %v4791 = vunpack.c.l.b16 %v4724
    %v4792 = vunpack.c.h.b16 %v4724
    %v4793 = vunpack.c.l.b16 %v4725
    %v4794 = vunpack.c.l.b16 %v4726
    %v4795 = vunpack.c.h.b16 %v4726
    %v4796 = vunpack.c.l.b16 %v4727
    %v4797 = vunpack.c.l.b16 %v4728
    %v4798 = vunpack.c.h.b16 %v4728
    %v4799 = vunpack.c.l.b16 %v4729
    %v4800 = vunpack.c.l.b16 %v4730
    %v4801 = vunpack.c.h.b16 %v4730
    %v4802 = vunpack.c.l.b16 %v4731
    %v4803 = vunpack.c.l.b16 %v4732
    %v4804 = vunpack.c.h.b16 %v4732
    %v4805 = vunpack.c.l.b16 %v4733
    %v4806 = vunpack.c.l.b16 %v4734
    %v4807 = vunpack.c.h.b16 %v4734
    %v4808 = vunpack.c.l.b16 %v4735
    %v4809 = vunpack.c.l.b16 %v4736
    %v4810 = vunpack.c.h.b16 %v4736
    %v4811 = vunpack.c.l.b16 %v4737
    %v4812 = vunpack.c.l.b16 %v4738
    %v4813 = vunpack.c.h.b16 %v4738
    %v4814 = vunpack.c.l.b16 %v4739
    %v4815 = vunpack.c.l.b16 %v4740
    %v4816 = vunpack.c.h.b16 %v4740
    %v4817 = vunpack.c.l.b16 %v4741
    %v4818 = vunpack.c.l.b16 %v4742
    %v4819 = vunpack.c.h.b16 %v4742
    %v4820 = vunpack.c.l.b16 %v4743
    %v4821 = vunpack.c.l.b16 %v4744
    %v4822 = vunpack.c.h.b16 %v4744
    %v4823 = vunpack.c.l.b16 %v4745
    %v4824 = vunpack.c.l.b16 %v4746
    %v4825 = vunpack.c.h.b16 %v4746
    %v4826 = vunpack.c.l.b16 %v4747
    %v4827 = vunpack.c.l.b16 %v4748
    %v4828 = vunpack.c.h.b16 %v4748
    %v4829 = vunpack.c.l.b16 %v4749
    %v4830 = vpack.c.b16 %v4785, %v4782
    %v4831 = vpack.c.b16 %v4786, %v4783
    %v4832 = vpack.c.b16 %v4787, %v4784
    %v4833 = vpack.c.b16 %v4791, %v4788
    %v4834 = vpack.c.b16 %v4792, %v4789
    %v4835 = vpack.c.b16 %v4793, %v4790
    %v4836 = vpack.c.b16 %v4797, %v4794
    %v4837 = vpack.c.b16 %v4798, %v4795
    %v4838 = vpack.c.b16 %v4799, %v4796
    %v4839 = vpack.c.b16 %v4803, %v4800
    %v4840 = vpack.c.b16 %v4804, %v4801
    %v4841 = vpack.c.b16 %v4805, %v4802
    %v4842 = vpack.c.b16 %v4809, %v4806
    %v4843 = vpack.c.b16 %v4810, %v4807
    %v4844 = vpack.c.b16 %v4811, %v4808
    %v4845 = vpack.c.b16 %v4815, %v4812
    %v4846 = vpack.c.b16 %v4816, %v4813
    %v4847 = vpack.c.b16 %v4817, %v4814
    %v4848 = vpack.c.b16 %v4821, %v4818
    %v4849 = vpack.c.b16 %v4822, %v4819
    %v4850 = vpack.c.b16 %v4823, %v4820
    %v4851 = vpack.c.b16 %v4827, %v4824
    %v4852 = vpack.c.b16 %v4828, %v4825
    %v4853 = vpack.c.b16 %v4829, %v4826
    %4878 = vmatprep.subr.bf16.mxu0 %v4831
    %4879 = vmatpush1.bf16.msra.mxu0 %v4830
    %4880 = vmatprep.subr.bf16.mxu0 %v4834
    %4881 = vmatpush1.bf16.msra.mxu0 %v4833
    %4882 = vmatprep.subr.bf16.mxu0 %v4837
    %4883 = vmatpush1.bf16.msra.mxu0 %v4836
    %4884 = vmatprep.subr.bf16.mxu0 %v4840
    %4885 = vmatpush1.bf16.msra.mxu0 %v4839
    %4886 = vmatprep.subr.bf16.mxu0 %v4843
    %4887 = vmatpush1.bf16.msra.mxu0 %v4842
    %4888 = vmatprep.subr.bf16.mxu0 %v4846
    %4889 = vmatpush1.bf16.msra.mxu0 %v4845
    %4890 = vmatprep.subr.bf16.mxu0 %v4849
    %4891 = vmatpush1.bf16.msra.mxu0 %v4848
    %4892 = vmatprep.subr.bf16.mxu0 %v4852
    %4893 = vmatpush1.bf16.msra.mxu0 %v4851
    %4894 = vmatprep.subr.bf16.mxu0 0
    %4895 = vmatpush1.bf16.msra.mxu0 0
    %4896 = vmatprep.subr.bf16.mxu0 0
    %4897 = vmatpush1.bf16.msra.mxu0 0
    %4898 = vmatprep.subr.bf16.mxu0 0
    %4899 = vmatpush1.bf16.msra.mxu0 0
    %4900 = vmatprep.subr.bf16.mxu0 0
    %4901 = vmatpush1.bf16.msra.mxu0 0
    %4902 = vmatprep.subr.bf16.mxu0 0
    %4903 = vmatpush1.bf16.msra.mxu0 0
    %4904 = vmatprep.subr.bf16.mxu0 0
    %4905 = vmatpush1.bf16.msra.mxu0 0
    %4906 = vmatprep.subr.bf16.mxu0 0
    %4907 = vmatpush1.bf16.msra.mxu0 0
    %4908 = vmatprep.subr.bf16.mxu0 0
    %4909 = vmatpush1.bf16.msra.mxu0 0
    %4910 = vmatprep.mubr.bf16.mxu0 0
    %4911 = vmatmul.mubr.bf16.gmra.mrb[0].mxu0 %v4717
    %v4912 = vpop.f32.mrb[0].mxu0
    %v4913 = vadd.f32 %v931, %v4912
    %v4914 = vpop.f32.mrb[0].mxu0
    %v4915 = vadd.f32 %v935, %v4914
    %v4916 = vpop.f32.mrb[0].mxu0
    %v4917 = vpop.f32.mrb[0].mxu0
    %4918 = vdwg.mxu0
    %4919 = vmatprep.subr.bf16.mxu0 0
    %4920 = vmatpush1.bf16.msra.mxu0 %v4832
    %4921 = vmatprep.subr.bf16.mxu0 0
    %4922 = vmatpush1.bf16.msra.mxu0 %v4835
    %4923 = vmatprep.subr.bf16.mxu0 0
    %4924 = vmatpush1.bf16.msra.mxu0 %v4838
    %4925 = vmatprep.subr.bf16.mxu0 0
    %4926 = vmatpush1.bf16.msra.mxu0 %v4841
    %4927 = vmatprep.subr.bf16.mxu0 0
    %4928 = vmatpush1.bf16.msra.mxu0 %v4844
    %4929 = vmatprep.subr.bf16.mxu0 0
    %4930 = vmatpush1.bf16.msra.mxu0 %v4847
    %4931 = vmatprep.subr.bf16.mxu0 0
    %4932 = vmatpush1.bf16.msra.mxu0 %v4850
    %4933 = vmatprep.subr.bf16.mxu0 0
    %4934 = vmatpush1.bf16.msra.mxu0 %v4853
    %4935 = vmatprep.subr.bf16.mxu0 0
    %4936 = vmatpush1.bf16.msra.mxu0 0
    %4937 = vmatprep.subr.bf16.mxu0 0
    %4938 = vmatpush1.bf16.msra.mxu0 0
    %4939 = vmatprep.subr.bf16.mxu0 0
    %4940 = vmatpush1.bf16.msra.mxu0 0
    %4941 = vmatprep.subr.bf16.mxu0 0
    %4942 = vmatpush1.bf16.msra.mxu0 0
    %4943 = vmatprep.subr.bf16.mxu0 0
    %4944 = vmatpush1.bf16.msra.mxu0 0
    %4945 = vmatprep.subr.bf16.mxu0 0
    %4946 = vmatpush1.bf16.msra.mxu0 0
    %4947 = vmatprep.subr.bf16.mxu0 0
    %4948 = vmatpush1.bf16.msra.mxu0 0
    %4949 = vmatprep.subr.bf16.mxu0 0
    %4950 = vmatpush1.bf16.msra.mxu0 0
    %4951 = vmatprep.mubr.bf16.mxu0 0
    %4952 = vmatmul.mubr.bf16.gmra.mrb[0].mxu0 %v4717
    %v4953 = vpop.f32.mrb[0].mxu0
    %v4954 = vadd.f32 %v939, %v4953
    %v4955 = vpop.f32.mrb[0].mxu0
    %v4956 = vpop.f32.mrb[0].mxu0
    %v4957 = vpop.f32.mrb[0].mxu0
    %4958 = vdwg.mxu0
    %v4959 = vpack.c.bf16 %v4434, %v4434
    %v4960 = vld [vmem:[%s6] sm:$0xff]
    %v4961 = vld [vmem:[%s6 + $0x8] sm:$0xf]
    %v4962 = vld [vmem:[%s6 + $0xc] sm:$0xff]
    %v4963 = vld [vmem:[%s6 + $0x14] sm:$0xf]
    %v4964 = vld [vmem:[%s6 + $0x18] sm:$0xff]
    %v4965 = vld [vmem:[%s6 + $0x20] sm:$0xf]
    %v4966 = vld [vmem:[%s6 + $0x24] sm:$0xff]
    %v4967 = vld [vmem:[%s6 + $0x2c] sm:$0xf]
    %v4968 = vld [vmem:[%s6 + $0x30] sm:$0xff]
    %v4969 = vld [vmem:[%s6 + $0x38] sm:$0xf]
    %v4970 = vld [vmem:[%s6 + $0x3c] sm:$0xff]
    %v4971 = vld [vmem:[%s6 + $0x44] sm:$0xf]
    %v4972 = vld [vmem:[%s6 + $0x48] sm:$0xff]
    %v4973 = vld [vmem:[%s6 + $0x50] sm:$0xf]
    %v4974 = vld [vmem:[%s6 + $0x54] sm:$0xff]
    %v4975 = vld [vmem:[%s6 + $0x5c] sm:$0xf]
    %v4976 = vld [vmem:[%s6 + $0x60] sm:$0xff]
    %v4977 = vld [vmem:[%s6 + $0x68] sm:$0xf]
    %v4978 = vld [vmem:[%s6 + $0x6c] sm:$0xff]
    %v4979 = vld [vmem:[%s6 + $0x74] sm:$0xf]
    %v4980 = vld [vmem:[%s6 + $0x78] sm:$0xff]
    %v4981 = vld [vmem:[%s6 + $0x80] sm:$0xf]
    %v4982 = vld [vmem:[%s6 + $0x84] sm:$0xff]
    %v4983 = vld [vmem:[%s6 + $0x8c] sm:$0xf]
    %v4984 = vld [vmem:[%s6 + $0x90] sm:$0xff]
    %v4985 = vld [vmem:[%s6 + $0x98] sm:$0xf]
    %v4986 = vld [vmem:[%s6 + $0x9c] sm:$0xff]
    %v4987 = vld [vmem:[%s6 + $0xa4] sm:$0xf]
    %v4988 = vld [vmem:[%s6 + $0xa8] sm:$0xff]
    %v4989 = vld [vmem:[%s6 + $0xb0] sm:$0xf]
    %v4990 = vld [vmem:[%s6 + $0xb4] sm:$0xff]
    %v4991 = vld [vmem:[%s6 + $0xbc] sm:$0xf]
    %v5024 = vunpack.c.l.b16 %v4960
    %v5025 = vunpack.c.h.b16 %v4960
    %v5026 = vunpack.c.l.b16 %v4961
    %v5027 = vunpack.c.l.b16 %v4962
    %v5028 = vunpack.c.h.b16 %v4962
    %v5029 = vunpack.c.l.b16 %v4963
    %v5030 = vunpack.c.l.b16 %v4964
    %v5031 = vunpack.c.h.b16 %v4964
    %v5032 = vunpack.c.l.b16 %v4965
    %v5033 = vunpack.c.l.b16 %v4966
    %v5034 = vunpack.c.h.b16 %v4966
    %v5035 = vunpack.c.l.b16 %v4967
    %v5036 = vunpack.c.l.b16 %v4968
    %v5037 = vunpack.c.h.b16 %v4968
    %v5038 = vunpack.c.l.b16 %v4969
    %v5039 = vunpack.c.l.b16 %v4970
    %v5040 = vunpack.c.h.b16 %v4970
    %v5041 = vunpack.c.l.b16 %v4971
    %v5042 = vunpack.c.l.b16 %v4972
    %v5043 = vunpack.c.h.b16 %v4972
    %v5044 = vunpack.c.l.b16 %v4973
    %v5045 = vunpack.c.l.b16 %v4974
    %v5046 = vunpack.c.h.b16 %v4974
    %v5047 = vunpack.c.l.b16 %v4975
    %v5048 = vunpack.c.l.b16 %v4976
    %v5049 = vunpack.c.h.b16 %v4976
    %v5050 = vunpack.c.l.b16 %v4977
    %v5051 = vunpack.c.l.b16 %v4978
    %v5052 = vunpack.c.h.b16 %v4978
    %v5053 = vunpack.c.l.b16 %v4979
    %v5054 = vunpack.c.l.b16 %v4980
    %v5055 = vunpack.c.h.b16 %v4980
    %v5056 = vunpack.c.l.b16 %v4981
    %v5057 = vunpack.c.l.b16 %v4982
    %v5058 = vunpack.c.h.b16 %v4982
    %v5059 = vunpack.c.l.b16 %v4983
    %v5060 = vunpack.c.l.b16 %v4984
    %v5061 = vunpack.c.h.b16 %v4984
    %v5062 = vunpack.c.l.b16 %v4985
    %v5063 = vunpack.c.l.b16 %v4986
    %v5064 = vunpack.c.h.b16 %v4986
    %v5065 = vunpack.c.l.b16 %v4987
    %v5066 = vunpack.c.l.b16 %v4988
    %v5067 = vunpack.c.h.b16 %v4988
    %v5068 = vunpack.c.l.b16 %v4989
    %v5069 = vunpack.c.l.b16 %v4990
    %v5070 = vunpack.c.h.b16 %v4990
    %v5071 = vunpack.c.l.b16 %v4991
    %v5072 = vpack.c.b16 %v5027, %v5024
    %v5073 = vpack.c.b16 %v5028, %v5025
    %v5074 = vpack.c.b16 %v5029, %v5026
    %v5075 = vpack.c.b16 %v5033, %v5030
    %v5076 = vpack.c.b16 %v5034, %v5031
    %v5077 = vpack.c.b16 %v5035, %v5032
    %v5078 = vpack.c.b16 %v5039, %v5036
    %v5079 = vpack.c.b16 %v5040, %v5037
    %v5080 = vpack.c.b16 %v5041, %v5038
    %v5081 = vpack.c.b16 %v5045, %v5042
    %v5082 = vpack.c.b16 %v5046, %v5043
    %v5083 = vpack.c.b16 %v5047, %v5044
    %v5084 = vpack.c.b16 %v5051, %v5048
    %v5085 = vpack.c.b16 %v5052, %v5049
    %v5086 = vpack.c.b16 %v5053, %v5050
    %v5087 = vpack.c.b16 %v5057, %v5054
    %v5088 = vpack.c.b16 %v5058, %v5055
    %v5089 = vpack.c.b16 %v5059, %v5056
    %v5090 = vpack.c.b16 %v5063, %v5060
    %v5091 = vpack.c.b16 %v5064, %v5061
    %v5092 = vpack.c.b16 %v5065, %v5062
    %v5093 = vpack.c.b16 %v5069, %v5066
    %v5094 = vpack.c.b16 %v5070, %v5067
    %v5095 = vpack.c.b16 %v5071, %v5068
    %5120 = vmatprep.subr.bf16.mxu0 %v5073
    %5121 = vmatpush1.bf16.msra.mxu0 %v5072
    %5122 = vmatprep.subr.bf16.mxu0 %v5076
    %5123 = vmatpush1.bf16.msra.mxu0 %v5075
    %5124 = vmatprep.subr.bf16.mxu0 %v5079
    %5125 = vmatpush1.bf16.msra.mxu0 %v5078
    %5126 = vmatprep.subr.bf16.mxu0 %v5082
    %5127 = vmatpush1.bf16.msra.mxu0 %v5081
    %5128 = vmatprep.subr.bf16.mxu0 %v5085
    %5129 = vmatpush1.bf16.msra.mxu0 %v5084
    %5130 = vmatprep.subr.bf16.mxu0 %v5088
    %5131 = vmatpush1.bf16.msra.mxu0 %v5087
    %5132 = vmatprep.subr.bf16.mxu0 %v5091
    %5133 = vmatpush1.bf16.msra.mxu0 %v5090
    %5134 = vmatprep.subr.bf16.mxu0 %v5094
    %5135 = vmatpush1.bf16.msra.mxu0 %v5093
    %5136 = vmatprep.subr.bf16.mxu0 0
    %5137 = vmatpush1.bf16.msra.mxu0 0
    %5138 = vmatprep.subr.bf16.mxu0 0
    %5139 = vmatpush1.bf16.msra.mxu0 0
    %5140 = vmatprep.subr.bf16.mxu0 0
    %5141 = vmatpush1.bf16.msra.mxu0 0
    %5142 = vmatprep.subr.bf16.mxu0 0
    %5143 = vmatpush1.bf16.msra.mxu0 0
    %5144 = vmatprep.subr.bf16.mxu0 0
    %5145 = vmatpush1.bf16.msra.mxu0 0
    %5146 = vmatprep.subr.bf16.mxu0 0
    %5147 = vmatpush1.bf16.msra.mxu0 0
    %5148 = vmatprep.subr.bf16.mxu0 0
    %5149 = vmatpush1.bf16.msra.mxu0 0
    %5150 = vmatprep.subr.bf16.mxu0 0
    %5151 = vmatpush1.bf16.msra.mxu0 0
    %5152 = vmatprep.mubr.bf16.mxu0 0
    %5153 = vmatmul.mubr.bf16.gmra.mrb[0].mxu0 %v4959
    %v5154 = vpop.f32.mrb[0].mxu0
    %v5155 = vadd.f32 0.0, %v5154
    %v5156 = vpop.f32.mrb[0].mxu0
    %v5157 = vadd.f32 0.0, %v5156
    %v5158 = vpop.f32.mrb[0].mxu0
    %v5159 = vpop.f32.mrb[0].mxu0
    %5160 = vdwg.mxu0
    %5161 = vmatprep.subr.bf16.mxu0 0
    %5162 = vmatpush1.bf16.msra.mxu0 %v5074
    %5163 = vmatprep.subr.bf16.mxu0 0
    %5164 = vmatpush1.bf16.msra.mxu0 %v5077
    %5165 = vmatprep.subr.bf16.mxu0 0
    %5166 = vmatpush1.bf16.msra.mxu0 %v5080
    %5167 = vmatprep.subr.bf16.mxu0 0
    %5168 = vmatpush1.bf16.msra.mxu0 %v5083
    %5169 = vmatprep.subr.bf16.mxu0 0
    %5170 = vmatpush1.bf16.msra.mxu0 %v5086
    %5171 = vmatprep.subr.bf16.mxu0 0
    %5172 = vmatpush1.bf16.msra.mxu0 %v5089
    %5173 = vmatprep.subr.bf16.mxu0 0
    %5174 = vmatpush1.bf16.msra.mxu0 %v5092
    %5175 = vmatprep.subr.bf16.mxu0 0
    %5176 = vmatpush1.bf16.msra.mxu0 %v5095
    %5177 = vmatprep.subr.bf16.mxu0 0
    %5178 = vmatpush1.bf16.msra.mxu0 0
    %5179 = vmatprep.subr.bf16.mxu0 0
    %5180 = vmatpush1.bf16.msra.mxu0 0
    %5181 = vmatprep.subr.bf16.mxu0 0
    %5182 = vmatpush1.bf16.msra.mxu0 0
    %5183 = vmatprep.subr.bf16.mxu0 0
    %5184 = vmatpush1.bf16.msra.mxu0 0
    %5185 = vmatprep.subr.bf16.mxu0 0
    %5186 = vmatpush1.bf16.msra.mxu0 0
    %5187 = vmatprep.subr.bf16.mxu0 0
    %5188 = vmatpush1.bf16.msra.mxu0 0
    %5189 = vmatprep.subr.bf16.mxu0 0
    %5190 = vmatpush1.bf16.msra.mxu0 0
    %5191 = vmatprep.subr.bf16.mxu0 0
    %5192 = vmatpush1.bf16.msra.mxu0 0
    %5193 = vmatprep.mubr.bf16.mxu0 0
    %5194 = vmatmul.mubr.bf16.gmra.mrb[0].mxu0 %v4959
    %v5195 = vpop.f32.mrb[0].mxu0
    %v5196 = vadd.f32 0.0, %v5195
    %v5197 = vpop.f32.mrb[0].mxu0
    %v5198 = vpop.f32.mrb[0].mxu0
    %v5199 = vpop.f32.mrb[0].mxu0
    %5200 = vdwg.mxu0
    %v5201 = vadd.f32 %v4913, %v5155
    %v5202 = vadd.f32 %v4915, %v5157
    %v5203 = vxor.u32 %v5201, 2147483648
    %v5204 = vxor.u32 %v5202, 2147483648
    %v5205 = vmul.f32 %v5203, 1.442695
    %v5206 = vpow.pop %v5205
    %v5207 = vmul.f32 %v5204, 1.442695
    %v5208 = vpow.pop %v5207
    %v5209 = vadd.f32 %v5206, 1.0
    %v5210 = vadd.f32 %v5208, 1.0
    %v5211 = vrcp.pop %v5209
    %v5212 = vmul.f32 1.0, %v5211
    %v5213 = vrcp.pop %v5210
    %v5214 = vmul.f32 1.0, %v5213
    %v5215 = vadd.f32 %v5196, %v482
    %v5216 = vmul.f32 %v5212, %v5215
    %v5217 = vadd.f32 %v4954, %v5216
    %v5218 = vtanh.pop %v5217
    %v5219 = vsub.f32 %v4434, %v5218
    %v5220 = vmul.f32 %v5214, %v5219
    %v5221 = vadd.f32 %v5218, %v5220
    %5222 = vst [vmem:[#allocation3 + $0x5] sm:$0x1] %v5221
    %v5223 = vld [vmem:[%s4] sm:$0xff]
    %v5224 = vld [vmem:[%s4 + $0x8] sm:$0xf]
    %v5225 = vld [vmem:[%s4 + $0xc] sm:$0xff]
    %v5226 = vld [vmem:[%s4 + $0x14] sm:$0xf]
    %v5227 = vld [vmem:[%s4 + $0x18] sm:$0xff]
    %v5228 = vld [vmem:[%s4 + $0x20] sm:$0xf]
    %v5229 = vld [vmem:[%s4 + $0x24] sm:$0xff]
    %v5230 = vld [vmem:[%s4 + $0x2c] sm:$0xf]
    %v5231 = vld [vmem:[%s4 + $0x30] sm:$0xff]
    %v5232 = vld [vmem:[%s4 + $0x38] sm:$0xf]
    %v5233 = vld [vmem:[%s4 + $0x3c] sm:$0xff]
    %v5234 = vld [vmem:[%s4 + $0x44] sm:$0xf]
    %v5235 = vld [vmem:[%s4 + $0x48] sm:$0xff]
    %v5236 = vld [vmem:[%s4 + $0x50] sm:$0xf]
    %v5237 = vld [vmem:[%s4 + $0x54] sm:$0xff]
    %v5238 = vld [vmem:[%s4 + $0x5c] sm:$0xf]
    %v5239 = vld [vmem:[%s4 + $0x60] sm:$0xff]
    %v5240 = vld [vmem:[%s4 + $0x68] sm:$0xf]
    %v5241 = vld [vmem:[%s4 + $0x6c] sm:$0xff]
    %v5242 = vld [vmem:[%s4 + $0x74] sm:$0xf]
    %v5243 = vld [vmem:[%s4 + $0x78] sm:$0xff]
    %v5244 = vld [vmem:[%s4 + $0x80] sm:$0xf]
    %v5245 = vld [vmem:[%s4 + $0x84] sm:$0xff]
    %v5246 = vld [vmem:[%s4 + $0x8c] sm:$0xf]
    %v5247 = vld [vmem:[%s4 + $0x90] sm:$0xff]
    %v5248 = vld [vmem:[%s4 + $0x98] sm:$0xf]
    %v5249 = vld [vmem:[%s4 + $0x9c] sm:$0xff]
    %v5250 = vld [vmem:[%s4 + $0xa4] sm:$0xf]
    %v5251 = vld [vmem:[%s4 + $0xa8] sm:$0xff]
    %v5252 = vld [vmem:[%s4 + $0xb0] sm:$0xf]
    %v5253 = vld [vmem:[%s4 + $0xb4] sm:$0xff]
    %v5254 = vld [vmem:[%s4 + $0xbc] sm:$0xf]
    %v5287 = vunpack.c.l.b16 %v5223
    %v5288 = vunpack.c.h.b16 %v5223
    %v5289 = vunpack.c.l.b16 %v5224
    %v5290 = vunpack.c.l.b16 %v5225
    %v5291 = vunpack.c.h.b16 %v5225
    %v5292 = vunpack.c.l.b16 %v5226
    %v5293 = vunpack.c.l.b16 %v5227
    %v5294 = vunpack.c.h.b16 %v5227
    %v5295 = vunpack.c.l.b16 %v5228
    %v5296 = vunpack.c.l.b16 %v5229
    %v5297 = vunpack.c.h.b16 %v5229
    %v5298 = vunpack.c.l.b16 %v5230
    %v5299 = vunpack.c.l.b16 %v5231
    %v5300 = vunpack.c.h.b16 %v5231
    %v5301 = vunpack.c.l.b16 %v5232
    %v5302 = vunpack.c.l.b16 %v5233
    %v5303 = vunpack.c.h.b16 %v5233
    %v5304 = vunpack.c.l.b16 %v5234
    %v5305 = vunpack.c.l.b16 %v5235
    %v5306 = vunpack.c.h.b16 %v5235
    %v5307 = vunpack.c.l.b16 %v5236
    %v5308 = vunpack.c.l.b16 %v5237
    %v5309 = vunpack.c.h.b16 %v5237
    %v5310 = vunpack.c.l.b16 %v5238
    %v5311 = vunpack.c.l.b16 %v5239
    %v5312 = vunpack.c.h.b16 %v5239
    %v5313 = vunpack.c.l.b16 %v5240
    %v5314 = vunpack.c.l.b16 %v5241
    %v5315 = vunpack.c.h.b16 %v5241
    %v5316 = vunpack.c.l.b16 %v5242
    %v5317 = vunpack.c.l.b16 %v5243
    %v5318 = vunpack.c.h.b16 %v5243
    %v5319 = vunpack.c.l.b16 %v5244
    %v5320 = vunpack.c.l.b16 %v5245
    %v5321 = vunpack.c.h.b16 %v5245
    %v5322 = vunpack.c.l.b16 %v5246
    %v5323 = vunpack.c.l.b16 %v5247
    %v5324 = vunpack.c.h.b16 %v5247
    %v5325 = vunpack.c.l.b16 %v5248
    %v5326 = vunpack.c.l.b16 %v5249
    %v5327 = vunpack.c.h.b16 %v5249
    %v5328 = vunpack.c.l.b16 %v5250
    %v5329 = vunpack.c.l.b16 %v5251
    %v5330 = vunpack.c.h.b16 %v5251
    %v5331 = vunpack.c.l.b16 %v5252
    %v5332 = vunpack.c.l.b16 %v5253
    %v5333 = vunpack.c.h.b16 %v5253
    %v5334 = vunpack.c.l.b16 %v5254
    %v5335 = vpack.c.b16 %v5290, %v5287
    %v5336 = vpack.c.b16 %v5291, %v5288
    %v5337 = vpack.c.b16 %v5292, %v5289
    %v5338 = vpack.c.b16 %v5296, %v5293
    %v5339 = vpack.c.b16 %v5297, %v5294
    %v5340 = vpack.c.b16 %v5298, %v5295
    %v5341 = vpack.c.b16 %v5302, %v5299
    %v5342 = vpack.c.b16 %v5303, %v5300
    %v5343 = vpack.c.b16 %v5304, %v5301
    %v5344 = vpack.c.b16 %v5308, %v5305
    %v5345 = vpack.c.b16 %v5309, %v5306
    %v5346 = vpack.c.b16 %v5310, %v5307
    %v5347 = vpack.c.b16 %v5314, %v5311
    %v5348 = vpack.c.b16 %v5315, %v5312
    %v5349 = vpack.c.b16 %v5316, %v5313
    %v5350 = vpack.c.b16 %v5320, %v5317
    %v5351 = vpack.c.b16 %v5321, %v5318
    %v5352 = vpack.c.b16 %v5322, %v5319
    %v5353 = vpack.c.b16 %v5326, %v5323
    %v5354 = vpack.c.b16 %v5327, %v5324
    %v5355 = vpack.c.b16 %v5328, %v5325
    %v5356 = vpack.c.b16 %v5332, %v5329
    %v5357 = vpack.c.b16 %v5333, %v5330
    %v5358 = vpack.c.b16 %v5334, %v5331
    %5383 = vmatprep.subr.bf16.mxu0 %v5336
    %5384 = vmatpush1.bf16.msra.mxu0 %v5335
    %5385 = vmatprep.subr.bf16.mxu0 %v5339
    %5386 = vmatpush1.bf16.msra.mxu0 %v5338
    %5387 = vmatprep.subr.bf16.mxu0 %v5342
    %5388 = vmatpush1.bf16.msra.mxu0 %v5341
    %5389 = vmatprep.subr.bf16.mxu0 %v5345
    %5390 = vmatpush1.bf16.msra.mxu0 %v5344
    %5391 = vmatprep.subr.bf16.mxu0 %v5348
    %5392 = vmatpush1.bf16.msra.mxu0 %v5347
    %5393 = vmatprep.subr.bf16.mxu0 %v5351
    %5394 = vmatpush1.bf16.msra.mxu0 %v5350
    %5395 = vmatprep.subr.bf16.mxu0 %v5354
    %5396 = vmatpush1.bf16.msra.mxu0 %v5353
    %5397 = vmatprep.subr.bf16.mxu0 %v5357
    %5398 = vmatpush1.bf16.msra.mxu0 %v5356
    %5399 = vmatprep.subr.bf16.mxu0 0
    %5400 = vmatpush1.bf16.msra.mxu0 0
    %5401 = vmatprep.subr.bf16.mxu0 0
    %5402 = vmatpush1.bf16.msra.mxu0 0
    %5403 = vmatprep.subr.bf16.mxu0 0
    %5404 = vmatpush1.bf16.msra.mxu0 0
    %5405 = vmatprep.subr.bf16.mxu0 0
    %5406 = vmatpush1.bf16.msra.mxu0 0
    %5407 = vmatprep.subr.bf16.mxu0 0
    %5408 = vmatpush1.bf16.msra.mxu0 0
    %5409 = vmatprep.subr.bf16.mxu0 0
    %5410 = vmatpush1.bf16.msra.mxu0 0
    %5411 = vmatprep.subr.bf16.mxu0 0
    %5412 = vmatpush1.bf16.msra.mxu0 0
    %5413 = vmatprep.subr.bf16.mxu0 0
    %5414 = vmatpush1.bf16.msra.mxu0 0
    %5415 = vmatprep.mubr.bf16.mxu0 0
    %5416 = vmatmul.mubr.bf16.gmra.mrb[0].mxu0 %v4717
    %v5417 = vpop.f32.mrb[0].mxu0
    %v5418 = vadd.f32 0.0, %v5417
    %v5419 = vpop.f32.mrb[0].mxu0
    %v5420 = vadd.f32 0.0, %v5419
    %v5421 = vpop.f32.mrb[0].mxu0
    %v5422 = vpop.f32.mrb[0].mxu0
    %5423 = vdwg.mxu0
    %5424 = vmatprep.subr.bf16.mxu0 0
    %5425 = vmatpush1.bf16.msra.mxu0 %v5337
    %5426 = vmatprep.subr.bf16.mxu0 0
    %5427 = vmatpush1.bf16.msra.mxu0 %v5340
    %5428 = vmatprep.subr.bf16.mxu0 0
    %5429 = vmatpush1.bf16.msra.mxu0 %v5343
    %5430 = vmatprep.subr.bf16.mxu0 0
    %5431 = vmatpush1.bf16.msra.mxu0 %v5346
    %5432 = vmatprep.subr.bf16.mxu0 0
    %5433 = vmatpush1.bf16.msra.mxu0 %v5349
    %5434 = vmatprep.subr.bf16.mxu0 0
    %5435 = vmatpush1.bf16.msra.mxu0 %v5352
    %5436 = vmatprep.subr.bf16.mxu0 0
    %5437 = vmatpush1.bf16.msra.mxu0 %v5355
    %5438 = vmatprep.subr.bf16.mxu0 0
    %5439 = vmatpush1.bf16.msra.mxu0 %v5358
    %5440 = vmatprep.subr.bf16.mxu0 0
    %5441 = vmatpush1.bf16.msra.mxu0 0
    %5442 = vmatprep.subr.bf16.mxu0 0
    %5443 = vmatpush1.bf16.msra.mxu0 0
    %5444 = vmatprep.subr.bf16.mxu0 0
    %5445 = vmatpush1.bf16.msra.mxu0 0
    %5446 = vmatprep.subr.bf16.mxu0 0
    %5447 = vmatpush1.bf16.msra.mxu0 0
    %5448 = vmatprep.subr.bf16.mxu0 0
    %5449 = vmatpush1.bf16.msra.mxu0 0
    %5450 = vmatprep.subr.bf16.mxu0 0
    %5451 = vmatpush1.bf16.msra.mxu0 0
    %5452 = vmatprep.subr.bf16.mxu0 0
    %5453 = vmatpush1.bf16.msra.mxu0 0
    %5454 = vmatprep.subr.bf16.mxu0 0
    %5455 = vmatpush1.bf16.msra.mxu0 0
    %5456 = vmatprep.mubr.bf16.mxu0 0
    %5457 = vmatmul.mubr.bf16.gmra.mrb[0].mxu0 %v4717
    %v5458 = vpop.f32.mrb[0].mxu0
    %v5459 = vadd.f32 0.0, %v5458
    %v5460 = vpop.f32.mrb[0].mxu0
    %v5461 = vpop.f32.mrb[0].mxu0
    %v5462 = vpop.f32.mrb[0].mxu0
    %5463 = vdwg.mxu0
    %s5464 = scalar_lea.vmem [#allocation2], 6
    %v5465 = vld [vmem:[%s5464] ss:$8 sm:$0x7]
    %v5468 = vcombine.low %v5418, %v5420
    %v5470 = vunpack.c.l.s4 1966171168
    %v5471 = vunpack.c.0.s8 %v5470
    %v5472 = vlaneseq
    %v5473 = vshrl.u32 %v5472, 7
    %v5474 = vsub.s32 %v5471, %v5473
    %v5475 = vrot.slane %v5468, %v5474
    %v5477 = vunpack.c.l.s4 1966171168
    %v5478 = vunpack.c.0.s8 %v5477
    %v5479 = vlaneseq
    %v5480 = vshrl.u32 %v5479, 7
    %v5481 = vsub.s32 %v5478, %v5480
    %v5482 = vrot.slane %v5475, %v5481
    %v5484 = vadd.f32 %v5465, %v5482
    %v5485 = vxor.u32 %v5484, 2147483648
    %v5486 = vmul.f32 %v5485, 1.442695
    %v5487 = vpow.pop %v5486
    %v5488 = vadd.f32 %v5487, 1.0
    %v5489 = vrcp.pop %v5488
    %v5490 = vmul.f32 1.0, %v5489
    %v5491 = vadd.f32 %v5459, %v480
    %v5492 = vmul.f32 %v5490, %v5491
    %v5494 = vrot.slane %v5465, 2
    %v5496 = vadd.f32 %v5494, %v5492
    %v5497 = vtanh.pop %v5496
    %v5498 = vsub.f32 %v4716, %v5497
    %v5500 = vrot.slane %v5490, 1
    %v5502 = vmul.f32 %v5500, %v5498
    %v5503 = vadd.f32 %v5497, %v5502
    %v5504 = vpack.c.bf16 %v5503, %v5503
    %v5505 = vld [vmem:[%s5] sm:$0xff]
    %v5506 = vld [vmem:[%s5 + $0x8] sm:$0xf]
    %v5507 = vld [vmem:[%s5 + $0xc] sm:$0xff]
    %v5508 = vld [vmem:[%s5 + $0x14] sm:$0xf]
    %v5509 = vld [vmem:[%s5 + $0x18] sm:$0xff]
    %v5510 = vld [vmem:[%s5 + $0x20] sm:$0xf]
    %v5511 = vld [vmem:[%s5 + $0x24] sm:$0xff]
    %v5512 = vld [vmem:[%s5 + $0x2c] sm:$0xf]
    %v5513 = vld [vmem:[%s5 + $0x30] sm:$0xff]
    %v5514 = vld [vmem:[%s5 + $0x38] sm:$0xf]
    %v5515 = vld [vmem:[%s5 + $0x3c] sm:$0xff]
    %v5516 = vld [vmem:[%s5 + $0x44] sm:$0xf]
    %v5517 = vld [vmem:[%s5 + $0x48] sm:$0xff]
    %v5518 = vld [vmem:[%s5 + $0x50] sm:$0xf]
    %v5519 = vld [vmem:[%s5 + $0x54] sm:$0xff]
    %v5520 = vld [vmem:[%s5 + $0x5c] sm:$0xf]
    %v5521 = vld [vmem:[%s5 + $0x60] sm:$0xff]
    %v5522 = vld [vmem:[%s5 + $0x68] sm:$0xf]
    %v5523 = vld [vmem:[%s5 + $0x6c] sm:$0xff]
    %v5524 = vld [vmem:[%s5 + $0x74] sm:$0xf]
    %v5525 = vld [vmem:[%s5 + $0x78] sm:$0xff]
    %v5526 = vld [vmem:[%s5 + $0x80] sm:$0xf]
    %v5527 = vld [vmem:[%s5 + $0x84] sm:$0xff]
    %v5528 = vld [vmem:[%s5 + $0x8c] sm:$0xf]
    %v5529 = vld [vmem:[%s5 + $0x90] sm:$0xff]
    %v5530 = vld [vmem:[%s5 + $0x98] sm:$0xf]
    %v5531 = vld [vmem:[%s5 + $0x9c] sm:$0xff]
    %v5532 = vld [vmem:[%s5 + $0xa4] sm:$0xf]
    %v5533 = vld [vmem:[%s5 + $0xa8] sm:$0xff]
    %v5534 = vld [vmem:[%s5 + $0xb0] sm:$0xf]
    %v5535 = vld [vmem:[%s5 + $0xb4] sm:$0xff]
    %v5536 = vld [vmem:[%s5 + $0xbc] sm:$0xf]
    %v5569 = vunpack.c.l.b16 %v5505
    %v5570 = vunpack.c.h.b16 %v5505
    %v5571 = vunpack.c.l.b16 %v5506
    %v5572 = vunpack.c.l.b16 %v5507
    %v5573 = vunpack.c.h.b16 %v5507
    %v5574 = vunpack.c.l.b16 %v5508
    %v5575 = vunpack.c.l.b16 %v5509
    %v5576 = vunpack.c.h.b16 %v5509
    %v5577 = vunpack.c.l.b16 %v5510
    %v5578 = vunpack.c.l.b16 %v5511
    %v5579 = vunpack.c.h.b16 %v5511
    %v5580 = vunpack.c.l.b16 %v5512
    %v5581 = vunpack.c.l.b16 %v5513
    %v5582 = vunpack.c.h.b16 %v5513
    %v5583 = vunpack.c.l.b16 %v5514
    %v5584 = vunpack.c.l.b16 %v5515
    %v5585 = vunpack.c.h.b16 %v5515
    %v5586 = vunpack.c.l.b16 %v5516
    %v5587 = vunpack.c.l.b16 %v5517
    %v5588 = vunpack.c.h.b16 %v5517
    %v5589 = vunpack.c.l.b16 %v5518
    %v5590 = vunpack.c.l.b16 %v5519
    %v5591 = vunpack.c.h.b16 %v5519
    %v5592 = vunpack.c.l.b16 %v5520
    %v5593 = vunpack.c.l.b16 %v5521
    %v5594 = vunpack.c.h.b16 %v5521
    %v5595 = vunpack.c.l.b16 %v5522
    %v5596 = vunpack.c.l.b16 %v5523
    %v5597 = vunpack.c.h.b16 %v5523
    %v5598 = vunpack.c.l.b16 %v5524
    %v5599 = vunpack.c.l.b16 %v5525
    %v5600 = vunpack.c.h.b16 %v5525
    %v5601 = vunpack.c.l.b16 %v5526
    %v5602 = vunpack.c.l.b16 %v5527
    %v5603 = vunpack.c.h.b16 %v5527
    %v5604 = vunpack.c.l.b16 %v5528
    %v5605 = vunpack.c.l.b16 %v5529
    %v5606 = vunpack.c.h.b16 %v5529
    %v5607 = vunpack.c.l.b16 %v5530
    %v5608 = vunpack.c.l.b16 %v5531
    %v5609 = vunpack.c.h.b16 %v5531
    %v5610 = vunpack.c.l.b16 %v5532
    %v5611 = vunpack.c.l.b16 %v5533
    %v5612 = vunpack.c.h.b16 %v5533
    %v5613 = vunpack.c.l.b16 %v5534
    %v5614 = vunpack.c.l.b16 %v5535
    %v5615 = vunpack.c.h.b16 %v5535
    %v5616 = vunpack.c.l.b16 %v5536
    %v5617 = vpack.c.b16 %v5572, %v5569
    %v5618 = vpack.c.b16 %v5573, %v5570
    %v5619 = vpack.c.b16 %v5574, %v5571
    %v5620 = vpack.c.b16 %v5578, %v5575
    %v5621 = vpack.c.b16 %v5579, %v5576
    %v5622 = vpack.c.b16 %v5580, %v5577
    %v5623 = vpack.c.b16 %v5584, %v5581
    %v5624 = vpack.c.b16 %v5585, %v5582
    %v5625 = vpack.c.b16 %v5586, %v5583
    %v5626 = vpack.c.b16 %v5590, %v5587
    %v5627 = vpack.c.b16 %v5591, %v5588
    %v5628 = vpack.c.b16 %v5592, %v5589
    %v5629 = vpack.c.b16 %v5596, %v5593
    %v5630 = vpack.c.b16 %v5597, %v5594
    %v5631 = vpack.c.b16 %v5598, %v5595
    %v5632 = vpack.c.b16 %v5602, %v5599
    %v5633 = vpack.c.b16 %v5603, %v5600
    %v5634 = vpack.c.b16 %v5604, %v5601
    %v5635 = vpack.c.b16 %v5608, %v5605
    %v5636 = vpack.c.b16 %v5609, %v5606
    %v5637 = vpack.c.b16 %v5610, %v5607
    %v5638 = vpack.c.b16 %v5614, %v5611
    %v5639 = vpack.c.b16 %v5615, %v5612
    %v5640 = vpack.c.b16 %v5616, %v5613
    %5665 = vmatprep.subr.bf16.mxu0 %v5618
    %5666 = vmatpush1.bf16.msra.mxu0 %v5617
    %5667 = vmatprep.subr.bf16.mxu0 %v5621
    %5668 = vmatpush1.bf16.msra.mxu0 %v5620
    %5669 = vmatprep.subr.bf16.mxu0 %v5624
    %5670 = vmatpush1.bf16.msra.mxu0 %v5623
    %5671 = vmatprep.subr.bf16.mxu0 %v5627
    %5672 = vmatpush1.bf16.msra.mxu0 %v5626
    %5673 = vmatprep.subr.bf16.mxu0 %v5630
    %5674 = vmatpush1.bf16.msra.mxu0 %v5629
    %5675 = vmatprep.subr.bf16.mxu0 %v5633
    %5676 = vmatpush1.bf16.msra.mxu0 %v5632
    %5677 = vmatprep.subr.bf16.mxu0 %v5636
    %5678 = vmatpush1.bf16.msra.mxu0 %v5635
    %5679 = vmatprep.subr.bf16.mxu0 %v5639
    %5680 = vmatpush1.bf16.msra.mxu0 %v5638
    %5681 = vmatprep.subr.bf16.mxu0 0
    %5682 = vmatpush1.bf16.msra.mxu0 0
    %5683 = vmatprep.subr.bf16.mxu0 0
    %5684 = vmatpush1.bf16.msra.mxu0 0
    %5685 = vmatprep.subr.bf16.mxu0 0
    %5686 = vmatpush1.bf16.msra.mxu0 0
    %5687 = vmatprep.subr.bf16.mxu0 0
    %5688 = vmatpush1.bf16.msra.mxu0 0
    %5689 = vmatprep.subr.bf16.mxu0 0
    %5690 = vmatpush1.bf16.msra.mxu0 0
    %5691 = vmatprep.subr.bf16.mxu0 0
    %5692 = vmatpush1.bf16.msra.mxu0 0
    %5693 = vmatprep.subr.bf16.mxu0 0
    %5694 = vmatpush1.bf16.msra.mxu0 0
    %5695 = vmatprep.subr.bf16.mxu0 0
    %5696 = vmatpush1.bf16.msra.mxu0 0
    %5697 = vmatprep.mubr.bf16.mxu0 0
    %5698 = vmatmul.mubr.bf16.gmra.mrb[0].mxu0 %v5504
    %v5699 = vpop.f32.mrb[0].mxu0
    %v5700 = vadd.f32 %v931, %v5699
    %v5701 = vpop.f32.mrb[0].mxu0
    %v5702 = vadd.f32 %v935, %v5701
    %v5703 = vpop.f32.mrb[0].mxu0
    %v5704 = vpop.f32.mrb[0].mxu0
    %5705 = vdwg.mxu0
    %5706 = vmatprep.subr.bf16.mxu0 0
    %5707 = vmatpush1.bf16.msra.mxu0 %v5619
    %5708 = vmatprep.subr.bf16.mxu0 0
    %5709 = vmatpush1.bf16.msra.mxu0 %v5622
    %5710 = vmatprep.subr.bf16.mxu0 0
    %5711 = vmatpush1.bf16.msra.mxu0 %v5625
    %5712 = vmatprep.subr.bf16.mxu0 0
    %5713 = vmatpush1.bf16.msra.mxu0 %v5628
    %5714 = vmatprep.subr.bf16.mxu0 0
    %5715 = vmatpush1.bf16.msra.mxu0 %v5631
    %5716 = vmatprep.subr.bf16.mxu0 0
    %5717 = vmatpush1.bf16.msra.mxu0 %v5634
    %5718 = vmatprep.subr.bf16.mxu0 0
    %5719 = vmatpush1.bf16.msra.mxu0 %v5637
    %5720 = vmatprep.subr.bf16.mxu0 0
    %5721 = vmatpush1.bf16.msra.mxu0 %v5640
    %5722 = vmatprep.subr.bf16.mxu0 0
    %5723 = vmatpush1.bf16.msra.mxu0 0
    %5724 = vmatprep.subr.bf16.mxu0 0
    %5725 = vmatpush1.bf16.msra.mxu0 0
    %5726 = vmatprep.subr.bf16.mxu0 0
    %5727 = vmatpush1.bf16.msra.mxu0 0
    %5728 = vmatprep.subr.bf16.mxu0 0
    %5729 = vmatpush1.bf16.msra.mxu0 0
    %5730 = vmatprep.subr.bf16.mxu0 0
    %5731 = vmatpush1.bf16.msra.mxu0 0
    %5732 = vmatprep.subr.bf16.mxu0 0
    %5733 = vmatpush1.bf16.msra.mxu0 0
    %5734 = vmatprep.subr.bf16.mxu0 0
    %5735 = vmatpush1.bf16.msra.mxu0 0
    %5736 = vmatprep.subr.bf16.mxu0 0
    %5737 = vmatpush1.bf16.msra.mxu0 0
    %5738 = vmatprep.mubr.bf16.mxu0 0
    %5739 = vmatmul.mubr.bf16.gmra.mrb[0].mxu0 %v5504
    %v5740 = vpop.f32.mrb[0].mxu0
    %v5741 = vadd.f32 %v939, %v5740
    %v5742 = vpop.f32.mrb[0].mxu0
    %v5743 = vpop.f32.mrb[0].mxu0
    %v5744 = vpop.f32.mrb[0].mxu0
    %5745 = vdwg.mxu0
    %v5746 = vpack.c.bf16 %v5221, %v5221
    %v5747 = vld [vmem:[%s6] sm:$0xff]
    %v5748 = vld [vmem:[%s6 + $0x8] sm:$0xf]
    %v5749 = vld [vmem:[%s6 + $0xc] sm:$0xff]
    %v5750 = vld [vmem:[%s6 + $0x14] sm:$0xf]
    %v5751 = vld [vmem:[%s6 + $0x18] sm:$0xff]
    %v5752 = vld [vmem:[%s6 + $0x20] sm:$0xf]
    %v5753 = vld [vmem:[%s6 + $0x24] sm:$0xff]
    %v5754 = vld [vmem:[%s6 + $0x2c] sm:$0xf]
    %v5755 = vld [vmem:[%s6 + $0x30] sm:$0xff]
    %v5756 = vld [vmem:[%s6 + $0x38] sm:$0xf]
    %v5757 = vld [vmem:[%s6 + $0x3c] sm:$0xff]
    %v5758 = vld [vmem:[%s6 + $0x44] sm:$0xf]
    %v5759 = vld [vmem:[%s6 + $0x48] sm:$0xff]
    %v5760 = vld [vmem:[%s6 + $0x50] sm:$0xf]
    %v5761 = vld [vmem:[%s6 + $0x54] sm:$0xff]
    %v5762 = vld [vmem:[%s6 + $0x5c] sm:$0xf]
    %v5763 = vld [vmem:[%s6 + $0x60] sm:$0xff]
    %v5764 = vld [vmem:[%s6 + $0x68] sm:$0xf]
    %v5765 = vld [vmem:[%s6 + $0x6c] sm:$0xff]
    %v5766 = vld [vmem:[%s6 + $0x74] sm:$0xf]
    %v5767 = vld [vmem:[%s6 + $0x78] sm:$0xff]
    %v5768 = vld [vmem:[%s6 + $0x80] sm:$0xf]
    %v5769 = vld [vmem:[%s6 + $0x84] sm:$0xff]
    %v5770 = vld [vmem:[%s6 + $0x8c] sm:$0xf]
    %v5771 = vld [vmem:[%s6 + $0x90] sm:$0xff]
    %v5772 = vld [vmem:[%s6 + $0x98] sm:$0xf]
    %v5773 = vld [vmem:[%s6 + $0x9c] sm:$0xff]
    %v5774 = vld [vmem:[%s6 + $0xa4] sm:$0xf]
    %v5775 = vld [vmem:[%s6 + $0xa8] sm:$0xff]
    %v5776 = vld [vmem:[%s6 + $0xb0] sm:$0xf]
    %v5777 = vld [vmem:[%s6 + $0xb4] sm:$0xff]
    %v5778 = vld [vmem:[%s6 + $0xbc] sm:$0xf]
    %v5811 = vunpack.c.l.b16 %v5747
    %v5812 = vunpack.c.h.b16 %v5747
    %v5813 = vunpack.c.l.b16 %v5748
    %v5814 = vunpack.c.l.b16 %v5749
    %v5815 = vunpack.c.h.b16 %v5749
    %v5816 = vunpack.c.l.b16 %v5750
    %v5817 = vunpack.c.l.b16 %v5751
    %v5818 = vunpack.c.h.b16 %v5751
    %v5819 = vunpack.c.l.b16 %v5752
    %v5820 = vunpack.c.l.b16 %v5753
    %v5821 = vunpack.c.h.b16 %v5753
    %v5822 = vunpack.c.l.b16 %v5754
    %v5823 = vunpack.c.l.b16 %v5755
    %v5824 = vunpack.c.h.b16 %v5755
    %v5825 = vunpack.c.l.b16 %v5756
    %v5826 = vunpack.c.l.b16 %v5757
    %v5827 = vunpack.c.h.b16 %v5757
    %v5828 = vunpack.c.l.b16 %v5758
    %v5829 = vunpack.c.l.b16 %v5759
    %v5830 = vunpack.c.h.b16 %v5759
    %v5831 = vunpack.c.l.b16 %v5760
    %v5832 = vunpack.c.l.b16 %v5761
    %v5833 = vunpack.c.h.b16 %v5761
    %v5834 = vunpack.c.l.b16 %v5762
    %v5835 = vunpack.c.l.b16 %v5763
    %v5836 = vunpack.c.h.b16 %v5763
    %v5837 = vunpack.c.l.b16 %v5764
    %v5838 = vunpack.c.l.b16 %v5765
    %v5839 = vunpack.c.h.b16 %v5765
    %v5840 = vunpack.c.l.b16 %v5766
    %v5841 = vunpack.c.l.b16 %v5767
    %v5842 = vunpack.c.h.b16 %v5767
    %v5843 = vunpack.c.l.b16 %v5768
    %v5844 = vunpack.c.l.b16 %v5769
    %v5845 = vunpack.c.h.b16 %v5769
    %v5846 = vunpack.c.l.b16 %v5770
    %v5847 = vunpack.c.l.b16 %v5771
    %v5848 = vunpack.c.h.b16 %v5771
    %v5849 = vunpack.c.l.b16 %v5772
    %v5850 = vunpack.c.l.b16 %v5773
    %v5851 = vunpack.c.h.b16 %v5773
    %v5852 = vunpack.c.l.b16 %v5774
    %v5853 = vunpack.c.l.b16 %v5775
    %v5854 = vunpack.c.h.b16 %v5775
    %v5855 = vunpack.c.l.b16 %v5776
    %v5856 = vunpack.c.l.b16 %v5777
    %v5857 = vunpack.c.h.b16 %v5777
    %v5858 = vunpack.c.l.b16 %v5778
    %v5859 = vpack.c.b16 %v5814, %v5811
    %v5860 = vpack.c.b16 %v5815, %v5812
    %v5861 = vpack.c.b16 %v5816, %v5813
    %v5862 = vpack.c.b16 %v5820, %v5817
    %v5863 = vpack.c.b16 %v5821, %v5818
    %v5864 = vpack.c.b16 %v5822, %v5819
    %v5865 = vpack.c.b16 %v5826, %v5823
    %v5866 = vpack.c.b16 %v5827, %v5824
    %v5867 = vpack.c.b16 %v5828, %v5825
    %v5868 = vpack.c.b16 %v5832, %v5829
    %v5869 = vpack.c.b16 %v5833, %v5830
    %v5870 = vpack.c.b16 %v5834, %v5831
    %v5871 = vpack.c.b16 %v5838, %v5835
    %v5872 = vpack.c.b16 %v5839, %v5836
    %v5873 = vpack.c.b16 %v5840, %v5837
    %v5874 = vpack.c.b16 %v5844, %v5841
    %v5875 = vpack.c.b16 %v5845, %v5842
    %v5876 = vpack.c.b16 %v5846, %v5843
    %v5877 = vpack.c.b16 %v5850, %v5847
    %v5878 = vpack.c.b16 %v5851, %v5848
    %v5879 = vpack.c.b16 %v5852, %v5849
    %v5880 = vpack.c.b16 %v5856, %v5853
    %v5881 = vpack.c.b16 %v5857, %v5854
    %v5882 = vpack.c.b16 %v5858, %v5855
    %5907 = vmatprep.subr.bf16.mxu0 %v5860
    %5908 = vmatpush1.bf16.msra.mxu0 %v5859
    %5909 = vmatprep.subr.bf16.mxu0 %v5863
    %5910 = vmatpush1.bf16.msra.mxu0 %v5862
    %5911 = vmatprep.subr.bf16.mxu0 %v5866
    %5912 = vmatpush1.bf16.msra.mxu0 %v5865
    %5913 = vmatprep.subr.bf16.mxu0 %v5869
    %5914 = vmatpush1.bf16.msra.mxu0 %v5868
    %5915 = vmatprep.subr.bf16.mxu0 %v5872
    %5916 = vmatpush1.bf16.msra.mxu0 %v5871
    %5917 = vmatprep.subr.bf16.mxu0 %v5875
    %5918 = vmatpush1.bf16.msra.mxu0 %v5874
    %5919 = vmatprep.subr.bf16.mxu0 %v5878
    %5920 = vmatpush1.bf16.msra.mxu0 %v5877
    %5921 = vmatprep.subr.bf16.mxu0 %v5881
    %5922 = vmatpush1.bf16.msra.mxu0 %v5880
    %5923 = vmatprep.subr.bf16.mxu0 0
    %5924 = vmatpush1.bf16.msra.mxu0 0
    %5925 = vmatprep.subr.bf16.mxu0 0
    %5926 = vmatpush1.bf16.msra.mxu0 0
    %5927 = vmatprep.subr.bf16.mxu0 0
    %5928 = vmatpush1.bf16.msra.mxu0 0
    %5929 = vmatprep.subr.bf16.mxu0 0
    %5930 = vmatpush1.bf16.msra.mxu0 0
    %5931 = vmatprep.subr.bf16.mxu0 0
    %5932 = vmatpush1.bf16.msra.mxu0 0
    %5933 = vmatprep.subr.bf16.mxu0 0
    %5934 = vmatpush1.bf16.msra.mxu0 0
    %5935 = vmatprep.subr.bf16.mxu0 0
    %5936 = vmatpush1.bf16.msra.mxu0 0
    %5937 = vmatprep.subr.bf16.mxu0 0
    %5938 = vmatpush1.bf16.msra.mxu0 0
    %5939 = vmatprep.mubr.bf16.mxu0 0
    %5940 = vmatmul.mubr.bf16.gmra.mrb[0].mxu0 %v5746
    %v5941 = vpop.f32.mrb[0].mxu0
    %v5942 = vadd.f32 0.0, %v5941
    %v5943 = vpop.f32.mrb[0].mxu0
    %v5944 = vadd.f32 0.0, %v5943
    %v5945 = vpop.f32.mrb[0].mxu0
    %v5946 = vpop.f32.mrb[0].mxu0
    %5947 = vdwg.mxu0
    %5948 = vmatprep.subr.bf16.mxu0 0
    %5949 = vmatpush1.bf16.msra.mxu0 %v5861
    %5950 = vmatprep.subr.bf16.mxu0 0
    %5951 = vmatpush1.bf16.msra.mxu0 %v5864
    %5952 = vmatprep.subr.bf16.mxu0 0
    %5953 = vmatpush1.bf16.msra.mxu0 %v5867
    %5954 = vmatprep.subr.bf16.mxu0 0
    %5955 = vmatpush1.bf16.msra.mxu0 %v5870
    %5956 = vmatprep.subr.bf16.mxu0 0
    %5957 = vmatpush1.bf16.msra.mxu0 %v5873
    %5958 = vmatprep.subr.bf16.mxu0 0
    %5959 = vmatpush1.bf16.msra.mxu0 %v5876
    %5960 = vmatprep.subr.bf16.mxu0 0
    %5961 = vmatpush1.bf16.msra.mxu0 %v5879
    %5962 = vmatprep.subr.bf16.mxu0 0
    %5963 = vmatpush1.bf16.msra.mxu0 %v5882
    %5964 = vmatprep.subr.bf16.mxu0 0
    %5965 = vmatpush1.bf16.msra.mxu0 0
    %5966 = vmatprep.subr.bf16.mxu0 0
    %5967 = vmatpush1.bf16.msra.mxu0 0
    %5968 = vmatprep.subr.bf16.mxu0 0
    %5969 = vmatpush1.bf16.msra.mxu0 0
    %5970 = vmatprep.subr.bf16.mxu0 0
    %5971 = vmatpush1.bf16.msra.mxu0 0
    %5972 = vmatprep.subr.bf16.mxu0 0
    %5973 = vmatpush1.bf16.msra.mxu0 0
    %5974 = vmatprep.subr.bf16.mxu0 0
    %5975 = vmatpush1.bf16.msra.mxu0 0
    %5976 = vmatprep.subr.bf16.mxu0 0
    %5977 = vmatpush1.bf16.msra.mxu0 0
    %5978 = vmatprep.subr.bf16.mxu0 0
    %5979 = vmatpush1.bf16.msra.mxu0 0
    %5980 = vmatprep.mubr.bf16.mxu0 0
    %5981 = vmatmul.mubr.bf16.gmra.mrb[0].mxu0 %v5746
    %v5982 = vpop.f32.mrb[0].mxu0
    %v5983 = vadd.f32 0.0, %v5982
    %v5984 = vpop.f32.mrb[0].mxu0
    %v5985 = vpop.f32.mrb[0].mxu0
    %v5986 = vpop.f32.mrb[0].mxu0
    %5987 = vdwg.mxu0
    %v5988 = vadd.f32 %v5700, %v5942
    %v5989 = vadd.f32 %v5702, %v5944
    %v5990 = vxor.u32 %v5988, 2147483648
    %v5991 = vxor.u32 %v5989, 2147483648
    %v5992 = vmul.f32 %v5990, 1.442695
    %v5993 = vpow.pop %v5992
    %v5994 = vmul.f32 %v5991, 1.442695
    %v5995 = vpow.pop %v5994
    %v5996 = vadd.f32 %v5993, 1.0
    %v5997 = vadd.f32 %v5995, 1.0
    %v5998 = vrcp.pop %v5996
    %v5999 = vmul.f32 1.0, %v5998
    %v6000 = vrcp.pop %v5997
    %v6001 = vmul.f32 1.0, %v6000
    %v6002 = vadd.f32 %v5983, %v482
    %v6003 = vmul.f32 %v5999, %v6002
    %v6004 = vadd.f32 %v5741, %v6003
    %v6005 = vtanh.pop %v6004
    %v6006 = vsub.f32 %v5221, %v6005
    %v6007 = vmul.f32 %v6001, %v6006
    %v6008 = vadd.f32 %v6005, %v6007
    %6009 = vst [vmem:[#allocation3 + $0x6] sm:$0x1] %v6008
    %v6010 = vld [vmem:[%s4] sm:$0xff]
    %v6011 = vld [vmem:[%s4 + $0x8] sm:$0xf]
    %v6012 = vld [vmem:[%s4 + $0xc] sm:$0xff]
    %v6013 = vld [vmem:[%s4 + $0x14] sm:$0xf]
    %v6014 = vld [vmem:[%s4 + $0x18] sm:$0xff]
    %v6015 = vld [vmem:[%s4 + $0x20] sm:$0xf]
    %v6016 = vld [vmem:[%s4 + $0x24] sm:$0xff]
    %v6017 = vld [vmem:[%s4 + $0x2c] sm:$0xf]
    %v6018 = vld [vmem:[%s4 + $0x30] sm:$0xff]
    %v6019 = vld [vmem:[%s4 + $0x38] sm:$0xf]
    %v6020 = vld [vmem:[%s4 + $0x3c] sm:$0xff]
    %v6021 = vld [vmem:[%s4 + $0x44] sm:$0xf]
    %v6022 = vld [vmem:[%s4 + $0x48] sm:$0xff]
    %v6023 = vld [vmem:[%s4 + $0x50] sm:$0xf]
    %v6024 = vld [vmem:[%s4 + $0x54] sm:$0xff]
    %v6025 = vld [vmem:[%s4 + $0x5c] sm:$0xf]
    %v6026 = vld [vmem:[%s4 + $0x60] sm:$0xff]
    %v6027 = vld [vmem:[%s4 + $0x68] sm:$0xf]
    %v6028 = vld [vmem:[%s4 + $0x6c] sm:$0xff]
    %v6029 = vld [vmem:[%s4 + $0x74] sm:$0xf]
    %v6030 = vld [vmem:[%s4 + $0x78] sm:$0xff]
    %v6031 = vld [vmem:[%s4 + $0x80] sm:$0xf]
    %v6032 = vld [vmem:[%s4 + $0x84] sm:$0xff]
    %v6033 = vld [vmem:[%s4 + $0x8c] sm:$0xf]
    %v6034 = vld [vmem:[%s4 + $0x90] sm:$0xff]
    %v6035 = vld [vmem:[%s4 + $0x98] sm:$0xf]
    %v6036 = vld [vmem:[%s4 + $0x9c] sm:$0xff]
    %v6037 = vld [vmem:[%s4 + $0xa4] sm:$0xf]
    %v6038 = vld [vmem:[%s4 + $0xa8] sm:$0xff]
    %v6039 = vld [vmem:[%s4 + $0xb0] sm:$0xf]
    %v6040 = vld [vmem:[%s4 + $0xb4] sm:$0xff]
    %v6041 = vld [vmem:[%s4 + $0xbc] sm:$0xf]
    %v6074 = vunpack.c.l.b16 %v6010
    %v6075 = vunpack.c.h.b16 %v6010
    %v6076 = vunpack.c.l.b16 %v6011
    %v6077 = vunpack.c.l.b16 %v6012
    %v6078 = vunpack.c.h.b16 %v6012
    %v6079 = vunpack.c.l.b16 %v6013
    %v6080 = vunpack.c.l.b16 %v6014
    %v6081 = vunpack.c.h.b16 %v6014
    %v6082 = vunpack.c.l.b16 %v6015
    %v6083 = vunpack.c.l.b16 %v6016
    %v6084 = vunpack.c.h.b16 %v6016
    %v6085 = vunpack.c.l.b16 %v6017
    %v6086 = vunpack.c.l.b16 %v6018
    %v6087 = vunpack.c.h.b16 %v6018
    %v6088 = vunpack.c.l.b16 %v6019
    %v6089 = vunpack.c.l.b16 %v6020
    %v6090 = vunpack.c.h.b16 %v6020
    %v6091 = vunpack.c.l.b16 %v6021
    %v6092 = vunpack.c.l.b16 %v6022
    %v6093 = vunpack.c.h.b16 %v6022
    %v6094 = vunpack.c.l.b16 %v6023
    %v6095 = vunpack.c.l.b16 %v6024
    %v6096 = vunpack.c.h.b16 %v6024
    %v6097 = vunpack.c.l.b16 %v6025
    %v6098 = vunpack.c.l.b16 %v6026
    %v6099 = vunpack.c.h.b16 %v6026
    %v6100 = vunpack.c.l.b16 %v6027
    %v6101 = vunpack.c.l.b16 %v6028
    %v6102 = vunpack.c.h.b16 %v6028
    %v6103 = vunpack.c.l.b16 %v6029
    %v6104 = vunpack.c.l.b16 %v6030
    %v6105 = vunpack.c.h.b16 %v6030
    %v6106 = vunpack.c.l.b16 %v6031
    %v6107 = vunpack.c.l.b16 %v6032
    %v6108 = vunpack.c.h.b16 %v6032
    %v6109 = vunpack.c.l.b16 %v6033
    %v6110 = vunpack.c.l.b16 %v6034
    %v6111 = vunpack.c.h.b16 %v6034
    %v6112 = vunpack.c.l.b16 %v6035
    %v6113 = vunpack.c.l.b16 %v6036
    %v6114 = vunpack.c.h.b16 %v6036
    %v6115 = vunpack.c.l.b16 %v6037
    %v6116 = vunpack.c.l.b16 %v6038
    %v6117 = vunpack.c.h.b16 %v6038
    %v6118 = vunpack.c.l.b16 %v6039
    %v6119 = vunpack.c.l.b16 %v6040
    %v6120 = vunpack.c.h.b16 %v6040
    %v6121 = vunpack.c.l.b16 %v6041
    %v6122 = vpack.c.b16 %v6077, %v6074
    %v6123 = vpack.c.b16 %v6078, %v6075
    %v6124 = vpack.c.b16 %v6079, %v6076
    %v6125 = vpack.c.b16 %v6083, %v6080
    %v6126 = vpack.c.b16 %v6084, %v6081
    %v6127 = vpack.c.b16 %v6085, %v6082
    %v6128 = vpack.c.b16 %v6089, %v6086
    %v6129 = vpack.c.b16 %v6090, %v6087
    %v6130 = vpack.c.b16 %v6091, %v6088
    %v6131 = vpack.c.b16 %v6095, %v6092
    %v6132 = vpack.c.b16 %v6096, %v6093
    %v6133 = vpack.c.b16 %v6097, %v6094
    %v6134 = vpack.c.b16 %v6101, %v6098
    %v6135 = vpack.c.b16 %v6102, %v6099
    %v6136 = vpack.c.b16 %v6103, %v6100
    %v6137 = vpack.c.b16 %v6107, %v6104
    %v6138 = vpack.c.b16 %v6108, %v6105
    %v6139 = vpack.c.b16 %v6109, %v6106
    %v6140 = vpack.c.b16 %v6113, %v6110
    %v6141 = vpack.c.b16 %v6114, %v6111
    %v6142 = vpack.c.b16 %v6115, %v6112
    %v6143 = vpack.c.b16 %v6119, %v6116
    %v6144 = vpack.c.b16 %v6120, %v6117
    %v6145 = vpack.c.b16 %v6121, %v6118
    %6170 = vmatprep.subr.bf16.mxu0 %v6123
    %6171 = vmatpush1.bf16.msra.mxu0 %v6122
    %6172 = vmatprep.subr.bf16.mxu0 %v6126
    %6173 = vmatpush1.bf16.msra.mxu0 %v6125
    %6174 = vmatprep.subr.bf16.mxu0 %v6129
    %6175 = vmatpush1.bf16.msra.mxu0 %v6128
    %6176 = vmatprep.subr.bf16.mxu0 %v6132
    %6177 = vmatpush1.bf16.msra.mxu0 %v6131
    %6178 = vmatprep.subr.bf16.mxu0 %v6135
    %6179 = vmatpush1.bf16.msra.mxu0 %v6134
    %6180 = vmatprep.subr.bf16.mxu0 %v6138
    %6181 = vmatpush1.bf16.msra.mxu0 %v6137
    %6182 = vmatprep.subr.bf16.mxu0 %v6141
    %6183 = vmatpush1.bf16.msra.mxu0 %v6140
    %6184 = vmatprep.subr.bf16.mxu0 %v6144
    %6185 = vmatpush1.bf16.msra.mxu0 %v6143
    %6186 = vmatprep.subr.bf16.mxu0 0
    %6187 = vmatpush1.bf16.msra.mxu0 0
    %6188 = vmatprep.subr.bf16.mxu0 0
    %6189 = vmatpush1.bf16.msra.mxu0 0
    %6190 = vmatprep.subr.bf16.mxu0 0
    %6191 = vmatpush1.bf16.msra.mxu0 0
    %6192 = vmatprep.subr.bf16.mxu0 0
    %6193 = vmatpush1.bf16.msra.mxu0 0
    %6194 = vmatprep.subr.bf16.mxu0 0
    %6195 = vmatpush1.bf16.msra.mxu0 0
    %6196 = vmatprep.subr.bf16.mxu0 0
    %6197 = vmatpush1.bf16.msra.mxu0 0
    %6198 = vmatprep.subr.bf16.mxu0 0
    %6199 = vmatpush1.bf16.msra.mxu0 0
    %6200 = vmatprep.subr.bf16.mxu0 0
    %6201 = vmatpush1.bf16.msra.mxu0 0
    %6202 = vmatprep.mubr.bf16.mxu0 0
    %6203 = vmatmul.mubr.bf16.gmra.mrb[0].mxu0 %v5504
    %v6204 = vpop.f32.mrb[0].mxu0
    %v6205 = vadd.f32 0.0, %v6204
    %v6206 = vpop.f32.mrb[0].mxu0
    %v6207 = vadd.f32 0.0, %v6206
    %v6208 = vpop.f32.mrb[0].mxu0
    %v6209 = vpop.f32.mrb[0].mxu0
    %6210 = vdwg.mxu0
    %6211 = vmatprep.subr.bf16.mxu0 0
    %6212 = vmatpush1.bf16.msra.mxu0 %v6124
    %6213 = vmatprep.subr.bf16.mxu0 0
    %6214 = vmatpush1.bf16.msra.mxu0 %v6127
    %6215 = vmatprep.subr.bf16.mxu0 0
    %6216 = vmatpush1.bf16.msra.mxu0 %v6130
    %6217 = vmatprep.subr.bf16.mxu0 0
    %6218 = vmatpush1.bf16.msra.mxu0 %v6133
    %6219 = vmatprep.subr.bf16.mxu0 0
    %6220 = vmatpush1.bf16.msra.mxu0 %v6136
    %6221 = vmatprep.subr.bf16.mxu0 0
    %6222 = vmatpush1.bf16.msra.mxu0 %v6139
    %6223 = vmatprep.subr.bf16.mxu0 0
    %6224 = vmatpush1.bf16.msra.mxu0 %v6142
    %6225 = vmatprep.subr.bf16.mxu0 0
    %6226 = vmatpush1.bf16.msra.mxu0 %v6145
    %6227 = vmatprep.subr.bf16.mxu0 0
    %6228 = vmatpush1.bf16.msra.mxu0 0
    %6229 = vmatprep.subr.bf16.mxu0 0
    %6230 = vmatpush1.bf16.msra.mxu0 0
    %6231 = vmatprep.subr.bf16.mxu0 0
    %6232 = vmatpush1.bf16.msra.mxu0 0
    %6233 = vmatprep.subr.bf16.mxu0 0
    %6234 = vmatpush1.bf16.msra.mxu0 0
    %6235 = vmatprep.subr.bf16.mxu0 0
    %6236 = vmatpush1.bf16.msra.mxu0 0
    %6237 = vmatprep.subr.bf16.mxu0 0
    %6238 = vmatpush1.bf16.msra.mxu0 0
    %6239 = vmatprep.subr.bf16.mxu0 0
    %6240 = vmatpush1.bf16.msra.mxu0 0
    %6241 = vmatprep.subr.bf16.mxu0 0
    %6242 = vmatpush1.bf16.msra.mxu0 0
    %6243 = vmatprep.mubr.bf16.mxu0 0
    %6244 = vmatmul.mubr.bf16.gmra.mrb[0].mxu0 %v5504
    %v6245 = vpop.f32.mrb[0].mxu0
    %v6246 = vadd.f32 0.0, %v6245
    %v6247 = vpop.f32.mrb[0].mxu0
    %v6248 = vpop.f32.mrb[0].mxu0
    %v6249 = vpop.f32.mrb[0].mxu0
    %6250 = vdwg.mxu0
    %s6251 = scalar_lea.vmem [#allocation2], 7
    %v6252 = vld [vmem:[%s6251] ss:$8 sm:$0x7]
    %v6255 = vcombine.low %v6205, %v6207
    %v6257 = vunpack.c.l.s4 1966171168
    %v6258 = vunpack.c.0.s8 %v6257
    %v6259 = vlaneseq
    %v6260 = vshrl.u32 %v6259, 7
    %v6261 = vsub.s32 %v6258, %v6260
    %v6262 = vrot.slane %v6255, %v6261
    %v6264 = vunpack.c.l.s4 1966171168
    %v6265 = vunpack.c.0.s8 %v6264
    %v6266 = vlaneseq
    %v6267 = vshrl.u32 %v6266, 7
    %v6268 = vsub.s32 %v6265, %v6267
    %v6269 = vrot.slane %v6262, %v6268
    %v6271 = vadd.f32 %v6252, %v6269
    %v6272 = vxor.u32 %v6271, 2147483648
    %v6273 = vmul.f32 %v6272, 1.442695
    %v6274 = vpow.pop %v6273
    %v6275 = vadd.f32 %v6274, 1.0
    %v6276 = vrcp.pop %v6275
    %v6277 = vmul.f32 1.0, %v6276
    %v6278 = vadd.f32 %v6246, %v480
    %v6279 = vmul.f32 %v6277, %v6278
    %v6281 = vrot.slane %v6252, 2
    %v6283 = vadd.f32 %v6281, %v6279
    %v6284 = vtanh.pop %v6283
    %v6285 = vsub.f32 %v5503, %v6284
    %v6287 = vrot.slane %v6277, 1
    %v6289 = vmul.f32 %v6287, %v6285
    %v6290 = vadd.f32 %v6284, %v6289
    %v6291 = vpack.c.bf16 %v6290, %v6290
    %v6292 = vld [vmem:[%s5] sm:$0xff]
    %v6293 = vld [vmem:[%s5 + $0x8] sm:$0xf]
    %v6294 = vld [vmem:[%s5 + $0xc] sm:$0xff]
    %v6295 = vld [vmem:[%s5 + $0x14] sm:$0xf]
    %v6296 = vld [vmem:[%s5 + $0x18] sm:$0xff]
    %v6297 = vld [vmem:[%s5 + $0x20] sm:$0xf]
    %v6298 = vld [vmem:[%s5 + $0x24] sm:$0xff]
    %v6299 = vld [vmem:[%s5 + $0x2c] sm:$0xf]
    %v6300 = vld [vmem:[%s5 + $0x30] sm:$0xff]
    %v6301 = vld [vmem:[%s5 + $0x38] sm:$0xf]
    %v6302 = vld [vmem:[%s5 + $0x3c] sm:$0xff]
    %v6303 = vld [vmem:[%s5 + $0x44] sm:$0xf]
    %v6304 = vld [vmem:[%s5 + $0x48] sm:$0xff]
    %v6305 = vld [vmem:[%s5 + $0x50] sm:$0xf]
    %v6306 = vld [vmem:[%s5 + $0x54] sm:$0xff]
    %v6307 = vld [vmem:[%s5 + $0x5c] sm:$0xf]
    %v6308 = vld [vmem:[%s5 + $0x60] sm:$0xff]
    %v6309 = vld [vmem:[%s5 + $0x68] sm:$0xf]
    %v6310 = vld [vmem:[%s5 + $0x6c] sm:$0xff]
    %v6311 = vld [vmem:[%s5 + $0x74] sm:$0xf]
    %v6312 = vld [vmem:[%s5 + $0x78] sm:$0xff]
    %v6313 = vld [vmem:[%s5 + $0x80] sm:$0xf]
    %v6314 = vld [vmem:[%s5 + $0x84] sm:$0xff]
    %v6315 = vld [vmem:[%s5 + $0x8c] sm:$0xf]
    %v6316 = vld [vmem:[%s5 + $0x90] sm:$0xff]
    %v6317 = vld [vmem:[%s5 + $0x98] sm:$0xf]
    %v6318 = vld [vmem:[%s5 + $0x9c] sm:$0xff]
    %v6319 = vld [vmem:[%s5 + $0xa4] sm:$0xf]
    %v6320 = vld [vmem:[%s5 + $0xa8] sm:$0xff]
    %v6321 = vld [vmem:[%s5 + $0xb0] sm:$0xf]
    %v6322 = vld [vmem:[%s5 + $0xb4] sm:$0xff]
    %v6323 = vld [vmem:[%s5 + $0xbc] sm:$0xf]
    %v6356 = vunpack.c.l.b16 %v6292
    %v6357 = vunpack.c.h.b16 %v6292
    %v6358 = vunpack.c.l.b16 %v6293
    %v6359 = vunpack.c.l.b16 %v6294
    %v6360 = vunpack.c.h.b16 %v6294
    %v6361 = vunpack.c.l.b16 %v6295
    %v6362 = vunpack.c.l.b16 %v6296
    %v6363 = vunpack.c.h.b16 %v6296
    %v6364 = vunpack.c.l.b16 %v6297
    %v6365 = vunpack.c.l.b16 %v6298
    %v6366 = vunpack.c.h.b16 %v6298
    %v6367 = vunpack.c.l.b16 %v6299
    %v6368 = vunpack.c.l.b16 %v6300
    %v6369 = vunpack.c.h.b16 %v6300
    %v6370 = vunpack.c.l.b16 %v6301
    %v6371 = vunpack.c.l.b16 %v6302
    %v6372 = vunpack.c.h.b16 %v6302
    %v6373 = vunpack.c.l.b16 %v6303
    %v6374 = vunpack.c.l.b16 %v6304
    %v6375 = vunpack.c.h.b16 %v6304
    %v6376 = vunpack.c.l.b16 %v6305
    %v6377 = vunpack.c.l.b16 %v6306
    %v6378 = vunpack.c.h.b16 %v6306
    %v6379 = vunpack.c.l.b16 %v6307
    %v6380 = vunpack.c.l.b16 %v6308
    %v6381 = vunpack.c.h.b16 %v6308
    %v6382 = vunpack.c.l.b16 %v6309
    %v6383 = vunpack.c.l.b16 %v6310
    %v6384 = vunpack.c.h.b16 %v6310
    %v6385 = vunpack.c.l.b16 %v6311
    %v6386 = vunpack.c.l.b16 %v6312
    %v6387 = vunpack.c.h.b16 %v6312
    %v6388 = vunpack.c.l.b16 %v6313
    %v6389 = vunpack.c.l.b16 %v6314
    %v6390 = vunpack.c.h.b16 %v6314
    %v6391 = vunpack.c.l.b16 %v6315
    %v6392 = vunpack.c.l.b16 %v6316
    %v6393 = vunpack.c.h.b16 %v6316
    %v6394 = vunpack.c.l.b16 %v6317
    %v6395 = vunpack.c.l.b16 %v6318
    %v6396 = vunpack.c.h.b16 %v6318
    %v6397 = vunpack.c.l.b16 %v6319
    %v6398 = vunpack.c.l.b16 %v6320
    %v6399 = vunpack.c.h.b16 %v6320
    %v6400 = vunpack.c.l.b16 %v6321
    %v6401 = vunpack.c.l.b16 %v6322
    %v6402 = vunpack.c.h.b16 %v6322
    %v6403 = vunpack.c.l.b16 %v6323
    %v6404 = vpack.c.b16 %v6359, %v6356
    %v6405 = vpack.c.b16 %v6360, %v6357
    %v6406 = vpack.c.b16 %v6361, %v6358
    %v6407 = vpack.c.b16 %v6365, %v6362
    %v6408 = vpack.c.b16 %v6366, %v6363
    %v6409 = vpack.c.b16 %v6367, %v6364
    %v6410 = vpack.c.b16 %v6371, %v6368
    %v6411 = vpack.c.b16 %v6372, %v6369
    %v6412 = vpack.c.b16 %v6373, %v6370
    %v6413 = vpack.c.b16 %v6377, %v6374
    %v6414 = vpack.c.b16 %v6378, %v6375
    %v6415 = vpack.c.b16 %v6379, %v6376
    %v6416 = vpack.c.b16 %v6383, %v6380
    %v6417 = vpack.c.b16 %v6384, %v6381
    %v6418 = vpack.c.b16 %v6385, %v6382
    %v6419 = vpack.c.b16 %v6389, %v6386
    %v6420 = vpack.c.b16 %v6390, %v6387
    %v6421 = vpack.c.b16 %v6391, %v6388
    %v6422 = vpack.c.b16 %v6395, %v6392
    %v6423 = vpack.c.b16 %v6396, %v6393
    %v6424 = vpack.c.b16 %v6397, %v6394
    %v6425 = vpack.c.b16 %v6401, %v6398
    %v6426 = vpack.c.b16 %v6402, %v6399
    %v6427 = vpack.c.b16 %v6403, %v6400
    %6452 = vmatprep.subr.bf16.mxu0 %v6405
    %6453 = vmatpush1.bf16.msra.mxu0 %v6404
    %6454 = vmatprep.subr.bf16.mxu0 %v6408
    %6455 = vmatpush1.bf16.msra.mxu0 %v6407
    %6456 = vmatprep.subr.bf16.mxu0 %v6411
    %6457 = vmatpush1.bf16.msra.mxu0 %v6410
    %6458 = vmatprep.subr.bf16.mxu0 %v6414
    %6459 = vmatpush1.bf16.msra.mxu0 %v6413
    %6460 = vmatprep.subr.bf16.mxu0 %v6417
    %6461 = vmatpush1.bf16.msra.mxu0 %v6416
    %6462 = vmatprep.subr.bf16.mxu0 %v6420
    %6463 = vmatpush1.bf16.msra.mxu0 %v6419
    %6464 = vmatprep.subr.bf16.mxu0 %v6423
    %6465 = vmatpush1.bf16.msra.mxu0 %v6422
    %6466 = vmatprep.subr.bf16.mxu0 %v6426
    %6467 = vmatpush1.bf16.msra.mxu0 %v6425
    %6468 = vmatprep.subr.bf16.mxu0 0
    %6469 = vmatpush1.bf16.msra.mxu0 0
    %6470 = vmatprep.subr.bf16.mxu0 0
    %6471 = vmatpush1.bf16.msra.mxu0 0
    %6472 = vmatprep.subr.bf16.mxu0 0
    %6473 = vmatpush1.bf16.msra.mxu0 0
    %6474 = vmatprep.subr.bf16.mxu0 0
    %6475 = vmatpush1.bf16.msra.mxu0 0
    %6476 = vmatprep.subr.bf16.mxu0 0
    %6477 = vmatpush1.bf16.msra.mxu0 0
    %6478 = vmatprep.subr.bf16.mxu0 0
    %6479 = vmatpush1.bf16.msra.mxu0 0
    %6480 = vmatprep.subr.bf16.mxu0 0
    %6481 = vmatpush1.bf16.msra.mxu0 0
    %6482 = vmatprep.subr.bf16.mxu0 0
    %6483 = vmatpush1.bf16.msra.mxu0 0
    %6484 = vmatprep.mubr.bf16.mxu0 0
    %6485 = vmatmul.mubr.bf16.gmra.mrb[0].mxu0 %v6291
    %v6486 = vpop.f32.mrb[0].mxu0
    %v6487 = vadd.f32 %v931, %v6486
    %v6488 = vpop.f32.mrb[0].mxu0
    %v6489 = vadd.f32 %v935, %v6488
    %v6490 = vpop.f32.mrb[0].mxu0
    %v6491 = vpop.f32.mrb[0].mxu0
    %6492 = vdwg.mxu0
    %6493 = vmatprep.subr.bf16.mxu0 0
    %6494 = vmatpush1.bf16.msra.mxu0 %v6406
    %6495 = vmatprep.subr.bf16.mxu0 0
    %6496 = vmatpush1.bf16.msra.mxu0 %v6409
    %6497 = vmatprep.subr.bf16.mxu0 0
    %6498 = vmatpush1.bf16.msra.mxu0 %v6412
    %6499 = vmatprep.subr.bf16.mxu0 0
    %6500 = vmatpush1.bf16.msra.mxu0 %v6415
    %6501 = vmatprep.subr.bf16.mxu0 0
    %6502 = vmatpush1.bf16.msra.mxu0 %v6418
    %6503 = vmatprep.subr.bf16.mxu0 0
    %6504 = vmatpush1.bf16.msra.mxu0 %v6421
    %6505 = vmatprep.subr.bf16.mxu0 0
    %6506 = vmatpush1.bf16.msra.mxu0 %v6424
    %6507 = vmatprep.subr.bf16.mxu0 0
    %6508 = vmatpush1.bf16.msra.mxu0 %v6427
    %6509 = vmatprep.subr.bf16.mxu0 0
    %6510 = vmatpush1.bf16.msra.mxu0 0
    %6511 = vmatprep.subr.bf16.mxu0 0
    %6512 = vmatpush1.bf16.msra.mxu0 0
    %6513 = vmatprep.subr.bf16.mxu0 0
    %6514 = vmatpush1.bf16.msra.mxu0 0
    %6515 = vmatprep.subr.bf16.mxu0 0
    %6516 = vmatpush1.bf16.msra.mxu0 0
    %6517 = vmatprep.subr.bf16.mxu0 0
    %6518 = vmatpush1.bf16.msra.mxu0 0
    %6519 = vmatprep.subr.bf16.mxu0 0
    %6520 = vmatpush1.bf16.msra.mxu0 0
    %6521 = vmatprep.subr.bf16.mxu0 0
    %6522 = vmatpush1.bf16.msra.mxu0 0
    %6523 = vmatprep.subr.bf16.mxu0 0
    %6524 = vmatpush1.bf16.msra.mxu0 0
    %6525 = vmatprep.mubr.bf16.mxu0 0
    %6526 = vmatmul.mubr.bf16.gmra.mrb[0].mxu0 %v6291
    %v6527 = vpop.f32.mrb[0].mxu0
    %v6528 = vadd.f32 %v939, %v6527
    %v6529 = vpop.f32.mrb[0].mxu0
    %v6530 = vpop.f32.mrb[0].mxu0
    %v6531 = vpop.f32.mrb[0].mxu0
    %6532 = vdwg.mxu0
    %v6533 = vpack.c.bf16 %v6008, %v6008
    %v6534 = vld [vmem:[%s6] sm:$0xff]
    %v6535 = vld [vmem:[%s6 + $0x8] sm:$0xf]
    %v6536 = vld [vmem:[%s6 + $0xc] sm:$0xff]
    %v6537 = vld [vmem:[%s6 + $0x14] sm:$0xf]
    %v6538 = vld [vmem:[%s6 + $0x18] sm:$0xff]
    %v6539 = vld [vmem:[%s6 + $0x20] sm:$0xf]
    %v6540 = vld [vmem:[%s6 + $0x24] sm:$0xff]
    %v6541 = vld [vmem:[%s6 + $0x2c] sm:$0xf]
    %v6542 = vld [vmem:[%s6 + $0x30] sm:$0xff]
    %v6543 = vld [vmem:[%s6 + $0x38] sm:$0xf]
    %v6544 = vld [vmem:[%s6 + $0x3c] sm:$0xff]
    %v6545 = vld [vmem:[%s6 + $0x44] sm:$0xf]
    %v6546 = vld [vmem:[%s6 + $0x48] sm:$0xff]
    %v6547 = vld [vmem:[%s6 + $0x50] sm:$0xf]
    %v6548 = vld [vmem:[%s6 + $0x54] sm:$0xff]
    %v6549 = vld [vmem:[%s6 + $0x5c] sm:$0xf]
    %v6550 = vld [vmem:[%s6 + $0x60] sm:$0xff]
    %v6551 = vld [vmem:[%s6 + $0x68] sm:$0xf]
    %v6552 = vld [vmem:[%s6 + $0x6c] sm:$0xff]
    %v6553 = vld [vmem:[%s6 + $0x74] sm:$0xf]
    %v6554 = vld [vmem:[%s6 + $0x78] sm:$0xff]
    %v6555 = vld [vmem:[%s6 + $0x80] sm:$0xf]
    %v6556 = vld [vmem:[%s6 + $0x84] sm:$0xff]
    %v6557 = vld [vmem:[%s6 + $0x8c] sm:$0xf]
    %v6558 = vld [vmem:[%s6 + $0x90] sm:$0xff]
    %v6559 = vld [vmem:[%s6 + $0x98] sm:$0xf]
    %v6560 = vld [vmem:[%s6 + $0x9c] sm:$0xff]
    %v6561 = vld [vmem:[%s6 + $0xa4] sm:$0xf]
    %v6562 = vld [vmem:[%s6 + $0xa8] sm:$0xff]
    %v6563 = vld [vmem:[%s6 + $0xb0] sm:$0xf]
    %v6564 = vld [vmem:[%s6 + $0xb4] sm:$0xff]
    %v6565 = vld [vmem:[%s6 + $0xbc] sm:$0xf]
    %v6598 = vunpack.c.l.b16 %v6534
    %v6599 = vunpack.c.h.b16 %v6534
    %v6600 = vunpack.c.l.b16 %v6535
    %v6601 = vunpack.c.l.b16 %v6536
    %v6602 = vunpack.c.h.b16 %v6536
    %v6603 = vunpack.c.l.b16 %v6537
    %v6604 = vunpack.c.l.b16 %v6538
    %v6605 = vunpack.c.h.b16 %v6538
    %v6606 = vunpack.c.l.b16 %v6539
    %v6607 = vunpack.c.l.b16 %v6540
    %v6608 = vunpack.c.h.b16 %v6540
    %v6609 = vunpack.c.l.b16 %v6541
    %v6610 = vunpack.c.l.b16 %v6542
    %v6611 = vunpack.c.h.b16 %v6542
    %v6612 = vunpack.c.l.b16 %v6543
    %v6613 = vunpack.c.l.b16 %v6544
    %v6614 = vunpack.c.h.b16 %v6544
    %v6615 = vunpack.c.l.b16 %v6545
    %v6616 = vunpack.c.l.b16 %v6546
    %v6617 = vunpack.c.h.b16 %v6546
    %v6618 = vunpack.c.l.b16 %v6547
    %v6619 = vunpack.c.l.b16 %v6548
    %v6620 = vunpack.c.h.b16 %v6548
    %v6621 = vunpack.c.l.b16 %v6549
    %v6622 = vunpack.c.l.b16 %v6550
    %v6623 = vunpack.c.h.b16 %v6550
    %v6624 = vunpack.c.l.b16 %v6551
    %v6625 = vunpack.c.l.b16 %v6552
    %v6626 = vunpack.c.h.b16 %v6552
    %v6627 = vunpack.c.l.b16 %v6553
    %v6628 = vunpack.c.l.b16 %v6554
    %v6629 = vunpack.c.h.b16 %v6554
    %v6630 = vunpack.c.l.b16 %v6555
    %v6631 = vunpack.c.l.b16 %v6556
    %v6632 = vunpack.c.h.b16 %v6556
    %v6633 = vunpack.c.l.b16 %v6557
    %v6634 = vunpack.c.l.b16 %v6558
    %v6635 = vunpack.c.h.b16 %v6558
    %v6636 = vunpack.c.l.b16 %v6559
    %v6637 = vunpack.c.l.b16 %v6560
    %v6638 = vunpack.c.h.b16 %v6560
    %v6639 = vunpack.c.l.b16 %v6561
    %v6640 = vunpack.c.l.b16 %v6562
    %v6641 = vunpack.c.h.b16 %v6562
    %v6642 = vunpack.c.l.b16 %v6563
    %v6643 = vunpack.c.l.b16 %v6564
    %v6644 = vunpack.c.h.b16 %v6564
    %v6645 = vunpack.c.l.b16 %v6565
    %v6646 = vpack.c.b16 %v6601, %v6598
    %v6647 = vpack.c.b16 %v6602, %v6599
    %v6648 = vpack.c.b16 %v6603, %v6600
    %v6649 = vpack.c.b16 %v6607, %v6604
    %v6650 = vpack.c.b16 %v6608, %v6605
    %v6651 = vpack.c.b16 %v6609, %v6606
    %v6652 = vpack.c.b16 %v6613, %v6610
    %v6653 = vpack.c.b16 %v6614, %v6611
    %v6654 = vpack.c.b16 %v6615, %v6612
    %v6655 = vpack.c.b16 %v6619, %v6616
    %v6656 = vpack.c.b16 %v6620, %v6617
    %v6657 = vpack.c.b16 %v6621, %v6618
    %v6658 = vpack.c.b16 %v6625, %v6622
    %v6659 = vpack.c.b16 %v6626, %v6623
    %v6660 = vpack.c.b16 %v6627, %v6624
    %v6661 = vpack.c.b16 %v6631, %v6628
    %v6662 = vpack.c.b16 %v6632, %v6629
    %v6663 = vpack.c.b16 %v6633, %v6630
    %v6664 = vpack.c.b16 %v6637, %v6634
    %v6665 = vpack.c.b16 %v6638, %v6635
    %v6666 = vpack.c.b16 %v6639, %v6636
    %v6667 = vpack.c.b16 %v6643, %v6640
    %v6668 = vpack.c.b16 %v6644, %v6641
    %v6669 = vpack.c.b16 %v6645, %v6642
    %6694 = vmatprep.subr.bf16.mxu0 %v6647
    %6695 = vmatpush1.bf16.msra.mxu0 %v6646
    %6696 = vmatprep.subr.bf16.mxu0 %v6650
    %6697 = vmatpush1.bf16.msra.mxu0 %v6649
    %6698 = vmatprep.subr.bf16.mxu0 %v6653
    %6699 = vmatpush1.bf16.msra.mxu0 %v6652
    %6700 = vmatprep.subr.bf16.mxu0 %v6656
    %6701 = vmatpush1.bf16.msra.mxu0 %v6655
    %6702 = vmatprep.subr.bf16.mxu0 %v6659
    %6703 = vmatpush1.bf16.msra.mxu0 %v6658
    %6704 = vmatprep.subr.bf16.mxu0 %v6662
    %6705 = vmatpush1.bf16.msra.mxu0 %v6661
    %6706 = vmatprep.subr.bf16.mxu0 %v6665
    %6707 = vmatpush1.bf16.msra.mxu0 %v6664
    %6708 = vmatprep.subr.bf16.mxu0 %v6668
    %6709 = vmatpush1.bf16.msra.mxu0 %v6667
    %6710 = vmatprep.subr.bf16.mxu0 0
    %6711 = vmatpush1.bf16.msra.mxu0 0
    %6712 = vmatprep.subr.bf16.mxu0 0
    %6713 = vmatpush1.bf16.msra.mxu0 0
    %6714 = vmatprep.subr.bf16.mxu0 0
    %6715 = vmatpush1.bf16.msra.mxu0 0
    %6716 = vmatprep.subr.bf16.mxu0 0
    %6717 = vmatpush1.bf16.msra.mxu0 0
    %6718 = vmatprep.subr.bf16.mxu0 0
    %6719 = vmatpush1.bf16.msra.mxu0 0
    %6720 = vmatprep.subr.bf16.mxu0 0
    %6721 = vmatpush1.bf16.msra.mxu0 0
    %6722 = vmatprep.subr.bf16.mxu0 0
    %6723 = vmatpush1.bf16.msra.mxu0 0
    %6724 = vmatprep.subr.bf16.mxu0 0
    %6725 = vmatpush1.bf16.msra.mxu0 0
    %6726 = vmatprep.mubr.bf16.mxu0 0
    %6727 = vmatmul.mubr.bf16.gmra.mrb[0].mxu0 %v6533
    %v6728 = vpop.f32.mrb[0].mxu0
    %v6729 = vadd.f32 0.0, %v6728
    %v6730 = vpop.f32.mrb[0].mxu0
    %v6731 = vadd.f32 0.0, %v6730
    %v6732 = vpop.f32.mrb[0].mxu0
    %v6733 = vpop.f32.mrb[0].mxu0
    %6734 = vdwg.mxu0
    %6735 = vmatprep.subr.bf16.mxu0 0
    %6736 = vmatpush1.bf16.msra.mxu0 %v6648
    %6737 = vmatprep.subr.bf16.mxu0 0
    %6738 = vmatpush1.bf16.msra.mxu0 %v6651
    %6739 = vmatprep.subr.bf16.mxu0 0
    %6740 = vmatpush1.bf16.msra.mxu0 %v6654
    %6741 = vmatprep.subr.bf16.mxu0 0
    %6742 = vmatpush1.bf16.msra.mxu0 %v6657
    %6743 = vmatprep.subr.bf16.mxu0 0
    %6744 = vmatpush1.bf16.msra.mxu0 %v6660
    %6745 = vmatprep.subr.bf16.mxu0 0
    %6746 = vmatpush1.bf16.msra.mxu0 %v6663
    %6747 = vmatprep.subr.bf16.mxu0 0
    %6748 = vmatpush1.bf16.msra.mxu0 %v6666
    %6749 = vmatprep.subr.bf16.mxu0 0
    %6750 = vmatpush1.bf16.msra.mxu0 %v6669
    %6751 = vmatprep.subr.bf16.mxu0 0
    %6752 = vmatpush1.bf16.msra.mxu0 0
    %6753 = vmatprep.subr.bf16.mxu0 0
    %6754 = vmatpush1.bf16.msra.mxu0 0
    %6755 = vmatprep.subr.bf16.mxu0 0
    %6756 = vmatpush1.bf16.msra.mxu0 0
    %6757 = vmatprep.subr.bf16.mxu0 0
    %6758 = vmatpush1.bf16.msra.mxu0 0
    %6759 = vmatprep.subr.bf16.mxu0 0
    %6760 = vmatpush1.bf16.msra.mxu0 0
    %6761 = vmatprep.subr.bf16.mxu0 0
    %6762 = vmatpush1.bf16.msra.mxu0 0
    %6763 = vmatprep.subr.bf16.mxu0 0
    %6764 = vmatpush1.bf16.msra.mxu0 0
    %6765 = vmatprep.subr.bf16.mxu0 0
    %6766 = vmatpush1.bf16.msra.mxu0 0
    %6767 = vmatprep.mubr.bf16.mxu0 0
    %6768 = vmatmul.mubr.bf16.gmra.mrb[0].mxu0 %v6533
    %v6769 = vpop.f32.mrb[0].mxu0
    %v6770 = vadd.f32 0.0, %v6769
    %v6771 = vpop.f32.mrb[0].mxu0
    %v6772 = vpop.f32.mrb[0].mxu0
    %v6773 = vpop.f32.mrb[0].mxu0
    %6774 = vdwg.mxu0
    %v6775 = vadd.f32 %v6487, %v6729
    %v6776 = vadd.f32 %v6489, %v6731
    %v6777 = vxor.u32 %v6775, 2147483648
    %v6778 = vxor.u32 %v6776, 2147483648
    %v6779 = vmul.f32 %v6777, 1.442695
    %v6780 = vpow.pop %v6779
    %v6781 = vmul.f32 %v6778, 1.442695
    %v6782 = vpow.pop %v6781
    %v6783 = vadd.f32 %v6780, 1.0
    %v6784 = vadd.f32 %v6782, 1.0
    %v6785 = vrcp.pop %v6783
    %v6786 = vmul.f32 1.0, %v6785
    %v6787 = vrcp.pop %v6784
    %v6788 = vmul.f32 1.0, %v6787
    %v6789 = vadd.f32 %v6770, %v482
    %v6790 = vmul.f32 %v6786, %v6789
    %v6791 = vadd.f32 %v6528, %v6790
    %v6792 = vtanh.pop %v6791
    %v6793 = vsub.f32 %v6008, %v6792
    %v6794 = vmul.f32 %v6788, %v6793
    %v6795 = vadd.f32 %v6792, %v6794
    %6796 = vst [vmem:[#allocation3 + $0x7] sm:$0x1] %v6795
    %6797 = vst [vmem:[%s14] sm:$0x1] %v6290
    %6798 = vst [vmem:[%s15] sm:$0x1] %v6795
    %v6799 = vld [vmem:[%s11] sm:$0xff]
    %v6800 = vld [vmem:[#allocation3] sm:$0xff]
    %v6801 = vld [vmem:[#allocation4] sm:$0x1]
    %v6803 = vlaneseq
    %v6804 = vshrl.u32 %v6803, 7
    %v6805 = vsub.s32 0, %v6804
    %v6806 = vrot.slane %v6801, %v6805
    %6807 = vset.pattern.permute.xlu0 0
    %6808 = vperm.xlu0 %6807, %v6806
    %v6809 = vpop.permute.xlu0 %6808
    %6811 = vmatprep.subr.mxu0 0.0
    %6812 = vmatpush1.xpose.msra.mxu0 %v6800
    %6813 = vmatprep.subr.mxu0 0.0
    %6814 = vmatpush1.xpose.msra.mxu0 0.0
    %6815 = vmatprep.subr.mxu0 0.0
    %6816 = vmatpush1.xpose.msra.mxu0 0.0
    %6817 = vmatprep.subr.mxu0 0.0
    %6818 = vmatpush1.xpose.msra.mxu0 0.0
    %6819 = vmatprep.subr.mxu0 0.0
    %6820 = vmatpush1.xpose.msra.mxu0 0.0
    %6821 = vmatprep.subr.mxu0 0.0
    %6822 = vmatpush1.xpose.msra.mxu0 0.0
    %6823 = vmatprep.subr.mxu0 0.0
    %6824 = vmatpush1.xpose.msra.mxu0 0.0
    %6825 = vmatprep.subr.mxu0 0.0
    %6826 = vmatpush1.xpose.msra.mxu0 0.0
    %6827 = vmatprep.subr.mxu0 0.0
    %6828 = vmatpush1.xpose.msra.mxu0 0.0
    %6829 = vmatprep.subr.mxu0 0.0
    %6830 = vmatpush1.xpose.msra.mxu0 0.0
    %6831 = vmatprep.subr.mxu0 0.0
    %6832 = vmatpush1.xpose.msra.mxu0 0.0
    %6833 = vmatprep.subr.mxu0 0.0
    %6834 = vmatpush1.xpose.msra.mxu0 0.0
    %6835 = vmatprep.subr.mxu0 0.0
    %6836 = vmatpush1.xpose.msra.mxu0 0.0
    %6837 = vmatprep.subr.mxu0 0.0
    %6838 = vmatpush1.xpose.msra.mxu0 0.0
    %6839 = vmatprep.subr.mxu0 0.0
    %6840 = vmatpush1.xpose.msra.mxu0 0.0
    %6841 = vmatprep.subr.mxu0 0.0
    %6842 = vmatpush1.xpose.msra.mxu0 0.0
    %6843 = vmatprep.subr.mxu0 0.0
    %6844 = vmatpush1.xpose.msra.mxu0 0.0
    %6845 = vmatprep.subr.mxu0 0.0
    %6846 = vmatpush1.xpose.msra.mxu0 0.0
    %6847 = vmatprep.subr.mxu0 0.0
    %6848 = vmatpush1.xpose.msra.mxu0 0.0
    %6849 = vmatprep.subr.mxu0 0.0
    %6850 = vmatpush1.xpose.msra.mxu0 0.0
    %6851 = vmatprep.subr.mxu0 0.0
    %6852 = vmatpush1.xpose.msra.mxu0 0.0
    %6853 = vmatprep.subr.mxu0 0.0
    %6854 = vmatpush1.xpose.msra.mxu0 0.0
    %6855 = vmatprep.subr.mxu0 0.0
    %6856 = vmatpush1.xpose.msra.mxu0 0.0
    %6857 = vmatprep.subr.mxu0 0.0
    %6858 = vmatpush1.xpose.msra.mxu0 0.0
    %6859 = vmatprep.subr.mxu0 0.0
    %6860 = vmatpush1.xpose.msra.mxu0 0.0
    %6861 = vmatprep.subr.mxu0 0.0
    %6862 = vmatpush1.xpose.msra.mxu0 0.0
    %6863 = vmatprep.subr.mxu0 0.0
    %6864 = vmatpush1.xpose.msra.mxu0 0.0
    %6865 = vmatprep.subr.mxu0 0.0
    %6866 = vmatpush1.xpose.msra.mxu0 0.0
    %6867 = vmatprep.subr.mxu0 0.0
    %6868 = vmatpush1.xpose.msra.mxu0 0.0
    %6869 = vmatprep.subr.mxu0 0.0
    %6870 = vmatpush1.xpose.msra.mxu0 0.0
    %6871 = vmatprep.subr.mxu0 0.0
    %6872 = vmatpush1.xpose.msra.mxu0 0.0
    %6873 = vmatprep.subr.mxu0 0.0
    %6874 = vmatpush1.xpose.msra.mxu0 0.0
    %6875 = vmatprep.mubr.f32.mxu0 0.0
    %6876 = vmatmul.mubr.f32.gmra.mrb[0].mxu0 %v6799
    %v6877 = vpop.f32.mrb[0].mxu0
    %v6878 = vadd.f32 %v6809, %v6877
    %v6879 = vpop.f32.mrb[0].mxu0
    %6880 = vdwg.mxu0
    %vm6881 = vcmask 64512
    %6882 = vst.msk [vmem:[#allocation5] sm:$0xff] %vm6881, %v6878
    // Predicated region
    $region54: #{_lambda_.1} parent=1 // pred_check
      _
    $region55: #{_lambda_.1} parent=1 // pred_check_branch
      %6884 = sbr.rel (0) target = $region57
    $region56: #{_lambda_.1} parent=1 // pred_region
      %s6886 = ssub.s32 128, 128
      %6887 = vsyncadd [#allocation6], %s6886
      %s6889 = sshll.u32 [#allocation5], 4
      %s6890 = int_to_ptr.vmem [resolvable:$true] %s6889
      %6892 = dma.vmem_to_hbm [thread:$0]  %s6890, 128, %s13, [#allocation6]
    $region57: #{_lambda_.1} parent=1 // pred_fallthru
      _
    // Predicated region
    $region58: #{_lambda_.1} parent=1 // pred_check
      _
    $region59: #{_lambda_.1} parent=1 // pred_check_branch
      %6894 = sbr.rel (0) target = $region61
    $region60: #{_lambda_.1} parent=1 // pred_region
      _
    $region61: #{_lambda_.1} parent=1 // pred_fallthru
      _
    // Predicated region
    $region62: #{_lambda_.1} parent=1 // pred_check
      _
    $region63: #{_lambda_.1} parent=1 // pred_check_branch
      %6896 = sbr.rel (0) target = $region65
    $region64: #{_lambda_.1} parent=1 // pred_region
      _
    $region65: #{_lambda_.1} parent=1 // pred_fallthru
      _
    // Predicated region
    $region66: #{_lambda_.1} parent=1 // pred_check
      _
    $region67: #{_lambda_.1} parent=1 // pred_check_branch
      %6898 = sbr.rel (0) target = $region69
    $region68: #{_lambda_.1} parent=1 // pred_region
      %6899 = dma.done [#allocation6], 128
    $region69: #{_lambda_.1} parent=1 // pred_fallthru
      _
    // Predicated region
    $region70: #{_lambda_.1} parent=1 // pred_check
      _
    $region71: #{_lambda_.1} parent=1 // pred_check_branch
      %6901 = sbr.rel (0) target = $region73
    $region72: #{_lambda_.1} parent=1 // pred_region
      _
    $region73: #{_lambda_.1} parent=1 // pred_fallthru
      _
    // Predicated region
    $region74: #{_lambda_.1} parent=1 // pred_check
      _
    $region75: #{_lambda_.1} parent=1 // pred_check_branch
      %6903 = sbr.rel (0) target = $region77
    $region76: #{_lambda_.1} parent=1 // pred_region
      _
    $region77: #{_lambda_.1} parent=1 // pred_fallthru
      _
    %6904 = vsyncpa [#allocation6], 1

</llo_original>
